<compile_context>
chip_gen: v5e
topology: v5e:2x2
jax: 0.10.0
libtpu: 0.0.40
codegen_flags: <defaults>
</compile_context>

<pallas_src>
import jax
import jax.numpy as jnp
from jax.experimental import pallas as pl
from jax.experimental.pallas import tpu as pltpu

EPS = 1e-5  # PyTorch InstanceNorm2d default eps


def _resnet_block_kernel(x_ref, w1_ref, b1_ref, w2_ref, b2_ref, o_ref, pad_ref):
    # x_ref:  (1, H, W, C) f32          w*_ref: (3, 3C, C) bf16  -> (kw, kh*Cin, Cout)
    # b*_ref: (1, C) f32                o_ref:  (1, H, W, C)
    # pad_ref: (H+2, W+2, C) f32 VMEM scratch (reflection-padded image, reused twice)
    x = x_ref[0]                                   # (H, W, C)
    H, W, C = x.shape

    def write_reflection_pad(a):
        # Fill pad_ref with ReflectionPad2d(1)(a) using slice stores only
        # (no concatenate chains, no extra full-image copies).
        pad_ref[1:H + 1, 1:W + 1, :] = a                                   # interior
        pad_ref[0:1, 1:W + 1, :] = a[1:2, :, :]                            # top row
        pad_ref[H + 1:H + 2, 1:W + 1, :] = a[H - 2:H - 1, :, :]            # bottom row
        # Left/right columns (corners included): under reflection the padded
        # column 0 equals padded column 2 and padded column W+1 equals W-1.
        pad_ref[:, 0:1, :] = pad_ref[:, 2:3, :]
        pad_ref[:, W + 1:W + 2, :] = pad_ref[:, W - 1:W, :]

    def conv3x3(w_ref, b_ref):
        # Consumes the current pad_ref content.  The kh taps are folded into the
        # matmul contraction: rows3[h, w', kh*C + ci] = pad[h + kh, w', ci], so
        # each of the 3 kw taps is a single (H*(W+2), 3C) x (3C, C) MXU matmul
        # with bf16 inputs and f32 accumulation.
        rows3 = jnp.concatenate(
            [pad_ref[0:H, :, :], pad_ref[1:H + 1, :, :], pad_ref[2:H + 2, :, :]],
            axis=-1,
        ).astype(jnp.bfloat16).reshape(H * (W + 2), 3 * C)
        acc = jnp.zeros((H, W, C), jnp.float32)
        for kw in range(3):
            r = jnp.dot(rows3, w_ref[kw],
                        preferred_element_type=jnp.float32).reshape(H, W + 2, C)
            acc = acc + r[:, kw:kw + W, :]
        # Conv bias (mathematically it cancels under the following InstanceNorm,
        # but it is kept for fidelity with the PyTorch module; cost is one add).
        return acc + b_ref[...]

    def channel_stats(a):
        # Single-pass per-channel stats over (H, W): mean and mean-of-squares.
        mu = jnp.mean(a, axis=(0, 1), keepdims=True)
        ms = jnp.mean(a * a, axis=(0, 1), keepdims=True)
        var = jnp.maximum(ms - mu * mu, 0.0)
        return mu, jax.lax.rsqrt(var + EPS)

    # --- conv1 -> InstanceNorm -------------------------------------------------
    write_reflection_pad(x)
    h = conv3x3(w1_ref, b1_ref)
    mu1, inv1 = channel_stats(h)
    h = (h - mu1) * inv1

    # --- conv2 -> InstanceNorm -> ReLU -> + x (fused epilogue) -------------------
    write_reflection_pad(h)
    h = conv3x3(w2_ref, b2_ref)
    mu2, inv2 = channel_stats(h)
    o_ref[0] = (jnp.maximum((h - mu2) * inv2, 0.0) + x).astype(o_ref.dtype)


def _fold_weight(w_torch):
    # PyTorch Conv2d weight (Cout, Cin, 3, 3) -> (kw, kh*Cin, Cout), bf16 for MXU.
    c_out, c_in, kh, kw = w_torch.shape
    w = jnp.transpose(w_torch.astype(jnp.float32), (3, 2, 1, 0))  # (kw, kh, ci, co)
    return w.reshape(kw, kh * c_in, c_out).astype(jnp.bfloat16)


def _vmem_limit_bytes(H, W, C):
    img = (H + 2) * (W + 2) * C * 4                # one padded f32 image
    need = (4 * img                                 # in/out blocks, double-buffered
            + img                                   # pad scratch
            + 3 * img + (3 * img) // 2              # rows3 (f32 build + bf16 copy)
            + 4 * img                               # matmul partials / acc / h
            + 4 * 9 * C * C * 2)                    # folded bf16 weights, 2x-buffered
    return int(min(max(2 * need, 8 << 20), 64 << 20))


def resnet_block_nhwc(x_nhwc, w1, b1, w2, b2):
    """x_nhwc: (B,H,W,C) f32; w1/w2: PyTorch-layout (C,C,3,3); b1/b2: (C,)."""
    B, H, W, C = x_nhwc.shape
    assert H >= 2 and W >= 2, "ReflectionPad2d(1) requires H, W >= 2"
    w1f, w2f = _fold_weight(w1), _fold_weight(w2)
    b1r = b1.reshape(1, C).astype(jnp.float32)
    b2r = b2.reshape(1, C).astype(jnp.float32)

    # TODO(synk): for large images add H-row tiling (1-row halo per conv) with a
    #             two-pass InstanceNorm (stats scratch), so the per-step working
    #             set fits v7x's 64 MiB VMEM and the extra grid axis keeps both
    #             v7x TensorCores busy when B < 2.
    # TODO(synk): for small channel counts (like C=4 here) a lane-dense repack
    #             (spatial dim on lanes) would recover the ~97% lane waste; NHWC
    #             with channels-on-lanes is kept as the right layout for C >= 128.
    return pl.pallas_call(
        _resnet_block_kernel,
        out_shape=jax.ShapeDtypeStruct((B, H, W, C), x_nhwc.dtype),
        grid_spec=pltpu.PrefetchScalarGridSpec(
            num_scalar_prefetch=0,
            grid=(B,),
            in_specs=[
                pl.BlockSpec((1, H, W, C), lambda b: (b, 0, 0, 0)),
                pl.BlockSpec((3, 3 * C, C), lambda b: (0, 0, 0)),
                pl.BlockSpec((1, C), lambda b: (0, 0)),
                pl.BlockSpec((3, 3 * C, C), lambda b: (0, 0, 0)),
                pl.BlockSpec((1, C), lambda b: (0, 0)),
            ],
            out_specs=pl.BlockSpec((1, H, W, C), lambda b: (b, 0, 0, 0)),
            scratch_shapes=[pltpu.VMEM((H + 2, W + 2, C), jnp.float32)],
        ),
        compiler_params=pltpu.CompilerParams(
            dimension_semantics=("parallel",),
            vmem_limit_bytes=_vmem_limit_bytes(H, W, C),
        ),
    )(x_nhwc, w1f, b1r, w2f, b2r)


def resnet_block(x_nchw, w1, b1, w2, b2):
    # PyTorch-convention NCHW entry point.  The two transposes are full HBM
    # passes; NHWC callers should call resnet_block_nhwc directly to avoid them.
    x_nhwc = jnp.transpose(x_nchw, (0, 2, 3, 1))
    y_nhwc = resnet_block_nhwc(x_nhwc, w1, b1, w2, b2)
    return jnp.transpose(y_nhwc, (0, 3, 1, 2))


# --- pure-JAX reference (mirrors the kernel's bf16 MXU input precision) --------
def _reference(x_nchw, w1, b1, w2, b2):
    x = jnp.transpose(x_nchw, (0, 2, 3, 1)).astype(jnp.float32)      # NHWC
    B, H, W, C = x.shape
    wk1 = jnp.transpose(w1, (2, 3, 1, 0))   # (kh, kw, ci, co)
    wk2 = jnp.transpose(w2, (2, 3, 1, 0))

    def conv(a, w, b):
        ap = jnp.pad(a, ((0, 0), (1, 1), (1, 1), (0, 0)), mode="reflect")
        ap = ap.astype(jnp.bfloat16)           # same rounding as the kernel's dot
        wq = w.astype(jnp.bfloat16)
        acc = jnp.zeros((B, H, W, C), jnp.float32)
        for kh in range(3):
            for kw in range(3):
                acc = acc + jnp.einsum(
                    "bhwi,io->bhwo", ap[:, kh:kh + H, kw:kw + W, :], wq[kh, kw],
                    preferred_element_type=jnp.float32)
        return acc + b

    def inorm(a):
        mu = jnp.mean(a, axis=(1, 2), keepdims=True)
        var = jnp.mean((a - mu) ** 2, axis=(1, 2), keepdims=True)
        return (a - mu) / jnp.sqrt(var + EPS)

    h = inorm(conv(x, wk1, b1))
    h = inorm(conv(h, wk2, b2))
    y = jnp.maximum(h, 0.0) + x
    return jnp.transpose(y, (0, 3, 1, 2))


if __name__ == "__main__":
    B, C, H, W = 2, 4, 16, 16
    key = jax.random.PRNGKey(0)
    kx, kw1, kb1, kw2, kb2 = jax.random.split(key, 5)

    x = jax.random.normal(kx, (B, C, H, W), dtype=jnp.float32)
    # PyTorch-layout conv weights (Cout, Cin, 3, 3) with Conv2d-style init bounds.
    fan_in = C * 3 * 3
    bound = 1.0 / (fan_in ** 0.5)
    w1 = jax.random.uniform(kw1, (C, C, 3, 3), jnp.float32, -bound, bound)
    b1 = jax.random.uniform(kb1, (C,), jnp.float32, -bound, bound)
    w2 = jax.random.uniform(kw2, (C, C, 3, 3), jnp.float32, -bound, bound)
    b2 = jax.random.uniform(kb2, (C,), jnp.float32, -bound, bound)

    y = jax.jit(resnet_block)(x, w1, b1, w2, b2)
    jax.block_until_ready(y)
    assert y.shape == (B, C, H, W)

    y_ref = _reference(x, w1, b1, w2, b2)
    err = float(jnp.max(jnp.abs(y - y_ref)))
    # Reference uses the same bf16 conv-input precision, so the remaining gap is
    # only accumulation-order / single-pass-variance noise.
    assert err < 1e-2, f"mismatch vs reference: {err}"
    print("KERNEL_OK")
</pallas_src>

<mosaic_0001>
module attributes {stable_mosaic.version = 11 : i64} {
  func.func @_resnet_block_kernel(%arg0: i32, %arg1: memref<1x16x16x4xf32, #tpu.memory_space<vmem>>, %arg2: memref<3x12x4xbf16, #tpu.memory_space<vmem>>, %arg3: memref<1x4xf32, #tpu.memory_space<vmem>>, %arg4: memref<3x12x4xbf16, #tpu.memory_space<vmem>>, %arg5: memref<1x4xf32, #tpu.memory_space<vmem>>, %arg6: memref<1x16x16x4xf32, #tpu.memory_space<vmem>>, %arg7: memref<18x18x4xf32, #tpu.memory_space<vmem>>) attributes {dimension_semantics = [#tpu.dimension_semantics<parallel>], iteration_bounds = array<i64: 2>, scalar_prefetch = 0 : i64, scratch_operands = 1 : i64, tpu.core_type = #tpu.core_type<tc>, window_params = [{transform_indices = @transform_0, window_bounds = array<i64: 1, 16, 16, 4>}, {pipeline_mode = #tpu.pipeline_mode<synchronous>, transform_indices = @transform_1, window_bounds = array<i64: 3, 12, 4>}, {pipeline_mode = #tpu.pipeline_mode<synchronous>, transform_indices = @transform_2, window_bounds = array<i64: 1, 4>}, {pipeline_mode = #tpu.pipeline_mode<synchronous>, transform_indices = @transform_3, window_bounds = array<i64: 3, 12, 4>}, {pipeline_mode = #tpu.pipeline_mode<synchronous>, transform_indices = @transform_4, window_bounds = array<i64: 1, 4>}, {transform_indices = @transform_5, window_bounds = array<i64: 1, 16, 16, 4>}]} {
    %c0 = arith.constant 0 : index
    %c0_0 = arith.constant 0 : index
    %c0_1 = arith.constant 0 : index
    %c0_2 = arith.constant 0 : index
    %0 = vector.load %arg1[%c0, %c0_0, %c0_1, %c0_2] : memref<1x16x16x4xf32, #tpu.memory_space<vmem>>, vector<1x16x16x4xf32>
    %1 = vector.shape_cast %0 : vector<1x16x16x4xf32> to vector<16x16x4xf32>
    %c1 = arith.constant 1 : index
    %c1_3 = arith.constant 1 : index
    %c0_4 = arith.constant 0 : index
    %2 = vector.load %arg7[%c1, %c1_3, %c0_4] : memref<18x18x4xf32, #tpu.memory_space<vmem>>, vector<16x16x4xf32>
    tpu.vector_store %arg7[%c1, %c1_3, %c0_4], %1 {strides = array<i32>} : memref<18x18x4xf32, #tpu.memory_space<vmem>>, vector<16x16x4xf32>,
    %3 = vector.extract_strided_slice %1 {offsets = [1, 0, 0], sizes = [1, 16, 4], strides = [1, 1, 1]} : vector<16x16x4xf32> to vector<1x16x4xf32>
    %c0_5 = arith.constant 0 : index
    %c1_6 = arith.constant 1 : index
    %c0_7 = arith.constant 0 : index
    %4 = vector.load %arg7[%c0_5, %c1_6, %c0_7] : memref<18x18x4xf32, #tpu.memory_space<vmem>>, vector<1x16x4xf32>
    tpu.vector_store %arg7[%c0_5, %c1_6, %c0_7], %3 {strides = array<i32>} : memref<18x18x4xf32, #tpu.memory_space<vmem>>, vector<1x16x4xf32>,
    %5 = vector.extract_strided_slice %1 {offsets = [14, 0, 0], sizes = [1, 16, 4], strides = [1, 1, 1]} : vector<16x16x4xf32> to vector<1x16x4xf32>
    %c17 = arith.constant 17 : index
    %c1_8 = arith.constant 1 : index
    %c0_9 = arith.constant 0 : index
    %6 = vector.load %arg7[%c17, %c1_8, %c0_9] : memref<18x18x4xf32, #tpu.memory_space<vmem>>, vector<1x16x4xf32>
    tpu.vector_store %arg7[%c17, %c1_8, %c0_9], %5 {strides = array<i32>} : memref<18x18x4xf32, #tpu.memory_space<vmem>>, vector<1x16x4xf32>,
    %c0_10 = arith.constant 0 : index
    %c2 = arith.constant 2 : index
    %c0_11 = arith.constant 0 : index
    %7 = vector.load %arg7[%c0_10, %c2, %c0_11] : memref<18x18x4xf32, #tpu.memory_space<vmem>>, vector<18x1x4xf32>
    %c0_12 = arith.constant 0 : index
    %c0_13 = arith.constant 0 : index
    %c0_14 = arith.constant 0 : index
    %8 = vector.load %arg7[%c0_12, %c0_13, %c0_14] : memref<18x18x4xf32, #tpu.memory_space<vmem>>, vector<18x1x4xf32>
    tpu.vector_store %arg7[%c0_12, %c0_13, %c0_14], %7 {strides = array<i32>} : memref<18x18x4xf32, #tpu.memory_space<vmem>>, vector<18x1x4xf32>,
    %c0_15 = arith.constant 0 : index
    %c15 = arith.constant 15 : index
    %c0_16 = arith.constant 0 : index
    %9 = vector.load %arg7[%c0_15, %c15, %c0_16] : memref<18x18x4xf32, #tpu.memory_space<vmem>>, vector<18x1x4xf32>
    %c0_17 = arith.constant 0 : index
    %c17_18 = arith.constant 17 : index
    %c0_19 = arith.constant 0 : index
    %10 = vector.load %arg7[%c0_17, %c17_18, %c0_19] : memref<18x18x4xf32, #tpu.memory_space<vmem>>, vector<18x1x4xf32>
    tpu.vector_store %arg7[%c0_17, %c17_18, %c0_19], %9 {strides = array<i32>} : memref<18x18x4xf32, #tpu.memory_space<vmem>>, vector<18x1x4xf32>,
    %c0_20 = arith.constant 0 : index
    %c0_21 = arith.constant 0 : index
    %c0_22 = arith.constant 0 : index
    %11 = vector.load %arg7[%c0_20, %c0_21, %c0_22] : memref<18x18x4xf32, #tpu.memory_space<vmem>>, vector<16x18x4xf32>
    %c1_23 = arith.constant 1 : index
    %c0_24 = arith.constant 0 : index
    %c0_25 = arith.constant 0 : index
    %12 = vector.load %arg7[%c1_23, %c0_24, %c0_25] : memref<18x18x4xf32, #tpu.memory_space<vmem>>, vector<16x18x4xf32>
    %c2_26 = arith.constant 2 : index
    %c0_27 = arith.constant 0 : index
    %c0_28 = arith.constant 0 : index
    %13 = vector.load %arg7[%c2_26, %c0_27, %c0_28] : memref<18x18x4xf32, #tpu.memory_space<vmem>>, vector<16x18x4xf32>
    %14 = tpu.concatenate %11, %12, %13 in 2 : vector<16x18x4xf32>, vector<16x18x4xf32>, vector<16x18x4xf32> -> vector<16x18x12xf32>
    %15 = arith.truncf %14 : vector<16x18x12xf32> to vector<16x18x12xbf16>
    %16 = vector.shape_cast %15 : vector<16x18x12xbf16> to vector<288x12xbf16>
    %cst = arith.constant 0.000000e+00 : f32
    %17 = vector.broadcast %cst : f32 to vector<16x16x4xf32>
    %c0_29 = arith.constant 0 : index
    %c0_30 = arith.constant 0 : index
    %c0_31 = arith.constant 0 : index
    %18 = vector.load %arg2[%c0_29, %c0_30, %c0_31] : memref<3x12x4xbf16, #tpu.memory_space<vmem>>, vector<1x12x4xbf16>
    %19 = vector.shape_cast %18 : vector<1x12x4xbf16> to vector<12x4xbf16>
    %cst_32 = arith.constant dense<0.000000e+00> : vector<288x4xf32>
    %20 = tpu.matmul %16, %19, %cst_32 {dimension_numbers = #tpu.dot_dimension_numbers<[1], [0], [0], [1], [0, 0, 1, 1], [], []>} : vector<288x12xbf16>, vector<12x4xbf16>, vector<288x4xf32> -> vector<288x4xf32>
    %21 = vector.shape_cast %20 : vector<288x4xf32> to vector<16x18x4xf32>
    %22 = vector.extract_strided_slice %21 {offsets = [0, 0, 0], sizes = [16, 16, 4], strides = [1, 1, 1]} : vector<16x18x4xf32> to vector<16x16x4xf32>
    %23 = arith.addf %17, %22 : vector<16x16x4xf32>
    %c1_33 = arith.constant 1 : index
    %c0_34 = arith.constant 0 : index
    %c0_35 = arith.constant 0 : index
    %24 = vector.load %arg2[%c1_33, %c0_34, %c0_35] : memref<3x12x4xbf16, #tpu.memory_space<vmem>>, vector<1x12x4xbf16>
    %25 = vector.shape_cast %24 : vector<1x12x4xbf16> to vector<12x4xbf16>
    %cst_36 = arith.constant dense<0.000000e+00> : vector<288x4xf32>
    %26 = tpu.matmul %16, %25, %cst_36 {dimension_numbers = #tpu.dot_dimension_numbers<[1], [0], [0], [1], [0, 0, 1, 1], [], []>} : vector<288x12xbf16>, vector<12x4xbf16>, vector<288x4xf32> -> vector<288x4xf32>
    %27 = vector.shape_cast %26 : vector<288x4xf32> to vector<16x18x4xf32>
    %28 = vector.extract_strided_slice %27 {offsets = [0, 1, 0], sizes = [16, 16, 4], strides = [1, 1, 1]} : vector<16x18x4xf32> to vector<16x16x4xf32>
    %29 = arith.addf %23, %28 : vector<16x16x4xf32>
    %c2_37 = arith.constant 2 : index
    %c0_38 = arith.constant 0 : index
    %c0_39 = arith.constant 0 : index
    %30 = vector.load %arg2[%c2_37, %c0_38, %c0_39] : memref<3x12x4xbf16, #tpu.memory_space<vmem>>, vector<1x12x4xbf16>
    %31 = vector.shape_cast %30 : vector<1x12x4xbf16> to vector<12x4xbf16>
    %cst_40 = arith.constant dense<0.000000e+00> : vector<288x4xf32>
    %32 = tpu.matmul %16, %31, %cst_40 {dimension_numbers = #tpu.dot_dimension_numbers<[1], [0], [0], [1], [0, 0, 1, 1], [], []>} : vector<288x12xbf16>, vector<12x4xbf16>, vector<288x4xf32> -> vector<288x4xf32>
    %33 = vector.shape_cast %32 : vector<288x4xf32> to vector<16x18x4xf32>
    %34 = vector.extract_strided_slice %33 {offsets = [0, 2, 0], sizes = [16, 16, 4], strides = [1, 1, 1]} : vector<16x18x4xf32> to vector<16x16x4xf32>
    %35 = arith.addf %29, %34 : vector<16x16x4xf32>
    %c0_41 = arith.constant 0 : index
    %c0_42 = arith.constant 0 : index
    %36 = vector.load %arg3[%c0_41, %c0_42] : memref<1x4xf32, #tpu.memory_space<vmem>>, vector<1x4xf32>
    %37 = vector.shape_cast %36 : vector<1x4xf32> to vector<1x1x4xf32>
    %38 = vector.broadcast %37 : vector<1x1x4xf32> to vector<16x16x4xf32>
    %39 = arith.addf %35, %38 : vector<16x16x4xf32>
    %cst_43 = arith.constant dense<0.000000e+00> : vector<4xf32>
    %40 = vector.multi_reduction <add>, %39, %cst_43 [0, 1] : vector<16x16x4xf32> to vector<4xf32>
    %41 = vector.shape_cast %40 : vector<4xf32> to vector<1x1x4xf32>
    %cst_44 = arith.constant 2.560000e+02 : f32
    %42 = vector.broadcast %cst_44 : f32 to vector<1x1x4xf32>
    %43 = arith.divf %41, %42 : vector<1x1x4xf32>
    %44 = arith.mulf %39, %39 : vector<16x16x4xf32>
    %cst_45 = arith.constant dense<0.000000e+00> : vector<4xf32>
    %45 = vector.multi_reduction <add>, %44, %cst_45 [0, 1] : vector<16x16x4xf32> to vector<4xf32>
    %46 = vector.shape_cast %45 : vector<4xf32> to vector<1x1x4xf32>
    %cst_46 = arith.constant 2.560000e+02 : f32
    %47 = vector.broadcast %cst_46 : f32 to vector<1x1x4xf32>
    %48 = arith.divf %46, %47 : vector<1x1x4xf32>
    %49 = arith.mulf %43, %43 : vector<1x1x4xf32>
    %50 = arith.subf %48, %49 : vector<1x1x4xf32>
    %cst_47 = arith.constant 0.000000e+00 : f32
    %51 = vector.broadcast %cst_47 : f32 to vector<1x1x4xf32>
    %52 = arith.maximumf %50, %51 : vector<1x1x4xf32>
    %cst_48 = arith.constant 9.99999974E-6 : f32
    %53 = vector.broadcast %cst_48 : f32 to vector<1x1x4xf32>
    %54 = arith.addf %52, %53 : vector<1x1x4xf32>
    %55 = math.rsqrt %54 : vector<1x1x4xf32>
    %56 = vector.broadcast %43 : vector<1x1x4xf32> to vector<16x16x4xf32>
    %57 = arith.subf %39, %56 : vector<16x16x4xf32>
    %58 = vector.broadcast %55 : vector<1x1x4xf32> to vector<16x16x4xf32>
    %59 = arith.mulf %57, %58 : vector<16x16x4xf32>
    %c1_49 = arith.constant 1 : index
    %c1_50 = arith.constant 1 : index
    %c0_51 = arith.constant 0 : index
    %60 = vector.load %arg7[%c1_49, %c1_50, %c0_51] : memref<18x18x4xf32, #tpu.memory_space<vmem>>, vector<16x16x4xf32>
    tpu.vector_store %arg7[%c1_49, %c1_50, %c0_51], %59 {strides = array<i32>} : memref<18x18x4xf32, #tpu.memory_space<vmem>>, vector<16x16x4xf32>,
    %61 = vector.extract_strided_slice %59 {offsets = [1, 0, 0], sizes = [1, 16, 4], strides = [1, 1, 1]} : vector<16x16x4xf32> to vector<1x16x4xf32>
    %c0_52 = arith.constant 0 : index
    %c1_53 = arith.constant 1 : index
    %c0_54 = arith.constant 0 : index
    %62 = vector.load %arg7[%c0_52, %c1_53, %c0_54] : memref<18x18x4xf32, #tpu.memory_space<vmem>>, vector<1x16x4xf32>
    tpu.vector_store %arg7[%c0_52, %c1_53, %c0_54], %61 {strides = array<i32>} : memref<18x18x4xf32, #tpu.memory_space<vmem>>, vector<1x16x4xf32>,
    %63 = vector.extract_strided_slice %59 {offsets = [14, 0, 0], sizes = [1, 16, 4], strides = [1, 1, 1]} : vector<16x16x4xf32> to vector<1x16x4xf32>
    %c17_55 = arith.constant 17 : index
    %c1_56 = arith.constant 1 : index
    %c0_57 = arith.constant 0 : index
    %64 = vector.load %arg7[%c17_55, %c1_56, %c0_57] : memref<18x18x4xf32, #tpu.memory_space<vmem>>, vector<1x16x4xf32>
    tpu.vector_store %arg7[%c17_55, %c1_56, %c0_57], %63 {strides = array<i32>} : memref<18x18x4xf32, #tpu.memory_space<vmem>>, vector<1x16x4xf32>,
    %c0_58 = arith.constant 0 : index
    %c2_59 = arith.constant 2 : index
    %c0_60 = arith.constant 0 : index
    %65 = vector.load %arg7[%c0_58, %c2_59, %c0_60] : memref<18x18x4xf32, #tpu.memory_space<vmem>>, vector<18x1x4xf32>
    %c0_61 = arith.constant 0 : index
    %c0_62 = arith.constant 0 : index
    %c0_63 = arith.constant 0 : index
    %66 = vector.load %arg7[%c0_61, %c0_62, %c0_63] : memref<18x18x4xf32, #tpu.memory_space<vmem>>, vector<18x1x4xf32>
    tpu.vector_store %arg7[%c0_61, %c0_62, %c0_63], %65 {strides = array<i32>} : memref<18x18x4xf32, #tpu.memory_space<vmem>>, vector<18x1x4xf32>,
    %c0_64 = arith.constant 0 : index
    %c15_65 = arith.constant 15 : index
    %c0_66 = arith.constant 0 : index
    %67 = vector.load %arg7[%c0_64, %c15_65, %c0_66] : memref<18x18x4xf32, #tpu.memory_space<vmem>>, vector<18x1x4xf32>
    %c0_67 = arith.constant 0 : index
    %c17_68 = arith.constant 17 : index
    %c0_69 = arith.constant 0 : index
    %68 = vector.load %arg7[%c0_67, %c17_68, %c0_69] : memref<18x18x4xf32, #tpu.memory_space<vmem>>, vector<18x1x4xf32>
    tpu.vector_store %arg7[%c0_67, %c17_68, %c0_69], %67 {strides = array<i32>} : memref<18x18x4xf32, #tpu.memory_space<vmem>>, vector<18x1x4xf32>,
    %c0_70 = arith.constant 0 : index
    %c0_71 = arith.constant 0 : index
    %c0_72 = arith.constant 0 : index
    %69 = vector.load %arg7[%c0_70, %c0_71, %c0_72] : memref<18x18x4xf32, #tpu.memory_space<vmem>>, vector<16x18x4xf32>
    %c1_73 = arith.constant 1 : index
    %c0_74 = arith.constant 0 : index
    %c0_75 = arith.constant 0 : index
    %70 = vector.load %arg7[%c1_73, %c0_74, %c0_75] : memref<18x18x4xf32, #tpu.memory_space<vmem>>, vector<16x18x4xf32>
    %c2_76 = arith.constant 2 : index
    %c0_77 = arith.constant 0 : index
    %c0_78 = arith.constant 0 : index
    %71 = vector.load %arg7[%c2_76, %c0_77, %c0_78] : memref<18x18x4xf32, #tpu.memory_space<vmem>>, vector<16x18x4xf32>
    %72 = tpu.concatenate %69, %70, %71 in 2 : vector<16x18x4xf32>, vector<16x18x4xf32>, vector<16x18x4xf32> -> vector<16x18x12xf32>
    %73 = arith.truncf %72 : vector<16x18x12xf32> to vector<16x18x12xbf16>
    %74 = vector.shape_cast %73 : vector<16x18x12xbf16> to vector<288x12xbf16>
    %cst_79 = arith.constant 0.000000e+00 : f32
    %75 = vector.broadcast %cst_79 : f32 to vector<16x16x4xf32>
    %c0_80 = arith.constant 0 : index
    %c0_81 = arith.constant 0 : index
    %c0_82 = arith.constant 0 : index
    %76 = vector.load %arg4[%c0_80, %c0_81, %c0_82] : memref<3x12x4xbf16, #tpu.memory_space<vmem>>, vector<1x12x4xbf16>
    %77 = vector.shape_cast %76 : vector<1x12x4xbf16> to vector<12x4xbf16>
    %cst_83 = arith.constant dense<0.000000e+00> : vector<288x4xf32>
    %78 = tpu.matmul %74, %77, %cst_83 {dimension_numbers = #tpu.dot_dimension_numbers<[1], [0], [0], [1], [0, 0, 1, 1], [], []>} : vector<288x12xbf16>, vector<12x4xbf16>, vector<288x4xf32> -> vector<288x4xf32>
    %79 = vector.shape_cast %78 : vector<288x4xf32> to vector<16x18x4xf32>
    %80 = vector.extract_strided_slice %79 {offsets = [0, 0, 0], sizes = [16, 16, 4], strides = [1, 1, 1]} : vector<16x18x4xf32> to vector<16x16x4xf32>
    %81 = arith.addf %75, %80 : vector<16x16x4xf32>
    %c1_84 = arith.constant 1 : index
    %c0_85 = arith.constant 0 : index
    %c0_86 = arith.constant 0 : index
    %82 = vector.load %arg4[%c1_84, %c0_85, %c0_86] : memref<3x12x4xbf16, #tpu.memory_space<vmem>>, vector<1x12x4xbf16>
    %83 = vector.shape_cast %82 : vector<1x12x4xbf16> to vector<12x4xbf16>
    %cst_87 = arith.constant dense<0.000000e+00> : vector<288x4xf32>
    %84 = tpu.matmul %74, %83, %cst_87 {dimension_numbers = #tpu.dot_dimension_numbers<[1], [0], [0], [1], [0, 0, 1, 1], [], []>} : vector<288x12xbf16>, vector<12x4xbf16>, vector<288x4xf32> -> vector<288x4xf32>
    %85 = vector.shape_cast %84 : vector<288x4xf32> to vector<16x18x4xf32>
    %86 = vector.extract_strided_slice %85 {offsets = [0, 1, 0], sizes = [16, 16, 4], strides = [1, 1, 1]} : vector<16x18x4xf32> to vector<16x16x4xf32>
    %87 = arith.addf %81, %86 : vector<16x16x4xf32>
    %c2_88 = arith.constant 2 : index
    %c0_89 = arith.constant 0 : index
    %c0_90 = arith.constant 0 : index
    %88 = vector.load %arg4[%c2_88, %c0_89, %c0_90] : memref<3x12x4xbf16, #tpu.memory_space<vmem>>, vector<1x12x4xbf16>
    %89 = vector.shape_cast %88 : vector<1x12x4xbf16> to vector<12x4xbf16>
    %cst_91 = arith.constant dense<0.000000e+00> : vector<288x4xf32>
    %90 = tpu.matmul %74, %89, %cst_91 {dimension_numbers = #tpu.dot_dimension_numbers<[1], [0], [0], [1], [0, 0, 1, 1], [], []>} : vector<288x12xbf16>, vector<12x4xbf16>, vector<288x4xf32> -> vector<288x4xf32>
    %91 = vector.shape_cast %90 : vector<288x4xf32> to vector<16x18x4xf32>
    %92 = vector.extract_strided_slice %91 {offsets = [0, 2, 0], sizes = [16, 16, 4], strides = [1, 1, 1]} : vector<16x18x4xf32> to vector<16x16x4xf32>
    %93 = arith.addf %87, %92 : vector<16x16x4xf32>
    %c0_92 = arith.constant 0 : index
    %c0_93 = arith.constant 0 : index
    %94 = vector.load %arg5[%c0_92, %c0_93] : memref<1x4xf32, #tpu.memory_space<vmem>>, vector<1x4xf32>
    %95 = vector.shape_cast %94 : vector<1x4xf32> to vector<1x1x4xf32>
    %96 = vector.broadcast %95 : vector<1x1x4xf32> to vector<16x16x4xf32>
    %97 = arith.addf %93, %96 : vector<16x16x4xf32>
    %cst_94 = arith.constant dense<0.000000e+00> : vector<4xf32>
    %98 = vector.multi_reduction <add>, %97, %cst_94 [0, 1] : vector<16x16x4xf32> to vector<4xf32>
    %99 = vector.shape_cast %98 : vector<4xf32> to vector<1x1x4xf32>
    %cst_95 = arith.constant 2.560000e+02 : f32
    %100 = vector.broadcast %cst_95 : f32 to vector<1x1x4xf32>
    %101 = arith.divf %99, %100 : vector<1x1x4xf32>
    %102 = arith.mulf %97, %97 : vector<16x16x4xf32>
    %cst_96 = arith.constant dense<0.000000e+00> : vector<4xf32>
    %103 = vector.multi_reduction <add>, %102, %cst_96 [0, 1] : vector<16x16x4xf32> to vector<4xf32>
    %104 = vector.shape_cast %103 : vector<4xf32> to vector<1x1x4xf32>
    %cst_97 = arith.constant 2.560000e+02 : f32
    %105 = vector.broadcast %cst_97 : f32 to vector<1x1x4xf32>
    %106 = arith.divf %104, %105 : vector<1x1x4xf32>
    %107 = arith.mulf %101, %101 : vector<1x1x4xf32>
    %108 = arith.subf %106, %107 : vector<1x1x4xf32>
    %cst_98 = arith.constant 0.000000e+00 : f32
    %109 = vector.broadcast %cst_98 : f32 to vector<1x1x4xf32>
    %110 = arith.maximumf %108, %109 : vector<1x1x4xf32>
    %cst_99 = arith.constant 9.99999974E-6 : f32
    %111 = vector.broadcast %cst_99 : f32 to vector<1x1x4xf32>
    %112 = arith.addf %110, %111 : vector<1x1x4xf32>
    %113 = math.rsqrt %112 : vector<1x1x4xf32>
    %114 = vector.broadcast %101 : vector<1x1x4xf32> to vector<16x16x4xf32>
    %115 = arith.subf %97, %114 : vector<16x16x4xf32>
    %116 = vector.broadcast %113 : vector<1x1x4xf32> to vector<16x16x4xf32>
    %117 = arith.mulf %115, %116 : vector<16x16x4xf32>
    %cst_100 = arith.constant 0.000000e+00 : f32
    %118 = vector.broadcast %cst_100 : f32 to vector<16x16x4xf32>
    %119 = arith.maximumf %117, %118 : vector<16x16x4xf32>
    %120 = arith.addf %119, %1 : vector<16x16x4xf32>
    %c0_101 = arith.constant 0 : index
    %c0_102 = arith.constant 0 : index
    %c0_103 = arith.constant 0 : index
    %c0_104 = arith.constant 0 : index
    %121 = vector.load %arg6[%c0_101, %c0_102, %c0_103, %c0_104] : memref<1x16x16x4xf32, #tpu.memory_space<vmem>>, vector<1x16x16x4xf32>
    %122 = vector.shape_cast %121 : vector<1x16x16x4xf32> to vector<16x16x4xf32>
    %123 = vector.shape_cast %120 : vector<16x16x4xf32> to vector<1x16x16x4xf32>
    tpu.vector_store %arg6[%c0_101, %c0_102, %c0_103, %c0_104], %123 {strides = array<i32>} : memref<1x16x16x4xf32, #tpu.memory_space<vmem>>, vector<1x16x16x4xf32>,
    return
  }
  func.func @transform_0(%arg0: i32) -> (i32, i32, i32, i32) {
    %c0_i32 = arith.constant 0 : i32
    %c0_i32_0 = arith.constant 0 : i32
    %c0_i32_1 = arith.constant 0 : i32
    %c0_i32_2 = arith.constant 0 : i32
    return %arg0, %c0_i32, %c0_i32_0, %c0_i32_1 : i32, i32, i32, i32
  }
  func.func @transform_1(%arg0: i32) -> (i32, i32, i32) {
    %c0_i32 = arith.constant 0 : i32
    %c0_i32_0 = arith.constant 0 : i32
    %c0_i32_1 = arith.constant 0 : i32
    %c0_i32_2 = arith.constant 0 : i32
    return %c0_i32, %c0_i32_0, %c0_i32_1 : i32, i32, i32
  }
  func.func @transform_2(%arg0: i32) -> (i32, i32) {
    %c0_i32 = arith.constant 0 : i32
    %c0_i32_0 = arith.constant 0 : i32
    %c0_i32_1 = arith.constant 0 : i32
    return %c0_i32, %c0_i32_0 : i32, i32
  }
  func.func @transform_3(%arg0: i32) -> (i32, i32, i32) {
    %c0_i32 = arith.constant 0 : i32
    %c0_i32_0 = arith.constant 0 : i32
    %c0_i32_1 = arith.constant 0 : i32
    %c0_i32_2 = arith.constant 0 : i32
    return %c0_i32, %c0_i32_0, %c0_i32_1 : i32, i32, i32
  }
  func.func @transform_4(%arg0: i32) -> (i32, i32) {
    %c0_i32 = arith.constant 0 : i32
    %c0_i32_0 = arith.constant 0 : i32
    %c0_i32_1 = arith.constant 0 : i32
    return %c0_i32, %c0_i32_0 : i32, i32
  }
  func.func @transform_5(%arg0: i32) -> (i32, i32, i32, i32) {
    %c0_i32 = arith.constant 0 : i32
    %c0_i32_0 = arith.constant 0 : i32
    %c0_i32_1 = arith.constant 0 : i32
    %c0_i32_2 = arith.constant 0 : i32
    return %arg0, %c0_i32, %c0_i32_0, %c0_i32_1 : i32, i32, i32, i32
  }
}

</mosaic_0001>

<llo_original>
// kernel: resnet_block.1
$region0: #{resnet_block.1}
  #allocation0 [shape = 'u32[]', space=smem, size = 0x4, offset = 0x4, fixed_abs, tag = 'smem constant byte address 0x4 - core index']
  #allocation1 [shape = 'u32[72,128]{1,0:T(1,128)}', space=vmem, size = 0x9000, scoped, tag = 'internal scratch']
  #allocation2 [shape = 'f32[18,18,4]{2,1,0:T(8,128)}', space=vmem, size = 0x36000, scoped, tag = 'scratch operand']
  %s0 = inlined_call_operand.vmem [shape: f32[2,16,16,4], index: 0, kind: input, shape index: {}]
  %s1 = inlined_call_operand.vmem [shape: bf16[3,12,4], index: 1, kind: input, shape index: {}]
  %s2 = inlined_call_operand.vmem [shape: f32[1,4], index: 2, kind: input, shape index: {}]
  %s3 = inlined_call_operand.vmem [shape: bf16[3,12,4], index: 3, kind: input, shape index: {}]
  %s4 = inlined_call_operand.vmem [shape: f32[1,4], index: 4, kind: input, shape index: {}]
  %s5 = inlined_call_operand.vmem [shape: f32[2,16,16,4], index: 5, kind: output, shape index: {}]
  %s6 = sld [smem:[#allocation0]]
  $region53: #{resnet_block.1} parent=0
    _
  %s8 = ssub.s32 1, %s6
  %s9 = scalar_select 0, %s8, %s6
  loop: start=0, step=1, limit=4
  $region2: #{resnet_block.1} parent=0 // loop_pre_header
    _
  $region3: #{resnet_block.1} parent=0 // loop_header
    %s11 = sphi 0, %s15
    %p12 = scmp.ge.s32.totalorder %s11, 4
    %s21 = sphi 0, %s23
    %s24 = sphi 0, %s21
    %s25 = sphi 0, %s24
    %s41 = sphi 0, %s25
    %s45 = sphi 0, %s45
    %s47 = sphi 0, %s45
    %s48 = sphi 0, %s47
    %s62 = sphi 0, %s48
    %s66 = sphi 0, %s66
    %s68 = sphi 0, %s66
    %s69 = sphi 0, %s68
    %s83 = sphi 0, %s69
    %s87 = sphi 0, %s87
    %s89 = sphi 0, %s87
    %s90 = sphi 0, %s89
    %s104 = sphi 0, %s90
    %s108 = sphi 0, %s108
    %s110 = sphi 0, %s108
    %s111 = sphi 0, %s110
    %s125 = sphi 0, %s111
    %s131 = sphi 0, %s133
    %s134 = sphi 0, %s131
    %s135 = sphi 0, %s134
    %s151 = sphi 0, %s135
  $region4: #{resnet_block.1} parent=0 // loop_header_branch
    %14 = sbr.rel (%p12) target = $region8
  $region5: #{resnet_block.1} parent=0 // loop_body
    %s16 = ssub.s32 %s11, 1
    %s17 = ssub.s32 %s11, 2
    %s18 = sadd.s32 %s11, 1
    %s19 = ssub.s32 %s11, %s18
    %p20 = scmp.eq.s32.totalorder %s19, 0
    %s22 = sadd.s32 %s21, 1
    %s23 = scalar_select %p20, %s21, %s22
    %p26 = pneg %p20
    %p27 = scmp.eq.s32.totalorder %s11, 1
    %p28 = por %p26, %p27
    %p29 = scmp.ne.s32.totalorder %s21, %s24
    %p30 = scmp.eq.s32.totalorder %s11, 0
    %p31 = por %p29, %p30
    %p32 = scmp.ne.s32.totalorder %s21, %s24
    %p33 = scmp.eq.s32.totalorder %s16, 1
    %p34 = por %p32, %p33
    %p35 = scmp.ne.s32.totalorder %s24, %s25
    %p36 = scmp.eq.s32.totalorder %s16, 0
    %p37 = por %p35, %p36
    %p38 = scmp.ne.s32.totalorder %s24, %s25
    %p39 = scmp.eq.s32.totalorder %s17, 1
    %p40 = por %p38, %p39
    %p42 = scmp.ne.s32.totalorder %s25, %s41
    %p43 = scmp.eq.s32.totalorder %s17, 0
    %p44 = por %p42, %p43
    %s46 = sadd.s32 %s45, 1
    %p49 = scmp.eq.s32.totalorder %s11, 1
    %p50 = scmp.ne.s32.totalorder %s45, %s47
    %p51 = scmp.eq.s32.totalorder %s11, 0
    %p52 = por %p50, %p51
    %p53 = scmp.ne.s32.totalorder %s45, %s47
    %p54 = scmp.eq.s32.totalorder %s16, 1
    %p55 = por %p53, %p54
    %p56 = scmp.ne.s32.totalorder %s47, %s48
    %p57 = scmp.eq.s32.totalorder %s16, 0
    %p58 = por %p56, %p57
    %p59 = scmp.ne.s32.totalorder %s47, %s48
    %p60 = scmp.eq.s32.totalorder %s17, 1
    %p61 = por %p59, %p60
    %p63 = scmp.ne.s32.totalorder %s48, %s62
    %p64 = scmp.eq.s32.totalorder %s17, 0
    %p65 = por %p63, %p64
    %s67 = sadd.s32 %s66, 1
    %p70 = scmp.eq.s32.totalorder %s11, 1
    %p71 = scmp.ne.s32.totalorder %s66, %s68
    %p72 = scmp.eq.s32.totalorder %s11, 0
    %p73 = por %p71, %p72
    %p74 = scmp.ne.s32.totalorder %s66, %s68
    %p75 = scmp.eq.s32.totalorder %s16, 1
    %p76 = por %p74, %p75
    %p77 = scmp.ne.s32.totalorder %s68, %s69
    %p78 = scmp.eq.s32.totalorder %s16, 0
    %p79 = por %p77, %p78
    %p80 = scmp.ne.s32.totalorder %s68, %s69
    %p81 = scmp.eq.s32.totalorder %s17, 1
    %p82 = por %p80, %p81
    %p84 = scmp.ne.s32.totalorder %s69, %s83
    %p85 = scmp.eq.s32.totalorder %s17, 0
    %p86 = por %p84, %p85
    %s88 = sadd.s32 %s87, 1
    %p91 = scmp.eq.s32.totalorder %s11, 1
    %p92 = scmp.ne.s32.totalorder %s87, %s89
    %p93 = scmp.eq.s32.totalorder %s11, 0
    %p94 = por %p92, %p93
    %p95 = scmp.ne.s32.totalorder %s87, %s89
    %p96 = scmp.eq.s32.totalorder %s16, 1
    %p97 = por %p95, %p96
    %p98 = scmp.ne.s32.totalorder %s89, %s90
    %p99 = scmp.eq.s32.totalorder %s16, 0
    %p100 = por %p98, %p99
    %p101 = scmp.ne.s32.totalorder %s89, %s90
    %p102 = scmp.eq.s32.totalorder %s17, 1
    %p103 = por %p101, %p102
    %p105 = scmp.ne.s32.totalorder %s90, %s104
    %p106 = scmp.eq.s32.totalorder %s17, 0
    %p107 = por %p105, %p106
    %s109 = sadd.s32 %s108, 1
    %p112 = scmp.eq.s32.totalorder %s11, 1
    %p113 = scmp.ne.s32.totalorder %s108, %s110
    %p114 = scmp.eq.s32.totalorder %s11, 0
    %p115 = por %p113, %p114
    %p116 = scmp.ne.s32.totalorder %s108, %s110
    %p117 = scmp.eq.s32.totalorder %s16, 1
    %p118 = por %p116, %p117
    %p119 = scmp.ne.s32.totalorder %s110, %s111
    %p120 = scmp.eq.s32.totalorder %s16, 0
    %p121 = por %p119, %p120
    %p122 = scmp.ne.s32.totalorder %s110, %s111
    %p123 = scmp.eq.s32.totalorder %s17, 1
    %p124 = por %p122, %p123
    %p126 = scmp.ne.s32.totalorder %s111, %s125
    %p127 = scmp.eq.s32.totalorder %s17, 0
    %p128 = por %p126, %p127
    %s129 = ssub.s32 %s11, %s18
    %p130 = scmp.eq.s32.totalorder %s129, 0
    %s132 = sadd.s32 %s131, 1
    %s133 = scalar_select %p130, %s131, %s132
    %p136 = pneg %p130
    %p137 = scmp.eq.s32.totalorder %s11, 1
    %p138 = por %p136, %p137
    %p139 = scmp.ne.s32.totalorder %s131, %s134
    %p140 = scmp.eq.s32.totalorder %s11, 0
    %p141 = por %p139, %p140
    %p142 = scmp.ne.s32.totalorder %s131, %s134
    %p143 = scmp.eq.s32.totalorder %s16, 1
    %p144 = por %p142, %p143
    %p145 = scmp.ne.s32.totalorder %s134, %s135
    %p146 = scmp.eq.s32.totalorder %s16, 0
    %p147 = por %p145, %p146
    %p148 = scmp.ne.s32.totalorder %s134, %s135
    %p149 = scmp.eq.s32.totalorder %s17, 1
    %p150 = por %p148, %p149
    %p152 = scmp.ne.s32.totalorder %s135, %s151
    %p153 = scmp.eq.s32.totalorder %s17, 0
    %p154 = por %p152, %p153
    %p155 = scmp.le.s32.totalorder 1, %s11
    %p156 = scmp.lt.s32.totalorder %s11, 3
    %p157 = pnand %p155, %p156
    %p158 = pneg %p157
    // Predicated region
    $region9: #{resnet_block.1} parent=5 // pred_check
      _
    $region10: #{resnet_block.1} parent=5 // pred_check_branch
      %160 = sbr.rel (%p157) target = $region12
    $region11: #{resnet_block.1} parent=5 // pred_region
      %s161 = ssub.s32 %s11, 1
      // Predicated region
      $region13: #{resnet_block.1} parent=11 // pred_check
        %p162 = pneg %p58
      $region14: #{resnet_block.1} parent=11 // pred_check_branch
        %164 = sbr.rel (%p162) target = $region16
      $region15: #{resnet_block.1} parent=11 // pred_region
        _
      $region16: #{resnet_block.1} parent=11 // pred_fallthru
        _
      // Predicated region
      $region17: #{resnet_block.1} parent=11 // pred_check
        %p165 = pneg %p79
      $region18: #{resnet_block.1} parent=11 // pred_check_branch
        %167 = sbr.rel (%p165) target = $region20
      $region19: #{resnet_block.1} parent=11 // pred_region
        _
      $region20: #{resnet_block.1} parent=11 // pred_fallthru
        _
      // Predicated region
      $region21: #{resnet_block.1} parent=11 // pred_check
        %p168 = pneg %p100
      $region22: #{resnet_block.1} parent=11 // pred_check_branch
        %170 = sbr.rel (%p168) target = $region24
      $region23: #{resnet_block.1} parent=11 // pred_region
        _
      $region24: #{resnet_block.1} parent=11 // pred_fallthru
        _
      // Predicated region
      $region25: #{resnet_block.1} parent=11 // pred_check
        %p171 = pneg %p121
      $region26: #{resnet_block.1} parent=11 // pred_check_branch
        %173 = sbr.rel (%p171) target = $region28
      $region27: #{resnet_block.1} parent=11 // pred_region
        _
      $region28: #{resnet_block.1} parent=11 // pred_fallthru
        _
    $region12: #{resnet_block.1} parent=5 // pred_fallthru
      _
    %p174 = scmp.lt.s32.totalorder %s11, 2
    // Predicated region
    $region29: #{resnet_block.1} parent=5 // pred_check
      %p175 = pneg %p174
    $region30: #{resnet_block.1} parent=5 // pred_check_branch
      %177 = sbr.rel (%p175) target = $region32
    $region31: #{resnet_block.1} parent=5 // pred_region
      // Predicated region
      $region33: #{resnet_block.1} parent=31 // pred_check
        %p178 = pneg %p31
      $region34: #{resnet_block.1} parent=31 // pred_check_branch
        %180 = sbr.rel (%p178) target = $region36
      $region35: #{resnet_block.1} parent=31 // pred_region
        %p181 = scmp.lt.s32.totalorder %s11, 1
        %s182 = scalar_select %p181, %s11, 1
        %s183 = smul.addr %s182, 32
        %s184 = smul.addr %s183, 8
        %s185 = scalar_lea.vmem %s0, %s184
      $region36: #{resnet_block.1} parent=31 // pred_fallthru
        _
    $region32: #{resnet_block.1} parent=5 // pred_fallthru
      _
    %p186 = scmp.le.s32.totalorder 1, %s11
    %p187 = scmp.lt.s32.totalorder %s11, 3
    %p188 = pnand %p186, %p187
    %p189 = pneg %p188
    // Predicated region
    $region37: #{resnet_block.1} parent=5 // pred_check
      _
    $region38: #{resnet_block.1} parent=5 // pred_check_branch
      %191 = sbr.rel (%p188) target = $region40
    $region39: #{resnet_block.1} parent=5 // pred_region
      %s192 = ssub.s32 %s11, 1
      %p193 = scmp.lt.s32.totalorder %s16, 1
      %s194 = scalar_select %p193, %s16, 1
      %s195 = smul.addr %s194, 32
      %s196 = smul.addr %s195, 8
      %s197 = scalar_lea.vmem %s0, %s196
      %p198 = pneg %p37
      %p199 = pneg %p34
      %p200 = pneg %p58
      %p201 = pneg %p55
      %p202 = pneg %p79
      %p203 = pneg %p76
      %p204 = pneg %p100
      %p205 = pneg %p97
      %p206 = pneg %p121
      %p207 = pneg %p118
      %p208 = pneg %p147
      %p209 = pneg %p144
      %p210 = scmp.lt.s32.totalorder %s16, 1
      %s211 = scalar_select %p210, %s16, 1
      %s212 = smul.addr %s211, 32
      %s213 = smul.addr %s212, 8
      %s214 = scalar_lea.vmem %s5, %s213
      %p215 = scmp.lt.s32.totalorder %s16, 1
      %s216 = scalar_select %p215, %s16, 1
      %s217 = smul.addr %s216, 32
      %s218 = smul.addr %s217, 8
      %s219 = scalar_lea.vmem %s0, %s218
      %p220 = scmp.lt.s32.totalorder %s16, 1
      %s221 = scalar_select %p220, %s16, 1
      %s222 = smul.addr %s221, 32
      %s223 = smul.addr %s222, 8
      %s224 = scalar_lea.vmem %s5, %s223
      %v226 = vld [vmem:[%s219] sm:$0xff]
      %v227 = vld [vmem:[%s219 + $0x8] sm:$0xff]
      %v228 = vld [vmem:[%s219 + $0x10] sm:$0xff]
      %v229 = vld [vmem:[%s219 + $0x18] sm:$0xff]
      %v230 = vld [vmem:[%s219 + $0x20] sm:$0xff]
      %v231 = vld [vmem:[%s219 + $0x28] sm:$0xff]
      %v232 = vld [vmem:[%s219 + $0x30] sm:$0xff]
      %v233 = vld [vmem:[%s219 + $0x38] sm:$0xff]
      %v234 = vld [vmem:[%s219 + $0x40] sm:$0xff]
      %v235 = vld [vmem:[%s219 + $0x48] sm:$0xff]
      %v236 = vld [vmem:[%s219 + $0x50] sm:$0xff]
      %v237 = vld [vmem:[%s219 + $0x58] sm:$0xff]
      %v238 = vld [vmem:[%s219 + $0x60] sm:$0xff]
      %v239 = vld [vmem:[%s219 + $0x68] sm:$0xff]
      %v240 = vld [vmem:[%s219 + $0x70] sm:$0xff]
      %v241 = vld [vmem:[%s219 + $0x78] sm:$0xff]
      %v242 = vld [vmem:[%s219 + $0x80] sm:$0xff]
      %v243 = vld [vmem:[%s219 + $0x88] sm:$0xff]
      %v244 = vld [vmem:[%s219 + $0x90] sm:$0xff]
      %v245 = vld [vmem:[%s219 + $0x98] sm:$0xff]
      %v246 = vld [vmem:[%s219 + $0xa0] sm:$0xff]
      %v247 = vld [vmem:[%s219 + $0xa8] sm:$0xff]
      %v248 = vld [vmem:[%s219 + $0xb0] sm:$0xff]
      %v249 = vld [vmem:[%s219 + $0xb8] sm:$0xff]
      %v250 = vld [vmem:[%s219 + $0xc0] sm:$0xff]
      %v251 = vld [vmem:[%s219 + $0xc8] sm:$0xff]
      %v252 = vld [vmem:[%s219 + $0xd0] sm:$0xff]
      %v253 = vld [vmem:[%s219 + $0xd8] sm:$0xff]
      %v254 = vld [vmem:[%s219 + $0xe0] sm:$0xff]
      %v255 = vld [vmem:[%s219 + $0xe8] sm:$0xff]
      %v256 = vld [vmem:[%s219 + $0xf0] sm:$0xff]
      %v257 = vld [vmem:[%s219 + $0xf8] sm:$0xff]
      %s258 = scalar_lea.vmem [#allocation2], 24
      %vm259 = vcmask 31744
      %260 = vst.msk [vmem:[%s258 + $0x1] sm:$0xff] %vm259, %v226
      %261 = vst.msk [vmem:[%s258 + $0x9] sm:$0xff] %vm259, %v227
      %262 = vst.msk [vmem:[%s258 + $0x19] sm:$0xff] %vm259, %v228
      %263 = vst.msk [vmem:[%s258 + $0x21] sm:$0xff] %vm259, %v229
      %264 = vst.msk [vmem:[%s258 + $0x31] sm:$0xff] %vm259, %v230
      %265 = vst.msk [vmem:[%s258 + $0x39] sm:$0xff] %vm259, %v231
      %266 = vst.msk [vmem:[%s258 + $0x49] sm:$0xff] %vm259, %v232
      %267 = vst.msk [vmem:[%s258 + $0x51] sm:$0xff] %vm259, %v233
      %268 = vst.msk [vmem:[%s258 + $0x61] sm:$0xff] %vm259, %v234
      %269 = vst.msk [vmem:[%s258 + $0x69] sm:$0xff] %vm259, %v235
      %270 = vst.msk [vmem:[%s258 + $0x79] sm:$0xff] %vm259, %v236
      %271 = vst.msk [vmem:[%s258 + $0x81] sm:$0xff] %vm259, %v237
      %272 = vst.msk [vmem:[%s258 + $0x91] sm:$0xff] %vm259, %v238
      %273 = vst.msk [vmem:[%s258 + $0x99] sm:$0xff] %vm259, %v239
      %274 = vst.msk [vmem:[%s258 + $0xa9] sm:$0xff] %vm259, %v240
      %275 = vst.msk [vmem:[%s258 + $0xb1] sm:$0xff] %vm259, %v241
      %276 = vst.msk [vmem:[%s258 + $0xc1] sm:$0xff] %vm259, %v242
      %277 = vst.msk [vmem:[%s258 + $0xc9] sm:$0xff] %vm259, %v243
      %278 = vst.msk [vmem:[%s258 + $0xd9] sm:$0xff] %vm259, %v244
      %279 = vst.msk [vmem:[%s258 + $0xe1] sm:$0xff] %vm259, %v245
      %280 = vst.msk [vmem:[%s258 + $0xf1] sm:$0xff] %vm259, %v246
      %281 = vst.msk [vmem:[%s258 + $0xf9] sm:$0xff] %vm259, %v247
      %282 = vst.msk [vmem:[%s258 + $0x109] sm:$0xff] %vm259, %v248
      %283 = vst.msk [vmem:[%s258 + $0x111] sm:$0xff] %vm259, %v249
      %284 = vst.msk [vmem:[%s258 + $0x121] sm:$0xff] %vm259, %v250
      %285 = vst.msk [vmem:[%s258 + $0x129] sm:$0xff] %vm259, %v251
      %286 = vst.msk [vmem:[%s258 + $0x139] sm:$0xff] %vm259, %v252
      %287 = vst.msk [vmem:[%s258 + $0x141] sm:$0xff] %vm259, %v253
      %288 = vst.msk [vmem:[%s258 + $0x151] sm:$0xff] %vm259, %v254
      %289 = vst.msk [vmem:[%s258 + $0x159] sm:$0xff] %vm259, %v255
      %290 = vst.msk [vmem:[%s258 + $0x169] sm:$0xff] %vm259, %v256
      %291 = vst.msk [vmem:[%s258 + $0x171] sm:$0xff] %vm259, %v257
      %292 = vst.msk [vmem:[#allocation2 + $0x1] sm:$0xff] %vm259, %v228
      %293 = vst.msk [vmem:[#allocation2 + $0x9] sm:$0xff] %vm259, %v229
      %s294 = scalar_lea.vmem [#allocation2], 408
      %295 = vst.msk [vmem:[%s294 + $0x1] sm:$0xff] %vm259, %v254
      %296 = vst.msk [vmem:[%s294 + $0x9] sm:$0xff] %vm259, %v255
      %v297 = vld [vmem:[#allocation2 + $0x2] sm:$0x1]
      %v298 = vld [vmem:[#allocation2 + $0x1a] sm:$0x1]
      %v299 = vld [vmem:[#allocation2 + $0x32] sm:$0x1]
      %v300 = vld [vmem:[#allocation2 + $0x4a] sm:$0x1]
      %v301 = vld [vmem:[#allocation2 + $0x62] sm:$0x1]
      %v302 = vld [vmem:[#allocation2 + $0x7a] sm:$0x1]
      %v303 = vld [vmem:[#allocation2 + $0x92] sm:$0x1]
      %v304 = vld [vmem:[#allocation2 + $0xaa] sm:$0x1]
      %v305 = vld [vmem:[#allocation2 + $0xc2] sm:$0x1]
      %v306 = vld [vmem:[#allocation2 + $0xda] sm:$0x1]
      %v307 = vld [vmem:[#allocation2 + $0xf2] sm:$0x1]
      %v308 = vld [vmem:[#allocation2 + $0x10a] sm:$0x1]
      %v309 = vld [vmem:[#allocation2 + $0x122] sm:$0x1]
      %v310 = vld [vmem:[#allocation2 + $0x13a] sm:$0x1]
      %v311 = vld [vmem:[#allocation2 + $0x152] sm:$0x1]
      %v312 = vld [vmem:[#allocation2 + $0x16a] sm:$0x1]
      %v313 = vld [vmem:[#allocation2 + $0x182] sm:$0x1]
      %v314 = vld [vmem:[#allocation2 + $0x19a] sm:$0x1]
      %vm315 = vcmask 24576
      %316 = vst.msk [vmem:[#allocation2] sm:$0x1] %vm315, %v297
      %317 = vst.msk [vmem:[#allocation2 + $0x18] sm:$0x1] %vm315, %v298
      %318 = vst.msk [vmem:[#allocation2 + $0x30] sm:$0x1] %vm315, %v299
      %319 = vst.msk [vmem:[#allocation2 + $0x48] sm:$0x1] %vm315, %v300
      %320 = vst.msk [vmem:[#allocation2 + $0x60] sm:$0x1] %vm315, %v301
      %321 = vst.msk [vmem:[#allocation2 + $0x78] sm:$0x1] %vm315, %v302
      %322 = vst.msk [vmem:[#allocation2 + $0x90] sm:$0x1] %vm315, %v303
      %323 = vst.msk [vmem:[#allocation2 + $0xa8] sm:$0x1] %vm315, %v304
      %324 = vst.msk [vmem:[#allocation2 + $0xc0] sm:$0x1] %vm315, %v305
      %325 = vst.msk [vmem:[#allocation2 + $0xd8] sm:$0x1] %vm315, %v306
      %326 = vst.msk [vmem:[#allocation2 + $0xf0] sm:$0x1] %vm315, %v307
      %327 = vst.msk [vmem:[#allocation2 + $0x108] sm:$0x1] %vm315, %v308
      %328 = vst.msk [vmem:[#allocation2 + $0x120] sm:$0x1] %vm315, %v309
      %329 = vst.msk [vmem:[#allocation2 + $0x138] sm:$0x1] %vm315, %v310
      %330 = vst.msk [vmem:[#allocation2 + $0x150] sm:$0x1] %vm315, %v311
      %331 = vst.msk [vmem:[#allocation2 + $0x168] sm:$0x1] %vm315, %v312
      %332 = vst.msk [vmem:[#allocation2 + $0x180] sm:$0x1] %vm315, %v313
      %333 = vst.msk [vmem:[#allocation2 + $0x198] sm:$0x1] %vm315, %v314
      %v334 = vld [vmem:[#allocation2 + $0xf] sm:$0x1]
      %v335 = vld [vmem:[#allocation2 + $0x27] sm:$0x1]
      %v336 = vld [vmem:[#allocation2 + $0x3f] sm:$0x1]
      %v337 = vld [vmem:[#allocation2 + $0x57] sm:$0x1]
      %v338 = vld [vmem:[#allocation2 + $0x6f] sm:$0x1]
      %v339 = vld [vmem:[#allocation2 + $0x87] sm:$0x1]
      %v340 = vld [vmem:[#allocation2 + $0x9f] sm:$0x1]
      %v341 = vld [vmem:[#allocation2 + $0xb7] sm:$0x1]
      %v342 = vld [vmem:[#allocation2 + $0xcf] sm:$0x1]
      %v343 = vld [vmem:[#allocation2 + $0xe7] sm:$0x1]
      %v344 = vld [vmem:[#allocation2 + $0xff] sm:$0x1]
      %v345 = vld [vmem:[#allocation2 + $0x117] sm:$0x1]
      %v346 = vld [vmem:[#allocation2 + $0x12f] sm:$0x1]
      %v347 = vld [vmem:[#allocation2 + $0x147] sm:$0x1]
      %v348 = vld [vmem:[#allocation2 + $0x15f] sm:$0x1]
      %v349 = vld [vmem:[#allocation2 + $0x177] sm:$0x1]
      %v350 = vld [vmem:[#allocation2 + $0x18f] sm:$0x1]
      %v351 = vld [vmem:[#allocation2 + $0x1a7] sm:$0x1]
      %352 = vst.msk [vmem:[#allocation2 + $0x11] sm:$0x1] %vm315, %v334
      %353 = vst.msk [vmem:[#allocation2 + $0x29] sm:$0x1] %vm315, %v335
      %354 = vst.msk [vmem:[#allocation2 + $0x41] sm:$0x1] %vm315, %v336
      %355 = vst.msk [vmem:[#allocation2 + $0x59] sm:$0x1] %vm315, %v337
      %356 = vst.msk [vmem:[#allocation2 + $0x71] sm:$0x1] %vm315, %v338
      %357 = vst.msk [vmem:[#allocation2 + $0x89] sm:$0x1] %vm315, %v339
      %358 = vst.msk [vmem:[#allocation2 + $0xa1] sm:$0x1] %vm315, %v340
      %359 = vst.msk [vmem:[#allocation2 + $0xb9] sm:$0x1] %vm315, %v341
      %360 = vst.msk [vmem:[#allocation2 + $0xd1] sm:$0x1] %vm315, %v342
      %361 = vst.msk [vmem:[#allocation2 + $0xe9] sm:$0x1] %vm315, %v343
      %362 = vst.msk [vmem:[#allocation2 + $0x101] sm:$0x1] %vm315, %v344
      %363 = vst.msk [vmem:[#allocation2 + $0x119] sm:$0x1] %vm315, %v345
      %364 = vst.msk [vmem:[#allocation2 + $0x131] sm:$0x1] %vm315, %v346
      %365 = vst.msk [vmem:[#allocation2 + $0x149] sm:$0x1] %vm315, %v347
      %366 = vst.msk [vmem:[#allocation2 + $0x161] sm:$0x1] %vm315, %v348
      %367 = vst.msk [vmem:[#allocation2 + $0x179] sm:$0x1] %vm315, %v349
      %368 = vst.msk [vmem:[#allocation2 + $0x191] sm:$0x1] %vm315, %v350
      %369 = vst.msk [vmem:[#allocation2 + $0x1a9] sm:$0x1] %vm315, %v351
      %v370 = vld [vmem:[#allocation2] sm:$0xff]
      %v371 = vld [vmem:[#allocation2 + $0x8] sm:$0xff]
      %v372 = vld [vmem:[#allocation2 + $0x10] sm:$0x3]
      %v373 = vld [vmem:[#allocation2 + $0x18] sm:$0xff]
      %v374 = vld [vmem:[#allocation2 + $0x20] sm:$0xff]
      %v375 = vld [vmem:[#allocation2 + $0x28] sm:$0x3]
      %v376 = vld [vmem:[#allocation2 + $0x30] sm:$0xff]
      %v377 = vld [vmem:[#allocation2 + $0x38] sm:$0xff]
      %v378 = vld [vmem:[#allocation2 + $0x40] sm:$0x3]
      %v379 = vld [vmem:[#allocation2 + $0x48] sm:$0xff]
      %v380 = vld [vmem:[#allocation2 + $0x50] sm:$0xff]
      %v381 = vld [vmem:[#allocation2 + $0x58] sm:$0x3]
      %v382 = vld [vmem:[#allocation2 + $0x60] sm:$0xff]
      %v383 = vld [vmem:[#allocation2 + $0x68] sm:$0xff]
      %v384 = vld [vmem:[#allocation2 + $0x70] sm:$0x3]
      %v385 = vld [vmem:[#allocation2 + $0x78] sm:$0xff]
      %v386 = vld [vmem:[#allocation2 + $0x80] sm:$0xff]
      %v387 = vld [vmem:[#allocation2 + $0x88] sm:$0x3]
      %v388 = vld [vmem:[#allocation2 + $0x90] sm:$0xff]
      %v389 = vld [vmem:[#allocation2 + $0x98] sm:$0xff]
      %v390 = vld [vmem:[#allocation2 + $0xa0] sm:$0x3]
      %v391 = vld [vmem:[#allocation2 + $0xa8] sm:$0xff]
      %v392 = vld [vmem:[#allocation2 + $0xb0] sm:$0xff]
      %v393 = vld [vmem:[#allocation2 + $0xb8] sm:$0x3]
      %v394 = vld [vmem:[#allocation2 + $0xc0] sm:$0xff]
      %v395 = vld [vmem:[#allocation2 + $0xc8] sm:$0xff]
      %v396 = vld [vmem:[#allocation2 + $0xd0] sm:$0x3]
      %v397 = vld [vmem:[#allocation2 + $0xd8] sm:$0xff]
      %v398 = vld [vmem:[#allocation2 + $0xe0] sm:$0xff]
      %v399 = vld [vmem:[#allocation2 + $0xe8] sm:$0x3]
      %v400 = vld [vmem:[#allocation2 + $0xf0] sm:$0xff]
      %v401 = vld [vmem:[#allocation2 + $0xf8] sm:$0xff]
      %v402 = vld [vmem:[#allocation2 + $0x100] sm:$0x3]
      %v403 = vld [vmem:[#allocation2 + $0x108] sm:$0xff]
      %v404 = vld [vmem:[#allocation2 + $0x110] sm:$0xff]
      %v405 = vld [vmem:[#allocation2 + $0x118] sm:$0x3]
      %v406 = vld [vmem:[#allocation2 + $0x120] sm:$0xff]
      %v407 = vld [vmem:[#allocation2 + $0x128] sm:$0xff]
      %v408 = vld [vmem:[#allocation2 + $0x130] sm:$0x3]
      %v409 = vld [vmem:[#allocation2 + $0x138] sm:$0xff]
      %v410 = vld [vmem:[#allocation2 + $0x140] sm:$0xff]
      %v411 = vld [vmem:[#allocation2 + $0x148] sm:$0x3]
      %v412 = vld [vmem:[#allocation2 + $0x150] sm:$0xff]
      %v413 = vld [vmem:[#allocation2 + $0x158] sm:$0xff]
      %v414 = vld [vmem:[#allocation2 + $0x160] sm:$0x3]
      %v415 = vld [vmem:[#allocation2 + $0x168] sm:$0xff]
      %v416 = vld [vmem:[#allocation2 + $0x170] sm:$0xff]
      %v417 = vld [vmem:[#allocation2 + $0x178] sm:$0x3]
      %v418 = vld [vmem:[%s258] sm:$0xff]
      %v419 = vld [vmem:[%s258 + $0x8] sm:$0xff]
      %v420 = vld [vmem:[%s258 + $0x10] sm:$0x3]
      %v421 = vld [vmem:[%s258 + $0x18] sm:$0xff]
      %v422 = vld [vmem:[%s258 + $0x20] sm:$0xff]
      %v423 = vld [vmem:[%s258 + $0x28] sm:$0x3]
      %v424 = vld [vmem:[%s258 + $0x30] sm:$0xff]
      %v425 = vld [vmem:[%s258 + $0x38] sm:$0xff]
      %v426 = vld [vmem:[%s258 + $0x40] sm:$0x3]
      %v427 = vld [vmem:[%s258 + $0x48] sm:$0xff]
      %v428 = vld [vmem:[%s258 + $0x50] sm:$0xff]
      %v429 = vld [vmem:[%s258 + $0x58] sm:$0x3]
      %v430 = vld [vmem:[%s258 + $0x60] sm:$0xff]
      %v431 = vld [vmem:[%s258 + $0x68] sm:$0xff]
      %v432 = vld [vmem:[%s258 + $0x70] sm:$0x3]
      %v433 = vld [vmem:[%s258 + $0x78] sm:$0xff]
      %v434 = vld [vmem:[%s258 + $0x80] sm:$0xff]
      %v435 = vld [vmem:[%s258 + $0x88] sm:$0x3]
      %v436 = vld [vmem:[%s258 + $0x90] sm:$0xff]
      %v437 = vld [vmem:[%s258 + $0x98] sm:$0xff]
      %v438 = vld [vmem:[%s258 + $0xa0] sm:$0x3]
      %v439 = vld [vmem:[%s258 + $0xa8] sm:$0xff]
      %v440 = vld [vmem:[%s258 + $0xb0] sm:$0xff]
      %v441 = vld [vmem:[%s258 + $0xb8] sm:$0x3]
      %v442 = vld [vmem:[%s258 + $0xc0] sm:$0xff]
      %v443 = vld [vmem:[%s258 + $0xc8] sm:$0xff]
      %v444 = vld [vmem:[%s258 + $0xd0] sm:$0x3]
      %v445 = vld [vmem:[%s258 + $0xd8] sm:$0xff]
      %v446 = vld [vmem:[%s258 + $0xe0] sm:$0xff]
      %v447 = vld [vmem:[%s258 + $0xe8] sm:$0x3]
      %v448 = vld [vmem:[%s258 + $0xf0] sm:$0xff]
      %v449 = vld [vmem:[%s258 + $0xf8] sm:$0xff]
      %v450 = vld [vmem:[%s258 + $0x100] sm:$0x3]
      %v451 = vld [vmem:[%s258 + $0x108] sm:$0xff]
      %v452 = vld [vmem:[%s258 + $0x110] sm:$0xff]
      %v453 = vld [vmem:[%s258 + $0x118] sm:$0x3]
      %v454 = vld [vmem:[%s258 + $0x120] sm:$0xff]
      %v455 = vld [vmem:[%s258 + $0x128] sm:$0xff]
      %v456 = vld [vmem:[%s258 + $0x130] sm:$0x3]
      %v457 = vld [vmem:[%s258 + $0x138] sm:$0xff]
      %v458 = vld [vmem:[%s258 + $0x140] sm:$0xff]
      %v459 = vld [vmem:[%s258 + $0x148] sm:$0x3]
      %v460 = vld [vmem:[%s258 + $0x150] sm:$0xff]
      %v461 = vld [vmem:[%s258 + $0x158] sm:$0xff]
      %v462 = vld [vmem:[%s258 + $0x160] sm:$0x3]
      %v463 = vld [vmem:[%s258 + $0x168] sm:$0xff]
      %v464 = vld [vmem:[%s258 + $0x170] sm:$0xff]
      %v465 = vld [vmem:[%s258 + $0x178] sm:$0x3]
      %s466 = scalar_lea.vmem [#allocation2], 48
      %v467 = vld [vmem:[%s466] sm:$0xff]
      %v468 = vld [vmem:[%s466 + $0x8] sm:$0xff]
      %v469 = vld [vmem:[%s466 + $0x10] sm:$0x3]
      %v470 = vld [vmem:[%s466 + $0x18] sm:$0xff]
      %v471 = vld [vmem:[%s466 + $0x20] sm:$0xff]
      %v472 = vld [vmem:[%s466 + $0x28] sm:$0x3]
      %v473 = vld [vmem:[%s466 + $0x30] sm:$0xff]
      %v474 = vld [vmem:[%s466 + $0x38] sm:$0xff]
      %v475 = vld [vmem:[%s466 + $0x40] sm:$0x3]
      %v476 = vld [vmem:[%s466 + $0x48] sm:$0xff]
      %v477 = vld [vmem:[%s466 + $0x50] sm:$0xff]
      %v478 = vld [vmem:[%s466 + $0x58] sm:$0x3]
      %v479 = vld [vmem:[%s466 + $0x60] sm:$0xff]
      %v480 = vld [vmem:[%s466 + $0x68] sm:$0xff]
      %v481 = vld [vmem:[%s466 + $0x70] sm:$0x3]
      %v482 = vld [vmem:[%s466 + $0x78] sm:$0xff]
      %v483 = vld [vmem:[%s466 + $0x80] sm:$0xff]
      %v484 = vld [vmem:[%s466 + $0x88] sm:$0x3]
      %v485 = vld [vmem:[%s466 + $0x90] sm:$0xff]
      %v486 = vld [vmem:[%s466 + $0x98] sm:$0xff]
      %v487 = vld [vmem:[%s466 + $0xa0] sm:$0x3]
      %v488 = vld [vmem:[%s466 + $0xa8] sm:$0xff]
      %v489 = vld [vmem:[%s466 + $0xb0] sm:$0xff]
      %v490 = vld [vmem:[%s466 + $0xb8] sm:$0x3]
      %v491 = vld [vmem:[%s466 + $0xc0] sm:$0xff]
      %v492 = vld [vmem:[%s466 + $0xc8] sm:$0xff]
      %v493 = vld [vmem:[%s466 + $0xd0] sm:$0x3]
      %v494 = vld [vmem:[%s466 + $0xd8] sm:$0xff]
      %v495 = vld [vmem:[%s466 + $0xe0] sm:$0xff]
      %v496 = vld [vmem:[%s466 + $0xe8] sm:$0x3]
      %v497 = vld [vmem:[%s466 + $0xf0] sm:$0xff]
      %v498 = vld [vmem:[%s466 + $0xf8] sm:$0xff]
      %v499 = vld [vmem:[%s466 + $0x100] sm:$0x3]
      %v500 = vld [vmem:[%s466 + $0x108] sm:$0xff]
      %v501 = vld [vmem:[%s466 + $0x110] sm:$0xff]
      %v502 = vld [vmem:[%s466 + $0x118] sm:$0x3]
      %v503 = vld [vmem:[%s466 + $0x120] sm:$0xff]
      %v504 = vld [vmem:[%s466 + $0x128] sm:$0xff]
      %v505 = vld [vmem:[%s466 + $0x130] sm:$0x3]
      %v506 = vld [vmem:[%s466 + $0x138] sm:$0xff]
      %v507 = vld [vmem:[%s466 + $0x140] sm:$0xff]
      %v508 = vld [vmem:[%s466 + $0x148] sm:$0x3]
      %v509 = vld [vmem:[%s466 + $0x150] sm:$0xff]
      %v510 = vld [vmem:[%s466 + $0x158] sm:$0xff]
      %v511 = vld [vmem:[%s466 + $0x160] sm:$0x3]
      %v512 = vld [vmem:[%s466 + $0x168] sm:$0xff]
      %v513 = vld [vmem:[%s466 + $0x170] sm:$0xff]
      %v514 = vld [vmem:[%s466 + $0x178] sm:$0x3]
      %563 = vrot.lane.b32.xlu0 %v418, 4
      %v564 = vpop.permute.xlu0 %563
      %565 = vrot.lane.b32.xlu0 %v419, 4
      %v566 = vpop.permute.xlu0 %565
      %567 = vrot.lane.b32.xlu0 %v420, 4
      %v568 = vpop.permute.xlu0 %567
      %569 = vrot.lane.b32.xlu0 %v421, 4
      %v570 = vpop.permute.xlu0 %569
      %571 = vrot.lane.b32.xlu0 %v422, 4
      %v572 = vpop.permute.xlu0 %571
      %573 = vrot.lane.b32.xlu0 %v423, 4
      %v574 = vpop.permute.xlu0 %573
      %575 = vrot.lane.b32.xlu0 %v424, 4
      %v576 = vpop.permute.xlu0 %575
      %577 = vrot.lane.b32.xlu0 %v425, 4
      %v578 = vpop.permute.xlu0 %577
      %579 = vrot.lane.b32.xlu0 %v426, 4
      %v580 = vpop.permute.xlu0 %579
      %581 = vrot.lane.b32.xlu0 %v427, 4
      %v582 = vpop.permute.xlu0 %581
      %583 = vrot.lane.b32.xlu0 %v428, 4
      %v584 = vpop.permute.xlu0 %583
      %585 = vrot.lane.b32.xlu0 %v429, 4
      %v586 = vpop.permute.xlu0 %585
      %587 = vrot.lane.b32.xlu0 %v430, 4
      %v588 = vpop.permute.xlu0 %587
      %589 = vrot.lane.b32.xlu0 %v431, 4
      %v590 = vpop.permute.xlu0 %589
      %591 = vrot.lane.b32.xlu0 %v432, 4
      %v592 = vpop.permute.xlu0 %591
      %593 = vrot.lane.b32.xlu0 %v433, 4
      %v594 = vpop.permute.xlu0 %593
      %595 = vrot.lane.b32.xlu0 %v434, 4
      %v596 = vpop.permute.xlu0 %595
      %597 = vrot.lane.b32.xlu0 %v435, 4
      %v598 = vpop.permute.xlu0 %597
      %599 = vrot.lane.b32.xlu0 %v436, 4
      %v600 = vpop.permute.xlu0 %599
      %601 = vrot.lane.b32.xlu0 %v437, 4
      %v602 = vpop.permute.xlu0 %601
      %603 = vrot.lane.b32.xlu0 %v438, 4
      %v604 = vpop.permute.xlu0 %603
      %605 = vrot.lane.b32.xlu0 %v439, 4
      %v606 = vpop.permute.xlu0 %605
      %607 = vrot.lane.b32.xlu0 %v440, 4
      %v608 = vpop.permute.xlu0 %607
      %609 = vrot.lane.b32.xlu0 %v441, 4
      %v610 = vpop.permute.xlu0 %609
      %611 = vrot.lane.b32.xlu0 %v442, 4
      %v612 = vpop.permute.xlu0 %611
      %613 = vrot.lane.b32.xlu0 %v443, 4
      %v614 = vpop.permute.xlu0 %613
      %615 = vrot.lane.b32.xlu0 %v444, 4
      %v616 = vpop.permute.xlu0 %615
      %617 = vrot.lane.b32.xlu0 %v445, 4
      %v618 = vpop.permute.xlu0 %617
      %619 = vrot.lane.b32.xlu0 %v446, 4
      %v620 = vpop.permute.xlu0 %619
      %621 = vrot.lane.b32.xlu0 %v447, 4
      %v622 = vpop.permute.xlu0 %621
      %623 = vrot.lane.b32.xlu0 %v448, 4
      %v624 = vpop.permute.xlu0 %623
      %625 = vrot.lane.b32.xlu0 %v449, 4
      %v626 = vpop.permute.xlu0 %625
      %627 = vrot.lane.b32.xlu0 %v450, 4
      %v628 = vpop.permute.xlu0 %627
      %629 = vrot.lane.b32.xlu0 %v451, 4
      %v630 = vpop.permute.xlu0 %629
      %631 = vrot.lane.b32.xlu0 %v452, 4
      %v632 = vpop.permute.xlu0 %631
      %633 = vrot.lane.b32.xlu0 %v453, 4
      %v634 = vpop.permute.xlu0 %633
      %635 = vrot.lane.b32.xlu0 %v454, 4
      %v636 = vpop.permute.xlu0 %635
      %637 = vrot.lane.b32.xlu0 %v455, 4
      %v638 = vpop.permute.xlu0 %637
      %639 = vrot.lane.b32.xlu0 %v456, 4
      %v640 = vpop.permute.xlu0 %639
      %641 = vrot.lane.b32.xlu0 %v457, 4
      %v642 = vpop.permute.xlu0 %641
      %643 = vrot.lane.b32.xlu0 %v458, 4
      %v644 = vpop.permute.xlu0 %643
      %645 = vrot.lane.b32.xlu0 %v459, 4
      %v646 = vpop.permute.xlu0 %645
      %647 = vrot.lane.b32.xlu0 %v460, 4
      %v648 = vpop.permute.xlu0 %647
      %649 = vrot.lane.b32.xlu0 %v461, 4
      %v650 = vpop.permute.xlu0 %649
      %651 = vrot.lane.b32.xlu0 %v462, 4
      %v652 = vpop.permute.xlu0 %651
      %653 = vrot.lane.b32.xlu0 %v463, 4
      %v654 = vpop.permute.xlu0 %653
      %655 = vrot.lane.b32.xlu0 %v464, 4
      %v656 = vpop.permute.xlu0 %655
      %657 = vrot.lane.b32.xlu0 %v465, 4
      %v658 = vpop.permute.xlu0 %657
      %755 = vrot.lane.b32.xlu0 %v467, 8
      %v756 = vpop.permute.xlu0 %755
      %757 = vrot.lane.b32.xlu0 %v468, 8
      %v758 = vpop.permute.xlu0 %757
      %759 = vrot.lane.b32.xlu0 %v469, 8
      %v760 = vpop.permute.xlu0 %759
      %761 = vrot.lane.b32.xlu0 %v470, 8
      %v762 = vpop.permute.xlu0 %761
      %763 = vrot.lane.b32.xlu0 %v471, 8
      %v764 = vpop.permute.xlu0 %763
      %765 = vrot.lane.b32.xlu0 %v472, 8
      %v766 = vpop.permute.xlu0 %765
      %767 = vrot.lane.b32.xlu0 %v473, 8
      %v768 = vpop.permute.xlu0 %767
      %769 = vrot.lane.b32.xlu0 %v474, 8
      %v770 = vpop.permute.xlu0 %769
      %771 = vrot.lane.b32.xlu0 %v475, 8
      %v772 = vpop.permute.xlu0 %771
      %773 = vrot.lane.b32.xlu0 %v476, 8
      %v774 = vpop.permute.xlu0 %773
      %775 = vrot.lane.b32.xlu0 %v477, 8
      %v776 = vpop.permute.xlu0 %775
      %777 = vrot.lane.b32.xlu0 %v478, 8
      %v778 = vpop.permute.xlu0 %777
      %779 = vrot.lane.b32.xlu0 %v479, 8
      %v780 = vpop.permute.xlu0 %779
      %781 = vrot.lane.b32.xlu0 %v480, 8
      %v782 = vpop.permute.xlu0 %781
      %783 = vrot.lane.b32.xlu0 %v481, 8
      %v784 = vpop.permute.xlu0 %783
      %785 = vrot.lane.b32.xlu0 %v482, 8
      %v786 = vpop.permute.xlu0 %785
      %787 = vrot.lane.b32.xlu0 %v483, 8
      %v788 = vpop.permute.xlu0 %787
      %789 = vrot.lane.b32.xlu0 %v484, 8
      %v790 = vpop.permute.xlu0 %789
      %791 = vrot.lane.b32.xlu0 %v485, 8
      %v792 = vpop.permute.xlu0 %791
      %793 = vrot.lane.b32.xlu0 %v486, 8
      %v794 = vpop.permute.xlu0 %793
      %795 = vrot.lane.b32.xlu0 %v487, 8
      %v796 = vpop.permute.xlu0 %795
      %797 = vrot.lane.b32.xlu0 %v488, 8
      %v798 = vpop.permute.xlu0 %797
      %799 = vrot.lane.b32.xlu0 %v489, 8
      %v800 = vpop.permute.xlu0 %799
      %801 = vrot.lane.b32.xlu0 %v490, 8
      %v802 = vpop.permute.xlu0 %801
      %803 = vrot.lane.b32.xlu0 %v491, 8
      %v804 = vpop.permute.xlu0 %803
      %805 = vrot.lane.b32.xlu0 %v492, 8
      %v806 = vpop.permute.xlu0 %805
      %807 = vrot.lane.b32.xlu0 %v493, 8
      %v808 = vpop.permute.xlu0 %807
      %809 = vrot.lane.b32.xlu0 %v494, 8
      %v810 = vpop.permute.xlu0 %809
      %811 = vrot.lane.b32.xlu0 %v495, 8
      %v812 = vpop.permute.xlu0 %811
      %813 = vrot.lane.b32.xlu0 %v496, 8
      %v814 = vpop.permute.xlu0 %813
      %815 = vrot.lane.b32.xlu0 %v497, 8
      %v816 = vpop.permute.xlu0 %815
      %817 = vrot.lane.b32.xlu0 %v498, 8
      %v818 = vpop.permute.xlu0 %817
      %819 = vrot.lane.b32.xlu0 %v499, 8
      %v820 = vpop.permute.xlu0 %819
      %821 = vrot.lane.b32.xlu0 %v500, 8
      %v822 = vpop.permute.xlu0 %821
      %823 = vrot.lane.b32.xlu0 %v501, 8
      %v824 = vpop.permute.xlu0 %823
      %825 = vrot.lane.b32.xlu0 %v502, 8
      %v826 = vpop.permute.xlu0 %825
      %827 = vrot.lane.b32.xlu0 %v503, 8
      %v828 = vpop.permute.xlu0 %827
      %829 = vrot.lane.b32.xlu0 %v504, 8
      %v830 = vpop.permute.xlu0 %829
      %831 = vrot.lane.b32.xlu0 %v505, 8
      %v832 = vpop.permute.xlu0 %831
      %833 = vrot.lane.b32.xlu0 %v506, 8
      %v834 = vpop.permute.xlu0 %833
      %835 = vrot.lane.b32.xlu0 %v507, 8
      %v836 = vpop.permute.xlu0 %835
      %837 = vrot.lane.b32.xlu0 %v508, 8
      %v838 = vpop.permute.xlu0 %837
      %839 = vrot.lane.b32.xlu0 %v509, 8
      %v840 = vpop.permute.xlu0 %839
      %841 = vrot.lane.b32.xlu0 %v510, 8
      %v842 = vpop.permute.xlu0 %841
      %843 = vrot.lane.b32.xlu0 %v511, 8
      %v844 = vpop.permute.xlu0 %843
      %845 = vrot.lane.b32.xlu0 %v512, 8
      %v846 = vpop.permute.xlu0 %845
      %847 = vrot.lane.b32.xlu0 %v513, 8
      %v848 = vpop.permute.xlu0 %847
      %849 = vrot.lane.b32.xlu0 %v514, 8
      %v850 = vpop.permute.xlu0 %849
      %v899 = vsel %vm259, %v370, %v564
      %v900 = vsel %vm259, %v371, %v566
      %v901 = vsel %vm259, %v372, %v568
      %v902 = vsel %vm259, %v373, %v570
      %v903 = vsel %vm259, %v374, %v572
      %v904 = vsel %vm259, %v375, %v574
      %v905 = vsel %vm259, %v376, %v576
      %v906 = vsel %vm259, %v377, %v578
      %v907 = vsel %vm259, %v378, %v580
      %v908 = vsel %vm259, %v379, %v582
      %v909 = vsel %vm259, %v380, %v584
      %v910 = vsel %vm259, %v381, %v586
      %v911 = vsel %vm259, %v382, %v588
      %v912 = vsel %vm259, %v383, %v590
      %v913 = vsel %vm259, %v384, %v592
      %v914 = vsel %vm259, %v385, %v594
      %v915 = vsel %vm259, %v386, %v596
      %v916 = vsel %vm259, %v387, %v598
      %v917 = vsel %vm259, %v388, %v600
      %v918 = vsel %vm259, %v389, %v602
      %v919 = vsel %vm259, %v390, %v604
      %v920 = vsel %vm259, %v391, %v606
      %v921 = vsel %vm259, %v392, %v608
      %v922 = vsel %vm259, %v393, %v610
      %v923 = vsel %vm259, %v394, %v612
      %v924 = vsel %vm259, %v395, %v614
      %v925 = vsel %vm259, %v396, %v616
      %v926 = vsel %vm259, %v397, %v618
      %v927 = vsel %vm259, %v398, %v620
      %v928 = vsel %vm259, %v399, %v622
      %v929 = vsel %vm259, %v400, %v624
      %v930 = vsel %vm259, %v401, %v626
      %v931 = vsel %vm259, %v402, %v628
      %v932 = vsel %vm259, %v403, %v630
      %v933 = vsel %vm259, %v404, %v632
      %v934 = vsel %vm259, %v405, %v634
      %v935 = vsel %vm259, %v406, %v636
      %v936 = vsel %vm259, %v407, %v638
      %v937 = vsel %vm259, %v408, %v640
      %v938 = vsel %vm259, %v409, %v642
      %v939 = vsel %vm259, %v410, %v644
      %v940 = vsel %vm259, %v411, %v646
      %v941 = vsel %vm259, %v412, %v648
      %v942 = vsel %vm259, %v413, %v650
      %v943 = vsel %vm259, %v414, %v652
      %v944 = vsel %vm259, %v415, %v654
      %v945 = vsel %vm259, %v416, %v656
      %v946 = vsel %vm259, %v417, %v658
      %vm947 = vcmask 64512
      %v948 = vsel %vm947, %v899, %v756
      %v949 = vsel %vm947, %v900, %v758
      %v950 = vsel %vm947, %v901, %v760
      %v951 = vsel %vm947, %v902, %v762
      %v952 = vsel %vm947, %v903, %v764
      %v953 = vsel %vm947, %v904, %v766
      %v954 = vsel %vm947, %v905, %v768
      %v955 = vsel %vm947, %v906, %v770
      %v956 = vsel %vm947, %v907, %v772
      %v957 = vsel %vm947, %v908, %v774
      %v958 = vsel %vm947, %v909, %v776
      %v959 = vsel %vm947, %v910, %v778
      %v960 = vsel %vm947, %v911, %v780
      %v961 = vsel %vm947, %v912, %v782
      %v962 = vsel %vm947, %v913, %v784
      %v963 = vsel %vm947, %v914, %v786
      %v964 = vsel %vm947, %v915, %v788
      %v965 = vsel %vm947, %v916, %v790
      %v966 = vsel %vm947, %v917, %v792
      %v967 = vsel %vm947, %v918, %v794
      %v968 = vsel %vm947, %v919, %v796
      %v969 = vsel %vm947, %v920, %v798
      %v970 = vsel %vm947, %v921, %v800
      %v971 = vsel %vm947, %v922, %v802
      %v972 = vsel %vm947, %v923, %v804
      %v973 = vsel %vm947, %v924, %v806
      %v974 = vsel %vm947, %v925, %v808
      %v975 = vsel %vm947, %v926, %v810
      %v976 = vsel %vm947, %v927, %v812
      %v977 = vsel %vm947, %v928, %v814
      %v978 = vsel %vm947, %v929, %v816
      %v979 = vsel %vm947, %v930, %v818
      %v980 = vsel %vm947, %v931, %v820
      %v981 = vsel %vm947, %v932, %v822
      %v982 = vsel %vm947, %v933, %v824
      %v983 = vsel %vm947, %v934, %v826
      %v984 = vsel %vm947, %v935, %v828
      %v985 = vsel %vm947, %v936, %v830
      %v986 = vsel %vm947, %v937, %v832
      %v987 = vsel %vm947, %v938, %v834
      %v988 = vsel %vm947, %v939, %v836
      %v989 = vsel %vm947, %v940, %v838
      %v990 = vsel %vm947, %v941, %v840
      %v991 = vsel %vm947, %v942, %v842
      %v992 = vsel %vm947, %v943, %v844
      %v993 = vsel %vm947, %v944, %v846
      %v994 = vsel %vm947, %v945, %v848
      %v995 = vsel %vm947, %v946, %v850
      %v996 = vpack.c.bf16 %v948, %v948
      %v997 = vpack.c.bf16 %v949, %v949
      %v998 = vpack.c.bf16 %v950, %v950
      %v999 = vpack.c.bf16 %v951, %v951
      %v1000 = vpack.c.bf16 %v952, %v952
      %v1001 = vpack.c.bf16 %v953, %v953
      %v1002 = vpack.c.bf16 %v954, %v954
      %v1003 = vpack.c.bf16 %v955, %v955
      %v1004 = vpack.c.bf16 %v956, %v956
      %v1005 = vpack.c.bf16 %v957, %v957
      %v1006 = vpack.c.bf16 %v958, %v958
      %v1007 = vpack.c.bf16 %v959, %v959
      %v1008 = vpack.c.bf16 %v960, %v960
      %v1009 = vpack.c.bf16 %v961, %v961
      %v1010 = vpack.c.bf16 %v962, %v962
      %v1011 = vpack.c.bf16 %v963, %v963
      %v1012 = vpack.c.bf16 %v964, %v964
      %v1013 = vpack.c.bf16 %v965, %v965
      %v1014 = vpack.c.bf16 %v966, %v966
      %v1015 = vpack.c.bf16 %v967, %v967
      %v1016 = vpack.c.bf16 %v968, %v968
      %v1017 = vpack.c.bf16 %v969, %v969
      %v1018 = vpack.c.bf16 %v970, %v970
      %v1019 = vpack.c.bf16 %v971, %v971
      %v1020 = vpack.c.bf16 %v972, %v972
      %v1021 = vpack.c.bf16 %v973, %v973
      %v1022 = vpack.c.bf16 %v974, %v974
      %v1023 = vpack.c.bf16 %v975, %v975
      %v1024 = vpack.c.bf16 %v976, %v976
      %v1025 = vpack.c.bf16 %v977, %v977
      %v1026 = vpack.c.bf16 %v978, %v978
      %v1027 = vpack.c.bf16 %v979, %v979
      %v1028 = vpack.c.bf16 %v980, %v980
      %v1029 = vpack.c.bf16 %v981, %v981
      %v1030 = vpack.c.bf16 %v982, %v982
      %v1031 = vpack.c.bf16 %v983, %v983
      %v1032 = vpack.c.bf16 %v984, %v984
      %v1033 = vpack.c.bf16 %v985, %v985
      %v1034 = vpack.c.bf16 %v986, %v986
      %v1035 = vpack.c.bf16 %v987, %v987
      %v1036 = vpack.c.bf16 %v988, %v988
      %v1037 = vpack.c.bf16 %v989, %v989
      %v1038 = vpack.c.bf16 %v990, %v990
      %v1039 = vpack.c.bf16 %v991, %v991
      %v1040 = vpack.c.bf16 %v992, %v992
      %v1041 = vpack.c.bf16 %v993, %v993
      %v1042 = vpack.c.bf16 %v994, %v994
      %v1043 = vpack.c.bf16 %v995, %v995
      %v1092 = vrot.slane %v996, 3
      %v1093 = vrot.slane %v997, 3
      %v1094 = vrot.slane %v998, 3
      %v1095 = vrot.slane %v999, 3
      %v1096 = vrot.slane %v1000, 3
      %v1097 = vrot.slane %v1001, 3
      %v1098 = vrot.slane %v1002, 3
      %v1099 = vrot.slane %v1003, 3
      %v1100 = vrot.slane %v1004, 3
      %v1101 = vrot.slane %v1005, 3
      %v1102 = vrot.slane %v1006, 3
      %v1103 = vrot.slane %v1007, 3
      %v1104 = vrot.slane %v1008, 3
      %v1105 = vrot.slane %v1009, 3
      %v1106 = vrot.slane %v1010, 3
      %v1107 = vrot.slane %v1011, 3
      %v1108 = vrot.slane %v1012, 3
      %v1109 = vrot.slane %v1013, 3
      %v1110 = vrot.slane %v1014, 3
      %v1111 = vrot.slane %v1015, 3
      %v1112 = vrot.slane %v1016, 3
      %v1113 = vrot.slane %v1017, 3
      %v1114 = vrot.slane %v1018, 3
      %v1115 = vrot.slane %v1019, 3
      %v1116 = vrot.slane %v1020, 3
      %v1117 = vrot.slane %v1021, 3
      %v1118 = vrot.slane %v1022, 3
      %v1119 = vrot.slane %v1023, 3
      %v1120 = vrot.slane %v1024, 3
      %v1121 = vrot.slane %v1025, 3
      %v1122 = vrot.slane %v1026, 3
      %v1123 = vrot.slane %v1027, 3
      %v1124 = vrot.slane %v1028, 3
      %v1125 = vrot.slane %v1029, 3
      %v1126 = vrot.slane %v1030, 3
      %v1127 = vrot.slane %v1031, 3
      %v1128 = vrot.slane %v1032, 3
      %v1129 = vrot.slane %v1033, 3
      %v1130 = vrot.slane %v1034, 3
      %v1131 = vrot.slane %v1035, 3
      %v1132 = vrot.slane %v1036, 3
      %v1133 = vrot.slane %v1037, 3
      %v1134 = vrot.slane %v1038, 3
      %v1135 = vrot.slane %v1039, 3
      %v1136 = vrot.slane %v1040, 3
      %v1137 = vrot.slane %v1041, 3
      %v1138 = vrot.slane %v1042, 3
      %v1139 = vrot.slane %v1043, 3
      %vm1140 = vcmask 1040384
      %v1143 = vsel %vm1140, %v996, %v1092
      %vm1144 = vcmask 1041409
      %v1145 = vsel %vm1144, %v996, %v1092
      %v1147 = vrot.slane %v1145, 1
      %vm1148 = vcmask 1042434
      %v1149 = vsel %vm1148, %v996, %v1092
      %v1151 = vrot.slane %v1149, 2
      %vm1152 = vcmask 1043459
      %v1153 = vsel %vm1152, %v996, %v1092
      %v1155 = vrot.slane %v1153, 3
      %v1158 = vsel %vm1140, %v997, %v1093
      %v1159 = vsel %vm1144, %v997, %v1093
      %v1161 = vrot.slane %v1159, 1
      %v1162 = vsel %vm1148, %v997, %v1093
      %v1164 = vrot.slane %v1162, 2
      %v1165 = vsel %vm1152, %v997, %v1093
      %v1167 = vrot.slane %v1165, 3
      %v1170 = vsel %vm1140, %v998, %v1094
      %v1173 = vsel %vm1140, %v999, %v1095
      %v1174 = vsel %vm1144, %v999, %v1095
      %v1176 = vrot.slane %v1174, 1
      %v1177 = vsel %vm1148, %v999, %v1095
      %v1179 = vrot.slane %v1177, 2
      %v1180 = vsel %vm1152, %v999, %v1095
      %v1182 = vrot.slane %v1180, 3
      %v1185 = vsel %vm1140, %v1000, %v1096
      %v1186 = vsel %vm1144, %v1000, %v1096
      %v1188 = vrot.slane %v1186, 1
      %v1189 = vsel %vm1148, %v1000, %v1096
      %v1191 = vrot.slane %v1189, 2
      %v1192 = vsel %vm1152, %v1000, %v1096
      %v1194 = vrot.slane %v1192, 3
      %v1197 = vsel %vm1140, %v1001, %v1097
      %v1200 = vsel %vm1140, %v1002, %v1098
      %v1201 = vsel %vm1144, %v1002, %v1098
      %v1203 = vrot.slane %v1201, 1
      %v1204 = vsel %vm1148, %v1002, %v1098
      %v1206 = vrot.slane %v1204, 2
      %v1207 = vsel %vm1152, %v1002, %v1098
      %v1209 = vrot.slane %v1207, 3
      %v1212 = vsel %vm1140, %v1003, %v1099
      %v1213 = vsel %vm1144, %v1003, %v1099
      %v1215 = vrot.slane %v1213, 1
      %v1216 = vsel %vm1148, %v1003, %v1099
      %v1218 = vrot.slane %v1216, 2
      %v1219 = vsel %vm1152, %v1003, %v1099
      %v1221 = vrot.slane %v1219, 3
      %v1224 = vsel %vm1140, %v1004, %v1100
      %v1227 = vsel %vm1140, %v1005, %v1101
      %v1228 = vsel %vm1144, %v1005, %v1101
      %v1230 = vrot.slane %v1228, 1
      %v1231 = vsel %vm1148, %v1005, %v1101
      %v1233 = vrot.slane %v1231, 2
      %v1234 = vsel %vm1152, %v1005, %v1101
      %v1236 = vrot.slane %v1234, 3
      %v1239 = vsel %vm1140, %v1006, %v1102
      %v1240 = vsel %vm1144, %v1006, %v1102
      %v1242 = vrot.slane %v1240, 1
      %v1243 = vsel %vm1148, %v1006, %v1102
      %v1245 = vrot.slane %v1243, 2
      %v1246 = vsel %vm1152, %v1006, %v1102
      %v1248 = vrot.slane %v1246, 3
      %v1251 = vsel %vm1140, %v1007, %v1103
      %v1254 = vsel %vm1140, %v1008, %v1104
      %v1255 = vsel %vm1144, %v1008, %v1104
      %v1257 = vrot.slane %v1255, 1
      %v1258 = vsel %vm1148, %v1008, %v1104
      %v1260 = vrot.slane %v1258, 2
      %v1261 = vsel %vm1152, %v1008, %v1104
      %v1263 = vrot.slane %v1261, 3
      %v1266 = vsel %vm1140, %v1009, %v1105
      %v1267 = vsel %vm1144, %v1009, %v1105
      %v1269 = vrot.slane %v1267, 1
      %v1270 = vsel %vm1148, %v1009, %v1105
      %v1272 = vrot.slane %v1270, 2
      %v1273 = vsel %vm1152, %v1009, %v1105
      %v1275 = vrot.slane %v1273, 3
      %v1278 = vsel %vm1140, %v1010, %v1106
      %v1281 = vsel %vm1140, %v1011, %v1107
      %v1282 = vsel %vm1144, %v1011, %v1107
      %v1284 = vrot.slane %v1282, 1
      %v1285 = vsel %vm1148, %v1011, %v1107
      %v1287 = vrot.slane %v1285, 2
      %v1288 = vsel %vm1152, %v1011, %v1107
      %v1290 = vrot.slane %v1288, 3
      %v1293 = vsel %vm1140, %v1012, %v1108
      %v1294 = vsel %vm1144, %v1012, %v1108
      %v1296 = vrot.slane %v1294, 1
      %v1297 = vsel %vm1148, %v1012, %v1108
      %v1299 = vrot.slane %v1297, 2
      %v1300 = vsel %vm1152, %v1012, %v1108
      %v1302 = vrot.slane %v1300, 3
      %v1305 = vsel %vm1140, %v1013, %v1109
      %v1308 = vsel %vm1140, %v1014, %v1110
      %v1309 = vsel %vm1144, %v1014, %v1110
      %v1311 = vrot.slane %v1309, 1
      %v1312 = vsel %vm1148, %v1014, %v1110
      %v1314 = vrot.slane %v1312, 2
      %v1315 = vsel %vm1152, %v1014, %v1110
      %v1317 = vrot.slane %v1315, 3
      %v1320 = vsel %vm1140, %v1015, %v1111
      %v1321 = vsel %vm1144, %v1015, %v1111
      %v1323 = vrot.slane %v1321, 1
      %v1324 = vsel %vm1148, %v1015, %v1111
      %v1326 = vrot.slane %v1324, 2
      %v1327 = vsel %vm1152, %v1015, %v1111
      %v1329 = vrot.slane %v1327, 3
      %v1332 = vsel %vm1140, %v1016, %v1112
      %v1335 = vsel %vm1140, %v1017, %v1113
      %v1336 = vsel %vm1144, %v1017, %v1113
      %v1338 = vrot.slane %v1336, 1
      %v1339 = vsel %vm1148, %v1017, %v1113
      %v1341 = vrot.slane %v1339, 2
      %v1342 = vsel %vm1152, %v1017, %v1113
      %v1344 = vrot.slane %v1342, 3
      %v1347 = vsel %vm1140, %v1018, %v1114
      %v1348 = vsel %vm1144, %v1018, %v1114
      %v1350 = vrot.slane %v1348, 1
      %v1351 = vsel %vm1148, %v1018, %v1114
      %v1353 = vrot.slane %v1351, 2
      %v1354 = vsel %vm1152, %v1018, %v1114
      %v1356 = vrot.slane %v1354, 3
      %v1359 = vsel %vm1140, %v1019, %v1115
      %v1362 = vsel %vm1140, %v1020, %v1116
      %v1363 = vsel %vm1144, %v1020, %v1116
      %v1365 = vrot.slane %v1363, 1
      %v1366 = vsel %vm1148, %v1020, %v1116
      %v1368 = vrot.slane %v1366, 2
      %v1369 = vsel %vm1152, %v1020, %v1116
      %v1371 = vrot.slane %v1369, 3
      %v1374 = vsel %vm1140, %v1021, %v1117
      %v1375 = vsel %vm1144, %v1021, %v1117
      %v1377 = vrot.slane %v1375, 1
      %v1378 = vsel %vm1148, %v1021, %v1117
      %v1380 = vrot.slane %v1378, 2
      %v1381 = vsel %vm1152, %v1021, %v1117
      %v1383 = vrot.slane %v1381, 3
      %v1386 = vsel %vm1140, %v1022, %v1118
      %v1389 = vsel %vm1140, %v1023, %v1119
      %v1390 = vsel %vm1144, %v1023, %v1119
      %v1392 = vrot.slane %v1390, 1
      %v1393 = vsel %vm1148, %v1023, %v1119
      %v1395 = vrot.slane %v1393, 2
      %v1396 = vsel %vm1152, %v1023, %v1119
      %v1398 = vrot.slane %v1396, 3
      %v1401 = vsel %vm1140, %v1024, %v1120
      %v1402 = vsel %vm1144, %v1024, %v1120
      %v1404 = vrot.slane %v1402, 1
      %v1405 = vsel %vm1148, %v1024, %v1120
      %v1407 = vrot.slane %v1405, 2
      %v1408 = vsel %vm1152, %v1024, %v1120
      %v1410 = vrot.slane %v1408, 3
      %v1413 = vsel %vm1140, %v1025, %v1121
      %v1416 = vsel %vm1140, %v1026, %v1122
      %v1417 = vsel %vm1144, %v1026, %v1122
      %v1419 = vrot.slane %v1417, 1
      %v1420 = vsel %vm1148, %v1026, %v1122
      %v1422 = vrot.slane %v1420, 2
      %v1423 = vsel %vm1152, %v1026, %v1122
      %v1425 = vrot.slane %v1423, 3
      %v1428 = vsel %vm1140, %v1027, %v1123
      %v1429 = vsel %vm1144, %v1027, %v1123
      %v1431 = vrot.slane %v1429, 1
      %v1432 = vsel %vm1148, %v1027, %v1123
      %v1434 = vrot.slane %v1432, 2
      %v1435 = vsel %vm1152, %v1027, %v1123
      %v1437 = vrot.slane %v1435, 3
      %v1440 = vsel %vm1140, %v1028, %v1124
      %v1443 = vsel %vm1140, %v1029, %v1125
      %v1444 = vsel %vm1144, %v1029, %v1125
      %v1446 = vrot.slane %v1444, 1
      %v1447 = vsel %vm1148, %v1029, %v1125
      %v1449 = vrot.slane %v1447, 2
      %v1450 = vsel %vm1152, %v1029, %v1125
      %v1452 = vrot.slane %v1450, 3
      %v1455 = vsel %vm1140, %v1030, %v1126
      %v1456 = vsel %vm1144, %v1030, %v1126
      %v1458 = vrot.slane %v1456, 1
      %v1459 = vsel %vm1148, %v1030, %v1126
      %v1461 = vrot.slane %v1459, 2
      %v1462 = vsel %vm1152, %v1030, %v1126
      %v1464 = vrot.slane %v1462, 3
      %v1467 = vsel %vm1140, %v1031, %v1127
      %v1470 = vsel %vm1140, %v1032, %v1128
      %v1471 = vsel %vm1144, %v1032, %v1128
      %v1473 = vrot.slane %v1471, 1
      %v1474 = vsel %vm1148, %v1032, %v1128
      %v1476 = vrot.slane %v1474, 2
      %v1477 = vsel %vm1152, %v1032, %v1128
      %v1479 = vrot.slane %v1477, 3
      %v1482 = vsel %vm1140, %v1033, %v1129
      %v1483 = vsel %vm1144, %v1033, %v1129
      %v1485 = vrot.slane %v1483, 1
      %v1486 = vsel %vm1148, %v1033, %v1129
      %v1488 = vrot.slane %v1486, 2
      %v1489 = vsel %vm1152, %v1033, %v1129
      %v1491 = vrot.slane %v1489, 3
      %v1494 = vsel %vm1140, %v1034, %v1130
      %v1497 = vsel %vm1140, %v1035, %v1131
      %v1498 = vsel %vm1144, %v1035, %v1131
      %v1500 = vrot.slane %v1498, 1
      %v1501 = vsel %vm1148, %v1035, %v1131
      %v1503 = vrot.slane %v1501, 2
      %v1504 = vsel %vm1152, %v1035, %v1131
      %v1506 = vrot.slane %v1504, 3
      %v1509 = vsel %vm1140, %v1036, %v1132
      %v1510 = vsel %vm1144, %v1036, %v1132
      %v1512 = vrot.slane %v1510, 1
      %v1513 = vsel %vm1148, %v1036, %v1132
      %v1515 = vrot.slane %v1513, 2
      %v1516 = vsel %vm1152, %v1036, %v1132
      %v1518 = vrot.slane %v1516, 3
      %v1521 = vsel %vm1140, %v1037, %v1133
      %v1524 = vsel %vm1140, %v1038, %v1134
      %v1525 = vsel %vm1144, %v1038, %v1134
      %v1527 = vrot.slane %v1525, 1
      %v1528 = vsel %vm1148, %v1038, %v1134
      %v1530 = vrot.slane %v1528, 2
      %v1531 = vsel %vm1152, %v1038, %v1134
      %v1533 = vrot.slane %v1531, 3
      %v1536 = vsel %vm1140, %v1039, %v1135
      %v1537 = vsel %vm1144, %v1039, %v1135
      %v1539 = vrot.slane %v1537, 1
      %v1540 = vsel %vm1148, %v1039, %v1135
      %v1542 = vrot.slane %v1540, 2
      %v1543 = vsel %vm1152, %v1039, %v1135
      %v1545 = vrot.slane %v1543, 3
      %v1548 = vsel %vm1140, %v1040, %v1136
      %v1551 = vsel %vm1140, %v1041, %v1137
      %v1552 = vsel %vm1144, %v1041, %v1137
      %v1554 = vrot.slane %v1552, 1
      %v1555 = vsel %vm1148, %v1041, %v1137
      %v1557 = vrot.slane %v1555, 2
      %v1558 = vsel %vm1152, %v1041, %v1137
      %v1560 = vrot.slane %v1558, 3
      %v1563 = vsel %vm1140, %v1042, %v1138
      %v1564 = vsel %vm1144, %v1042, %v1138
      %v1566 = vrot.slane %v1564, 1
      %v1567 = vsel %vm1148, %v1042, %v1138
      %v1569 = vrot.slane %v1567, 2
      %v1570 = vsel %vm1152, %v1042, %v1138
      %v1572 = vrot.slane %v1570, 3
      %v1575 = vsel %vm1140, %v1043, %v1139
      %v1576 = vld [vmem:[%s1] sm:$0xf]
      %v1577 = vld [vmem:[%s1 + $0x4] sm:$0x3]
      %1578 = vst [vmem:[#allocation1] ss:$9 sm:$0xff] %v1143
      %s1580 = scalar_lea.vmem [#allocation1], 1
      %1581 = vst [vmem:[%s1580] ss:$9 sm:$0xff] %v1147
      %s1583 = scalar_lea.vmem [#allocation1], 2
      %1584 = vst [vmem:[%s1583] ss:$9 sm:$0xff] %v1151
      %s1586 = scalar_lea.vmem [#allocation1], 3
      %1587 = vst [vmem:[%s1586] ss:$9 sm:$0xff] %v1155
      %s1588 = scalar_lea.vmem [#allocation1], 4
      %1589 = vst [vmem:[%s1588] ss:$9 sm:$0xff] %v1158
      %s1591 = scalar_lea.vmem [#allocation1], 5
      %1592 = vst [vmem:[%s1591] ss:$9 sm:$0xff] %v1161
      %s1594 = scalar_lea.vmem [#allocation1], 6
      %1595 = vst [vmem:[%s1594] ss:$9 sm:$0xff] %v1164
      %s1597 = scalar_lea.vmem [#allocation1], 7
      %1598 = vst [vmem:[%s1597] ss:$9 sm:$0xff] %v1167
      %v1599 = vld [vmem:[#allocation1] sm:$0xff]
      %1600 = vst [vmem:[#allocation1] ss:$9 sm:$0xff] %v1170
      %1601 = vst [vmem:[%s1580] ss:$9 sm:$0xff] %v1173
      %1603 = vst [vmem:[%s1583] ss:$9 sm:$0xff] %v1176
      %1605 = vst [vmem:[%s1586] ss:$9 sm:$0xff] %v1179
      %1607 = vst [vmem:[%s1588] ss:$9 sm:$0xff] %v1182
      %1608 = vst [vmem:[%s1591] ss:$9 sm:$0xff] %v1185
      %1610 = vst [vmem:[%s1594] ss:$9 sm:$0xff] %v1188
      %1612 = vst [vmem:[%s1597] ss:$9 sm:$0xff] %v1191
      %v1613 = vld [vmem:[#allocation1] sm:$0xff]
      %1615 = vst [vmem:[#allocation1] ss:$9 sm:$0xff] %v1194
      %1616 = vst [vmem:[%s1580] ss:$9 sm:$0xff] %v1197
      %1617 = vst [vmem:[%s1583] ss:$9 sm:$0xff] %v1200
      %1619 = vst [vmem:[%s1586] ss:$9 sm:$0xff] %v1203
      %1621 = vst [vmem:[%s1588] ss:$9 sm:$0xff] %v1206
      %1623 = vst [vmem:[%s1591] ss:$9 sm:$0xff] %v1209
      %1624 = vst [vmem:[%s1594] ss:$9 sm:$0xff] %v1212
      %1626 = vst [vmem:[%s1597] ss:$9 sm:$0xff] %v1215
      %v1627 = vld [vmem:[#allocation1] sm:$0xff]
      %1629 = vst [vmem:[#allocation1] ss:$9 sm:$0xff] %v1218
      %1631 = vst [vmem:[%s1580] ss:$9 sm:$0xff] %v1221
      %1632 = vst [vmem:[%s1583] ss:$9 sm:$0xff] %v1224
      %1633 = vst [vmem:[%s1586] ss:$9 sm:$0xff] %v1227
      %1635 = vst [vmem:[%s1588] ss:$9 sm:$0xff] %v1230
      %1637 = vst [vmem:[%s1591] ss:$9 sm:$0xff] %v1233
      %1639 = vst [vmem:[%s1594] ss:$9 sm:$0xff] %v1236
      %1640 = vst [vmem:[%s1597] ss:$9 sm:$0xff] %v1239
      %v1641 = vld [vmem:[#allocation1] sm:$0xff]
      %1643 = vst [vmem:[#allocation1] ss:$9 sm:$0xff] %v1242
      %1645 = vst [vmem:[%s1580] ss:$9 sm:$0xff] %v1245
      %1647 = vst [vmem:[%s1583] ss:$9 sm:$0xff] %v1248
      %1648 = vst [vmem:[%s1586] ss:$9 sm:$0xff] %v1251
      %1649 = vst [vmem:[%s1588] ss:$9 sm:$0xff] %v1254
      %1651 = vst [vmem:[%s1591] ss:$9 sm:$0xff] %v1257
      %1653 = vst [vmem:[%s1594] ss:$9 sm:$0xff] %v1260
      %1655 = vst [vmem:[%s1597] ss:$9 sm:$0xff] %v1263
      %v1656 = vld [vmem:[#allocation1] sm:$0xff]
      %1657 = vst [vmem:[#allocation1] ss:$9 sm:$0xff] %v1266
      %1659 = vst [vmem:[%s1580] ss:$9 sm:$0xff] %v1269
      %1661 = vst [vmem:[%s1583] ss:$9 sm:$0xff] %v1272
      %1663 = vst [vmem:[%s1586] ss:$9 sm:$0xff] %v1275
      %1664 = vst [vmem:[%s1588] ss:$9 sm:$0xff] %v1278
      %1665 = vst [vmem:[%s1591] ss:$9 sm:$0xff] %v1281
      %1667 = vst [vmem:[%s1594] ss:$9 sm:$0xff] %v1284
      %1669 = vst [vmem:[%s1597] ss:$9 sm:$0xff] %v1287
      %v1670 = vld [vmem:[#allocation1] sm:$0xff]
      %1672 = vst [vmem:[#allocation1] ss:$9 sm:$0xff] %v1290
      %1673 = vst [vmem:[%s1580] ss:$9 sm:$0xff] %v1293
      %1675 = vst [vmem:[%s1583] ss:$9 sm:$0xff] %v1296
      %1677 = vst [vmem:[%s1586] ss:$9 sm:$0xff] %v1299
      %1679 = vst [vmem:[%s1588] ss:$9 sm:$0xff] %v1302
      %1680 = vst [vmem:[%s1591] ss:$9 sm:$0xff] %v1305
      %1681 = vst [vmem:[%s1594] ss:$9 sm:$0xff] %v1308
      %1683 = vst [vmem:[%s1597] ss:$9 sm:$0xff] %v1311
      %v1684 = vld [vmem:[#allocation1] sm:$0xff]
      %1686 = vst [vmem:[#allocation1] ss:$9 sm:$0xff] %v1314
      %1688 = vst [vmem:[%s1580] ss:$9 sm:$0xff] %v1317
      %1689 = vst [vmem:[%s1583] ss:$9 sm:$0xff] %v1320
      %1691 = vst [vmem:[%s1586] ss:$9 sm:$0xff] %v1323
      %1693 = vst [vmem:[%s1588] ss:$9 sm:$0xff] %v1326
      %1695 = vst [vmem:[%s1591] ss:$9 sm:$0xff] %v1329
      %1696 = vst [vmem:[%s1594] ss:$9 sm:$0xff] %v1332
      %1697 = vst [vmem:[%s1597] ss:$9 sm:$0xff] %v1335
      %v1698 = vld [vmem:[#allocation1] sm:$0xff]
      %1700 = vst [vmem:[#allocation1] ss:$9 sm:$0xff] %v1338
      %1702 = vst [vmem:[%s1580] ss:$9 sm:$0xff] %v1341
      %1704 = vst [vmem:[%s1583] ss:$9 sm:$0xff] %v1344
      %1705 = vst [vmem:[%s1586] ss:$9 sm:$0xff] %v1347
      %1707 = vst [vmem:[%s1588] ss:$9 sm:$0xff] %v1350
      %1709 = vst [vmem:[%s1591] ss:$9 sm:$0xff] %v1353
      %1711 = vst [vmem:[%s1594] ss:$9 sm:$0xff] %v1356
      %1712 = vst [vmem:[%s1597] ss:$9 sm:$0xff] %v1359
      %v1713 = vld [vmem:[#allocation1] sm:$0xff]
      %1714 = vst [vmem:[#allocation1] ss:$9 sm:$0xff] %v1362
      %1716 = vst [vmem:[%s1580] ss:$9 sm:$0xff] %v1365
      %1718 = vst [vmem:[%s1583] ss:$9 sm:$0xff] %v1368
      %1720 = vst [vmem:[%s1586] ss:$9 sm:$0xff] %v1371
      %1721 = vst [vmem:[%s1588] ss:$9 sm:$0xff] %v1374
      %1723 = vst [vmem:[%s1591] ss:$9 sm:$0xff] %v1377
      %1725 = vst [vmem:[%s1594] ss:$9 sm:$0xff] %v1380
      %1727 = vst [vmem:[%s1597] ss:$9 sm:$0xff] %v1383
      %v1728 = vld [vmem:[#allocation1] sm:$0xff]
      %1729 = vst [vmem:[#allocation1] ss:$9 sm:$0xff] %v1386
      %1730 = vst [vmem:[%s1580] ss:$9 sm:$0xff] %v1389
      %1732 = vst [vmem:[%s1583] ss:$9 sm:$0xff] %v1392
      %1734 = vst [vmem:[%s1586] ss:$9 sm:$0xff] %v1395
      %1736 = vst [vmem:[%s1588] ss:$9 sm:$0xff] %v1398
      %1737 = vst [vmem:[%s1591] ss:$9 sm:$0xff] %v1401
      %1739 = vst [vmem:[%s1594] ss:$9 sm:$0xff] %v1404
      %1741 = vst [vmem:[%s1597] ss:$9 sm:$0xff] %v1407
      %v1742 = vld [vmem:[#allocation1] sm:$0xff]
      %1744 = vst [vmem:[#allocation1] ss:$9 sm:$0xff] %v1410
      %1745 = vst [vmem:[%s1580] ss:$9 sm:$0xff] %v1413
      %1746 = vst [vmem:[%s1583] ss:$9 sm:$0xff] %v1416
      %1748 = vst [vmem:[%s1586] ss:$9 sm:$0xff] %v1419
      %1750 = vst [vmem:[%s1588] ss:$9 sm:$0xff] %v1422
      %1752 = vst [vmem:[%s1591] ss:$9 sm:$0xff] %v1425
      %1753 = vst [vmem:[%s1594] ss:$9 sm:$0xff] %v1428
      %1755 = vst [vmem:[%s1597] ss:$9 sm:$0xff] %v1431
      %v1756 = vld [vmem:[#allocation1] sm:$0xff]
      %1758 = vst [vmem:[#allocation1] ss:$9 sm:$0xff] %v1434
      %1760 = vst [vmem:[%s1580] ss:$9 sm:$0xff] %v1437
      %1761 = vst [vmem:[%s1583] ss:$9 sm:$0xff] %v1440
      %1762 = vst [vmem:[%s1586] ss:$9 sm:$0xff] %v1443
      %1764 = vst [vmem:[%s1588] ss:$9 sm:$0xff] %v1446
      %1766 = vst [vmem:[%s1591] ss:$9 sm:$0xff] %v1449
      %1768 = vst [vmem:[%s1594] ss:$9 sm:$0xff] %v1452
      %1769 = vst [vmem:[%s1597] ss:$9 sm:$0xff] %v1455
      %v1770 = vld [vmem:[#allocation1] sm:$0xff]
      %1772 = vst [vmem:[#allocation1] ss:$9 sm:$0xff] %v1458
      %1774 = vst [vmem:[%s1580] ss:$9 sm:$0xff] %v1461
      %1776 = vst [vmem:[%s1583] ss:$9 sm:$0xff] %v1464
      %1777 = vst [vmem:[%s1586] ss:$9 sm:$0xff] %v1467
      %1778 = vst [vmem:[%s1588] ss:$9 sm:$0xff] %v1470
      %1780 = vst [vmem:[%s1591] ss:$9 sm:$0xff] %v1473
      %1782 = vst [vmem:[%s1594] ss:$9 sm:$0xff] %v1476
      %1784 = vst [vmem:[%s1597] ss:$9 sm:$0xff] %v1479
      %v1785 = vld [vmem:[#allocation1] sm:$0xff]
      %1786 = vst [vmem:[#allocation1] ss:$9 sm:$0xff] %v1482
      %1788 = vst [vmem:[%s1580] ss:$9 sm:$0xff] %v1485
      %1790 = vst [vmem:[%s1583] ss:$9 sm:$0xff] %v1488
      %1792 = vst [vmem:[%s1586] ss:$9 sm:$0xff] %v1491
      %1793 = vst [vmem:[%s1588] ss:$9 sm:$0xff] %v1494
      %1794 = vst [vmem:[%s1591] ss:$9 sm:$0xff] %v1497
      %1796 = vst [vmem:[%s1594] ss:$9 sm:$0xff] %v1500
      %1798 = vst [vmem:[%s1597] ss:$9 sm:$0xff] %v1503
      %v1799 = vld [vmem:[#allocation1] sm:$0xff]
      %1801 = vst [vmem:[#allocation1] ss:$9 sm:$0xff] %v1506
      %1802 = vst [vmem:[%s1580] ss:$9 sm:$0xff] %v1509
      %1804 = vst [vmem:[%s1583] ss:$9 sm:$0xff] %v1512
      %1806 = vst [vmem:[%s1586] ss:$9 sm:$0xff] %v1515
      %1808 = vst [vmem:[%s1588] ss:$9 sm:$0xff] %v1518
      %1809 = vst [vmem:[%s1591] ss:$9 sm:$0xff] %v1521
      %1810 = vst [vmem:[%s1594] ss:$9 sm:$0xff] %v1524
      %1812 = vst [vmem:[%s1597] ss:$9 sm:$0xff] %v1527
      %v1813 = vld [vmem:[#allocation1] sm:$0xff]
      %1815 = vst [vmem:[#allocation1] ss:$9 sm:$0xff] %v1530
      %1817 = vst [vmem:[%s1580] ss:$9 sm:$0xff] %v1533
      %1818 = vst [vmem:[%s1583] ss:$9 sm:$0xff] %v1536
      %1820 = vst [vmem:[%s1586] ss:$9 sm:$0xff] %v1539
      %1822 = vst [vmem:[%s1588] ss:$9 sm:$0xff] %v1542
      %1824 = vst [vmem:[%s1591] ss:$9 sm:$0xff] %v1545
      %1825 = vst [vmem:[%s1594] ss:$9 sm:$0xff] %v1548
      %1826 = vst [vmem:[%s1597] ss:$9 sm:$0xff] %v1551
      %v1827 = vld [vmem:[#allocation1] sm:$0xff]
      %1829 = vst [vmem:[#allocation1] ss:$9 sm:$0xff] %v1554
      %1831 = vst [vmem:[%s1580] ss:$9 sm:$0xff] %v1557
      %1833 = vst [vmem:[%s1583] ss:$9 sm:$0xff] %v1560
      %1834 = vst [vmem:[%s1586] ss:$9 sm:$0xff] %v1563
      %1836 = vst [vmem:[%s1588] ss:$9 sm:$0xff] %v1566
      %1838 = vst [vmem:[%s1591] ss:$9 sm:$0xff] %v1569
      %1840 = vst [vmem:[%s1594] ss:$9 sm:$0xff] %v1572
      %1841 = vst [vmem:[%s1597] ss:$9 sm:$0xff] %v1575
      %v1842 = vld [vmem:[#allocation1] sm:$0xff]
      %v1845 = vunpack.c.l.b16 %v1576
      %v1846 = vunpack.c.l.b16 %v1577
      %v1847 = vpack.c.b16 %v1846, %v1845
      %vm1848 = vcmask 97280
      %v1849 = vsel %vm1848, %v1599, 0
      %v1851 = vsel %vm1848, %v1613, 0
      %v1853 = vsel %vm1848, %v1627, 0
      %v1855 = vsel %vm1848, %v1641, 0
      %v1857 = vsel %vm1848, %v1656, 0
      %v1859 = vsel %vm1848, %v1670, 0
      %v1861 = vsel %vm1848, %v1684, 0
      %v1863 = vsel %vm1848, %v1698, 0
      %v1865 = vsel %vm1848, %v1713, 0
      %v1867 = vsel %vm1848, %v1728, 0
      %v1869 = vsel %vm1848, %v1742, 0
      %v1871 = vsel %vm1848, %v1756, 0
      %v1873 = vsel %vm1848, %v1770, 0
      %v1875 = vsel %vm1848, %v1785, 0
      %v1877 = vsel %vm1848, %v1799, 0
      %v1879 = vsel %vm1848, %v1813, 0
      %v1881 = vsel %vm1848, %v1827, 0
      %v1883 = vsel %vm1848, %v1842, 0
      %vm1885 = vcmask 1045504
      %v1887 = vsel %vm1885, %v1847, 0
      %1889 = vmatpush.bf16.msra.mxu0 0
      %1890 = vmatpush.bf16.msra.mxu0 0
      %1891 = vmatpush.bf16.msra.mxu0 0
      %1892 = vmatpush.bf16.msra.mxu0 0
      %1893 = vmatpush.bf16.msra.mxu0 0
      %1894 = vmatpush.bf16.msra.mxu0 0
      %1895 = vmatpush.bf16.msra.mxu0 0
      %1896 = vmatpush.bf16.msra.mxu0 %v1887
      %1897 = vmatmul.bf16.gmra.mxu0 %v1849
      %v1898 = vpop.f32.mrf.mxu0
      %v1899 = vadd.f32 0.0, %v1898
      %v1900 = vpop.f32.mrf.mxu0
      %v1901 = vadd.f32 0.0, %v1900
      %1902 = vmatmul.bf16.gmra.mxu0 %v1851
      %v1903 = vpop.f32.mrf.mxu0
      %v1904 = vadd.f32 0.0, %v1903
      %v1905 = vpop.f32.mrf.mxu0
      %v1906 = vadd.f32 0.0, %v1905
      %1907 = vmatmul.bf16.gmra.mxu0 %v1853
      %v1908 = vpop.f32.mrf.mxu0
      %v1909 = vadd.f32 0.0, %v1908
      %v1910 = vpop.f32.mrf.mxu0
      %v1911 = vadd.f32 0.0, %v1910
      %1912 = vmatmul.bf16.gmra.mxu0 %v1855
      %v1913 = vpop.f32.mrf.mxu0
      %v1914 = vadd.f32 0.0, %v1913
      %v1915 = vpop.f32.mrf.mxu0
      %v1916 = vadd.f32 0.0, %v1915
      %1917 = vmatmul.bf16.gmra.mxu0 %v1857
      %v1918 = vpop.f32.mrf.mxu0
      %v1919 = vadd.f32 0.0, %v1918
      %v1920 = vpop.f32.mrf.mxu0
      %v1921 = vadd.f32 0.0, %v1920
      %1922 = vmatmul.bf16.gmra.mxu0 %v1859
      %v1923 = vpop.f32.mrf.mxu0
      %v1924 = vadd.f32 0.0, %v1923
      %v1925 = vpop.f32.mrf.mxu0
      %v1926 = vadd.f32 0.0, %v1925
      %1927 = vmatmul.bf16.gmra.mxu0 %v1861
      %v1928 = vpop.f32.mrf.mxu0
      %v1929 = vadd.f32 0.0, %v1928
      %v1930 = vpop.f32.mrf.mxu0
      %v1931 = vadd.f32 0.0, %v1930
      %1932 = vmatmul.bf16.gmra.mxu0 %v1863
      %v1933 = vpop.f32.mrf.mxu0
      %v1934 = vadd.f32 0.0, %v1933
      %v1935 = vpop.f32.mrf.mxu0
      %v1936 = vadd.f32 0.0, %v1935
      %1937 = vmatmul.bf16.gmra.mxu0 %v1865
      %v1938 = vpop.f32.mrf.mxu0
      %v1939 = vadd.f32 0.0, %v1938
      %v1940 = vpop.f32.mrf.mxu0
      %v1941 = vadd.f32 0.0, %v1940
      %1942 = vmatmul.bf16.gmra.mxu0 %v1867
      %v1943 = vpop.f32.mrf.mxu0
      %v1944 = vadd.f32 0.0, %v1943
      %v1945 = vpop.f32.mrf.mxu0
      %v1946 = vadd.f32 0.0, %v1945
      %1947 = vmatmul.bf16.gmra.mxu0 %v1869
      %v1948 = vpop.f32.mrf.mxu0
      %v1949 = vadd.f32 0.0, %v1948
      %v1950 = vpop.f32.mrf.mxu0
      %v1951 = vadd.f32 0.0, %v1950
      %1952 = vmatmul.bf16.gmra.mxu0 %v1871
      %v1953 = vpop.f32.mrf.mxu0
      %v1954 = vadd.f32 0.0, %v1953
      %v1955 = vpop.f32.mrf.mxu0
      %v1956 = vadd.f32 0.0, %v1955
      %1957 = vmatmul.bf16.gmra.mxu0 %v1873
      %v1958 = vpop.f32.mrf.mxu0
      %v1959 = vadd.f32 0.0, %v1958
      %v1960 = vpop.f32.mrf.mxu0
      %v1961 = vadd.f32 0.0, %v1960
      %1962 = vmatmul.bf16.gmra.mxu0 %v1875
      %v1963 = vpop.f32.mrf.mxu0
      %v1964 = vadd.f32 0.0, %v1963
      %v1965 = vpop.f32.mrf.mxu0
      %v1966 = vadd.f32 0.0, %v1965
      %1967 = vmatmul.bf16.gmra.mxu0 %v1877
      %v1968 = vpop.f32.mrf.mxu0
      %v1969 = vadd.f32 0.0, %v1968
      %v1970 = vpop.f32.mrf.mxu0
      %v1971 = vadd.f32 0.0, %v1970
      %1972 = vmatmul.bf16.gmra.mxu0 %v1879
      %v1973 = vpop.f32.mrf.mxu0
      %v1974 = vadd.f32 0.0, %v1973
      %v1975 = vpop.f32.mrf.mxu0
      %v1976 = vadd.f32 0.0, %v1975
      %1977 = vmatmul.bf16.gmra.mxu0 %v1881
      %v1978 = vpop.f32.mrf.mxu0
      %v1979 = vadd.f32 0.0, %v1978
      %v1980 = vpop.f32.mrf.mxu0
      %v1981 = vadd.f32 0.0, %v1980
      %1982 = vmatmul.bf16.gmra.mxu0 %v1883
      %v1983 = vpop.f32.mrf.mxu0
      %v1984 = vadd.f32 0.0, %v1983
      %v1985 = vpop.f32.mrf.mxu0
      %v1986 = vadd.f32 0.0, %v1985
      %1987 = vdwg.mxu0
      %v2024 = vrot.slane %v1899, 2
      %v2025 = vrot.slane %v1899, 4
      %v2026 = vrot.slane %v1899, 6
      %v2027 = vrot.slane %v1901, 2
      %v2028 = vrot.slane %v1901, 4
      %v2029 = vrot.slane %v1901, 6
      %v2030 = vrot.slane %v1904, 2
      %v2031 = vrot.slane %v1904, 4
      %v2032 = vrot.slane %v1904, 6
      %v2033 = vrot.slane %v1906, 2
      %v2034 = vrot.slane %v1906, 4
      %v2035 = vrot.slane %v1906, 6
      %v2036 = vrot.slane %v1909, 4
      %v2037 = vrot.slane %v1909, 6
      %v2038 = vrot.slane %v1911, 2
      %v2039 = vrot.slane %v1911, 4
      %v2040 = vrot.slane %v1911, 6
      %v2041 = vrot.slane %v1914, 2
      %v2042 = vrot.slane %v1914, 6
      %v2043 = vrot.slane %v1916, 2
      %v2044 = vrot.slane %v1916, 4
      %v2045 = vrot.slane %v1916, 6
      %v2046 = vrot.slane %v1919, 2
      %v2047 = vrot.slane %v1919, 4
      %v2048 = vrot.slane %v1921, 2
      %v2049 = vrot.slane %v1921, 4
      %v2050 = vrot.slane %v1921, 6
      %v2051 = vrot.slane %v1924, 2
      %v2052 = vrot.slane %v1924, 4
      %v2053 = vrot.slane %v1924, 6
      %v2054 = vrot.slane %v1926, 2
      %v2055 = vrot.slane %v1926, 4
      %v2056 = vrot.slane %v1926, 6
      %v2057 = vrot.slane %v1929, 2
      %v2058 = vrot.slane %v1929, 4
      %v2059 = vrot.slane %v1929, 6
      %v2060 = vrot.slane %v1931, 4
      %v2061 = vrot.slane %v1931, 6
      %v2062 = vrot.slane %v1934, 2
      %v2063 = vrot.slane %v1934, 4
      %v2064 = vrot.slane %v1934, 6
      %v2065 = vrot.slane %v1936, 2
      %v2066 = vrot.slane %v1936, 6
      %v2067 = vrot.slane %v1939, 2
      %v2068 = vrot.slane %v1939, 4
      %v2069 = vrot.slane %v1939, 6
      %v2070 = vrot.slane %v1941, 2
      %v2071 = vrot.slane %v1941, 4
      %v2072 = vrot.slane %v1944, 2
      %v2073 = vrot.slane %v1944, 4
      %v2074 = vrot.slane %v1944, 6
      %v2075 = vrot.slane %v1946, 2
      %v2076 = vrot.slane %v1946, 4
      %v2077 = vrot.slane %v1946, 6
      %v2078 = vrot.slane %v1949, 2
      %v2079 = vrot.slane %v1949, 4
      %v2080 = vrot.slane %v1949, 6
      %v2081 = vrot.slane %v1951, 2
      %v2082 = vrot.slane %v1951, 4
      %v2083 = vrot.slane %v1951, 6
      %v2084 = vrot.slane %v1954, 4
      %v2085 = vrot.slane %v1954, 6
      %v2086 = vrot.slane %v1956, 2
      %v2087 = vrot.slane %v1956, 4
      %v2088 = vrot.slane %v1956, 6
      %v2089 = vrot.slane %v1959, 2
      %v2090 = vrot.slane %v1959, 6
      %v2091 = vrot.slane %v1961, 2
      %v2092 = vrot.slane %v1961, 4
      %v2093 = vrot.slane %v1961, 6
      %v2094 = vrot.slane %v1964, 2
      %v2095 = vrot.slane %v1964, 4
      %v2096 = vrot.slane %v1966, 2
      %v2097 = vrot.slane %v1966, 4
      %v2098 = vrot.slane %v1966, 6
      %v2099 = vrot.slane %v1969, 2
      %v2100 = vrot.slane %v1969, 4
      %v2101 = vrot.slane %v1969, 6
      %v2102 = vrot.slane %v1971, 2
      %v2103 = vrot.slane %v1971, 4
      %v2104 = vrot.slane %v1971, 6
      %v2105 = vrot.slane %v1974, 2
      %v2106 = vrot.slane %v1974, 4
      %v2107 = vrot.slane %v1974, 6
      %v2108 = vrot.slane %v1976, 4
      %v2109 = vrot.slane %v1976, 6
      %v2110 = vrot.slane %v1979, 2
      %v2111 = vrot.slane %v1979, 4
      %v2112 = vrot.slane %v1979, 6
      %v2113 = vrot.slane %v1981, 2
      %v2114 = vrot.slane %v1981, 6
      %v2115 = vrot.slane %v1984, 2
      %v2116 = vrot.slane %v1984, 4
      %v2117 = vrot.slane %v1984, 6
      %v2118 = vrot.slane %v1986, 2
      %v2119 = vrot.slane %v1986, 4
      %v2216 = vadd.f32 %v1899, 0.0
      %v2217 = vadd.f32 %v2024, 0.0
      %v2218 = vadd.f32 %v2025, 0.0
      %v2219 = vadd.f32 %v2026, 0.0
      %v2220 = vadd.f32 %v1901, 0.0
      %v2221 = vadd.f32 %v2027, 0.0
      %v2222 = vadd.f32 %v2028, 0.0
      %v2223 = vadd.f32 %v2029, 0.0
      %v2224 = vadd.f32 %v2030, 0.0
      %v2225 = vadd.f32 %v2031, 0.0
      %v2226 = vadd.f32 %v2032, 0.0
      %v2227 = vadd.f32 %v1906, 0.0
      %v2228 = vadd.f32 %v2033, 0.0
      %v2229 = vadd.f32 %v2034, 0.0
      %v2230 = vadd.f32 %v2035, 0.0
      %v2231 = vadd.f32 %v1909, 0.0
      %v2232 = vadd.f32 %v2036, 0.0
      %v2233 = vadd.f32 %v2037, 0.0
      %v2234 = vadd.f32 %v1911, 0.0
      %v2235 = vadd.f32 %v2038, 0.0
      %v2236 = vadd.f32 %v2039, 0.0
      %v2237 = vadd.f32 %v2040, 0.0
      %v2238 = vadd.f32 %v1914, 0.0
      %v2239 = vadd.f32 %v2041, 0.0
      %v2240 = vadd.f32 %v2042, 0.0
      %v2241 = vadd.f32 %v1916, 0.0
      %v2242 = vadd.f32 %v2043, 0.0
      %v2243 = vadd.f32 %v2044, 0.0
      %v2244 = vadd.f32 %v2045, 0.0
      %v2245 = vadd.f32 %v1919, 0.0
      %v2246 = vadd.f32 %v2046, 0.0
      %v2247 = vadd.f32 %v2047, 0.0
      %v2248 = vadd.f32 %v1921, 0.0
      %v2249 = vadd.f32 %v2048, 0.0
      %v2250 = vadd.f32 %v2049, 0.0
      %v2251 = vadd.f32 %v2050, 0.0
      %v2252 = vadd.f32 %v1924, 0.0
      %v2253 = vadd.f32 %v2051, 0.0
      %v2254 = vadd.f32 %v2052, 0.0
      %v2255 = vadd.f32 %v2053, 0.0
      %v2256 = vadd.f32 %v2054, 0.0
      %v2257 = vadd.f32 %v2055, 0.0
      %v2258 = vadd.f32 %v2056, 0.0
      %v2259 = vadd.f32 %v1929, 0.0
      %v2260 = vadd.f32 %v2057, 0.0
      %v2261 = vadd.f32 %v2058, 0.0
      %v2262 = vadd.f32 %v2059, 0.0
      %v2263 = vadd.f32 %v1931, 0.0
      %v2264 = vadd.f32 %v2060, 0.0
      %v2265 = vadd.f32 %v2061, 0.0
      %v2266 = vadd.f32 %v1934, 0.0
      %v2267 = vadd.f32 %v2062, 0.0
      %v2268 = vadd.f32 %v2063, 0.0
      %v2269 = vadd.f32 %v2064, 0.0
      %v2270 = vadd.f32 %v1936, 0.0
      %v2271 = vadd.f32 %v2065, 0.0
      %v2272 = vadd.f32 %v2066, 0.0
      %v2273 = vadd.f32 %v1939, 0.0
      %v2274 = vadd.f32 %v2067, 0.0
      %v2275 = vadd.f32 %v2068, 0.0
      %v2276 = vadd.f32 %v2069, 0.0
      %v2277 = vadd.f32 %v1941, 0.0
      %v2278 = vadd.f32 %v2070, 0.0
      %v2279 = vadd.f32 %v2071, 0.0
      %v2280 = vadd.f32 %v1944, 0.0
      %v2281 = vadd.f32 %v2072, 0.0
      %v2282 = vadd.f32 %v2073, 0.0
      %v2283 = vadd.f32 %v2074, 0.0
      %v2284 = vadd.f32 %v1946, 0.0
      %v2285 = vadd.f32 %v2075, 0.0
      %v2286 = vadd.f32 %v2076, 0.0
      %v2287 = vadd.f32 %v2077, 0.0
      %v2288 = vadd.f32 %v2078, 0.0
      %v2289 = vadd.f32 %v2079, 0.0
      %v2290 = vadd.f32 %v2080, 0.0
      %v2291 = vadd.f32 %v1951, 0.0
      %v2292 = vadd.f32 %v2081, 0.0
      %v2293 = vadd.f32 %v2082, 0.0
      %v2294 = vadd.f32 %v2083, 0.0
      %v2295 = vadd.f32 %v1954, 0.0
      %v2296 = vadd.f32 %v2084, 0.0
      %v2297 = vadd.f32 %v2085, 0.0
      %v2298 = vadd.f32 %v1956, 0.0
      %v2299 = vadd.f32 %v2086, 0.0
      %v2300 = vadd.f32 %v2087, 0.0
      %v2301 = vadd.f32 %v2088, 0.0
      %v2302 = vadd.f32 %v1959, 0.0
      %v2303 = vadd.f32 %v2089, 0.0
      %v2304 = vadd.f32 %v2090, 0.0
      %v2305 = vadd.f32 %v1961, 0.0
      %v2306 = vadd.f32 %v2091, 0.0
      %v2307 = vadd.f32 %v2092, 0.0
      %v2308 = vadd.f32 %v2093, 0.0
      %v2309 = vadd.f32 %v1964, 0.0
      %v2310 = vadd.f32 %v2094, 0.0
      %v2311 = vadd.f32 %v2095, 0.0
      %v2312 = vadd.f32 %v1966, 0.0
      %v2313 = vadd.f32 %v2096, 0.0
      %v2314 = vadd.f32 %v2097, 0.0
      %v2315 = vadd.f32 %v2098, 0.0
      %v2316 = vadd.f32 %v1969, 0.0
      %v2317 = vadd.f32 %v2099, 0.0
      %v2318 = vadd.f32 %v2100, 0.0
      %v2319 = vadd.f32 %v2101, 0.0
      %v2320 = vadd.f32 %v2102, 0.0
      %v2321 = vadd.f32 %v2103, 0.0
      %v2322 = vadd.f32 %v2104, 0.0
      %v2323 = vadd.f32 %v1974, 0.0
      %v2324 = vadd.f32 %v2105, 0.0
      %v2325 = vadd.f32 %v2106, 0.0
      %v2326 = vadd.f32 %v2107, 0.0
      %v2327 = vadd.f32 %v1976, 0.0
      %v2328 = vadd.f32 %v2108, 0.0
      %v2329 = vadd.f32 %v2109, 0.0
      %v2330 = vadd.f32 %v1979, 0.0
      %v2331 = vadd.f32 %v2110, 0.0
      %v2332 = vadd.f32 %v2111, 0.0
      %v2333 = vadd.f32 %v2112, 0.0
      %v2334 = vadd.f32 %v1981, 0.0
      %v2335 = vadd.f32 %v2113, 0.0
      %v2336 = vadd.f32 %v2114, 0.0
      %v2337 = vadd.f32 %v1984, 0.0
      %v2338 = vadd.f32 %v2115, 0.0
      %v2339 = vadd.f32 %v2116, 0.0
      %v2340 = vadd.f32 %v2117, 0.0
      %v2341 = vadd.f32 %v1986, 0.0
      %v2342 = vadd.f32 %v2118, 0.0
      %v2343 = vadd.f32 %v2119, 0.0
      %s2344 = scalar_lea.vmem %s1, 8
      %v2345 = vld [vmem:[%s2344] sm:$0xf]
      %v2346 = vld [vmem:[%s2344 + $0x4] sm:$0x3]
      %2347 = vst [vmem:[#allocation1] ss:$9 sm:$0xff] %v1143
      %s2348 = scalar_lea.vmem [#allocation1], 1
      %2349 = vst [vmem:[%s2348] ss:$9 sm:$0xff] %v1147
      %s2350 = scalar_lea.vmem [#allocation1], 2
      %2351 = vst [vmem:[%s2350] ss:$9 sm:$0xff] %v1151
      %s2352 = scalar_lea.vmem [#allocation1], 3
      %2353 = vst [vmem:[%s2352] ss:$9 sm:$0xff] %v1155
      %s2354 = scalar_lea.vmem [#allocation1], 4
      %2355 = vst [vmem:[%s2354] ss:$9 sm:$0xff] %v1158
      %s2356 = scalar_lea.vmem [#allocation1], 5
      %2357 = vst [vmem:[%s2356] ss:$9 sm:$0xff] %v1161
      %s2358 = scalar_lea.vmem [#allocation1], 6
      %2359 = vst [vmem:[%s2358] ss:$9 sm:$0xff] %v1164
      %s2360 = scalar_lea.vmem [#allocation1], 7
      %2361 = vst [vmem:[%s2360] ss:$9 sm:$0xff] %v1167
      %v2362 = vld [vmem:[#allocation1] sm:$0xff]
      %2363 = vst [vmem:[#allocation1] ss:$9 sm:$0xff] %v1170
      %2364 = vst [vmem:[%s2348] ss:$9 sm:$0xff] %v1173
      %2365 = vst [vmem:[%s2350] ss:$9 sm:$0xff] %v1176
      %2366 = vst [vmem:[%s2352] ss:$9 sm:$0xff] %v1179
      %2367 = vst [vmem:[%s2354] ss:$9 sm:$0xff] %v1182
      %2368 = vst [vmem:[%s2356] ss:$9 sm:$0xff] %v1185
      %2369 = vst [vmem:[%s2358] ss:$9 sm:$0xff] %v1188
      %2370 = vst [vmem:[%s2360] ss:$9 sm:$0xff] %v1191
      %v2371 = vld [vmem:[#allocation1] sm:$0xff]
      %2372 = vst [vmem:[#allocation1] ss:$9 sm:$0xff] %v1194
      %2373 = vst [vmem:[%s2348] ss:$9 sm:$0xff] %v1197
      %2374 = vst [vmem:[%s2350] ss:$9 sm:$0xff] %v1200
      %2375 = vst [vmem:[%s2352] ss:$9 sm:$0xff] %v1203
      %2376 = vst [vmem:[%s2354] ss:$9 sm:$0xff] %v1206
      %2377 = vst [vmem:[%s2356] ss:$9 sm:$0xff] %v1209
      %2378 = vst [vmem:[%s2358] ss:$9 sm:$0xff] %v1212
      %2379 = vst [vmem:[%s2360] ss:$9 sm:$0xff] %v1215
      %v2380 = vld [vmem:[#allocation1] sm:$0xff]
      %2381 = vst [vmem:[#allocation1] ss:$9 sm:$0xff] %v1218
      %2382 = vst [vmem:[%s2348] ss:$9 sm:$0xff] %v1221
      %2383 = vst [vmem:[%s2350] ss:$9 sm:$0xff] %v1224
      %2384 = vst [vmem:[%s2352] ss:$9 sm:$0xff] %v1227
      %2385 = vst [vmem:[%s2354] ss:$9 sm:$0xff] %v1230
      %2386 = vst [vmem:[%s2356] ss:$9 sm:$0xff] %v1233
      %2387 = vst [vmem:[%s2358] ss:$9 sm:$0xff] %v1236
      %2388 = vst [vmem:[%s2360] ss:$9 sm:$0xff] %v1239
      %v2389 = vld [vmem:[#allocation1] sm:$0xff]
      %2390 = vst [vmem:[#allocation1] ss:$9 sm:$0xff] %v1242
      %2391 = vst [vmem:[%s2348] ss:$9 sm:$0xff] %v1245
      %2392 = vst [vmem:[%s2350] ss:$9 sm:$0xff] %v1248
      %2393 = vst [vmem:[%s2352] ss:$9 sm:$0xff] %v1251
      %2394 = vst [vmem:[%s2354] ss:$9 sm:$0xff] %v1254
      %2395 = vst [vmem:[%s2356] ss:$9 sm:$0xff] %v1257
      %2396 = vst [vmem:[%s2358] ss:$9 sm:$0xff] %v1260
      %2397 = vst [vmem:[%s2360] ss:$9 sm:$0xff] %v1263
      %v2398 = vld [vmem:[#allocation1] sm:$0xff]
      %2399 = vst [vmem:[#allocation1] ss:$9 sm:$0xff] %v1266
      %2400 = vst [vmem:[%s2348] ss:$9 sm:$0xff] %v1269
      %2401 = vst [vmem:[%s2350] ss:$9 sm:$0xff] %v1272
      %2402 = vst [vmem:[%s2352] ss:$9 sm:$0xff] %v1275
      %2403 = vst [vmem:[%s2354] ss:$9 sm:$0xff] %v1278
      %2404 = vst [vmem:[%s2356] ss:$9 sm:$0xff] %v1281
      %2405 = vst [vmem:[%s2358] ss:$9 sm:$0xff] %v1284
      %2406 = vst [vmem:[%s2360] ss:$9 sm:$0xff] %v1287
      %v2407 = vld [vmem:[#allocation1] sm:$0xff]
      %2408 = vst [vmem:[#allocation1] ss:$9 sm:$0xff] %v1290
      %2409 = vst [vmem:[%s2348] ss:$9 sm:$0xff] %v1293
      %2410 = vst [vmem:[%s2350] ss:$9 sm:$0xff] %v1296
      %2411 = vst [vmem:[%s2352] ss:$9 sm:$0xff] %v1299
      %2412 = vst [vmem:[%s2354] ss:$9 sm:$0xff] %v1302
      %2413 = vst [vmem:[%s2356] ss:$9 sm:$0xff] %v1305
      %2414 = vst [vmem:[%s2358] ss:$9 sm:$0xff] %v1308
      %2415 = vst [vmem:[%s2360] ss:$9 sm:$0xff] %v1311
      %v2416 = vld [vmem:[#allocation1] sm:$0xff]
      %2417 = vst [vmem:[#allocation1] ss:$9 sm:$0xff] %v1314
      %2418 = vst [vmem:[%s2348] ss:$9 sm:$0xff] %v1317
      %2419 = vst [vmem:[%s2350] ss:$9 sm:$0xff] %v1320
      %2420 = vst [vmem:[%s2352] ss:$9 sm:$0xff] %v1323
      %2421 = vst [vmem:[%s2354] ss:$9 sm:$0xff] %v1326
      %2422 = vst [vmem:[%s2356] ss:$9 sm:$0xff] %v1329
      %2423 = vst [vmem:[%s2358] ss:$9 sm:$0xff] %v1332
      %2424 = vst [vmem:[%s2360] ss:$9 sm:$0xff] %v1335
      %v2425 = vld [vmem:[#allocation1] sm:$0xff]
      %2426 = vst [vmem:[#allocation1] ss:$9 sm:$0xff] %v1338
      %2427 = vst [vmem:[%s2348] ss:$9 sm:$0xff] %v1341
      %2428 = vst [vmem:[%s2350] ss:$9 sm:$0xff] %v1344
      %2429 = vst [vmem:[%s2352] ss:$9 sm:$0xff] %v1347
      %2430 = vst [vmem:[%s2354] ss:$9 sm:$0xff] %v1350
      %2431 = vst [vmem:[%s2356] ss:$9 sm:$0xff] %v1353
      %2432 = vst [vmem:[%s2358] ss:$9 sm:$0xff] %v1356
      %2433 = vst [vmem:[%s2360] ss:$9 sm:$0xff] %v1359
      %v2434 = vld [vmem:[#allocation1] sm:$0xff]
      %2435 = vst [vmem:[#allocation1] ss:$9 sm:$0xff] %v1362
      %2436 = vst [vmem:[%s2348] ss:$9 sm:$0xff] %v1365
      %2437 = vst [vmem:[%s2350] ss:$9 sm:$0xff] %v1368
      %2438 = vst [vmem:[%s2352] ss:$9 sm:$0xff] %v1371
      %2439 = vst [vmem:[%s2354] ss:$9 sm:$0xff] %v1374
      %2440 = vst [vmem:[%s2356] ss:$9 sm:$0xff] %v1377
      %2441 = vst [vmem:[%s2358] ss:$9 sm:$0xff] %v1380
      %2442 = vst [vmem:[%s2360] ss:$9 sm:$0xff] %v1383
      %v2443 = vld [vmem:[#allocation1] sm:$0xff]
      %2444 = vst [vmem:[#allocation1] ss:$9 sm:$0xff] %v1386
      %2445 = vst [vmem:[%s2348] ss:$9 sm:$0xff] %v1389
      %2446 = vst [vmem:[%s2350] ss:$9 sm:$0xff] %v1392
      %2447 = vst [vmem:[%s2352] ss:$9 sm:$0xff] %v1395
      %2448 = vst [vmem:[%s2354] ss:$9 sm:$0xff] %v1398
      %2449 = vst [vmem:[%s2356] ss:$9 sm:$0xff] %v1401
      %2450 = vst [vmem:[%s2358] ss:$9 sm:$0xff] %v1404
      %2451 = vst [vmem:[%s2360] ss:$9 sm:$0xff] %v1407
      %v2452 = vld [vmem:[#allocation1] sm:$0xff]
      %2453 = vst [vmem:[#allocation1] ss:$9 sm:$0xff] %v1410
      %2454 = vst [vmem:[%s2348] ss:$9 sm:$0xff] %v1413
      %2455 = vst [vmem:[%s2350] ss:$9 sm:$0xff] %v1416
      %2456 = vst [vmem:[%s2352] ss:$9 sm:$0xff] %v1419
      %2457 = vst [vmem:[%s2354] ss:$9 sm:$0xff] %v1422
      %2458 = vst [vmem:[%s2356] ss:$9 sm:$0xff] %v1425
      %2459 = vst [vmem:[%s2358] ss:$9 sm:$0xff] %v1428
      %2460 = vst [vmem:[%s2360] ss:$9 sm:$0xff] %v1431
      %v2461 = vld [vmem:[#allocation1] sm:$0xff]
      %2462 = vst [vmem:[#allocation1] ss:$9 sm:$0xff] %v1434
      %2463 = vst [vmem:[%s2348] ss:$9 sm:$0xff] %v1437
      %2464 = vst [vmem:[%s2350] ss:$9 sm:$0xff] %v1440
      %2465 = vst [vmem:[%s2352] ss:$9 sm:$0xff] %v1443
      %2466 = vst [vmem:[%s2354] ss:$9 sm:$0xff] %v1446
      %2467 = vst [vmem:[%s2356] ss:$9 sm:$0xff] %v1449
      %2468 = vst [vmem:[%s2358] ss:$9 sm:$0xff] %v1452
      %2469 = vst [vmem:[%s2360] ss:$9 sm:$0xff] %v1455
      %v2470 = vld [vmem:[#allocation1] sm:$0xff]
      %2471 = vst [vmem:[#allocation1] ss:$9 sm:$0xff] %v1458
      %2472 = vst [vmem:[%s2348] ss:$9 sm:$0xff] %v1461
      %2473 = vst [vmem:[%s2350] ss:$9 sm:$0xff] %v1464
      %2474 = vst [vmem:[%s2352] ss:$9 sm:$0xff] %v1467
      %2475 = vst [vmem:[%s2354] ss:$9 sm:$0xff] %v1470
      %2476 = vst [vmem:[%s2356] ss:$9 sm:$0xff] %v1473
      %2477 = vst [vmem:[%s2358] ss:$9 sm:$0xff] %v1476
      %2478 = vst [vmem:[%s2360] ss:$9 sm:$0xff] %v1479
      %v2479 = vld [vmem:[#allocation1] sm:$0xff]
      %2480 = vst [vmem:[#allocation1] ss:$9 sm:$0xff] %v1482
      %2481 = vst [vmem:[%s2348] ss:$9 sm:$0xff] %v1485
      %2482 = vst [vmem:[%s2350] ss:$9 sm:$0xff] %v1488
      %2483 = vst [vmem:[%s2352] ss:$9 sm:$0xff] %v1491
      %2484 = vst [vmem:[%s2354] ss:$9 sm:$0xff] %v1494
      %2485 = vst [vmem:[%s2356] ss:$9 sm:$0xff] %v1497
      %2486 = vst [vmem:[%s2358] ss:$9 sm:$0xff] %v1500
      %2487 = vst [vmem:[%s2360] ss:$9 sm:$0xff] %v1503
      %v2488 = vld [vmem:[#allocation1] sm:$0xff]
      %2489 = vst [vmem:[#allocation1] ss:$9 sm:$0xff] %v1506
      %2490 = vst [vmem:[%s2348] ss:$9 sm:$0xff] %v1509
      %2491 = vst [vmem:[%s2350] ss:$9 sm:$0xff] %v1512
      %2492 = vst [vmem:[%s2352] ss:$9 sm:$0xff] %v1515
      %2493 = vst [vmem:[%s2354] ss:$9 sm:$0xff] %v1518
      %2494 = vst [vmem:[%s2356] ss:$9 sm:$0xff] %v1521
      %2495 = vst [vmem:[%s2358] ss:$9 sm:$0xff] %v1524
      %2496 = vst [vmem:[%s2360] ss:$9 sm:$0xff] %v1527
      %v2497 = vld [vmem:[#allocation1] sm:$0xff]
      %2498 = vst [vmem:[#allocation1] ss:$9 sm:$0xff] %v1530
      %2499 = vst [vmem:[%s2348] ss:$9 sm:$0xff] %v1533
      %2500 = vst [vmem:[%s2350] ss:$9 sm:$0xff] %v1536
      %2501 = vst [vmem:[%s2352] ss:$9 sm:$0xff] %v1539
      %2502 = vst [vmem:[%s2354] ss:$9 sm:$0xff] %v1542
      %2503 = vst [vmem:[%s2356] ss:$9 sm:$0xff] %v1545
      %2504 = vst [vmem:[%s2358] ss:$9 sm:$0xff] %v1548
      %2505 = vst [vmem:[%s2360] ss:$9 sm:$0xff] %v1551
      %v2506 = vld [vmem:[#allocation1] sm:$0xff]
      %2507 = vst [vmem:[#allocation1] ss:$9 sm:$0xff] %v1554
      %2508 = vst [vmem:[%s2348] ss:$9 sm:$0xff] %v1557
      %2509 = vst [vmem:[%s2350] ss:$9 sm:$0xff] %v1560
      %2510 = vst [vmem:[%s2352] ss:$9 sm:$0xff] %v1563
      %2511 = vst [vmem:[%s2354] ss:$9 sm:$0xff] %v1566
      %2512 = vst [vmem:[%s2356] ss:$9 sm:$0xff] %v1569
      %2513 = vst [vmem:[%s2358] ss:$9 sm:$0xff] %v1572
      %2514 = vst [vmem:[%s2360] ss:$9 sm:$0xff] %v1575
      %v2515 = vld [vmem:[#allocation1] sm:$0xff]
      %v2518 = vunpack.c.l.b16 %v2345
      %v2519 = vunpack.c.l.b16 %v2346
      %v2520 = vpack.c.b16 %v2519, %v2518
      %v2521 = vsel %vm1848, %v2362, 0
      %v2523 = vsel %vm1848, %v2371, 0
      %v2525 = vsel %vm1848, %v2380, 0
      %v2527 = vsel %vm1848, %v2389, 0
      %v2529 = vsel %vm1848, %v2398, 0
      %v2531 = vsel %vm1848, %v2407, 0
      %v2533 = vsel %vm1848, %v2416, 0
      %v2535 = vsel %vm1848, %v2425, 0
      %v2537 = vsel %vm1848, %v2434, 0
      %v2539 = vsel %vm1848, %v2443, 0
      %v2541 = vsel %vm1848, %v2452, 0
      %v2543 = vsel %vm1848, %v2461, 0
      %v2545 = vsel %vm1848, %v2470, 0
      %v2547 = vsel %vm1848, %v2479, 0
      %v2549 = vsel %vm1848, %v2488, 0
      %v2551 = vsel %vm1848, %v2497, 0
      %v2553 = vsel %vm1848, %v2506, 0
      %v2555 = vsel %vm1848, %v2515, 0
      %v2558 = vsel %vm1885, %v2520, 0
      %2560 = vmatpush.bf16.msra.mxu0 0
      %2561 = vmatpush.bf16.msra.mxu0 0
      %2562 = vmatpush.bf16.msra.mxu0 0
      %2563 = vmatpush.bf16.msra.mxu0 0
      %2564 = vmatpush.bf16.msra.mxu0 0
      %2565 = vmatpush.bf16.msra.mxu0 0
      %2566 = vmatpush.bf16.msra.mxu0 0
      %2567 = vmatpush.bf16.msra.mxu0 %v2558
      %2568 = vmatmul.bf16.gmra.mxu0 %v2521
      %v2569 = vpop.f32.mrf.mxu0
      %v2570 = vadd.f32 0.0, %v2569
      %v2571 = vpop.f32.mrf.mxu0
      %v2572 = vadd.f32 0.0, %v2571
      %2573 = vmatmul.bf16.gmra.mxu0 %v2523
      %v2574 = vpop.f32.mrf.mxu0
      %v2575 = vadd.f32 0.0, %v2574
      %v2576 = vpop.f32.mrf.mxu0
      %v2577 = vadd.f32 0.0, %v2576
      %2578 = vmatmul.bf16.gmra.mxu0 %v2525
      %v2579 = vpop.f32.mrf.mxu0
      %v2580 = vadd.f32 0.0, %v2579
      %v2581 = vpop.f32.mrf.mxu0
      %v2582 = vadd.f32 0.0, %v2581
      %2583 = vmatmul.bf16.gmra.mxu0 %v2527
      %v2584 = vpop.f32.mrf.mxu0
      %v2585 = vadd.f32 0.0, %v2584
      %v2586 = vpop.f32.mrf.mxu0
      %v2587 = vadd.f32 0.0, %v2586
      %2588 = vmatmul.bf16.gmra.mxu0 %v2529
      %v2589 = vpop.f32.mrf.mxu0
      %v2590 = vadd.f32 0.0, %v2589
      %v2591 = vpop.f32.mrf.mxu0
      %v2592 = vadd.f32 0.0, %v2591
      %2593 = vmatmul.bf16.gmra.mxu0 %v2531
      %v2594 = vpop.f32.mrf.mxu0
      %v2595 = vadd.f32 0.0, %v2594
      %v2596 = vpop.f32.mrf.mxu0
      %v2597 = vadd.f32 0.0, %v2596
      %2598 = vmatmul.bf16.gmra.mxu0 %v2533
      %v2599 = vpop.f32.mrf.mxu0
      %v2600 = vadd.f32 0.0, %v2599
      %v2601 = vpop.f32.mrf.mxu0
      %v2602 = vadd.f32 0.0, %v2601
      %2603 = vmatmul.bf16.gmra.mxu0 %v2535
      %v2604 = vpop.f32.mrf.mxu0
      %v2605 = vadd.f32 0.0, %v2604
      %v2606 = vpop.f32.mrf.mxu0
      %v2607 = vadd.f32 0.0, %v2606
      %2608 = vmatmul.bf16.gmra.mxu0 %v2537
      %v2609 = vpop.f32.mrf.mxu0
      %v2610 = vadd.f32 0.0, %v2609
      %v2611 = vpop.f32.mrf.mxu0
      %v2612 = vadd.f32 0.0, %v2611
      %2613 = vmatmul.bf16.gmra.mxu0 %v2539
      %v2614 = vpop.f32.mrf.mxu0
      %v2615 = vadd.f32 0.0, %v2614
      %v2616 = vpop.f32.mrf.mxu0
      %v2617 = vadd.f32 0.0, %v2616
      %2618 = vmatmul.bf16.gmra.mxu0 %v2541
      %v2619 = vpop.f32.mrf.mxu0
      %v2620 = vadd.f32 0.0, %v2619
      %v2621 = vpop.f32.mrf.mxu0
      %v2622 = vadd.f32 0.0, %v2621
      %2623 = vmatmul.bf16.gmra.mxu0 %v2543
      %v2624 = vpop.f32.mrf.mxu0
      %v2625 = vadd.f32 0.0, %v2624
      %v2626 = vpop.f32.mrf.mxu0
      %v2627 = vadd.f32 0.0, %v2626
      %2628 = vmatmul.bf16.gmra.mxu0 %v2545
      %v2629 = vpop.f32.mrf.mxu0
      %v2630 = vadd.f32 0.0, %v2629
      %v2631 = vpop.f32.mrf.mxu0
      %v2632 = vadd.f32 0.0, %v2631
      %2633 = vmatmul.bf16.gmra.mxu0 %v2547
      %v2634 = vpop.f32.mrf.mxu0
      %v2635 = vadd.f32 0.0, %v2634
      %v2636 = vpop.f32.mrf.mxu0
      %v2637 = vadd.f32 0.0, %v2636
      %2638 = vmatmul.bf16.gmra.mxu0 %v2549
      %v2639 = vpop.f32.mrf.mxu0
      %v2640 = vadd.f32 0.0, %v2639
      %v2641 = vpop.f32.mrf.mxu0
      %v2642 = vadd.f32 0.0, %v2641
      %2643 = vmatmul.bf16.gmra.mxu0 %v2551
      %v2644 = vpop.f32.mrf.mxu0
      %v2645 = vadd.f32 0.0, %v2644
      %v2646 = vpop.f32.mrf.mxu0
      %v2647 = vadd.f32 0.0, %v2646
      %2648 = vmatmul.bf16.gmra.mxu0 %v2553
      %v2649 = vpop.f32.mrf.mxu0
      %v2650 = vadd.f32 0.0, %v2649
      %v2651 = vpop.f32.mrf.mxu0
      %v2652 = vadd.f32 0.0, %v2651
      %2653 = vmatmul.bf16.gmra.mxu0 %v2555
      %v2654 = vpop.f32.mrf.mxu0
      %v2655 = vadd.f32 0.0, %v2654
      %v2656 = vpop.f32.mrf.mxu0
      %v2657 = vadd.f32 0.0, %v2656
      %2658 = vdwg.mxu0
      %v2695 = vrot.slane %v2570, 2
      %v2696 = vrot.slane %v2570, 4
      %v2697 = vrot.slane %v2570, 6
      %v2698 = vrot.slane %v2572, 2
      %v2699 = vrot.slane %v2572, 4
      %v2700 = vrot.slane %v2572, 6
      %v2701 = vrot.slane %v2575, 2
      %v2702 = vrot.slane %v2575, 4
      %v2703 = vrot.slane %v2575, 6
      %v2704 = vrot.slane %v2577, 2
      %v2705 = vrot.slane %v2577, 4
      %v2706 = vrot.slane %v2577, 6
      %v2707 = vrot.slane %v2580, 2
      %v2708 = vrot.slane %v2580, 4
      %v2709 = vrot.slane %v2580, 6
      %v2710 = vrot.slane %v2582, 2
      %v2711 = vrot.slane %v2582, 4
      %v2712 = vrot.slane %v2582, 6
      %v2713 = vrot.slane %v2585, 2
      %v2714 = vrot.slane %v2585, 4
      %v2715 = vrot.slane %v2585, 6
      %v2716 = vrot.slane %v2587, 2
      %v2717 = vrot.slane %v2587, 4
      %v2718 = vrot.slane %v2587, 6
      %v2719 = vrot.slane %v2590, 2
      %v2720 = vrot.slane %v2590, 4
      %v2721 = vrot.slane %v2590, 6
      %v2722 = vrot.slane %v2592, 2
      %v2723 = vrot.slane %v2592, 4
      %v2724 = vrot.slane %v2592, 6
      %v2725 = vrot.slane %v2595, 2
      %v2726 = vrot.slane %v2595, 4
      %v2727 = vrot.slane %v2595, 6
      %v2728 = vrot.slane %v2597, 2
      %v2729 = vrot.slane %v2597, 4
      %v2730 = vrot.slane %v2597, 6
      %v2731 = vrot.slane %v2600, 2
      %v2732 = vrot.slane %v2600, 4
      %v2733 = vrot.slane %v2600, 6
      %v2734 = vrot.slane %v2602, 2
      %v2735 = vrot.slane %v2602, 4
      %v2736 = vrot.slane %v2602, 6
      %v2737 = vrot.slane %v2605, 2
      %v2738 = vrot.slane %v2605, 4
      %v2739 = vrot.slane %v2605, 6
      %v2740 = vrot.slane %v2607, 2
      %v2741 = vrot.slane %v2607, 4
      %v2742 = vrot.slane %v2607, 6
      %v2743 = vrot.slane %v2610, 2
      %v2744 = vrot.slane %v2610, 4
      %v2745 = vrot.slane %v2610, 6
      %v2746 = vrot.slane %v2612, 2
      %v2747 = vrot.slane %v2612, 4
      %v2748 = vrot.slane %v2612, 6
      %v2749 = vrot.slane %v2615, 2
      %v2750 = vrot.slane %v2615, 4
      %v2751 = vrot.slane %v2615, 6
      %v2752 = vrot.slane %v2617, 2
      %v2753 = vrot.slane %v2617, 4
      %v2754 = vrot.slane %v2617, 6
      %v2755 = vrot.slane %v2620, 2
      %v2756 = vrot.slane %v2620, 4
      %v2757 = vrot.slane %v2620, 6
      %v2758 = vrot.slane %v2622, 2
      %v2759 = vrot.slane %v2622, 4
      %v2760 = vrot.slane %v2622, 6
      %v2761 = vrot.slane %v2625, 2
      %v2762 = vrot.slane %v2625, 4
      %v2763 = vrot.slane %v2625, 6
      %v2764 = vrot.slane %v2627, 2
      %v2765 = vrot.slane %v2627, 4
      %v2766 = vrot.slane %v2627, 6
      %v2767 = vrot.slane %v2630, 2
      %v2768 = vrot.slane %v2630, 4
      %v2769 = vrot.slane %v2630, 6
      %v2770 = vrot.slane %v2632, 2
      %v2771 = vrot.slane %v2632, 4
      %v2772 = vrot.slane %v2632, 6
      %v2773 = vrot.slane %v2635, 2
      %v2774 = vrot.slane %v2635, 4
      %v2775 = vrot.slane %v2635, 6
      %v2776 = vrot.slane %v2637, 2
      %v2777 = vrot.slane %v2637, 4
      %v2778 = vrot.slane %v2637, 6
      %v2779 = vrot.slane %v2640, 2
      %v2780 = vrot.slane %v2640, 4
      %v2781 = vrot.slane %v2640, 6
      %v2782 = vrot.slane %v2642, 2
      %v2783 = vrot.slane %v2642, 4
      %v2784 = vrot.slane %v2642, 6
      %v2785 = vrot.slane %v2645, 2
      %v2786 = vrot.slane %v2645, 4
      %v2787 = vrot.slane %v2645, 6
      %v2788 = vrot.slane %v2647, 2
      %v2789 = vrot.slane %v2647, 4
      %v2790 = vrot.slane %v2647, 6
      %v2791 = vrot.slane %v2650, 2
      %v2792 = vrot.slane %v2650, 4
      %v2793 = vrot.slane %v2650, 6
      %v2794 = vrot.slane %v2652, 2
      %v2795 = vrot.slane %v2652, 4
      %v2796 = vrot.slane %v2652, 6
      %v2797 = vrot.slane %v2655, 2
      %v2798 = vrot.slane %v2655, 4
      %v2799 = vrot.slane %v2655, 6
      %v2800 = vrot.slane %v2657, 2
      %v2801 = vrot.slane %v2657, 4
      %v2802 = vrot.slane %v2657, 6
      %vm2803 = vmor %vm1140, %vm1148
      %vm2804 = vcmask 1044484
      %vm2805 = vmor %vm2803, %vm2804
      %vm2806 = vcmask 1046534
      %vm2807 = vmor %vm2805, %vm2806
      %v2808 = vrot.slane %v2570, 7
      %v2809 = vrot.slane %v2808, 2
      %v2810 = vrot.slane %v2695, 7
      %v2811 = vsel %vm2807, %v2809, %v2810
      %v2812 = vrot.slane %v2810, 2
      %v2813 = vrot.slane %v2696, 7
      %v2814 = vsel %vm2807, %v2812, %v2813
      %v2815 = vrot.slane %v2813, 2
      %v2816 = vrot.slane %v2697, 7
      %v2817 = vsel %vm2807, %v2815, %v2816
      %v2818 = vrot.slane %v2816, 2
      %v2819 = vrot.slane %v2572, 7
      %v2820 = vsel %vm2807, %v2818, %v2819
      %v2821 = vrot.slane %v2819, 2
      %v2822 = vrot.slane %v2698, 7
      %v2823 = vsel %vm2807, %v2821, %v2822
      %v2824 = vrot.slane %v2822, 2
      %v2825 = vrot.slane %v2699, 7
      %v2826 = vsel %vm2807, %v2824, %v2825
      %v2827 = vrot.slane %v2825, 2
      %v2828 = vrot.slane %v2700, 7
      %v2829 = vsel %vm2807, %v2827, %v2828
      %v2830 = vrot.slane %v2828, 2
      %v2831 = vrot.slane %v2575, 7
      %v2832 = vsel %vm2807, %v2830, %v2831
      %v2833 = vrot.slane %v2701, 7
      %v2834 = vrot.slane %v2833, 2
      %v2835 = vrot.slane %v2702, 7
      %v2836 = vsel %vm2807, %v2834, %v2835
      %v2837 = vrot.slane %v2835, 2
      %v2838 = vrot.slane %v2703, 7
      %v2839 = vsel %vm2807, %v2837, %v2838
      %v2840 = vrot.slane %v2838, 2
      %v2841 = vrot.slane %v2577, 7
      %v2842 = vsel %vm2807, %v2840, %v2841
      %v2843 = vrot.slane %v2841, 2
      %v2844 = vrot.slane %v2704, 7
      %v2845 = vsel %vm2807, %v2843, %v2844
      %v2846 = vrot.slane %v2844, 2
      %v2847 = vrot.slane %v2705, 7
      %v2848 = vsel %vm2807, %v2846, %v2847
      %v2849 = vrot.slane %v2847, 2
      %v2850 = vrot.slane %v2706, 7
      %v2851 = vsel %vm2807, %v2849, %v2850
      %v2852 = vrot.slane %v2850, 2
      %v2853 = vrot.slane %v2580, 7
      %v2854 = vsel %vm2807, %v2852, %v2853
      %v2855 = vrot.slane %v2853, 2
      %v2856 = vrot.slane %v2707, 7
      %v2857 = vsel %vm2807, %v2855, %v2856
      %v2858 = vrot.slane %v2708, 7
      %v2859 = vrot.slane %v2858, 2
      %v2860 = vrot.slane %v2709, 7
      %v2861 = vsel %vm2807, %v2859, %v2860
      %v2862 = vrot.slane %v2860, 2
      %v2863 = vrot.slane %v2582, 7
      %v2864 = vsel %vm2807, %v2862, %v2863
      %v2865 = vrot.slane %v2863, 2
      %v2866 = vrot.slane %v2710, 7
      %v2867 = vsel %vm2807, %v2865, %v2866
      %v2868 = vrot.slane %v2866, 2
      %v2869 = vrot.slane %v2711, 7
      %v2870 = vsel %vm2807, %v2868, %v2869
      %v2871 = vrot.slane %v2869, 2
      %v2872 = vrot.slane %v2712, 7
      %v2873 = vsel %vm2807, %v2871, %v2872
      %v2874 = vrot.slane %v2872, 2
      %v2875 = vrot.slane %v2585, 7
      %v2876 = vsel %vm2807, %v2874, %v2875
      %v2877 = vrot.slane %v2875, 2
      %v2878 = vrot.slane %v2713, 7
      %v2879 = vsel %vm2807, %v2877, %v2878
      %v2880 = vrot.slane %v2878, 2
      %v2881 = vrot.slane %v2714, 7
      %v2882 = vsel %vm2807, %v2880, %v2881
      %v2883 = vrot.slane %v2715, 7
      %v2884 = vrot.slane %v2883, 2
      %v2885 = vrot.slane %v2587, 7
      %v2886 = vsel %vm2807, %v2884, %v2885
      %v2887 = vrot.slane %v2885, 2
      %v2888 = vrot.slane %v2716, 7
      %v2889 = vsel %vm2807, %v2887, %v2888
      %v2890 = vrot.slane %v2888, 2
      %v2891 = vrot.slane %v2717, 7
      %v2892 = vsel %vm2807, %v2890, %v2891
      %v2893 = vrot.slane %v2891, 2
      %v2894 = vrot.slane %v2718, 7
      %v2895 = vsel %vm2807, %v2893, %v2894
      %v2896 = vrot.slane %v2894, 2
      %v2897 = vrot.slane %v2590, 7
      %v2898 = vsel %vm2807, %v2896, %v2897
      %v2899 = vrot.slane %v2897, 2
      %v2900 = vrot.slane %v2719, 7
      %v2901 = vsel %vm2807, %v2899, %v2900
      %v2902 = vrot.slane %v2900, 2
      %v2903 = vrot.slane %v2720, 7
      %v2904 = vsel %vm2807, %v2902, %v2903
      %v2905 = vrot.slane %v2903, 2
      %v2906 = vrot.slane %v2721, 7
      %v2907 = vsel %vm2807, %v2905, %v2906
      %v2908 = vrot.slane %v2592, 7
      %v2909 = vrot.slane %v2908, 2
      %v2910 = vrot.slane %v2722, 7
      %v2911 = vsel %vm2807, %v2909, %v2910
      %v2912 = vrot.slane %v2910, 2
      %v2913 = vrot.slane %v2723, 7
      %v2914 = vsel %vm2807, %v2912, %v2913
      %v2915 = vrot.slane %v2913, 2
      %v2916 = vrot.slane %v2724, 7
      %v2917 = vsel %vm2807, %v2915, %v2916
      %v2918 = vrot.slane %v2916, 2
      %v2919 = vrot.slane %v2595, 7
      %v2920 = vsel %vm2807, %v2918, %v2919
      %v2921 = vrot.slane %v2919, 2
      %v2922 = vrot.slane %v2725, 7
      %v2923 = vsel %vm2807, %v2921, %v2922
      %v2924 = vrot.slane %v2922, 2
      %v2925 = vrot.slane %v2726, 7
      %v2926 = vsel %vm2807, %v2924, %v2925
      %v2927 = vrot.slane %v2925, 2
      %v2928 = vrot.slane %v2727, 7
      %v2929 = vsel %vm2807, %v2927, %v2928
      %v2930 = vrot.slane %v2928, 2
      %v2931 = vrot.slane %v2597, 7
      %v2932 = vsel %vm2807, %v2930, %v2931
      %v2933 = vrot.slane %v2728, 7
      %v2934 = vrot.slane %v2933, 2
      %v2935 = vrot.slane %v2729, 7
      %v2936 = vsel %vm2807, %v2934, %v2935
      %v2937 = vrot.slane %v2935, 2
      %v2938 = vrot.slane %v2730, 7
      %v2939 = vsel %vm2807, %v2937, %v2938
      %v2940 = vrot.slane %v2938, 2
      %v2941 = vrot.slane %v2600, 7
      %v2942 = vsel %vm2807, %v2940, %v2941
      %v2943 = vrot.slane %v2941, 2
      %v2944 = vrot.slane %v2731, 7
      %v2945 = vsel %vm2807, %v2943, %v2944
      %v2946 = vrot.slane %v2944, 2
      %v2947 = vrot.slane %v2732, 7
      %v2948 = vsel %vm2807, %v2946, %v2947
      %v2949 = vrot.slane %v2947, 2
      %v2950 = vrot.slane %v2733, 7
      %v2951 = vsel %vm2807, %v2949, %v2950
      %v2952 = vrot.slane %v2950, 2
      %v2953 = vrot.slane %v2602, 7
      %v2954 = vsel %vm2807, %v2952, %v2953
      %v2955 = vrot.slane %v2953, 2
      %v2956 = vrot.slane %v2734, 7
      %v2957 = vsel %vm2807, %v2955, %v2956
      %v2958 = vrot.slane %v2735, 7
      %v2959 = vrot.slane %v2958, 2
      %v2960 = vrot.slane %v2736, 7
      %v2961 = vsel %vm2807, %v2959, %v2960
      %v2962 = vrot.slane %v2960, 2
      %v2963 = vrot.slane %v2605, 7
      %v2964 = vsel %vm2807, %v2962, %v2963
      %v2965 = vrot.slane %v2963, 2
      %v2966 = vrot.slane %v2737, 7
      %v2967 = vsel %vm2807, %v2965, %v2966
      %v2968 = vrot.slane %v2966, 2
      %v2969 = vrot.slane %v2738, 7
      %v2970 = vsel %vm2807, %v2968, %v2969
      %v2971 = vrot.slane %v2969, 2
      %v2972 = vrot.slane %v2739, 7
      %v2973 = vsel %vm2807, %v2971, %v2972
      %v2974 = vrot.slane %v2972, 2
      %v2975 = vrot.slane %v2607, 7
      %v2976 = vsel %vm2807, %v2974, %v2975
      %v2977 = vrot.slane %v2975, 2
      %v2978 = vrot.slane %v2740, 7
      %v2979 = vsel %vm2807, %v2977, %v2978
      %v2980 = vrot.slane %v2978, 2
      %v2981 = vrot.slane %v2741, 7
      %v2982 = vsel %vm2807, %v2980, %v2981
      %v2983 = vrot.slane %v2742, 7
      %v2984 = vrot.slane %v2983, 2
      %v2985 = vrot.slane %v2610, 7
      %v2986 = vsel %vm2807, %v2984, %v2985
      %v2987 = vrot.slane %v2985, 2
      %v2988 = vrot.slane %v2743, 7
      %v2989 = vsel %vm2807, %v2987, %v2988
      %v2990 = vrot.slane %v2988, 2
      %v2991 = vrot.slane %v2744, 7
      %v2992 = vsel %vm2807, %v2990, %v2991
      %v2993 = vrot.slane %v2991, 2
      %v2994 = vrot.slane %v2745, 7
      %v2995 = vsel %vm2807, %v2993, %v2994
      %v2996 = vrot.slane %v2994, 2
      %v2997 = vrot.slane %v2612, 7
      %v2998 = vsel %vm2807, %v2996, %v2997
      %v2999 = vrot.slane %v2997, 2
      %v3000 = vrot.slane %v2746, 7
      %v3001 = vsel %vm2807, %v2999, %v3000
      %v3002 = vrot.slane %v3000, 2
      %v3003 = vrot.slane %v2747, 7
      %v3004 = vsel %vm2807, %v3002, %v3003
      %v3005 = vrot.slane %v3003, 2
      %v3006 = vrot.slane %v2748, 7
      %v3007 = vsel %vm2807, %v3005, %v3006
      %v3008 = vrot.slane %v2615, 7
      %v3009 = vrot.slane %v3008, 2
      %v3010 = vrot.slane %v2749, 7
      %v3011 = vsel %vm2807, %v3009, %v3010
      %v3012 = vrot.slane %v3010, 2
      %v3013 = vrot.slane %v2750, 7
      %v3014 = vsel %vm2807, %v3012, %v3013
      %v3015 = vrot.slane %v3013, 2
      %v3016 = vrot.slane %v2751, 7
      %v3017 = vsel %vm2807, %v3015, %v3016
      %v3018 = vrot.slane %v3016, 2
      %v3019 = vrot.slane %v2617, 7
      %v3020 = vsel %vm2807, %v3018, %v3019
      %v3021 = vrot.slane %v3019, 2
      %v3022 = vrot.slane %v2752, 7
      %v3023 = vsel %vm2807, %v3021, %v3022
      %v3024 = vrot.slane %v3022, 2
      %v3025 = vrot.slane %v2753, 7
      %v3026 = vsel %vm2807, %v3024, %v3025
      %v3027 = vrot.slane %v3025, 2
      %v3028 = vrot.slane %v2754, 7
      %v3029 = vsel %vm2807, %v3027, %v3028
      %v3030 = vrot.slane %v3028, 2
      %v3031 = vrot.slane %v2620, 7
      %v3032 = vsel %vm2807, %v3030, %v3031
      %v3033 = vrot.slane %v2755, 7
      %v3034 = vrot.slane %v3033, 2
      %v3035 = vrot.slane %v2756, 7
      %v3036 = vsel %vm2807, %v3034, %v3035
      %v3037 = vrot.slane %v3035, 2
      %v3038 = vrot.slane %v2757, 7
      %v3039 = vsel %vm2807, %v3037, %v3038
      %v3040 = vrot.slane %v3038, 2
      %v3041 = vrot.slane %v2622, 7
      %v3042 = vsel %vm2807, %v3040, %v3041
      %v3043 = vrot.slane %v3041, 2
      %v3044 = vrot.slane %v2758, 7
      %v3045 = vsel %vm2807, %v3043, %v3044
      %v3046 = vrot.slane %v3044, 2
      %v3047 = vrot.slane %v2759, 7
      %v3048 = vsel %vm2807, %v3046, %v3047
      %v3049 = vrot.slane %v3047, 2
      %v3050 = vrot.slane %v2760, 7
      %v3051 = vsel %vm2807, %v3049, %v3050
      %v3052 = vrot.slane %v3050, 2
      %v3053 = vrot.slane %v2625, 7
      %v3054 = vsel %vm2807, %v3052, %v3053
      %v3055 = vrot.slane %v3053, 2
      %v3056 = vrot.slane %v2761, 7
      %v3057 = vsel %vm2807, %v3055, %v3056
      %v3058 = vrot.slane %v2762, 7
      %v3059 = vrot.slane %v3058, 2
      %v3060 = vrot.slane %v2763, 7
      %v3061 = vsel %vm2807, %v3059, %v3060
      %v3062 = vrot.slane %v3060, 2
      %v3063 = vrot.slane %v2627, 7
      %v3064 = vsel %vm2807, %v3062, %v3063
      %v3065 = vrot.slane %v3063, 2
      %v3066 = vrot.slane %v2764, 7
      %v3067 = vsel %vm2807, %v3065, %v3066
      %v3068 = vrot.slane %v3066, 2
      %v3069 = vrot.slane %v2765, 7
      %v3070 = vsel %vm2807, %v3068, %v3069
      %v3071 = vrot.slane %v3069, 2
      %v3072 = vrot.slane %v2766, 7
      %v3073 = vsel %vm2807, %v3071, %v3072
      %v3074 = vrot.slane %v3072, 2
      %v3075 = vrot.slane %v2630, 7
      %v3076 = vsel %vm2807, %v3074, %v3075
      %v3077 = vrot.slane %v3075, 2
      %v3078 = vrot.slane %v2767, 7
      %v3079 = vsel %vm2807, %v3077, %v3078
      %v3080 = vrot.slane %v3078, 2
      %v3081 = vrot.slane %v2768, 7
      %v3082 = vsel %vm2807, %v3080, %v3081
      %v3083 = vrot.slane %v2769, 7
      %v3084 = vrot.slane %v3083, 2
      %v3085 = vrot.slane %v2632, 7
      %v3086 = vsel %vm2807, %v3084, %v3085
      %v3087 = vrot.slane %v3085, 2
      %v3088 = vrot.slane %v2770, 7
      %v3089 = vsel %vm2807, %v3087, %v3088
      %v3090 = vrot.slane %v3088, 2
      %v3091 = vrot.slane %v2771, 7
      %v3092 = vsel %vm2807, %v3090, %v3091
      %v3093 = vrot.slane %v3091, 2
      %v3094 = vrot.slane %v2772, 7
      %v3095 = vsel %vm2807, %v3093, %v3094
      %v3096 = vrot.slane %v3094, 2
      %v3097 = vrot.slane %v2635, 7
      %v3098 = vsel %vm2807, %v3096, %v3097
      %v3099 = vrot.slane %v3097, 2
      %v3100 = vrot.slane %v2773, 7
      %v3101 = vsel %vm2807, %v3099, %v3100
      %v3102 = vrot.slane %v3100, 2
      %v3103 = vrot.slane %v2774, 7
      %v3104 = vsel %vm2807, %v3102, %v3103
      %v3105 = vrot.slane %v3103, 2
      %v3106 = vrot.slane %v2775, 7
      %v3107 = vsel %vm2807, %v3105, %v3106
      %v3108 = vrot.slane %v2637, 7
      %v3109 = vrot.slane %v3108, 2
      %v3110 = vrot.slane %v2776, 7
      %v3111 = vsel %vm2807, %v3109, %v3110
      %v3112 = vrot.slane %v3110, 2
      %v3113 = vrot.slane %v2777, 7
      %v3114 = vsel %vm2807, %v3112, %v3113
      %v3115 = vrot.slane %v3113, 2
      %v3116 = vrot.slane %v2778, 7
      %v3117 = vsel %vm2807, %v3115, %v3116
      %v3118 = vrot.slane %v3116, 2
      %v3119 = vrot.slane %v2640, 7
      %v3120 = vsel %vm2807, %v3118, %v3119
      %v3121 = vrot.slane %v3119, 2
      %v3122 = vrot.slane %v2779, 7
      %v3123 = vsel %vm2807, %v3121, %v3122
      %v3124 = vrot.slane %v3122, 2
      %v3125 = vrot.slane %v2780, 7
      %v3126 = vsel %vm2807, %v3124, %v3125
      %v3127 = vrot.slane %v3125, 2
      %v3128 = vrot.slane %v2781, 7
      %v3129 = vsel %vm2807, %v3127, %v3128
      %v3130 = vrot.slane %v3128, 2
      %v3131 = vrot.slane %v2642, 7
      %v3132 = vsel %vm2807, %v3130, %v3131
      %v3133 = vrot.slane %v2782, 7
      %v3134 = vrot.slane %v3133, 2
      %v3135 = vrot.slane %v2783, 7
      %v3136 = vsel %vm2807, %v3134, %v3135
      %v3137 = vrot.slane %v3135, 2
      %v3138 = vrot.slane %v2784, 7
      %v3139 = vsel %vm2807, %v3137, %v3138
      %v3140 = vrot.slane %v3138, 2
      %v3141 = vrot.slane %v2645, 7
      %v3142 = vsel %vm2807, %v3140, %v3141
      %v3143 = vrot.slane %v3141, 2
      %v3144 = vrot.slane %v2785, 7
      %v3145 = vsel %vm2807, %v3143, %v3144
      %v3146 = vrot.slane %v3144, 2
      %v3147 = vrot.slane %v2786, 7
      %v3148 = vsel %vm2807, %v3146, %v3147
      %v3149 = vrot.slane %v3147, 2
      %v3150 = vrot.slane %v2787, 7
      %v3151 = vsel %vm2807, %v3149, %v3150
      %v3152 = vrot.slane %v3150, 2
      %v3153 = vrot.slane %v2647, 7
      %v3154 = vsel %vm2807, %v3152, %v3153
      %v3155 = vrot.slane %v3153, 2
      %v3156 = vrot.slane %v2788, 7
      %v3157 = vsel %vm2807, %v3155, %v3156
      %v3158 = vrot.slane %v2789, 7
      %v3159 = vrot.slane %v3158, 2
      %v3160 = vrot.slane %v2790, 7
      %v3161 = vsel %vm2807, %v3159, %v3160
      %v3162 = vrot.slane %v3160, 2
      %v3163 = vrot.slane %v2650, 7
      %v3164 = vsel %vm2807, %v3162, %v3163
      %v3165 = vrot.slane %v3163, 2
      %v3166 = vrot.slane %v2791, 7
      %v3167 = vsel %vm2807, %v3165, %v3166
      %v3168 = vrot.slane %v3166, 2
      %v3169 = vrot.slane %v2792, 7
      %v3170 = vsel %vm2807, %v3168, %v3169
      %v3171 = vrot.slane %v3169, 2
      %v3172 = vrot.slane %v2793, 7
      %v3173 = vsel %vm2807, %v3171, %v3172
      %v3174 = vrot.slane %v3172, 2
      %v3175 = vrot.slane %v2652, 7
      %v3176 = vsel %vm2807, %v3174, %v3175
      %v3177 = vrot.slane %v3175, 2
      %v3178 = vrot.slane %v2794, 7
      %v3179 = vsel %vm2807, %v3177, %v3178
      %v3180 = vrot.slane %v3178, 2
      %v3181 = vrot.slane %v2795, 7
      %v3182 = vsel %vm2807, %v3180, %v3181
      %v3183 = vrot.slane %v2796, 7
      %v3184 = vrot.slane %v3183, 2
      %v3185 = vrot.slane %v2655, 7
      %v3186 = vsel %vm2807, %v3184, %v3185
      %v3187 = vrot.slane %v3185, 2
      %v3188 = vrot.slane %v2797, 7
      %v3189 = vsel %vm2807, %v3187, %v3188
      %v3190 = vrot.slane %v3188, 2
      %v3191 = vrot.slane %v2798, 7
      %v3192 = vsel %vm2807, %v3190, %v3191
      %v3193 = vrot.slane %v3191, 2
      %v3194 = vrot.slane %v2799, 7
      %v3195 = vsel %vm2807, %v3193, %v3194
      %v3196 = vrot.slane %v3194, 2
      %v3197 = vrot.slane %v2657, 7
      %v3198 = vsel %vm2807, %v3196, %v3197
      %v3199 = vrot.slane %v3197, 2
      %v3200 = vrot.slane %v2800, 7
      %v3201 = vsel %vm2807, %v3199, %v3200
      %v3202 = vrot.slane %v3200, 2
      %v3203 = vrot.slane %v2801, 7
      %v3204 = vsel %vm2807, %v3202, %v3203
      %v3205 = vrot.slane %v3203, 2
      %v3206 = vrot.slane %v2802, 7
      %v3207 = vsel %vm2807, %v3205, %v3206
      %v3336 = vadd.f32 %v2216, %v2811
      %v3337 = vadd.f32 %v2217, %v2814
      %v3338 = vadd.f32 %v2218, %v2817
      %v3339 = vadd.f32 %v2219, %v2820
      %v3340 = vadd.f32 %v2220, %v2823
      %v3341 = vadd.f32 %v2221, %v2826
      %v3342 = vadd.f32 %v2222, %v2829
      %v3343 = vadd.f32 %v2223, %v2832
      %v3344 = vadd.f32 %v2224, %v2836
      %v3345 = vadd.f32 %v2225, %v2839
      %v3346 = vadd.f32 %v2226, %v2842
      %v3347 = vadd.f32 %v2227, %v2845
      %v3348 = vadd.f32 %v2228, %v2848
      %v3349 = vadd.f32 %v2229, %v2851
      %v3350 = vadd.f32 %v2230, %v2854
      %v3351 = vadd.f32 %v2231, %v2857
      %v3352 = vadd.f32 %v2232, %v2861
      %v3353 = vadd.f32 %v2233, %v2864
      %v3354 = vadd.f32 %v2234, %v2867
      %v3355 = vadd.f32 %v2235, %v2870
      %v3356 = vadd.f32 %v2236, %v2873
      %v3357 = vadd.f32 %v2237, %v2876
      %v3358 = vadd.f32 %v2238, %v2879
      %v3359 = vadd.f32 %v2239, %v2882
      %v3360 = vadd.f32 %v2240, %v2886
      %v3361 = vadd.f32 %v2241, %v2889
      %v3362 = vadd.f32 %v2242, %v2892
      %v3363 = vadd.f32 %v2243, %v2895
      %v3364 = vadd.f32 %v2244, %v2898
      %v3365 = vadd.f32 %v2245, %v2901
      %v3366 = vadd.f32 %v2246, %v2904
      %v3367 = vadd.f32 %v2247, %v2907
      %v3368 = vadd.f32 %v2248, %v2911
      %v3369 = vadd.f32 %v2249, %v2914
      %v3370 = vadd.f32 %v2250, %v2917
      %v3371 = vadd.f32 %v2251, %v2920
      %v3372 = vadd.f32 %v2252, %v2923
      %v3373 = vadd.f32 %v2253, %v2926
      %v3374 = vadd.f32 %v2254, %v2929
      %v3375 = vadd.f32 %v2255, %v2932
      %v3376 = vadd.f32 %v2256, %v2936
      %v3377 = vadd.f32 %v2257, %v2939
      %v3378 = vadd.f32 %v2258, %v2942
      %v3379 = vadd.f32 %v2259, %v2945
      %v3380 = vadd.f32 %v2260, %v2948
      %v3381 = vadd.f32 %v2261, %v2951
      %v3382 = vadd.f32 %v2262, %v2954
      %v3383 = vadd.f32 %v2263, %v2957
      %v3384 = vadd.f32 %v2264, %v2961
      %v3385 = vadd.f32 %v2265, %v2964
      %v3386 = vadd.f32 %v2266, %v2967
      %v3387 = vadd.f32 %v2267, %v2970
      %v3388 = vadd.f32 %v2268, %v2973
      %v3389 = vadd.f32 %v2269, %v2976
      %v3390 = vadd.f32 %v2270, %v2979
      %v3391 = vadd.f32 %v2271, %v2982
      %v3392 = vadd.f32 %v2272, %v2986
      %v3393 = vadd.f32 %v2273, %v2989
      %v3394 = vadd.f32 %v2274, %v2992
      %v3395 = vadd.f32 %v2275, %v2995
      %v3396 = vadd.f32 %v2276, %v2998
      %v3397 = vadd.f32 %v2277, %v3001
      %v3398 = vadd.f32 %v2278, %v3004
      %v3399 = vadd.f32 %v2279, %v3007
      %v3400 = vadd.f32 %v2280, %v3011
      %v3401 = vadd.f32 %v2281, %v3014
      %v3402 = vadd.f32 %v2282, %v3017
      %v3403 = vadd.f32 %v2283, %v3020
      %v3404 = vadd.f32 %v2284, %v3023
      %v3405 = vadd.f32 %v2285, %v3026
      %v3406 = vadd.f32 %v2286, %v3029
      %v3407 = vadd.f32 %v2287, %v3032
      %v3408 = vadd.f32 %v2288, %v3036
      %v3409 = vadd.f32 %v2289, %v3039
      %v3410 = vadd.f32 %v2290, %v3042
      %v3411 = vadd.f32 %v2291, %v3045
      %v3412 = vadd.f32 %v2292, %v3048
      %v3413 = vadd.f32 %v2293, %v3051
      %v3414 = vadd.f32 %v2294, %v3054
      %v3415 = vadd.f32 %v2295, %v3057
      %v3416 = vadd.f32 %v2296, %v3061
      %v3417 = vadd.f32 %v2297, %v3064
      %v3418 = vadd.f32 %v2298, %v3067
      %v3419 = vadd.f32 %v2299, %v3070
      %v3420 = vadd.f32 %v2300, %v3073
      %v3421 = vadd.f32 %v2301, %v3076
      %v3422 = vadd.f32 %v2302, %v3079
      %v3423 = vadd.f32 %v2303, %v3082
      %v3424 = vadd.f32 %v2304, %v3086
      %v3425 = vadd.f32 %v2305, %v3089
      %v3426 = vadd.f32 %v2306, %v3092
      %v3427 = vadd.f32 %v2307, %v3095
      %v3428 = vadd.f32 %v2308, %v3098
      %v3429 = vadd.f32 %v2309, %v3101
      %v3430 = vadd.f32 %v2310, %v3104
      %v3431 = vadd.f32 %v2311, %v3107
      %v3432 = vadd.f32 %v2312, %v3111
      %v3433 = vadd.f32 %v2313, %v3114
      %v3434 = vadd.f32 %v2314, %v3117
      %v3435 = vadd.f32 %v2315, %v3120
      %v3436 = vadd.f32 %v2316, %v3123
      %v3437 = vadd.f32 %v2317, %v3126
      %v3438 = vadd.f32 %v2318, %v3129
      %v3439 = vadd.f32 %v2319, %v3132
      %v3440 = vadd.f32 %v2320, %v3136
      %v3441 = vadd.f32 %v2321, %v3139
      %v3442 = vadd.f32 %v2322, %v3142
      %v3443 = vadd.f32 %v2323, %v3145
      %v3444 = vadd.f32 %v2324, %v3148
      %v3445 = vadd.f32 %v2325, %v3151
      %v3446 = vadd.f32 %v2326, %v3154
      %v3447 = vadd.f32 %v2327, %v3157
      %v3448 = vadd.f32 %v2328, %v3161
      %v3449 = vadd.f32 %v2329, %v3164
      %v3450 = vadd.f32 %v2330, %v3167
      %v3451 = vadd.f32 %v2331, %v3170
      %v3452 = vadd.f32 %v2332, %v3173
      %v3453 = vadd.f32 %v2333, %v3176
      %v3454 = vadd.f32 %v2334, %v3179
      %v3455 = vadd.f32 %v2335, %v3182
      %v3456 = vadd.f32 %v2336, %v3186
      %v3457 = vadd.f32 %v2337, %v3189
      %v3458 = vadd.f32 %v2338, %v3192
      %v3459 = vadd.f32 %v2339, %v3195
      %v3460 = vadd.f32 %v2340, %v3198
      %v3461 = vadd.f32 %v2341, %v3201
      %v3462 = vadd.f32 %v2342, %v3204
      %v3463 = vadd.f32 %v2343, %v3207
      %s3464 = scalar_lea.vmem %s1, 16
      %v3465 = vld [vmem:[%s3464] sm:$0xf]
      %v3466 = vld [vmem:[%s3464 + $0x4] sm:$0x3]
      %3467 = vst [vmem:[#allocation1] ss:$9 sm:$0xff] %v1143
      %s3468 = scalar_lea.vmem [#allocation1], 1
      %3469 = vst [vmem:[%s3468] ss:$9 sm:$0xff] %v1147
      %s3470 = scalar_lea.vmem [#allocation1], 2
      %3471 = vst [vmem:[%s3470] ss:$9 sm:$0xff] %v1151
      %s3472 = scalar_lea.vmem [#allocation1], 3
      %3473 = vst [vmem:[%s3472] ss:$9 sm:$0xff] %v1155
      %s3474 = scalar_lea.vmem [#allocation1], 4
      %3475 = vst [vmem:[%s3474] ss:$9 sm:$0xff] %v1158
      %s3476 = scalar_lea.vmem [#allocation1], 5
      %3477 = vst [vmem:[%s3476] ss:$9 sm:$0xff] %v1161
      %s3478 = scalar_lea.vmem [#allocation1], 6
      %3479 = vst [vmem:[%s3478] ss:$9 sm:$0xff] %v1164
      %s3480 = scalar_lea.vmem [#allocation1], 7
      %3481 = vst [vmem:[%s3480] ss:$9 sm:$0xff] %v1167
      %v3482 = vld [vmem:[#allocation1] sm:$0xff]
      %3483 = vst [vmem:[#allocation1] ss:$9 sm:$0xff] %v1170
      %3484 = vst [vmem:[%s3468] ss:$9 sm:$0xff] %v1173
      %3485 = vst [vmem:[%s3470] ss:$9 sm:$0xff] %v1176
      %3486 = vst [vmem:[%s3472] ss:$9 sm:$0xff] %v1179
      %3487 = vst [vmem:[%s3474] ss:$9 sm:$0xff] %v1182
      %3488 = vst [vmem:[%s3476] ss:$9 sm:$0xff] %v1185
      %3489 = vst [vmem:[%s3478] ss:$9 sm:$0xff] %v1188
      %3490 = vst [vmem:[%s3480] ss:$9 sm:$0xff] %v1191
      %v3491 = vld [vmem:[#allocation1] sm:$0xff]
      %3492 = vst [vmem:[#allocation1] ss:$9 sm:$0xff] %v1194
      %3493 = vst [vmem:[%s3468] ss:$9 sm:$0xff] %v1197
      %3494 = vst [vmem:[%s3470] ss:$9 sm:$0xff] %v1200
      %3495 = vst [vmem:[%s3472] ss:$9 sm:$0xff] %v1203
      %3496 = vst [vmem:[%s3474] ss:$9 sm:$0xff] %v1206
      %3497 = vst [vmem:[%s3476] ss:$9 sm:$0xff] %v1209
      %3498 = vst [vmem:[%s3478] ss:$9 sm:$0xff] %v1212
      %3499 = vst [vmem:[%s3480] ss:$9 sm:$0xff] %v1215
      %v3500 = vld [vmem:[#allocation1] sm:$0xff]
      %3501 = vst [vmem:[#allocation1] ss:$9 sm:$0xff] %v1218
      %3502 = vst [vmem:[%s3468] ss:$9 sm:$0xff] %v1221
      %3503 = vst [vmem:[%s3470] ss:$9 sm:$0xff] %v1224
      %3504 = vst [vmem:[%s3472] ss:$9 sm:$0xff] %v1227
      %3505 = vst [vmem:[%s3474] ss:$9 sm:$0xff] %v1230
      %3506 = vst [vmem:[%s3476] ss:$9 sm:$0xff] %v1233
      %3507 = vst [vmem:[%s3478] ss:$9 sm:$0xff] %v1236
      %3508 = vst [vmem:[%s3480] ss:$9 sm:$0xff] %v1239
      %v3509 = vld [vmem:[#allocation1] sm:$0xff]
      %3510 = vst [vmem:[#allocation1] ss:$9 sm:$0xff] %v1242
      %3511 = vst [vmem:[%s3468] ss:$9 sm:$0xff] %v1245
      %3512 = vst [vmem:[%s3470] ss:$9 sm:$0xff] %v1248
      %3513 = vst [vmem:[%s3472] ss:$9 sm:$0xff] %v1251
      %3514 = vst [vmem:[%s3474] ss:$9 sm:$0xff] %v1254
      %3515 = vst [vmem:[%s3476] ss:$9 sm:$0xff] %v1257
      %3516 = vst [vmem:[%s3478] ss:$9 sm:$0xff] %v1260
      %3517 = vst [vmem:[%s3480] ss:$9 sm:$0xff] %v1263
      %v3518 = vld [vmem:[#allocation1] sm:$0xff]
      %3519 = vst [vmem:[#allocation1] ss:$9 sm:$0xff] %v1266
      %3520 = vst [vmem:[%s3468] ss:$9 sm:$0xff] %v1269
      %3521 = vst [vmem:[%s3470] ss:$9 sm:$0xff] %v1272
      %3522 = vst [vmem:[%s3472] ss:$9 sm:$0xff] %v1275
      %3523 = vst [vmem:[%s3474] ss:$9 sm:$0xff] %v1278
      %3524 = vst [vmem:[%s3476] ss:$9 sm:$0xff] %v1281
      %3525 = vst [vmem:[%s3478] ss:$9 sm:$0xff] %v1284
      %3526 = vst [vmem:[%s3480] ss:$9 sm:$0xff] %v1287
      %v3527 = vld [vmem:[#allocation1] sm:$0xff]
      %3528 = vst [vmem:[#allocation1] ss:$9 sm:$0xff] %v1290
      %3529 = vst [vmem:[%s3468] ss:$9 sm:$0xff] %v1293
      %3530 = vst [vmem:[%s3470] ss:$9 sm:$0xff] %v1296
      %3531 = vst [vmem:[%s3472] ss:$9 sm:$0xff] %v1299
      %3532 = vst [vmem:[%s3474] ss:$9 sm:$0xff] %v1302
      %3533 = vst [vmem:[%s3476] ss:$9 sm:$0xff] %v1305
      %3534 = vst [vmem:[%s3478] ss:$9 sm:$0xff] %v1308
      %3535 = vst [vmem:[%s3480] ss:$9 sm:$0xff] %v1311
      %v3536 = vld [vmem:[#allocation1] sm:$0xff]
      %3537 = vst [vmem:[#allocation1] ss:$9 sm:$0xff] %v1314
      %3538 = vst [vmem:[%s3468] ss:$9 sm:$0xff] %v1317
      %3539 = vst [vmem:[%s3470] ss:$9 sm:$0xff] %v1320
      %3540 = vst [vmem:[%s3472] ss:$9 sm:$0xff] %v1323
      %3541 = vst [vmem:[%s3474] ss:$9 sm:$0xff] %v1326
      %3542 = vst [vmem:[%s3476] ss:$9 sm:$0xff] %v1329
      %3543 = vst [vmem:[%s3478] ss:$9 sm:$0xff] %v1332
      %3544 = vst [vmem:[%s3480] ss:$9 sm:$0xff] %v1335
      %v3545 = vld [vmem:[#allocation1] sm:$0xff]
      %3546 = vst [vmem:[#allocation1] ss:$9 sm:$0xff] %v1338
      %3547 = vst [vmem:[%s3468] ss:$9 sm:$0xff] %v1341
      %3548 = vst [vmem:[%s3470] ss:$9 sm:$0xff] %v1344
      %3549 = vst [vmem:[%s3472] ss:$9 sm:$0xff] %v1347
      %3550 = vst [vmem:[%s3474] ss:$9 sm:$0xff] %v1350
      %3551 = vst [vmem:[%s3476] ss:$9 sm:$0xff] %v1353
      %3552 = vst [vmem:[%s3478] ss:$9 sm:$0xff] %v1356
      %3553 = vst [vmem:[%s3480] ss:$9 sm:$0xff] %v1359
      %v3554 = vld [vmem:[#allocation1] sm:$0xff]
      %3555 = vst [vmem:[#allocation1] ss:$9 sm:$0xff] %v1362
      %3556 = vst [vmem:[%s3468] ss:$9 sm:$0xff] %v1365
      %3557 = vst [vmem:[%s3470] ss:$9 sm:$0xff] %v1368
      %3558 = vst [vmem:[%s3472] ss:$9 sm:$0xff] %v1371
      %3559 = vst [vmem:[%s3474] ss:$9 sm:$0xff] %v1374
      %3560 = vst [vmem:[%s3476] ss:$9 sm:$0xff] %v1377
      %3561 = vst [vmem:[%s3478] ss:$9 sm:$0xff] %v1380
      %3562 = vst [vmem:[%s3480] ss:$9 sm:$0xff] %v1383
      %v3563 = vld [vmem:[#allocation1] sm:$0xff]
      %3564 = vst [vmem:[#allocation1] ss:$9 sm:$0xff] %v1386
      %3565 = vst [vmem:[%s3468] ss:$9 sm:$0xff] %v1389
      %3566 = vst [vmem:[%s3470] ss:$9 sm:$0xff] %v1392
      %3567 = vst [vmem:[%s3472] ss:$9 sm:$0xff] %v1395
      %3568 = vst [vmem:[%s3474] ss:$9 sm:$0xff] %v1398
      %3569 = vst [vmem:[%s3476] ss:$9 sm:$0xff] %v1401
      %3570 = vst [vmem:[%s3478] ss:$9 sm:$0xff] %v1404
      %3571 = vst [vmem:[%s3480] ss:$9 sm:$0xff] %v1407
      %v3572 = vld [vmem:[#allocation1] sm:$0xff]
      %3573 = vst [vmem:[#allocation1] ss:$9 sm:$0xff] %v1410
      %3574 = vst [vmem:[%s3468] ss:$9 sm:$0xff] %v1413
      %3575 = vst [vmem:[%s3470] ss:$9 sm:$0xff] %v1416
      %3576 = vst [vmem:[%s3472] ss:$9 sm:$0xff] %v1419
      %3577 = vst [vmem:[%s3474] ss:$9 sm:$0xff] %v1422
      %3578 = vst [vmem:[%s3476] ss:$9 sm:$0xff] %v1425
      %3579 = vst [vmem:[%s3478] ss:$9 sm:$0xff] %v1428
      %3580 = vst [vmem:[%s3480] ss:$9 sm:$0xff] %v1431
      %v3581 = vld [vmem:[#allocation1] sm:$0xff]
      %3582 = vst [vmem:[#allocation1] ss:$9 sm:$0xff] %v1434
      %3583 = vst [vmem:[%s3468] ss:$9 sm:$0xff] %v1437
      %3584 = vst [vmem:[%s3470] ss:$9 sm:$0xff] %v1440
      %3585 = vst [vmem:[%s3472] ss:$9 sm:$0xff] %v1443
      %3586 = vst [vmem:[%s3474] ss:$9 sm:$0xff] %v1446
      %3587 = vst [vmem:[%s3476] ss:$9 sm:$0xff] %v1449
      %3588 = vst [vmem:[%s3478] ss:$9 sm:$0xff] %v1452
      %3589 = vst [vmem:[%s3480] ss:$9 sm:$0xff] %v1455
      %v3590 = vld [vmem:[#allocation1] sm:$0xff]
      %3591 = vst [vmem:[#allocation1] ss:$9 sm:$0xff] %v1458
      %3592 = vst [vmem:[%s3468] ss:$9 sm:$0xff] %v1461
      %3593 = vst [vmem:[%s3470] ss:$9 sm:$0xff] %v1464
      %3594 = vst [vmem:[%s3472] ss:$9 sm:$0xff] %v1467
      %3595 = vst [vmem:[%s3474] ss:$9 sm:$0xff] %v1470
      %3596 = vst [vmem:[%s3476] ss:$9 sm:$0xff] %v1473
      %3597 = vst [vmem:[%s3478] ss:$9 sm:$0xff] %v1476
      %3598 = vst [vmem:[%s3480] ss:$9 sm:$0xff] %v1479
      %v3599 = vld [vmem:[#allocation1] sm:$0xff]
      %3600 = vst [vmem:[#allocation1] ss:$9 sm:$0xff] %v1482
      %3601 = vst [vmem:[%s3468] ss:$9 sm:$0xff] %v1485
      %3602 = vst [vmem:[%s3470] ss:$9 sm:$0xff] %v1488
      %3603 = vst [vmem:[%s3472] ss:$9 sm:$0xff] %v1491
      %3604 = vst [vmem:[%s3474] ss:$9 sm:$0xff] %v1494
      %3605 = vst [vmem:[%s3476] ss:$9 sm:$0xff] %v1497
      %3606 = vst [vmem:[%s3478] ss:$9 sm:$0xff] %v1500
      %3607 = vst [vmem:[%s3480] ss:$9 sm:$0xff] %v1503
      %v3608 = vld [vmem:[#allocation1] sm:$0xff]
      %3609 = vst [vmem:[#allocation1] ss:$9 sm:$0xff] %v1506
      %3610 = vst [vmem:[%s3468] ss:$9 sm:$0xff] %v1509
      %3611 = vst [vmem:[%s3470] ss:$9 sm:$0xff] %v1512
      %3612 = vst [vmem:[%s3472] ss:$9 sm:$0xff] %v1515
      %3613 = vst [vmem:[%s3474] ss:$9 sm:$0xff] %v1518
      %3614 = vst [vmem:[%s3476] ss:$9 sm:$0xff] %v1521
      %3615 = vst [vmem:[%s3478] ss:$9 sm:$0xff] %v1524
      %3616 = vst [vmem:[%s3480] ss:$9 sm:$0xff] %v1527
      %v3617 = vld [vmem:[#allocation1] sm:$0xff]
      %3618 = vst [vmem:[#allocation1] ss:$9 sm:$0xff] %v1530
      %3619 = vst [vmem:[%s3468] ss:$9 sm:$0xff] %v1533
      %3620 = vst [vmem:[%s3470] ss:$9 sm:$0xff] %v1536
      %3621 = vst [vmem:[%s3472] ss:$9 sm:$0xff] %v1539
      %3622 = vst [vmem:[%s3474] ss:$9 sm:$0xff] %v1542
      %3623 = vst [vmem:[%s3476] ss:$9 sm:$0xff] %v1545
      %3624 = vst [vmem:[%s3478] ss:$9 sm:$0xff] %v1548
      %3625 = vst [vmem:[%s3480] ss:$9 sm:$0xff] %v1551
      %v3626 = vld [vmem:[#allocation1] sm:$0xff]
      %3627 = vst [vmem:[#allocation1] ss:$9 sm:$0xff] %v1554
      %3628 = vst [vmem:[%s3468] ss:$9 sm:$0xff] %v1557
      %3629 = vst [vmem:[%s3470] ss:$9 sm:$0xff] %v1560
      %3630 = vst [vmem:[%s3472] ss:$9 sm:$0xff] %v1563
      %3631 = vst [vmem:[%s3474] ss:$9 sm:$0xff] %v1566
      %3632 = vst [vmem:[%s3476] ss:$9 sm:$0xff] %v1569
      %3633 = vst [vmem:[%s3478] ss:$9 sm:$0xff] %v1572
      %3634 = vst [vmem:[%s3480] ss:$9 sm:$0xff] %v1575
      %v3635 = vld [vmem:[#allocation1] sm:$0xff]
      %v3638 = vunpack.c.l.b16 %v3465
      %v3639 = vunpack.c.l.b16 %v3466
      %v3640 = vpack.c.b16 %v3639, %v3638
      %v3641 = vsel %vm1848, %v3482, 0
      %v3643 = vsel %vm1848, %v3491, 0
      %v3645 = vsel %vm1848, %v3500, 0
      %v3647 = vsel %vm1848, %v3509, 0
      %v3649 = vsel %vm1848, %v3518, 0
      %v3651 = vsel %vm1848, %v3527, 0
      %v3653 = vsel %vm1848, %v3536, 0
      %v3655 = vsel %vm1848, %v3545, 0
      %v3657 = vsel %vm1848, %v3554, 0
      %v3659 = vsel %vm1848, %v3563, 0
      %v3661 = vsel %vm1848, %v3572, 0
      %v3663 = vsel %vm1848, %v3581, 0
      %v3665 = vsel %vm1848, %v3590, 0
      %v3667 = vsel %vm1848, %v3599, 0
      %v3669 = vsel %vm1848, %v3608, 0
      %v3671 = vsel %vm1848, %v3617, 0
      %v3673 = vsel %vm1848, %v3626, 0
      %v3675 = vsel %vm1848, %v3635, 0
      %v3678 = vsel %vm1885, %v3640, 0
      %3680 = vmatpush.bf16.msra.mxu0 0
      %3681 = vmatpush.bf16.msra.mxu0 0
      %3682 = vmatpush.bf16.msra.mxu0 0
      %3683 = vmatpush.bf16.msra.mxu0 0
      %3684 = vmatpush.bf16.msra.mxu0 0
      %3685 = vmatpush.bf16.msra.mxu0 0
      %3686 = vmatpush.bf16.msra.mxu0 0
      %3687 = vmatpush.bf16.msra.mxu0 %v3678
      %3688 = vmatmul.bf16.gmra.mxu0 %v3641
      %v3689 = vpop.f32.mrf.mxu0
      %v3690 = vadd.f32 0.0, %v3689
      %v3691 = vpop.f32.mrf.mxu0
      %v3692 = vadd.f32 0.0, %v3691
      %3693 = vmatmul.bf16.gmra.mxu0 %v3643
      %v3694 = vpop.f32.mrf.mxu0
      %v3695 = vadd.f32 0.0, %v3694
      %v3696 = vpop.f32.mrf.mxu0
      %v3697 = vadd.f32 0.0, %v3696
      %3698 = vmatmul.bf16.gmra.mxu0 %v3645
      %v3699 = vpop.f32.mrf.mxu0
      %v3700 = vadd.f32 0.0, %v3699
      %v3701 = vpop.f32.mrf.mxu0
      %v3702 = vadd.f32 0.0, %v3701
      %3703 = vmatmul.bf16.gmra.mxu0 %v3647
      %v3704 = vpop.f32.mrf.mxu0
      %v3705 = vadd.f32 0.0, %v3704
      %v3706 = vpop.f32.mrf.mxu0
      %v3707 = vadd.f32 0.0, %v3706
      %3708 = vmatmul.bf16.gmra.mxu0 %v3649
      %v3709 = vpop.f32.mrf.mxu0
      %v3710 = vadd.f32 0.0, %v3709
      %v3711 = vpop.f32.mrf.mxu0
      %v3712 = vadd.f32 0.0, %v3711
      %3713 = vmatmul.bf16.gmra.mxu0 %v3651
      %v3714 = vpop.f32.mrf.mxu0
      %v3715 = vadd.f32 0.0, %v3714
      %v3716 = vpop.f32.mrf.mxu0
      %v3717 = vadd.f32 0.0, %v3716
      %3718 = vmatmul.bf16.gmra.mxu0 %v3653
      %v3719 = vpop.f32.mrf.mxu0
      %v3720 = vadd.f32 0.0, %v3719
      %v3721 = vpop.f32.mrf.mxu0
      %v3722 = vadd.f32 0.0, %v3721
      %3723 = vmatmul.bf16.gmra.mxu0 %v3655
      %v3724 = vpop.f32.mrf.mxu0
      %v3725 = vadd.f32 0.0, %v3724
      %v3726 = vpop.f32.mrf.mxu0
      %v3727 = vadd.f32 0.0, %v3726
      %3728 = vmatmul.bf16.gmra.mxu0 %v3657
      %v3729 = vpop.f32.mrf.mxu0
      %v3730 = vadd.f32 0.0, %v3729
      %v3731 = vpop.f32.mrf.mxu0
      %v3732 = vadd.f32 0.0, %v3731
      %3733 = vmatmul.bf16.gmra.mxu0 %v3659
      %v3734 = vpop.f32.mrf.mxu0
      %v3735 = vadd.f32 0.0, %v3734
      %v3736 = vpop.f32.mrf.mxu0
      %v3737 = vadd.f32 0.0, %v3736
      %3738 = vmatmul.bf16.gmra.mxu0 %v3661
      %v3739 = vpop.f32.mrf.mxu0
      %v3740 = vadd.f32 0.0, %v3739
      %v3741 = vpop.f32.mrf.mxu0
      %v3742 = vadd.f32 0.0, %v3741
      %3743 = vmatmul.bf16.gmra.mxu0 %v3663
      %v3744 = vpop.f32.mrf.mxu0
      %v3745 = vadd.f32 0.0, %v3744
      %v3746 = vpop.f32.mrf.mxu0
      %v3747 = vadd.f32 0.0, %v3746
      %3748 = vmatmul.bf16.gmra.mxu0 %v3665
      %v3749 = vpop.f32.mrf.mxu0
      %v3750 = vadd.f32 0.0, %v3749
      %v3751 = vpop.f32.mrf.mxu0
      %v3752 = vadd.f32 0.0, %v3751
      %3753 = vmatmul.bf16.gmra.mxu0 %v3667
      %v3754 = vpop.f32.mrf.mxu0
      %v3755 = vadd.f32 0.0, %v3754
      %v3756 = vpop.f32.mrf.mxu0
      %v3757 = vadd.f32 0.0, %v3756
      %3758 = vmatmul.bf16.gmra.mxu0 %v3669
      %v3759 = vpop.f32.mrf.mxu0
      %v3760 = vadd.f32 0.0, %v3759
      %v3761 = vpop.f32.mrf.mxu0
      %v3762 = vadd.f32 0.0, %v3761
      %3763 = vmatmul.bf16.gmra.mxu0 %v3671
      %v3764 = vpop.f32.mrf.mxu0
      %v3765 = vadd.f32 0.0, %v3764
      %v3766 = vpop.f32.mrf.mxu0
      %v3767 = vadd.f32 0.0, %v3766
      %3768 = vmatmul.bf16.gmra.mxu0 %v3673
      %v3769 = vpop.f32.mrf.mxu0
      %v3770 = vadd.f32 0.0, %v3769
      %v3771 = vpop.f32.mrf.mxu0
      %v3772 = vadd.f32 0.0, %v3771
      %3773 = vmatmul.bf16.gmra.mxu0 %v3675
      %v3774 = vpop.f32.mrf.mxu0
      %v3775 = vadd.f32 0.0, %v3774
      %v3776 = vpop.f32.mrf.mxu0
      %v3777 = vadd.f32 0.0, %v3776
      %3778 = vdwg.mxu0
      %v3815 = vrot.slane %v3690, 2
      %v3816 = vrot.slane %v3690, 4
      %v3817 = vrot.slane %v3690, 6
      %v3818 = vrot.slane %v3692, 2
      %v3819 = vrot.slane %v3692, 4
      %v3820 = vrot.slane %v3692, 6
      %v3821 = vrot.slane %v3695, 4
      %v3822 = vrot.slane %v3695, 6
      %v3823 = vrot.slane %v3697, 2
      %v3824 = vrot.slane %v3697, 4
      %v3825 = vrot.slane %v3697, 6
      %v3826 = vrot.slane %v3700, 2
      %v3827 = vrot.slane %v3700, 6
      %v3828 = vrot.slane %v3702, 2
      %v3829 = vrot.slane %v3702, 4
      %v3830 = vrot.slane %v3702, 6
      %v3831 = vrot.slane %v3705, 2
      %v3832 = vrot.slane %v3705, 4
      %v3833 = vrot.slane %v3707, 2
      %v3834 = vrot.slane %v3707, 4
      %v3835 = vrot.slane %v3707, 6
      %v3836 = vrot.slane %v3710, 2
      %v3837 = vrot.slane %v3710, 4
      %v3838 = vrot.slane %v3710, 6
      %v3839 = vrot.slane %v3712, 2
      %v3840 = vrot.slane %v3712, 4
      %v3841 = vrot.slane %v3712, 6
      %v3842 = vrot.slane %v3715, 2
      %v3843 = vrot.slane %v3715, 4
      %v3844 = vrot.slane %v3715, 6
      %v3845 = vrot.slane %v3717, 4
      %v3846 = vrot.slane %v3717, 6
      %v3847 = vrot.slane %v3720, 2
      %v3848 = vrot.slane %v3720, 4
      %v3849 = vrot.slane %v3720, 6
      %v3850 = vrot.slane %v3722, 2
      %v3851 = vrot.slane %v3722, 6
      %v3852 = vrot.slane %v3725, 2
      %v3853 = vrot.slane %v3725, 4
      %v3854 = vrot.slane %v3725, 6
      %v3855 = vrot.slane %v3727, 2
      %v3856 = vrot.slane %v3727, 4
      %v3857 = vrot.slane %v3730, 2
      %v3858 = vrot.slane %v3730, 4
      %v3859 = vrot.slane %v3730, 6
      %v3860 = vrot.slane %v3732, 2
      %v3861 = vrot.slane %v3732, 4
      %v3862 = vrot.slane %v3732, 6
      %v3863 = vrot.slane %v3735, 2
      %v3864 = vrot.slane %v3735, 4
      %v3865 = vrot.slane %v3735, 6
      %v3866 = vrot.slane %v3737, 2
      %v3867 = vrot.slane %v3737, 4
      %v3868 = vrot.slane %v3737, 6
      %v3869 = vrot.slane %v3740, 4
      %v3870 = vrot.slane %v3740, 6
      %v3871 = vrot.slane %v3742, 2
      %v3872 = vrot.slane %v3742, 4
      %v3873 = vrot.slane %v3742, 6
      %v3874 = vrot.slane %v3745, 2
      %v3875 = vrot.slane %v3745, 6
      %v3876 = vrot.slane %v3747, 2
      %v3877 = vrot.slane %v3747, 4
      %v3878 = vrot.slane %v3747, 6
      %v3879 = vrot.slane %v3750, 2
      %v3880 = vrot.slane %v3750, 4
      %v3881 = vrot.slane %v3752, 2
      %v3882 = vrot.slane %v3752, 4
      %v3883 = vrot.slane %v3752, 6
      %v3884 = vrot.slane %v3755, 2
      %v3885 = vrot.slane %v3755, 4
      %v3886 = vrot.slane %v3755, 6
      %v3887 = vrot.slane %v3757, 2
      %v3888 = vrot.slane %v3757, 4
      %v3889 = vrot.slane %v3757, 6
      %v3890 = vrot.slane %v3760, 2
      %v3891 = vrot.slane %v3760, 4
      %v3892 = vrot.slane %v3760, 6
      %v3893 = vrot.slane %v3762, 4
      %v3894 = vrot.slane %v3762, 6
      %v3895 = vrot.slane %v3765, 2
      %v3896 = vrot.slane %v3765, 4
      %v3897 = vrot.slane %v3765, 6
      %v3898 = vrot.slane %v3767, 2
      %v3899 = vrot.slane %v3767, 6
      %v3900 = vrot.slane %v3770, 2
      %v3901 = vrot.slane %v3770, 4
      %v3902 = vrot.slane %v3770, 6
      %v3903 = vrot.slane %v3772, 2
      %v3904 = vrot.slane %v3772, 4
      %v3905 = vrot.slane %v3775, 2
      %v3906 = vrot.slane %v3775, 4
      %v3907 = vrot.slane %v3775, 6
      %v3908 = vrot.slane %v3777, 2
      %v3909 = vrot.slane %v3777, 4
      %v3910 = vrot.slane %v3777, 6
      %v4007 = vadd.f32 %v3336, %v3815
      %v4008 = vadd.f32 %v3337, %v3816
      %v4009 = vadd.f32 %v3338, %v3817
      %v4010 = vadd.f32 %v3339, %v3692
      %v4011 = vadd.f32 %v3340, %v3818
      %v4012 = vadd.f32 %v3341, %v3819
      %v4013 = vadd.f32 %v3342, %v3820
      %v4014 = vadd.f32 %v3343, %v3695
      %v4015 = vadd.f32 %v3344, %v3821
      %v4016 = vadd.f32 %v3345, %v3822
      %v4017 = vadd.f32 %v3346, %v3697
      %v4018 = vadd.f32 %v3347, %v3823
      %v4019 = vadd.f32 %v3348, %v3824
      %v4020 = vadd.f32 %v3349, %v3825
      %v4021 = vadd.f32 %v3350, %v3700
      %v4022 = vadd.f32 %v3351, %v3826
      %v4023 = vadd.f32 %v3352, %v3827
      %v4024 = vadd.f32 %v3353, %v3702
      %v4025 = vadd.f32 %v3354, %v3828
      %v4026 = vadd.f32 %v3355, %v3829
      %v4027 = vadd.f32 %v3356, %v3830
      %v4028 = vadd.f32 %v3357, %v3705
      %v4029 = vadd.f32 %v3358, %v3831
      %v4030 = vadd.f32 %v3359, %v3832
      %v4031 = vadd.f32 %v3360, %v3707
      %v4032 = vadd.f32 %v3361, %v3833
      %v4033 = vadd.f32 %v3362, %v3834
      %v4034 = vadd.f32 %v3363, %v3835
      %v4035 = vadd.f32 %v3364, %v3710
      %v4036 = vadd.f32 %v3365, %v3836
      %v4037 = vadd.f32 %v3366, %v3837
      %v4038 = vadd.f32 %v3367, %v3838
      %v4039 = vadd.f32 %v3368, %v3839
      %v4040 = vadd.f32 %v3369, %v3840
      %v4041 = vadd.f32 %v3370, %v3841
      %v4042 = vadd.f32 %v3371, %v3715
      %v4043 = vadd.f32 %v3372, %v3842
      %v4044 = vadd.f32 %v3373, %v3843
      %v4045 = vadd.f32 %v3374, %v3844
      %v4046 = vadd.f32 %v3375, %v3717
      %v4047 = vadd.f32 %v3376, %v3845
      %v4048 = vadd.f32 %v3377, %v3846
      %v4049 = vadd.f32 %v3378, %v3720
      %v4050 = vadd.f32 %v3379, %v3847
      %v4051 = vadd.f32 %v3380, %v3848
      %v4052 = vadd.f32 %v3381, %v3849
      %v4053 = vadd.f32 %v3382, %v3722
      %v4054 = vadd.f32 %v3383, %v3850
      %v4055 = vadd.f32 %v3384, %v3851
      %v4056 = vadd.f32 %v3385, %v3725
      %v4057 = vadd.f32 %v3386, %v3852
      %v4058 = vadd.f32 %v3387, %v3853
      %v4059 = vadd.f32 %v3388, %v3854
      %v4060 = vadd.f32 %v3389, %v3727
      %v4061 = vadd.f32 %v3390, %v3855
      %v4062 = vadd.f32 %v3391, %v3856
      %v4063 = vadd.f32 %v3392, %v3730
      %v4064 = vadd.f32 %v3393, %v3857
      %v4065 = vadd.f32 %v3394, %v3858
      %v4066 = vadd.f32 %v3395, %v3859
      %v4067 = vadd.f32 %v3396, %v3732
      %v4068 = vadd.f32 %v3397, %v3860
      %v4069 = vadd.f32 %v3398, %v3861
      %v4070 = vadd.f32 %v3399, %v3862
      %v4071 = vadd.f32 %v3400, %v3863
      %v4072 = vadd.f32 %v3401, %v3864
      %v4073 = vadd.f32 %v3402, %v3865
      %v4074 = vadd.f32 %v3403, %v3737
      %v4075 = vadd.f32 %v3404, %v3866
      %v4076 = vadd.f32 %v3405, %v3867
      %v4077 = vadd.f32 %v3406, %v3868
      %v4078 = vadd.f32 %v3407, %v3740
      %v4079 = vadd.f32 %v3408, %v3869
      %v4080 = vadd.f32 %v3409, %v3870
      %v4081 = vadd.f32 %v3410, %v3742
      %v4082 = vadd.f32 %v3411, %v3871
      %v4083 = vadd.f32 %v3412, %v3872
      %v4084 = vadd.f32 %v3413, %v3873
      %v4085 = vadd.f32 %v3414, %v3745
      %v4086 = vadd.f32 %v3415, %v3874
      %v4087 = vadd.f32 %v3416, %v3875
      %v4088 = vadd.f32 %v3417, %v3747
      %v4089 = vadd.f32 %v3418, %v3876
      %v4090 = vadd.f32 %v3419, %v3877
      %v4091 = vadd.f32 %v3420, %v3878
      %v4092 = vadd.f32 %v3421, %v3750
      %v4093 = vadd.f32 %v3422, %v3879
      %v4094 = vadd.f32 %v3423, %v3880
      %v4095 = vadd.f32 %v3424, %v3752
      %v4096 = vadd.f32 %v3425, %v3881
      %v4097 = vadd.f32 %v3426, %v3882
      %v4098 = vadd.f32 %v3427, %v3883
      %v4099 = vadd.f32 %v3428, %v3755
      %v4100 = vadd.f32 %v3429, %v3884
      %v4101 = vadd.f32 %v3430, %v3885
      %v4102 = vadd.f32 %v3431, %v3886
      %v4103 = vadd.f32 %v3432, %v3887
      %v4104 = vadd.f32 %v3433, %v3888
      %v4105 = vadd.f32 %v3434, %v3889
      %v4106 = vadd.f32 %v3435, %v3760
      %v4107 = vadd.f32 %v3436, %v3890
      %v4108 = vadd.f32 %v3437, %v3891
      %v4109 = vadd.f32 %v3438, %v3892
      %v4110 = vadd.f32 %v3439, %v3762
      %v4111 = vadd.f32 %v3440, %v3893
      %v4112 = vadd.f32 %v3441, %v3894
      %v4113 = vadd.f32 %v3442, %v3765
      %v4114 = vadd.f32 %v3443, %v3895
      %v4115 = vadd.f32 %v3444, %v3896
      %v4116 = vadd.f32 %v3445, %v3897
      %v4117 = vadd.f32 %v3446, %v3767
      %v4118 = vadd.f32 %v3447, %v3898
      %v4119 = vadd.f32 %v3448, %v3899
      %v4120 = vadd.f32 %v3449, %v3770
      %v4121 = vadd.f32 %v3450, %v3900
      %v4122 = vadd.f32 %v3451, %v3901
      %v4123 = vadd.f32 %v3452, %v3902
      %v4124 = vadd.f32 %v3453, %v3772
      %v4125 = vadd.f32 %v3454, %v3903
      %v4126 = vadd.f32 %v3455, %v3904
      %v4127 = vadd.f32 %v3456, %v3775
      %v4128 = vadd.f32 %v3457, %v3905
      %v4129 = vadd.f32 %v3458, %v3906
      %v4130 = vadd.f32 %v3459, %v3907
      %v4131 = vadd.f32 %v3460, %v3777
      %v4132 = vadd.f32 %v3461, %v3908
      %v4133 = vadd.f32 %v3462, %v3909
      %v4134 = vadd.f32 %v3463, %v3910
      %v4135 = vld [vmem:[%s2] sm:$0x1]
      %v4137 = vperm.slane %v4135, 0
      %v4139 = vrot.slane %v4137, 2
      %v4140 = vrot.slane %v4137, 4
      %v4141 = vrot.slane %v4137, 6
      %v4145 = vadd.f32 %v4007, %v4137
      %v4146 = vadd.f32 %v4008, %v4139
      %v4147 = vadd.f32 %v4009, %v4140
      %v4148 = vadd.f32 %v4010, %v4141
      %v4149 = vadd.f32 %v4011, %v4137
      %v4150 = vadd.f32 %v4012, %v4139
      %v4151 = vadd.f32 %v4013, %v4140
      %v4152 = vadd.f32 %v4014, %v4141
      %v4153 = vadd.f32 %v4015, %v4137
      %v4154 = vadd.f32 %v4016, %v4139
      %v4155 = vadd.f32 %v4017, %v4140
      %v4156 = vadd.f32 %v4018, %v4141
      %v4157 = vadd.f32 %v4019, %v4137
      %v4158 = vadd.f32 %v4020, %v4139
      %v4159 = vadd.f32 %v4021, %v4140
      %v4160 = vadd.f32 %v4022, %v4141
      %v4161 = vadd.f32 %v4023, %v4137
      %v4162 = vadd.f32 %v4024, %v4139
      %v4163 = vadd.f32 %v4025, %v4140
      %v4164 = vadd.f32 %v4026, %v4141
      %v4165 = vadd.f32 %v4027, %v4137
      %v4166 = vadd.f32 %v4028, %v4139
      %v4167 = vadd.f32 %v4029, %v4140
      %v4168 = vadd.f32 %v4030, %v4141
      %v4169 = vadd.f32 %v4031, %v4137
      %v4170 = vadd.f32 %v4032, %v4139
      %v4171 = vadd.f32 %v4033, %v4140
      %v4172 = vadd.f32 %v4034, %v4141
      %v4173 = vadd.f32 %v4035, %v4137
      %v4174 = vadd.f32 %v4036, %v4139
      %v4175 = vadd.f32 %v4037, %v4140
      %v4176 = vadd.f32 %v4038, %v4141
      %v4177 = vadd.f32 %v4039, %v4137
      %v4178 = vadd.f32 %v4040, %v4139
      %v4179 = vadd.f32 %v4041, %v4140
      %v4180 = vadd.f32 %v4042, %v4141
      %v4181 = vadd.f32 %v4043, %v4137
      %v4182 = vadd.f32 %v4044, %v4139
      %v4183 = vadd.f32 %v4045, %v4140
      %v4184 = vadd.f32 %v4046, %v4141
      %v4185 = vadd.f32 %v4047, %v4137
      %v4186 = vadd.f32 %v4048, %v4139
      %v4187 = vadd.f32 %v4049, %v4140
      %v4188 = vadd.f32 %v4050, %v4141
      %v4189 = vadd.f32 %v4051, %v4137
      %v4190 = vadd.f32 %v4052, %v4139
      %v4191 = vadd.f32 %v4053, %v4140
      %v4192 = vadd.f32 %v4054, %v4141
      %v4193 = vadd.f32 %v4055, %v4137
      %v4194 = vadd.f32 %v4056, %v4139
      %v4195 = vadd.f32 %v4057, %v4140
      %v4196 = vadd.f32 %v4058, %v4141
      %v4197 = vadd.f32 %v4059, %v4137
      %v4198 = vadd.f32 %v4060, %v4139
      %v4199 = vadd.f32 %v4061, %v4140
      %v4200 = vadd.f32 %v4062, %v4141
      %v4201 = vadd.f32 %v4063, %v4137
      %v4202 = vadd.f32 %v4064, %v4139
      %v4203 = vadd.f32 %v4065, %v4140
      %v4204 = vadd.f32 %v4066, %v4141
      %v4205 = vadd.f32 %v4067, %v4137
      %v4206 = vadd.f32 %v4068, %v4139
      %v4207 = vadd.f32 %v4069, %v4140
      %v4208 = vadd.f32 %v4070, %v4141
      %v4209 = vadd.f32 %v4071, %v4137
      %v4210 = vadd.f32 %v4072, %v4139
      %v4211 = vadd.f32 %v4073, %v4140
      %v4212 = vadd.f32 %v4074, %v4141
      %v4213 = vadd.f32 %v4075, %v4137
      %v4214 = vadd.f32 %v4076, %v4139
      %v4215 = vadd.f32 %v4077, %v4140
      %v4216 = vadd.f32 %v4078, %v4141
      %v4217 = vadd.f32 %v4079, %v4137
      %v4218 = vadd.f32 %v4080, %v4139
      %v4219 = vadd.f32 %v4081, %v4140
      %v4220 = vadd.f32 %v4082, %v4141
      %v4221 = vadd.f32 %v4083, %v4137
      %v4222 = vadd.f32 %v4084, %v4139
      %v4223 = vadd.f32 %v4085, %v4140
      %v4224 = vadd.f32 %v4086, %v4141
      %v4225 = vadd.f32 %v4087, %v4137
      %v4226 = vadd.f32 %v4088, %v4139
      %v4227 = vadd.f32 %v4089, %v4140
      %v4228 = vadd.f32 %v4090, %v4141
      %v4229 = vadd.f32 %v4091, %v4137
      %v4230 = vadd.f32 %v4092, %v4139
      %v4231 = vadd.f32 %v4093, %v4140
      %v4232 = vadd.f32 %v4094, %v4141
      %v4233 = vadd.f32 %v4095, %v4137
      %v4234 = vadd.f32 %v4096, %v4139
      %v4235 = vadd.f32 %v4097, %v4140
      %v4236 = vadd.f32 %v4098, %v4141
      %v4237 = vadd.f32 %v4099, %v4137
      %v4238 = vadd.f32 %v4100, %v4139
      %v4239 = vadd.f32 %v4101, %v4140
      %v4240 = vadd.f32 %v4102, %v4141
      %v4241 = vadd.f32 %v4103, %v4137
      %v4242 = vadd.f32 %v4104, %v4139
      %v4243 = vadd.f32 %v4105, %v4140
      %v4244 = vadd.f32 %v4106, %v4141
      %v4245 = vadd.f32 %v4107, %v4137
      %v4246 = vadd.f32 %v4108, %v4139
      %v4247 = vadd.f32 %v4109, %v4140
      %v4248 = vadd.f32 %v4110, %v4141
      %v4249 = vadd.f32 %v4111, %v4137
      %v4250 = vadd.f32 %v4112, %v4139
      %v4251 = vadd.f32 %v4113, %v4140
      %v4252 = vadd.f32 %v4114, %v4141
      %v4253 = vadd.f32 %v4115, %v4137
      %v4254 = vadd.f32 %v4116, %v4139
      %v4255 = vadd.f32 %v4117, %v4140
      %v4256 = vadd.f32 %v4118, %v4141
      %v4257 = vadd.f32 %v4119, %v4137
      %v4258 = vadd.f32 %v4120, %v4139
      %v4259 = vadd.f32 %v4121, %v4140
      %v4260 = vadd.f32 %v4122, %v4141
      %v4261 = vadd.f32 %v4123, %v4137
      %v4262 = vadd.f32 %v4124, %v4139
      %v4263 = vadd.f32 %v4125, %v4140
      %v4264 = vadd.f32 %v4126, %v4141
      %v4265 = vadd.f32 %v4127, %v4137
      %v4266 = vadd.f32 %v4128, %v4139
      %v4267 = vadd.f32 %v4129, %v4140
      %v4268 = vadd.f32 %v4130, %v4141
      %v4269 = vadd.f32 %v4131, %v4137
      %v4270 = vadd.f32 %v4132, %v4139
      %v4271 = vadd.f32 %v4133, %v4140
      %v4272 = vadd.f32 %v4134, %v4141
      %4401 = vst [vmem:[#allocation1] ss:$4 sm:$0xff] %v4145
      %s4402 = scalar_lea.vmem [#allocation1], 1
      %4403 = vst [vmem:[%s4402] ss:$4 sm:$0xff] %v4146
      %s4404 = scalar_lea.vmem [#allocation1], 2
      %4405 = vst [vmem:[%s4404] ss:$4 sm:$0xff] %v4147
      %s4406 = scalar_lea.vmem [#allocation1], 3
      %4407 = vst [vmem:[%s4406] ss:$4 sm:$0xff] %v4148
      %s4408 = scalar_lea.vmem [#allocation1], 32
      %4409 = vst [vmem:[%s4408] ss:$4 sm:$0xff] %v4149
      %s4410 = scalar_lea.vmem [#allocation1], 33
      %4411 = vst [vmem:[%s4410] ss:$4 sm:$0xff] %v4150
      %s4412 = scalar_lea.vmem [#allocation1], 34
      %4413 = vst [vmem:[%s4412] ss:$4 sm:$0xff] %v4151
      %s4414 = scalar_lea.vmem [#allocation1], 35
      %4415 = vst [vmem:[%s4414] ss:$4 sm:$0xff] %v4152
      %v4416 = vld.sshfl [vmem:[#allocation1] sm:$0xff pattern:$0x73625140]
      %v4417 = vld.sshfl [vmem:[#allocation1 + $0x20] sm:$0xff pattern:$0x73625140]
      %4418 = vst [vmem:[#allocation1] ss:$4 sm:$0xff] %v4153
      %4419 = vst [vmem:[%s4402] ss:$4 sm:$0xff] %v4154
      %4420 = vst [vmem:[%s4404] ss:$4 sm:$0xff] %v4155
      %4421 = vst [vmem:[%s4406] ss:$4 sm:$0xff] %v4156
      %4422 = vst [vmem:[%s4408] ss:$4 sm:$0xff] %v4157
      %4423 = vst [vmem:[%s4410] ss:$4 sm:$0xff] %v4158
      %4424 = vst [vmem:[%s4412] ss:$4 sm:$0xff] %v4159
      %4425 = vst [vmem:[%s4414] ss:$4 sm:$0xff] %v4160
      %v4426 = vld.sshfl [vmem:[#allocation1] sm:$0xff pattern:$0x73625140]
      %v4427 = vld.sshfl [vmem:[#allocation1 + $0x20] sm:$0xff pattern:$0x73625140]
      %4428 = vst [vmem:[#allocation1] ss:$4 sm:$0xff] %v4161
      %4429 = vst [vmem:[%s4402] ss:$4 sm:$0xff] %v4162
      %4430 = vst [vmem:[%s4404] ss:$4 sm:$0xff] %v4163
      %4431 = vst [vmem:[%s4406] ss:$4 sm:$0xff] %v4164
      %4432 = vst [vmem:[%s4408] ss:$4 sm:$0xff] %v4165
      %4433 = vst [vmem:[%s4410] ss:$4 sm:$0xff] %v4166
      %4434 = vst [vmem:[%s4412] ss:$4 sm:$0xff] %v4167
      %4435 = vst [vmem:[%s4414] ss:$4 sm:$0xff] %v4168
      %v4436 = vld.sshfl [vmem:[#allocation1] sm:$0xff pattern:$0x73625140]
      %v4437 = vld.sshfl [vmem:[#allocation1 + $0x20] sm:$0xff pattern:$0x73625140]
      %4438 = vst [vmem:[#allocation1] ss:$4 sm:$0xff] %v4169
      %4439 = vst [vmem:[%s4402] ss:$4 sm:$0xff] %v4170
      %4440 = vst [vmem:[%s4404] ss:$4 sm:$0xff] %v4171
      %4441 = vst [vmem:[%s4406] ss:$4 sm:$0xff] %v4172
      %4442 = vst [vmem:[%s4408] ss:$4 sm:$0xff] %v4173
      %4443 = vst [vmem:[%s4410] ss:$4 sm:$0xff] %v4174
      %4444 = vst [vmem:[%s4412] ss:$4 sm:$0xff] %v4175
      %4445 = vst [vmem:[%s4414] ss:$4 sm:$0xff] %v4176
      %v4446 = vld.sshfl [vmem:[#allocation1] sm:$0xff pattern:$0x73625140]
      %v4447 = vld.sshfl [vmem:[#allocation1 + $0x20] sm:$0xff pattern:$0x73625140]
      %4448 = vst [vmem:[#allocation1] ss:$4 sm:$0xff] %v4177
      %4449 = vst [vmem:[%s4402] ss:$4 sm:$0xff] %v4178
      %4450 = vst [vmem:[%s4404] ss:$4 sm:$0xff] %v4179
      %4451 = vst [vmem:[%s4406] ss:$4 sm:$0xff] %v4180
      %4452 = vst [vmem:[%s4408] ss:$4 sm:$0xff] %v4181
      %4453 = vst [vmem:[%s4410] ss:$4 sm:$0xff] %v4182
      %4454 = vst [vmem:[%s4412] ss:$4 sm:$0xff] %v4183
      %4455 = vst [vmem:[%s4414] ss:$4 sm:$0xff] %v4184
      %v4456 = vld.sshfl [vmem:[#allocation1] sm:$0xff pattern:$0x73625140]
      %v4457 = vld.sshfl [vmem:[#allocation1 + $0x20] sm:$0xff pattern:$0x73625140]
      %4458 = vst [vmem:[#allocation1] ss:$4 sm:$0xff] %v4185
      %4459 = vst [vmem:[%s4402] ss:$4 sm:$0xff] %v4186
      %4460 = vst [vmem:[%s4404] ss:$4 sm:$0xff] %v4187
      %4461 = vst [vmem:[%s4406] ss:$4 sm:$0xff] %v4188
      %4462 = vst [vmem:[%s4408] ss:$4 sm:$0xff] %v4189
      %4463 = vst [vmem:[%s4410] ss:$4 sm:$0xff] %v4190
      %4464 = vst [vmem:[%s4412] ss:$4 sm:$0xff] %v4191
      %4465 = vst [vmem:[%s4414] ss:$4 sm:$0xff] %v4192
      %v4466 = vld.sshfl [vmem:[#allocation1] sm:$0xff pattern:$0x73625140]
      %v4467 = vld.sshfl [vmem:[#allocation1 + $0x20] sm:$0xff pattern:$0x73625140]
      %4468 = vst [vmem:[#allocation1] ss:$4 sm:$0xff] %v4193
      %4469 = vst [vmem:[%s4402] ss:$4 sm:$0xff] %v4194
      %4470 = vst [vmem:[%s4404] ss:$4 sm:$0xff] %v4195
      %4471 = vst [vmem:[%s4406] ss:$4 sm:$0xff] %v4196
      %4472 = vst [vmem:[%s4408] ss:$4 sm:$0xff] %v4197
      %4473 = vst [vmem:[%s4410] ss:$4 sm:$0xff] %v4198
      %4474 = vst [vmem:[%s4412] ss:$4 sm:$0xff] %v4199
      %4475 = vst [vmem:[%s4414] ss:$4 sm:$0xff] %v4200
      %v4476 = vld.sshfl [vmem:[#allocation1] sm:$0xff pattern:$0x73625140]
      %v4477 = vld.sshfl [vmem:[#allocation1 + $0x20] sm:$0xff pattern:$0x73625140]
      %4478 = vst [vmem:[#allocation1] ss:$4 sm:$0xff] %v4201
      %4479 = vst [vmem:[%s4402] ss:$4 sm:$0xff] %v4202
      %4480 = vst [vmem:[%s4404] ss:$4 sm:$0xff] %v4203
      %4481 = vst [vmem:[%s4406] ss:$4 sm:$0xff] %v4204
      %4482 = vst [vmem:[%s4408] ss:$4 sm:$0xff] %v4205
      %4483 = vst [vmem:[%s4410] ss:$4 sm:$0xff] %v4206
      %4484 = vst [vmem:[%s4412] ss:$4 sm:$0xff] %v4207
      %4485 = vst [vmem:[%s4414] ss:$4 sm:$0xff] %v4208
      %v4486 = vld.sshfl [vmem:[#allocation1] sm:$0xff pattern:$0x73625140]
      %v4487 = vld.sshfl [vmem:[#allocation1 + $0x20] sm:$0xff pattern:$0x73625140]
      %4488 = vst [vmem:[#allocation1] ss:$4 sm:$0xff] %v4209
      %4489 = vst [vmem:[%s4402] ss:$4 sm:$0xff] %v4210
      %4490 = vst [vmem:[%s4404] ss:$4 sm:$0xff] %v4211
      %4491 = vst [vmem:[%s4406] ss:$4 sm:$0xff] %v4212
      %4492 = vst [vmem:[%s4408] ss:$4 sm:$0xff] %v4213
      %4493 = vst [vmem:[%s4410] ss:$4 sm:$0xff] %v4214
      %4494 = vst [vmem:[%s4412] ss:$4 sm:$0xff] %v4215
      %4495 = vst [vmem:[%s4414] ss:$4 sm:$0xff] %v4216
      %v4496 = vld.sshfl [vmem:[#allocation1] sm:$0xff pattern:$0x73625140]
      %v4497 = vld.sshfl [vmem:[#allocation1 + $0x20] sm:$0xff pattern:$0x73625140]
      %4498 = vst [vmem:[#allocation1] ss:$4 sm:$0xff] %v4217
      %4499 = vst [vmem:[%s4402] ss:$4 sm:$0xff] %v4218
      %4500 = vst [vmem:[%s4404] ss:$4 sm:$0xff] %v4219
      %4501 = vst [vmem:[%s4406] ss:$4 sm:$0xff] %v4220
      %4502 = vst [vmem:[%s4408] ss:$4 sm:$0xff] %v4221
      %4503 = vst [vmem:[%s4410] ss:$4 sm:$0xff] %v4222
      %4504 = vst [vmem:[%s4412] ss:$4 sm:$0xff] %v4223
      %4505 = vst [vmem:[%s4414] ss:$4 sm:$0xff] %v4224
      %v4506 = vld.sshfl [vmem:[#allocation1] sm:$0xff pattern:$0x73625140]
      %v4507 = vld.sshfl [vmem:[#allocation1 + $0x20] sm:$0xff pattern:$0x73625140]
      %4508 = vst [vmem:[#allocation1] ss:$4 sm:$0xff] %v4225
      %4509 = vst [vmem:[%s4402] ss:$4 sm:$0xff] %v4226
      %4510 = vst [vmem:[%s4404] ss:$4 sm:$0xff] %v4227
      %4511 = vst [vmem:[%s4406] ss:$4 sm:$0xff] %v4228
      %4512 = vst [vmem:[%s4408] ss:$4 sm:$0xff] %v4229
      %4513 = vst [vmem:[%s4410] ss:$4 sm:$0xff] %v4230
      %4514 = vst [vmem:[%s4412] ss:$4 sm:$0xff] %v4231
      %4515 = vst [vmem:[%s4414] ss:$4 sm:$0xff] %v4232
      %v4516 = vld.sshfl [vmem:[#allocation1] sm:$0xff pattern:$0x73625140]
      %v4517 = vld.sshfl [vmem:[#allocation1 + $0x20] sm:$0xff pattern:$0x73625140]
      %4518 = vst [vmem:[#allocation1] ss:$4 sm:$0xff] %v4233
      %4519 = vst [vmem:[%s4402] ss:$4 sm:$0xff] %v4234
      %4520 = vst [vmem:[%s4404] ss:$4 sm:$0xff] %v4235
      %4521 = vst [vmem:[%s4406] ss:$4 sm:$0xff] %v4236
      %4522 = vst [vmem:[%s4408] ss:$4 sm:$0xff] %v4237
      %4523 = vst [vmem:[%s4410] ss:$4 sm:$0xff] %v4238
      %4524 = vst [vmem:[%s4412] ss:$4 sm:$0xff] %v4239
      %4525 = vst [vmem:[%s4414] ss:$4 sm:$0xff] %v4240
      %v4526 = vld.sshfl [vmem:[#allocation1] sm:$0xff pattern:$0x73625140]
      %v4527 = vld.sshfl [vmem:[#allocation1 + $0x20] sm:$0xff pattern:$0x73625140]
      %4528 = vst [vmem:[#allocation1] ss:$4 sm:$0xff] %v4241
      %4529 = vst [vmem:[%s4402] ss:$4 sm:$0xff] %v4242
      %4530 = vst [vmem:[%s4404] ss:$4 sm:$0xff] %v4243
      %4531 = vst [vmem:[%s4406] ss:$4 sm:$0xff] %v4244
      %4532 = vst [vmem:[%s4408] ss:$4 sm:$0xff] %v4245
      %4533 = vst [vmem:[%s4410] ss:$4 sm:$0xff] %v4246
      %4534 = vst [vmem:[%s4412] ss:$4 sm:$0xff] %v4247
      %4535 = vst [vmem:[%s4414] ss:$4 sm:$0xff] %v4248
      %v4536 = vld.sshfl [vmem:[#allocation1] sm:$0xff pattern:$0x73625140]
      %v4537 = vld.sshfl [vmem:[#allocation1 + $0x20] sm:$0xff pattern:$0x73625140]
      %4538 = vst [vmem:[#allocation1] ss:$4 sm:$0xff] %v4249
      %4539 = vst [vmem:[%s4402] ss:$4 sm:$0xff] %v4250
      %4540 = vst [vmem:[%s4404] ss:$4 sm:$0xff] %v4251
      %4541 = vst [vmem:[%s4406] ss:$4 sm:$0xff] %v4252
      %4542 = vst [vmem:[%s4408] ss:$4 sm:$0xff] %v4253
      %4543 = vst [vmem:[%s4410] ss:$4 sm:$0xff] %v4254
      %4544 = vst [vmem:[%s4412] ss:$4 sm:$0xff] %v4255
      %4545 = vst [vmem:[%s4414] ss:$4 sm:$0xff] %v4256
      %v4546 = vld.sshfl [vmem:[#allocation1] sm:$0xff pattern:$0x73625140]
      %v4547 = vld.sshfl [vmem:[#allocation1 + $0x20] sm:$0xff pattern:$0x73625140]
      %4548 = vst [vmem:[#allocation1] ss:$4 sm:$0xff] %v4257
      %4549 = vst [vmem:[%s4402] ss:$4 sm:$0xff] %v4258
      %4550 = vst [vmem:[%s4404] ss:$4 sm:$0xff] %v4259
      %4551 = vst [vmem:[%s4406] ss:$4 sm:$0xff] %v4260
      %4552 = vst [vmem:[%s4408] ss:$4 sm:$0xff] %v4261
      %4553 = vst [vmem:[%s4410] ss:$4 sm:$0xff] %v4262
      %4554 = vst [vmem:[%s4412] ss:$4 sm:$0xff] %v4263
      %4555 = vst [vmem:[%s4414] ss:$4 sm:$0xff] %v4264
      %v4556 = vld.sshfl [vmem:[#allocation1] sm:$0xff pattern:$0x73625140]
      %v4557 = vld.sshfl [vmem:[#allocation1 + $0x20] sm:$0xff pattern:$0x73625140]
      %4558 = vst [vmem:[#allocation1] ss:$4 sm:$0xff] %v4265
      %4559 = vst [vmem:[%s4402] ss:$4 sm:$0xff] %v4266
      %4560 = vst [vmem:[%s4404] ss:$4 sm:$0xff] %v4267
      %4561 = vst [vmem:[%s4406] ss:$4 sm:$0xff] %v4268
      %4562 = vst [vmem:[%s4408] ss:$4 sm:$0xff] %v4269
      %4563 = vst [vmem:[%s4410] ss:$4 sm:$0xff] %v4270
      %4564 = vst [vmem:[%s4412] ss:$4 sm:$0xff] %v4271
      %4565 = vst [vmem:[%s4414] ss:$4 sm:$0xff] %v4272
      %v4566 = vld.sshfl [vmem:[#allocation1] sm:$0xff pattern:$0x73625140]
      %v4567 = vld.sshfl [vmem:[#allocation1 + $0x20] sm:$0xff pattern:$0x73625140]
      %v4600 = vsel %vm259, %v4416, 0.0
      %v4601 = vsel %vm259, %v4417, 0.0
      %v4602 = vadd.f32 %v4600, %v4601
      %v4603 = vsel %vm259, %v4426, 0.0
      %v4604 = vadd.f32 %v4602, %v4603
      %v4605 = vsel %vm259, %v4427, 0.0
      %v4606 = vadd.f32 %v4604, %v4605
      %v4607 = vsel %vm259, %v4436, 0.0
      %v4608 = vadd.f32 %v4606, %v4607
      %v4609 = vsel %vm259, %v4437, 0.0
      %v4610 = vadd.f32 %v4608, %v4609
      %v4611 = vsel %vm259, %v4446, 0.0
      %v4612 = vadd.f32 %v4610, %v4611
      %v4613 = vsel %vm259, %v4447, 0.0
      %v4614 = vadd.f32 %v4612, %v4613
      %v4615 = vsel %vm259, %v4456, 0.0
      %v4616 = vadd.f32 %v4614, %v4615
      %v4617 = vsel %vm259, %v4457, 0.0
      %v4618 = vadd.f32 %v4616, %v4617
      %v4619 = vsel %vm259, %v4466, 0.0
      %v4620 = vadd.f32 %v4618, %v4619
      %v4621 = vsel %vm259, %v4467, 0.0
      %v4622 = vadd.f32 %v4620, %v4621
      %v4623 = vsel %vm259, %v4476, 0.0
      %v4624 = vadd.f32 %v4622, %v4623
      %v4625 = vsel %vm259, %v4477, 0.0
      %v4626 = vadd.f32 %v4624, %v4625
      %v4627 = vsel %vm259, %v4486, 0.0
      %v4628 = vadd.f32 %v4626, %v4627
      %v4629 = vsel %vm259, %v4487, 0.0
      %v4630 = vadd.f32 %v4628, %v4629
      %v4631 = vsel %vm259, %v4496, 0.0
      %v4632 = vadd.f32 %v4630, %v4631
      %v4633 = vsel %vm259, %v4497, 0.0
      %v4634 = vadd.f32 %v4632, %v4633
      %v4635 = vsel %vm259, %v4506, 0.0
      %v4636 = vadd.f32 %v4634, %v4635
      %v4637 = vsel %vm259, %v4507, 0.0
      %v4638 = vadd.f32 %v4636, %v4637
      %v4639 = vsel %vm259, %v4516, 0.0
      %v4640 = vadd.f32 %v4638, %v4639
      %v4641 = vsel %vm259, %v4517, 0.0
      %v4642 = vadd.f32 %v4640, %v4641
      %v4643 = vsel %vm259, %v4526, 0.0
      %v4644 = vadd.f32 %v4642, %v4643
      %v4645 = vsel %vm259, %v4527, 0.0
      %v4646 = vadd.f32 %v4644, %v4645
      %v4647 = vsel %vm259, %v4536, 0.0
      %v4648 = vadd.f32 %v4646, %v4647
      %v4649 = vsel %vm259, %v4537, 0.0
      %v4650 = vadd.f32 %v4648, %v4649
      %v4651 = vsel %vm259, %v4546, 0.0
      %v4652 = vadd.f32 %v4650, %v4651
      %v4653 = vsel %vm259, %v4547, 0.0
      %v4654 = vadd.f32 %v4652, %v4653
      %v4655 = vsel %vm259, %v4556, 0.0
      %v4656 = vadd.f32 %v4654, %v4655
      %v4657 = vsel %vm259, %v4557, 0.0
      %v4658 = vadd.f32 %v4656, %v4657
      %v4659 = vsel %vm259, %v4566, 0.0
      %v4660 = vadd.f32 %v4658, %v4659
      %v4661 = vsel %vm259, %v4567, 0.0
      %v4662 = vadd.f32 %v4660, %v4661
      %v4663 = vrot.slane %v4662, 4
      %v4664 = vadd.f32 %v4662, %v4663
      %v4665 = vrot.slane %v4664, 2
      %v4666 = vadd.f32 %v4664, %v4665
      %v4667 = vrot.slane %v4666, 1
      %v4668 = vadd.f32 %v4666, %v4667
      %v4669 = vrcp.pop 256.0
      %v4670 = vmul.f32 256.0, %v4669
      %v4671 = vsub.f32 1.0, %v4670
      %v4672 = vmul.f32 %v4669, %v4671
      %v4673 = vadd.f32 %v4669, %v4672
      %vm4674 = vweird.f32 %v4669
      %v4675 = vsel %vm4674, %v4669, %v4673
      %v4676 = vmul.f32 %v4668, %v4675
      %v4677 = vmul.f32 %v4145, %v4145
      %v4678 = vmul.f32 %v4146, %v4146
      %v4679 = vmul.f32 %v4147, %v4147
      %v4680 = vmul.f32 %v4148, %v4148
      %v4681 = vmul.f32 %v4149, %v4149
      %v4682 = vmul.f32 %v4150, %v4150
      %v4683 = vmul.f32 %v4151, %v4151
      %v4684 = vmul.f32 %v4152, %v4152
      %v4685 = vmul.f32 %v4153, %v4153
      %v4686 = vmul.f32 %v4154, %v4154
      %v4687 = vmul.f32 %v4155, %v4155
      %v4688 = vmul.f32 %v4156, %v4156
      %v4689 = vmul.f32 %v4157, %v4157
      %v4690 = vmul.f32 %v4158, %v4158
      %v4691 = vmul.f32 %v4159, %v4159
      %v4692 = vmul.f32 %v4160, %v4160
      %v4693 = vmul.f32 %v4161, %v4161
      %v4694 = vmul.f32 %v4162, %v4162
      %v4695 = vmul.f32 %v4163, %v4163
      %v4696 = vmul.f32 %v4164, %v4164
      %v4697 = vmul.f32 %v4165, %v4165
      %v4698 = vmul.f32 %v4166, %v4166
      %v4699 = vmul.f32 %v4167, %v4167
      %v4700 = vmul.f32 %v4168, %v4168
      %v4701 = vmul.f32 %v4169, %v4169
      %v4702 = vmul.f32 %v4170, %v4170
      %v4703 = vmul.f32 %v4171, %v4171
      %v4704 = vmul.f32 %v4172, %v4172
      %v4705 = vmul.f32 %v4173, %v4173
      %v4706 = vmul.f32 %v4174, %v4174
      %v4707 = vmul.f32 %v4175, %v4175
      %v4708 = vmul.f32 %v4176, %v4176
      %v4709 = vmul.f32 %v4177, %v4177
      %v4710 = vmul.f32 %v4178, %v4178
      %v4711 = vmul.f32 %v4179, %v4179
      %v4712 = vmul.f32 %v4180, %v4180
      %v4713 = vmul.f32 %v4181, %v4181
      %v4714 = vmul.f32 %v4182, %v4182
      %v4715 = vmul.f32 %v4183, %v4183
      %v4716 = vmul.f32 %v4184, %v4184
      %v4717 = vmul.f32 %v4185, %v4185
      %v4718 = vmul.f32 %v4186, %v4186
      %v4719 = vmul.f32 %v4187, %v4187
      %v4720 = vmul.f32 %v4188, %v4188
      %v4721 = vmul.f32 %v4189, %v4189
      %v4722 = vmul.f32 %v4190, %v4190
      %v4723 = vmul.f32 %v4191, %v4191
      %v4724 = vmul.f32 %v4192, %v4192
      %v4725 = vmul.f32 %v4193, %v4193
      %v4726 = vmul.f32 %v4194, %v4194
      %v4727 = vmul.f32 %v4195, %v4195
      %v4728 = vmul.f32 %v4196, %v4196
      %v4729 = vmul.f32 %v4197, %v4197
      %v4730 = vmul.f32 %v4198, %v4198
      %v4731 = vmul.f32 %v4199, %v4199
      %v4732 = vmul.f32 %v4200, %v4200
      %v4733 = vmul.f32 %v4201, %v4201
      %v4734 = vmul.f32 %v4202, %v4202
      %v4735 = vmul.f32 %v4203, %v4203
      %v4736 = vmul.f32 %v4204, %v4204
      %v4737 = vmul.f32 %v4205, %v4205
      %v4738 = vmul.f32 %v4206, %v4206
      %v4739 = vmul.f32 %v4207, %v4207
      %v4740 = vmul.f32 %v4208, %v4208
      %v4741 = vmul.f32 %v4209, %v4209
      %v4742 = vmul.f32 %v4210, %v4210
      %v4743 = vmul.f32 %v4211, %v4211
      %v4744 = vmul.f32 %v4212, %v4212
      %v4745 = vmul.f32 %v4213, %v4213
      %v4746 = vmul.f32 %v4214, %v4214
      %v4747 = vmul.f32 %v4215, %v4215
      %v4748 = vmul.f32 %v4216, %v4216
      %v4749 = vmul.f32 %v4217, %v4217
      %v4750 = vmul.f32 %v4218, %v4218
      %v4751 = vmul.f32 %v4219, %v4219
      %v4752 = vmul.f32 %v4220, %v4220
      %v4753 = vmul.f32 %v4221, %v4221
      %v4754 = vmul.f32 %v4222, %v4222
      %v4755 = vmul.f32 %v4223, %v4223
      %v4756 = vmul.f32 %v4224, %v4224
      %v4757 = vmul.f32 %v4225, %v4225
      %v4758 = vmul.f32 %v4226, %v4226
      %v4759 = vmul.f32 %v4227, %v4227
      %v4760 = vmul.f32 %v4228, %v4228
      %v4761 = vmul.f32 %v4229, %v4229
      %v4762 = vmul.f32 %v4230, %v4230
      %v4763 = vmul.f32 %v4231, %v4231
      %v4764 = vmul.f32 %v4232, %v4232
      %v4765 = vmul.f32 %v4233, %v4233
      %v4766 = vmul.f32 %v4234, %v4234
      %v4767 = vmul.f32 %v4235, %v4235
      %v4768 = vmul.f32 %v4236, %v4236
      %v4769 = vmul.f32 %v4237, %v4237
      %v4770 = vmul.f32 %v4238, %v4238
      %v4771 = vmul.f32 %v4239, %v4239
      %v4772 = vmul.f32 %v4240, %v4240
      %v4773 = vmul.f32 %v4241, %v4241
      %v4774 = vmul.f32 %v4242, %v4242
      %v4775 = vmul.f32 %v4243, %v4243
      %v4776 = vmul.f32 %v4244, %v4244
      %v4777 = vmul.f32 %v4245, %v4245
      %v4778 = vmul.f32 %v4246, %v4246
      %v4779 = vmul.f32 %v4247, %v4247
      %v4780 = vmul.f32 %v4248, %v4248
      %v4781 = vmul.f32 %v4249, %v4249
      %v4782 = vmul.f32 %v4250, %v4250
      %v4783 = vmul.f32 %v4251, %v4251
      %v4784 = vmul.f32 %v4252, %v4252
      %v4785 = vmul.f32 %v4253, %v4253
      %v4786 = vmul.f32 %v4254, %v4254
      %v4787 = vmul.f32 %v4255, %v4255
      %v4788 = vmul.f32 %v4256, %v4256
      %v4789 = vmul.f32 %v4257, %v4257
      %v4790 = vmul.f32 %v4258, %v4258
      %v4791 = vmul.f32 %v4259, %v4259
      %v4792 = vmul.f32 %v4260, %v4260
      %v4793 = vmul.f32 %v4261, %v4261
      %v4794 = vmul.f32 %v4262, %v4262
      %v4795 = vmul.f32 %v4263, %v4263
      %v4796 = vmul.f32 %v4264, %v4264
      %v4797 = vmul.f32 %v4265, %v4265
      %v4798 = vmul.f32 %v4266, %v4266
      %v4799 = vmul.f32 %v4267, %v4267
      %v4800 = vmul.f32 %v4268, %v4268
      %v4801 = vmul.f32 %v4269, %v4269
      %v4802 = vmul.f32 %v4270, %v4270
      %v4803 = vmul.f32 %v4271, %v4271
      %v4804 = vmul.f32 %v4272, %v4272
      %4933 = vst [vmem:[#allocation1] ss:$4 sm:$0xff] %v4677
      %s4934 = scalar_lea.vmem [#allocation1], 1
      %4935 = vst [vmem:[%s4934] ss:$4 sm:$0xff] %v4678
      %s4936 = scalar_lea.vmem [#allocation1], 2
      %4937 = vst [vmem:[%s4936] ss:$4 sm:$0xff] %v4679
      %s4938 = scalar_lea.vmem [#allocation1], 3
      %4939 = vst [vmem:[%s4938] ss:$4 sm:$0xff] %v4680
      %s4940 = scalar_lea.vmem [#allocation1], 32
      %4941 = vst [vmem:[%s4940] ss:$4 sm:$0xff] %v4681
      %s4942 = scalar_lea.vmem [#allocation1], 33
      %4943 = vst [vmem:[%s4942] ss:$4 sm:$0xff] %v4682
      %s4944 = scalar_lea.vmem [#allocation1], 34
      %4945 = vst [vmem:[%s4944] ss:$4 sm:$0xff] %v4683
      %s4946 = scalar_lea.vmem [#allocation1], 35
      %4947 = vst [vmem:[%s4946] ss:$4 sm:$0xff] %v4684
      %v4948 = vld.sshfl [vmem:[#allocation1] sm:$0xff pattern:$0x73625140]
      %v4949 = vld.sshfl [vmem:[#allocation1 + $0x20] sm:$0xff pattern:$0x73625140]
      %4950 = vst [vmem:[#allocation1] ss:$4 sm:$0xff] %v4685
      %4951 = vst [vmem:[%s4934] ss:$4 sm:$0xff] %v4686
      %4952 = vst [vmem:[%s4936] ss:$4 sm:$0xff] %v4687
      %4953 = vst [vmem:[%s4938] ss:$4 sm:$0xff] %v4688
      %4954 = vst [vmem:[%s4940] ss:$4 sm:$0xff] %v4689
      %4955 = vst [vmem:[%s4942] ss:$4 sm:$0xff] %v4690
      %4956 = vst [vmem:[%s4944] ss:$4 sm:$0xff] %v4691
      %4957 = vst [vmem:[%s4946] ss:$4 sm:$0xff] %v4692
      %v4958 = vld.sshfl [vmem:[#allocation1] sm:$0xff pattern:$0x73625140]
      %v4959 = vld.sshfl [vmem:[#allocation1 + $0x20] sm:$0xff pattern:$0x73625140]
      %4960 = vst [vmem:[#allocation1] ss:$4 sm:$0xff] %v4693
      %4961 = vst [vmem:[%s4934] ss:$4 sm:$0xff] %v4694
      %4962 = vst [vmem:[%s4936] ss:$4 sm:$0xff] %v4695
      %4963 = vst [vmem:[%s4938] ss:$4 sm:$0xff] %v4696
      %4964 = vst [vmem:[%s4940] ss:$4 sm:$0xff] %v4697
      %4965 = vst [vmem:[%s4942] ss:$4 sm:$0xff] %v4698
      %4966 = vst [vmem:[%s4944] ss:$4 sm:$0xff] %v4699
      %4967 = vst [vmem:[%s4946] ss:$4 sm:$0xff] %v4700
      %v4968 = vld.sshfl [vmem:[#allocation1] sm:$0xff pattern:$0x73625140]
      %v4969 = vld.sshfl [vmem:[#allocation1 + $0x20] sm:$0xff pattern:$0x73625140]
      %4970 = vst [vmem:[#allocation1] ss:$4 sm:$0xff] %v4701
      %4971 = vst [vmem:[%s4934] ss:$4 sm:$0xff] %v4702
      %4972 = vst [vmem:[%s4936] ss:$4 sm:$0xff] %v4703
      %4973 = vst [vmem:[%s4938] ss:$4 sm:$0xff] %v4704
      %4974 = vst [vmem:[%s4940] ss:$4 sm:$0xff] %v4705
      %4975 = vst [vmem:[%s4942] ss:$4 sm:$0xff] %v4706
      %4976 = vst [vmem:[%s4944] ss:$4 sm:$0xff] %v4707
      %4977 = vst [vmem:[%s4946] ss:$4 sm:$0xff] %v4708
      %v4978 = vld.sshfl [vmem:[#allocation1] sm:$0xff pattern:$0x73625140]
      %v4979 = vld.sshfl [vmem:[#allocation1 + $0x20] sm:$0xff pattern:$0x73625140]
      %4980 = vst [vmem:[#allocation1] ss:$4 sm:$0xff] %v4709
      %4981 = vst [vmem:[%s4934] ss:$4 sm:$0xff] %v4710
      %4982 = vst [vmem:[%s4936] ss:$4 sm:$0xff] %v4711
      %4983 = vst [vmem:[%s4938] ss:$4 sm:$0xff] %v4712
      %4984 = vst [vmem:[%s4940] ss:$4 sm:$0xff] %v4713
      %4985 = vst [vmem:[%s4942] ss:$4 sm:$0xff] %v4714
      %4986 = vst [vmem:[%s4944] ss:$4 sm:$0xff] %v4715
      %4987 = vst [vmem:[%s4946] ss:$4 sm:$0xff] %v4716
      %v4988 = vld.sshfl [vmem:[#allocation1] sm:$0xff pattern:$0x73625140]
      %v4989 = vld.sshfl [vmem:[#allocation1 + $0x20] sm:$0xff pattern:$0x73625140]
      %4990 = vst [vmem:[#allocation1] ss:$4 sm:$0xff] %v4717
      %4991 = vst [vmem:[%s4934] ss:$4 sm:$0xff] %v4718
      %4992 = vst [vmem:[%s4936] ss:$4 sm:$0xff] %v4719
      %4993 = vst [vmem:[%s4938] ss:$4 sm:$0xff] %v4720
      %4994 = vst [vmem:[%s4940] ss:$4 sm:$0xff] %v4721
      %4995 = vst [vmem:[%s4942] ss:$4 sm:$0xff] %v4722
      %4996 = vst [vmem:[%s4944] ss:$4 sm:$0xff] %v4723
      %4997 = vst [vmem:[%s4946] ss:$4 sm:$0xff] %v4724
      %v4998 = vld.sshfl [vmem:[#allocation1] sm:$0xff pattern:$0x73625140]
      %v4999 = vld.sshfl [vmem:[#allocation1 + $0x20] sm:$0xff pattern:$0x73625140]
      %5000 = vst [vmem:[#allocation1] ss:$4 sm:$0xff] %v4725
      %5001 = vst [vmem:[%s4934] ss:$4 sm:$0xff] %v4726
      %5002 = vst [vmem:[%s4936] ss:$4 sm:$0xff] %v4727
      %5003 = vst [vmem:[%s4938] ss:$4 sm:$0xff] %v4728
      %5004 = vst [vmem:[%s4940] ss:$4 sm:$0xff] %v4729
      %5005 = vst [vmem:[%s4942] ss:$4 sm:$0xff] %v4730
      %5006 = vst [vmem:[%s4944] ss:$4 sm:$0xff] %v4731
      %5007 = vst [vmem:[%s4946] ss:$4 sm:$0xff] %v4732
      %v5008 = vld.sshfl [vmem:[#allocation1] sm:$0xff pattern:$0x73625140]
      %v5009 = vld.sshfl [vmem:[#allocation1 + $0x20] sm:$0xff pattern:$0x73625140]
      %5010 = vst [vmem:[#allocation1] ss:$4 sm:$0xff] %v4733
      %5011 = vst [vmem:[%s4934] ss:$4 sm:$0xff] %v4734
      %5012 = vst [vmem:[%s4936] ss:$4 sm:$0xff] %v4735
      %5013 = vst [vmem:[%s4938] ss:$4 sm:$0xff] %v4736
      %5014 = vst [vmem:[%s4940] ss:$4 sm:$0xff] %v4737
      %5015 = vst [vmem:[%s4942] ss:$4 sm:$0xff] %v4738
      %5016 = vst [vmem:[%s4944] ss:$4 sm:$0xff] %v4739
      %5017 = vst [vmem:[%s4946] ss:$4 sm:$0xff] %v4740
      %v5018 = vld.sshfl [vmem:[#allocation1] sm:$0xff pattern:$0x73625140]
      %v5019 = vld.sshfl [vmem:[#allocation1 + $0x20] sm:$0xff pattern:$0x73625140]
      %5020 = vst [vmem:[#allocation1] ss:$4 sm:$0xff] %v4741
      %5021 = vst [vmem:[%s4934] ss:$4 sm:$0xff] %v4742
      %5022 = vst [vmem:[%s4936] ss:$4 sm:$0xff] %v4743
      %5023 = vst [vmem:[%s4938] ss:$4 sm:$0xff] %v4744
      %5024 = vst [vmem:[%s4940] ss:$4 sm:$0xff] %v4745
      %5025 = vst [vmem:[%s4942] ss:$4 sm:$0xff] %v4746
      %5026 = vst [vmem:[%s4944] ss:$4 sm:$0xff] %v4747
      %5027 = vst [vmem:[%s4946] ss:$4 sm:$0xff] %v4748
      %v5028 = vld.sshfl [vmem:[#allocation1] sm:$0xff pattern:$0x73625140]
      %v5029 = vld.sshfl [vmem:[#allocation1 + $0x20] sm:$0xff pattern:$0x73625140]
      %5030 = vst [vmem:[#allocation1] ss:$4 sm:$0xff] %v4749
      %5031 = vst [vmem:[%s4934] ss:$4 sm:$0xff] %v4750
      %5032 = vst [vmem:[%s4936] ss:$4 sm:$0xff] %v4751
      %5033 = vst [vmem:[%s4938] ss:$4 sm:$0xff] %v4752
      %5034 = vst [vmem:[%s4940] ss:$4 sm:$0xff] %v4753
      %5035 = vst [vmem:[%s4942] ss:$4 sm:$0xff] %v4754
      %5036 = vst [vmem:[%s4944] ss:$4 sm:$0xff] %v4755
      %5037 = vst [vmem:[%s4946] ss:$4 sm:$0xff] %v4756
      %v5038 = vld.sshfl [vmem:[#allocation1] sm:$0xff pattern:$0x73625140]
      %v5039 = vld.sshfl [vmem:[#allocation1 + $0x20] sm:$0xff pattern:$0x73625140]
      %5040 = vst [vmem:[#allocation1] ss:$4 sm:$0xff] %v4757
      %5041 = vst [vmem:[%s4934] ss:$4 sm:$0xff] %v4758
      %5042 = vst [vmem:[%s4936] ss:$4 sm:$0xff] %v4759
      %5043 = vst [vmem:[%s4938] ss:$4 sm:$0xff] %v4760
      %5044 = vst [vmem:[%s4940] ss:$4 sm:$0xff] %v4761
      %5045 = vst [vmem:[%s4942] ss:$4 sm:$0xff] %v4762
      %5046 = vst [vmem:[%s4944] ss:$4 sm:$0xff] %v4763
      %5047 = vst [vmem:[%s4946] ss:$4 sm:$0xff] %v4764
      %v5048 = vld.sshfl [vmem:[#allocation1] sm:$0xff pattern:$0x73625140]
      %v5049 = vld.sshfl [vmem:[#allocation1 + $0x20] sm:$0xff pattern:$0x73625140]
      %5050 = vst [vmem:[#allocation1] ss:$4 sm:$0xff] %v4765
      %5051 = vst [vmem:[%s4934] ss:$4 sm:$0xff] %v4766
      %5052 = vst [vmem:[%s4936] ss:$4 sm:$0xff] %v4767
      %5053 = vst [vmem:[%s4938] ss:$4 sm:$0xff] %v4768
      %5054 = vst [vmem:[%s4940] ss:$4 sm:$0xff] %v4769
      %5055 = vst [vmem:[%s4942] ss:$4 sm:$0xff] %v4770
      %5056 = vst [vmem:[%s4944] ss:$4 sm:$0xff] %v4771
      %5057 = vst [vmem:[%s4946] ss:$4 sm:$0xff] %v4772
      %v5058 = vld.sshfl [vmem:[#allocation1] sm:$0xff pattern:$0x73625140]
      %v5059 = vld.sshfl [vmem:[#allocation1 + $0x20] sm:$0xff pattern:$0x73625140]
      %5060 = vst [vmem:[#allocation1] ss:$4 sm:$0xff] %v4773
      %5061 = vst [vmem:[%s4934] ss:$4 sm:$0xff] %v4774
      %5062 = vst [vmem:[%s4936] ss:$4 sm:$0xff] %v4775
      %5063 = vst [vmem:[%s4938] ss:$4 sm:$0xff] %v4776
      %5064 = vst [vmem:[%s4940] ss:$4 sm:$0xff] %v4777
      %5065 = vst [vmem:[%s4942] ss:$4 sm:$0xff] %v4778
      %5066 = vst [vmem:[%s4944] ss:$4 sm:$0xff] %v4779
      %5067 = vst [vmem:[%s4946] ss:$4 sm:$0xff] %v4780
      %v5068 = vld.sshfl [vmem:[#allocation1] sm:$0xff pattern:$0x73625140]
      %v5069 = vld.sshfl [vmem:[#allocation1 + $0x20] sm:$0xff pattern:$0x73625140]
      %5070 = vst [vmem:[#allocation1] ss:$4 sm:$0xff] %v4781
      %5071 = vst [vmem:[%s4934] ss:$4 sm:$0xff] %v4782
      %5072 = vst [vmem:[%s4936] ss:$4 sm:$0xff] %v4783
      %5073 = vst [vmem:[%s4938] ss:$4 sm:$0xff] %v4784
      %5074 = vst [vmem:[%s4940] ss:$4 sm:$0xff] %v4785
      %5075 = vst [vmem:[%s4942] ss:$4 sm:$0xff] %v4786
      %5076 = vst [vmem:[%s4944] ss:$4 sm:$0xff] %v4787
      %5077 = vst [vmem:[%s4946] ss:$4 sm:$0xff] %v4788
      %v5078 = vld.sshfl [vmem:[#allocation1] sm:$0xff pattern:$0x73625140]
      %v5079 = vld.sshfl [vmem:[#allocation1 + $0x20] sm:$0xff pattern:$0x73625140]
      %5080 = vst [vmem:[#allocation1] ss:$4 sm:$0xff] %v4789
      %5081 = vst [vmem:[%s4934] ss:$4 sm:$0xff] %v4790
      %5082 = vst [vmem:[%s4936] ss:$4 sm:$0xff] %v4791
      %5083 = vst [vmem:[%s4938] ss:$4 sm:$0xff] %v4792
      %5084 = vst [vmem:[%s4940] ss:$4 sm:$0xff] %v4793
      %5085 = vst [vmem:[%s4942] ss:$4 sm:$0xff] %v4794
      %5086 = vst [vmem:[%s4944] ss:$4 sm:$0xff] %v4795
      %5087 = vst [vmem:[%s4946] ss:$4 sm:$0xff] %v4796
      %v5088 = vld.sshfl [vmem:[#allocation1] sm:$0xff pattern:$0x73625140]
      %v5089 = vld.sshfl [vmem:[#allocation1 + $0x20] sm:$0xff pattern:$0x73625140]
      %5090 = vst [vmem:[#allocation1] ss:$4 sm:$0xff] %v4797
      %5091 = vst [vmem:[%s4934] ss:$4 sm:$0xff] %v4798
      %5092 = vst [vmem:[%s4936] ss:$4 sm:$0xff] %v4799
      %5093 = vst [vmem:[%s4938] ss:$4 sm:$0xff] %v4800
      %5094 = vst [vmem:[%s4940] ss:$4 sm:$0xff] %v4801
      %5095 = vst [vmem:[%s4942] ss:$4 sm:$0xff] %v4802
      %5096 = vst [vmem:[%s4944] ss:$4 sm:$0xff] %v4803
      %5097 = vst [vmem:[%s4946] ss:$4 sm:$0xff] %v4804
      %v5098 = vld.sshfl [vmem:[#allocation1] sm:$0xff pattern:$0x73625140]
      %v5099 = vld.sshfl [vmem:[#allocation1 + $0x20] sm:$0xff pattern:$0x73625140]
      %v5132 = vsel %vm259, %v4948, 0.0
      %v5133 = vsel %vm259, %v4949, 0.0
      %v5134 = vadd.f32 %v5132, %v5133
      %v5135 = vsel %vm259, %v4958, 0.0
      %v5136 = vadd.f32 %v5134, %v5135
      %v5137 = vsel %vm259, %v4959, 0.0
      %v5138 = vadd.f32 %v5136, %v5137
      %v5139 = vsel %vm259, %v4968, 0.0
      %v5140 = vadd.f32 %v5138, %v5139
      %v5141 = vsel %vm259, %v4969, 0.0
      %v5142 = vadd.f32 %v5140, %v5141
      %v5143 = vsel %vm259, %v4978, 0.0
      %v5144 = vadd.f32 %v5142, %v5143
      %v5145 = vsel %vm259, %v4979, 0.0
      %v5146 = vadd.f32 %v5144, %v5145
      %v5147 = vsel %vm259, %v4988, 0.0
      %v5148 = vadd.f32 %v5146, %v5147
      %v5149 = vsel %vm259, %v4989, 0.0
      %v5150 = vadd.f32 %v5148, %v5149
      %v5151 = vsel %vm259, %v4998, 0.0
      %v5152 = vadd.f32 %v5150, %v5151
      %v5153 = vsel %vm259, %v4999, 0.0
      %v5154 = vadd.f32 %v5152, %v5153
      %v5155 = vsel %vm259, %v5008, 0.0
      %v5156 = vadd.f32 %v5154, %v5155
      %v5157 = vsel %vm259, %v5009, 0.0
      %v5158 = vadd.f32 %v5156, %v5157
      %v5159 = vsel %vm259, %v5018, 0.0
      %v5160 = vadd.f32 %v5158, %v5159
      %v5161 = vsel %vm259, %v5019, 0.0
      %v5162 = vadd.f32 %v5160, %v5161
      %v5163 = vsel %vm259, %v5028, 0.0
      %v5164 = vadd.f32 %v5162, %v5163
      %v5165 = vsel %vm259, %v5029, 0.0
      %v5166 = vadd.f32 %v5164, %v5165
      %v5167 = vsel %vm259, %v5038, 0.0
      %v5168 = vadd.f32 %v5166, %v5167
      %v5169 = vsel %vm259, %v5039, 0.0
      %v5170 = vadd.f32 %v5168, %v5169
      %v5171 = vsel %vm259, %v5048, 0.0
      %v5172 = vadd.f32 %v5170, %v5171
      %v5173 = vsel %vm259, %v5049, 0.0
      %v5174 = vadd.f32 %v5172, %v5173
      %v5175 = vsel %vm259, %v5058, 0.0
      %v5176 = vadd.f32 %v5174, %v5175
      %v5177 = vsel %vm259, %v5059, 0.0
      %v5178 = vadd.f32 %v5176, %v5177
      %v5179 = vsel %vm259, %v5068, 0.0
      %v5180 = vadd.f32 %v5178, %v5179
      %v5181 = vsel %vm259, %v5069, 0.0
      %v5182 = vadd.f32 %v5180, %v5181
      %v5183 = vsel %vm259, %v5078, 0.0
      %v5184 = vadd.f32 %v5182, %v5183
      %v5185 = vsel %vm259, %v5079, 0.0
      %v5186 = vadd.f32 %v5184, %v5185
      %v5187 = vsel %vm259, %v5088, 0.0
      %v5188 = vadd.f32 %v5186, %v5187
      %v5189 = vsel %vm259, %v5089, 0.0
      %v5190 = vadd.f32 %v5188, %v5189
      %v5191 = vsel %vm259, %v5098, 0.0
      %v5192 = vadd.f32 %v5190, %v5191
      %v5193 = vsel %vm259, %v5099, 0.0
      %v5194 = vadd.f32 %v5192, %v5193
      %v5195 = vrot.slane %v5194, 4
      %v5196 = vadd.f32 %v5194, %v5195
      %v5197 = vrot.slane %v5196, 2
      %v5198 = vadd.f32 %v5196, %v5197
      %v5199 = vrot.slane %v5198, 1
      %v5200 = vadd.f32 %v5198, %v5199
      %v5201 = vmul.f32 %v5200, %v4675
      %v5202 = vmul.f32 %v4676, %v4676
      %v5203 = vsub.f32 %v5201, %v5202
      %v5204 = vmax.f32 %v5203, 0.0
      %v5205 = vadd.f32 %v5204, 1e-05
      %v5206 = vrsqrt.pop %v5205
      %v5207 = vmul.f32 %v5206, %v5205
      %v5208 = vmul.f32 %v5207, %v5206
      %v5209 = vmul.f32 0.5, %v5208
      %v5210 = vsub.f32 1.5, %v5209
      %v5211 = vmul.f32 %v5206, %v5210
      %vm5212 = vweird.f32 %v5205
      %vm5213 = vweird.f32 %v5206
      %vm5214 = vmor %vm5212, %vm5213
      %v5215 = vsel %vm5214, %v5206, %v5211
      %v5217 = vrot.slane %v4676, 2
      %v5218 = vrot.slane %v4676, 4
      %v5219 = vrot.slane %v4676, 6
      %v5223 = vsub.f32 %v4145, %v4676
      %v5224 = vsub.f32 %v4146, %v5217
      %v5225 = vsub.f32 %v4147, %v5218
      %v5226 = vsub.f32 %v4148, %v5219
      %v5227 = vsub.f32 %v4149, %v4676
      %v5228 = vsub.f32 %v4150, %v5217
      %v5229 = vsub.f32 %v4151, %v5218
      %v5230 = vsub.f32 %v4152, %v5219
      %v5231 = vsub.f32 %v4153, %v4676
      %v5232 = vsub.f32 %v4154, %v5217
      %v5233 = vsub.f32 %v4155, %v5218
      %v5234 = vsub.f32 %v4156, %v5219
      %v5235 = vsub.f32 %v4157, %v4676
      %v5236 = vsub.f32 %v4158, %v5217
      %v5237 = vsub.f32 %v4159, %v5218
      %v5238 = vsub.f32 %v4160, %v5219
      %v5239 = vsub.f32 %v4161, %v4676
      %v5240 = vsub.f32 %v4162, %v5217
      %v5241 = vsub.f32 %v4163, %v5218
      %v5242 = vsub.f32 %v4164, %v5219
      %v5243 = vsub.f32 %v4165, %v4676
      %v5244 = vsub.f32 %v4166, %v5217
      %v5245 = vsub.f32 %v4167, %v5218
      %v5246 = vsub.f32 %v4168, %v5219
      %v5247 = vsub.f32 %v4169, %v4676
      %v5248 = vsub.f32 %v4170, %v5217
      %v5249 = vsub.f32 %v4171, %v5218
      %v5250 = vsub.f32 %v4172, %v5219
      %v5251 = vsub.f32 %v4173, %v4676
      %v5252 = vsub.f32 %v4174, %v5217
      %v5253 = vsub.f32 %v4175, %v5218
      %v5254 = vsub.f32 %v4176, %v5219
      %v5255 = vsub.f32 %v4177, %v4676
      %v5256 = vsub.f32 %v4178, %v5217
      %v5257 = vsub.f32 %v4179, %v5218
      %v5258 = vsub.f32 %v4180, %v5219
      %v5259 = vsub.f32 %v4181, %v4676
      %v5260 = vsub.f32 %v4182, %v5217
      %v5261 = vsub.f32 %v4183, %v5218
      %v5262 = vsub.f32 %v4184, %v5219
      %v5263 = vsub.f32 %v4185, %v4676
      %v5264 = vsub.f32 %v4186, %v5217
      %v5265 = vsub.f32 %v4187, %v5218
      %v5266 = vsub.f32 %v4188, %v5219
      %v5267 = vsub.f32 %v4189, %v4676
      %v5268 = vsub.f32 %v4190, %v5217
      %v5269 = vsub.f32 %v4191, %v5218
      %v5270 = vsub.f32 %v4192, %v5219
      %v5271 = vsub.f32 %v4193, %v4676
      %v5272 = vsub.f32 %v4194, %v5217
      %v5273 = vsub.f32 %v4195, %v5218
      %v5274 = vsub.f32 %v4196, %v5219
      %v5275 = vsub.f32 %v4197, %v4676
      %v5276 = vsub.f32 %v4198, %v5217
      %v5277 = vsub.f32 %v4199, %v5218
      %v5278 = vsub.f32 %v4200, %v5219
      %v5279 = vsub.f32 %v4201, %v4676
      %v5280 = vsub.f32 %v4202, %v5217
      %v5281 = vsub.f32 %v4203, %v5218
      %v5282 = vsub.f32 %v4204, %v5219
      %v5283 = vsub.f32 %v4205, %v4676
      %v5284 = vsub.f32 %v4206, %v5217
      %v5285 = vsub.f32 %v4207, %v5218
      %v5286 = vsub.f32 %v4208, %v5219
      %v5287 = vsub.f32 %v4209, %v4676
      %v5288 = vsub.f32 %v4210, %v5217
      %v5289 = vsub.f32 %v4211, %v5218
      %v5290 = vsub.f32 %v4212, %v5219
      %v5291 = vsub.f32 %v4213, %v4676
      %v5292 = vsub.f32 %v4214, %v5217
      %v5293 = vsub.f32 %v4215, %v5218
      %v5294 = vsub.f32 %v4216, %v5219
      %v5295 = vsub.f32 %v4217, %v4676
      %v5296 = vsub.f32 %v4218, %v5217
      %v5297 = vsub.f32 %v4219, %v5218
      %v5298 = vsub.f32 %v4220, %v5219
      %v5299 = vsub.f32 %v4221, %v4676
      %v5300 = vsub.f32 %v4222, %v5217
      %v5301 = vsub.f32 %v4223, %v5218
      %v5302 = vsub.f32 %v4224, %v5219
      %v5303 = vsub.f32 %v4225, %v4676
      %v5304 = vsub.f32 %v4226, %v5217
      %v5305 = vsub.f32 %v4227, %v5218
      %v5306 = vsub.f32 %v4228, %v5219
      %v5307 = vsub.f32 %v4229, %v4676
      %v5308 = vsub.f32 %v4230, %v5217
      %v5309 = vsub.f32 %v4231, %v5218
      %v5310 = vsub.f32 %v4232, %v5219
      %v5311 = vsub.f32 %v4233, %v4676
      %v5312 = vsub.f32 %v4234, %v5217
      %v5313 = vsub.f32 %v4235, %v5218
      %v5314 = vsub.f32 %v4236, %v5219
      %v5315 = vsub.f32 %v4237, %v4676
      %v5316 = vsub.f32 %v4238, %v5217
      %v5317 = vsub.f32 %v4239, %v5218
      %v5318 = vsub.f32 %v4240, %v5219
      %v5319 = vsub.f32 %v4241, %v4676
      %v5320 = vsub.f32 %v4242, %v5217
      %v5321 = vsub.f32 %v4243, %v5218
      %v5322 = vsub.f32 %v4244, %v5219
      %v5323 = vsub.f32 %v4245, %v4676
      %v5324 = vsub.f32 %v4246, %v5217
      %v5325 = vsub.f32 %v4247, %v5218
      %v5326 = vsub.f32 %v4248, %v5219
      %v5327 = vsub.f32 %v4249, %v4676
      %v5328 = vsub.f32 %v4250, %v5217
      %v5329 = vsub.f32 %v4251, %v5218
      %v5330 = vsub.f32 %v4252, %v5219
      %v5331 = vsub.f32 %v4253, %v4676
      %v5332 = vsub.f32 %v4254, %v5217
      %v5333 = vsub.f32 %v4255, %v5218
      %v5334 = vsub.f32 %v4256, %v5219
      %v5335 = vsub.f32 %v4257, %v4676
      %v5336 = vsub.f32 %v4258, %v5217
      %v5337 = vsub.f32 %v4259, %v5218
      %v5338 = vsub.f32 %v4260, %v5219
      %v5339 = vsub.f32 %v4261, %v4676
      %v5340 = vsub.f32 %v4262, %v5217
      %v5341 = vsub.f32 %v4263, %v5218
      %v5342 = vsub.f32 %v4264, %v5219
      %v5343 = vsub.f32 %v4265, %v4676
      %v5344 = vsub.f32 %v4266, %v5217
      %v5345 = vsub.f32 %v4267, %v5218
      %v5346 = vsub.f32 %v4268, %v5219
      %v5347 = vsub.f32 %v4269, %v4676
      %v5348 = vsub.f32 %v4270, %v5217
      %v5349 = vsub.f32 %v4271, %v5218
      %v5350 = vsub.f32 %v4272, %v5219
      %v5352 = vrot.slane %v5215, 2
      %v5353 = vrot.slane %v5215, 4
      %v5354 = vrot.slane %v5215, 6
      %v5358 = vmul.f32 %v5223, %v5215
      %v5359 = vmul.f32 %v5224, %v5352
      %v5360 = vmul.f32 %v5225, %v5353
      %v5361 = vmul.f32 %v5226, %v5354
      %v5362 = vmul.f32 %v5227, %v5215
      %v5363 = vmul.f32 %v5228, %v5352
      %v5364 = vmul.f32 %v5229, %v5353
      %v5365 = vmul.f32 %v5230, %v5354
      %v5366 = vmul.f32 %v5231, %v5215
      %v5367 = vmul.f32 %v5232, %v5352
      %v5368 = vmul.f32 %v5233, %v5353
      %v5369 = vmul.f32 %v5234, %v5354
      %v5370 = vmul.f32 %v5235, %v5215
      %v5371 = vmul.f32 %v5236, %v5352
      %v5372 = vmul.f32 %v5237, %v5353
      %v5373 = vmul.f32 %v5238, %v5354
      %v5374 = vmul.f32 %v5239, %v5215
      %v5375 = vmul.f32 %v5240, %v5352
      %v5376 = vmul.f32 %v5241, %v5353
      %v5377 = vmul.f32 %v5242, %v5354
      %v5378 = vmul.f32 %v5243, %v5215
      %v5379 = vmul.f32 %v5244, %v5352
      %v5380 = vmul.f32 %v5245, %v5353
      %v5381 = vmul.f32 %v5246, %v5354
      %v5382 = vmul.f32 %v5247, %v5215
      %v5383 = vmul.f32 %v5248, %v5352
      %v5384 = vmul.f32 %v5249, %v5353
      %v5385 = vmul.f32 %v5250, %v5354
      %v5386 = vmul.f32 %v5251, %v5215
      %v5387 = vmul.f32 %v5252, %v5352
      %v5388 = vmul.f32 %v5253, %v5353
      %v5389 = vmul.f32 %v5254, %v5354
      %v5390 = vmul.f32 %v5255, %v5215
      %v5391 = vmul.f32 %v5256, %v5352
      %v5392 = vmul.f32 %v5257, %v5353
      %v5393 = vmul.f32 %v5258, %v5354
      %v5394 = vmul.f32 %v5259, %v5215
      %v5395 = vmul.f32 %v5260, %v5352
      %v5396 = vmul.f32 %v5261, %v5353
      %v5397 = vmul.f32 %v5262, %v5354
      %v5398 = vmul.f32 %v5263, %v5215
      %v5399 = vmul.f32 %v5264, %v5352
      %v5400 = vmul.f32 %v5265, %v5353
      %v5401 = vmul.f32 %v5266, %v5354
      %v5402 = vmul.f32 %v5267, %v5215
      %v5403 = vmul.f32 %v5268, %v5352
      %v5404 = vmul.f32 %v5269, %v5353
      %v5405 = vmul.f32 %v5270, %v5354
      %v5406 = vmul.f32 %v5271, %v5215
      %v5407 = vmul.f32 %v5272, %v5352
      %v5408 = vmul.f32 %v5273, %v5353
      %v5409 = vmul.f32 %v5274, %v5354
      %v5410 = vmul.f32 %v5275, %v5215
      %v5411 = vmul.f32 %v5276, %v5352
      %v5412 = vmul.f32 %v5277, %v5353
      %v5413 = vmul.f32 %v5278, %v5354
      %v5414 = vmul.f32 %v5279, %v5215
      %v5415 = vmul.f32 %v5280, %v5352
      %v5416 = vmul.f32 %v5281, %v5353
      %v5417 = vmul.f32 %v5282, %v5354
      %v5418 = vmul.f32 %v5283, %v5215
      %v5419 = vmul.f32 %v5284, %v5352
      %v5420 = vmul.f32 %v5285, %v5353
      %v5421 = vmul.f32 %v5286, %v5354
      %v5422 = vmul.f32 %v5287, %v5215
      %v5423 = vmul.f32 %v5288, %v5352
      %v5424 = vmul.f32 %v5289, %v5353
      %v5425 = vmul.f32 %v5290, %v5354
      %v5426 = vmul.f32 %v5291, %v5215
      %v5427 = vmul.f32 %v5292, %v5352
      %v5428 = vmul.f32 %v5293, %v5353
      %v5429 = vmul.f32 %v5294, %v5354
      %v5430 = vmul.f32 %v5295, %v5215
      %v5431 = vmul.f32 %v5296, %v5352
      %v5432 = vmul.f32 %v5297, %v5353
      %v5433 = vmul.f32 %v5298, %v5354
      %v5434 = vmul.f32 %v5299, %v5215
      %v5435 = vmul.f32 %v5300, %v5352
      %v5436 = vmul.f32 %v5301, %v5353
      %v5437 = vmul.f32 %v5302, %v5354
      %v5438 = vmul.f32 %v5303, %v5215
      %v5439 = vmul.f32 %v5304, %v5352
      %v5440 = vmul.f32 %v5305, %v5353
      %v5441 = vmul.f32 %v5306, %v5354
      %v5442 = vmul.f32 %v5307, %v5215
      %v5443 = vmul.f32 %v5308, %v5352
      %v5444 = vmul.f32 %v5309, %v5353
      %v5445 = vmul.f32 %v5310, %v5354
      %v5446 = vmul.f32 %v5311, %v5215
      %v5447 = vmul.f32 %v5312, %v5352
      %v5448 = vmul.f32 %v5313, %v5353
      %v5449 = vmul.f32 %v5314, %v5354
      %v5450 = vmul.f32 %v5315, %v5215
      %v5451 = vmul.f32 %v5316, %v5352
      %v5452 = vmul.f32 %v5317, %v5353
      %v5453 = vmul.f32 %v5318, %v5354
      %v5454 = vmul.f32 %v5319, %v5215
      %v5455 = vmul.f32 %v5320, %v5352
      %v5456 = vmul.f32 %v5321, %v5353
      %v5457 = vmul.f32 %v5322, %v5354
      %v5458 = vmul.f32 %v5323, %v5215
      %v5459 = vmul.f32 %v5324, %v5352
      %v5460 = vmul.f32 %v5325, %v5353
      %v5461 = vmul.f32 %v5326, %v5354
      %v5462 = vmul.f32 %v5327, %v5215
      %v5463 = vmul.f32 %v5328, %v5352
      %v5464 = vmul.f32 %v5329, %v5353
      %v5465 = vmul.f32 %v5330, %v5354
      %v5466 = vmul.f32 %v5331, %v5215
      %v5467 = vmul.f32 %v5332, %v5352
      %v5468 = vmul.f32 %v5333, %v5353
      %v5469 = vmul.f32 %v5334, %v5354
      %v5470 = vmul.f32 %v5335, %v5215
      %v5471 = vmul.f32 %v5336, %v5352
      %v5472 = vmul.f32 %v5337, %v5353
      %v5473 = vmul.f32 %v5338, %v5354
      %v5474 = vmul.f32 %v5339, %v5215
      %v5475 = vmul.f32 %v5340, %v5352
      %v5476 = vmul.f32 %v5341, %v5353
      %v5477 = vmul.f32 %v5342, %v5354
      %v5478 = vmul.f32 %v5343, %v5215
      %v5479 = vmul.f32 %v5344, %v5352
      %v5480 = vmul.f32 %v5345, %v5353
      %v5481 = vmul.f32 %v5346, %v5354
      %v5482 = vmul.f32 %v5347, %v5215
      %v5483 = vmul.f32 %v5348, %v5352
      %v5484 = vmul.f32 %v5349, %v5353
      %v5485 = vmul.f32 %v5350, %v5354
      %5614 = vst [vmem:[#allocation1] ss:$4 sm:$0xff] %v5358
      %s5615 = scalar_lea.vmem [#allocation1], 1
      %5616 = vst [vmem:[%s5615] ss:$4 sm:$0xff] %v5359
      %s5617 = scalar_lea.vmem [#allocation1], 2
      %5618 = vst [vmem:[%s5617] ss:$4 sm:$0xff] %v5360
      %s5619 = scalar_lea.vmem [#allocation1], 3
      %5620 = vst [vmem:[%s5619] ss:$4 sm:$0xff] %v5361
      %s5621 = scalar_lea.vmem [#allocation1], 32
      %5622 = vst [vmem:[%s5621] ss:$4 sm:$0xff] %v5362
      %s5623 = scalar_lea.vmem [#allocation1], 33
      %5624 = vst [vmem:[%s5623] ss:$4 sm:$0xff] %v5363
      %s5625 = scalar_lea.vmem [#allocation1], 34
      %5626 = vst [vmem:[%s5625] ss:$4 sm:$0xff] %v5364
      %s5627 = scalar_lea.vmem [#allocation1], 35
      %5628 = vst [vmem:[%s5627] ss:$4 sm:$0xff] %v5365
      %v5629 = vld.sshfl [vmem:[#allocation1] sm:$0xff pattern:$0x73625140]
      %v5630 = vld.sshfl [vmem:[#allocation1 + $0x20] sm:$0xff pattern:$0x73625140]
      %5631 = vst [vmem:[#allocation1] ss:$4 sm:$0xff] %v5366
      %5632 = vst [vmem:[%s5615] ss:$4 sm:$0xff] %v5367
      %5633 = vst [vmem:[%s5617] ss:$4 sm:$0xff] %v5368
      %5634 = vst [vmem:[%s5619] ss:$4 sm:$0xff] %v5369
      %5635 = vst [vmem:[%s5621] ss:$4 sm:$0xff] %v5370
      %5636 = vst [vmem:[%s5623] ss:$4 sm:$0xff] %v5371
      %5637 = vst [vmem:[%s5625] ss:$4 sm:$0xff] %v5372
      %5638 = vst [vmem:[%s5627] ss:$4 sm:$0xff] %v5373
      %v5639 = vld.sshfl [vmem:[#allocation1] sm:$0xff pattern:$0x73625140]
      %v5640 = vld.sshfl [vmem:[#allocation1 + $0x20] sm:$0xff pattern:$0x73625140]
      %5641 = vst [vmem:[#allocation1] ss:$4 sm:$0xff] %v5374
      %5642 = vst [vmem:[%s5615] ss:$4 sm:$0xff] %v5375
      %5643 = vst [vmem:[%s5617] ss:$4 sm:$0xff] %v5376
      %5644 = vst [vmem:[%s5619] ss:$4 sm:$0xff] %v5377
      %5645 = vst [vmem:[%s5621] ss:$4 sm:$0xff] %v5378
      %5646 = vst [vmem:[%s5623] ss:$4 sm:$0xff] %v5379
      %5647 = vst [vmem:[%s5625] ss:$4 sm:$0xff] %v5380
      %5648 = vst [vmem:[%s5627] ss:$4 sm:$0xff] %v5381
      %v5649 = vld.sshfl [vmem:[#allocation1] sm:$0xff pattern:$0x73625140]
      %v5650 = vld.sshfl [vmem:[#allocation1 + $0x20] sm:$0xff pattern:$0x73625140]
      %5651 = vst [vmem:[#allocation1] ss:$4 sm:$0xff] %v5382
      %5652 = vst [vmem:[%s5615] ss:$4 sm:$0xff] %v5383
      %5653 = vst [vmem:[%s5617] ss:$4 sm:$0xff] %v5384
      %5654 = vst [vmem:[%s5619] ss:$4 sm:$0xff] %v5385
      %5655 = vst [vmem:[%s5621] ss:$4 sm:$0xff] %v5386
      %5656 = vst [vmem:[%s5623] ss:$4 sm:$0xff] %v5387
      %5657 = vst [vmem:[%s5625] ss:$4 sm:$0xff] %v5388
      %5658 = vst [vmem:[%s5627] ss:$4 sm:$0xff] %v5389
      %v5659 = vld.sshfl [vmem:[#allocation1] sm:$0xff pattern:$0x73625140]
      %v5660 = vld.sshfl [vmem:[#allocation1 + $0x20] sm:$0xff pattern:$0x73625140]
      %5661 = vst [vmem:[#allocation1] ss:$4 sm:$0xff] %v5390
      %5662 = vst [vmem:[%s5615] ss:$4 sm:$0xff] %v5391
      %5663 = vst [vmem:[%s5617] ss:$4 sm:$0xff] %v5392
      %5664 = vst [vmem:[%s5619] ss:$4 sm:$0xff] %v5393
      %5665 = vst [vmem:[%s5621] ss:$4 sm:$0xff] %v5394
      %5666 = vst [vmem:[%s5623] ss:$4 sm:$0xff] %v5395
      %5667 = vst [vmem:[%s5625] ss:$4 sm:$0xff] %v5396
      %5668 = vst [vmem:[%s5627] ss:$4 sm:$0xff] %v5397
      %v5669 = vld.sshfl [vmem:[#allocation1] sm:$0xff pattern:$0x73625140]
      %v5670 = vld.sshfl [vmem:[#allocation1 + $0x20] sm:$0xff pattern:$0x73625140]
      %5671 = vst [vmem:[#allocation1] ss:$4 sm:$0xff] %v5398
      %5672 = vst [vmem:[%s5615] ss:$4 sm:$0xff] %v5399
      %5673 = vst [vmem:[%s5617] ss:$4 sm:$0xff] %v5400
      %5674 = vst [vmem:[%s5619] ss:$4 sm:$0xff] %v5401
      %5675 = vst [vmem:[%s5621] ss:$4 sm:$0xff] %v5402
      %5676 = vst [vmem:[%s5623] ss:$4 sm:$0xff] %v5403
      %5677 = vst [vmem:[%s5625] ss:$4 sm:$0xff] %v5404
      %5678 = vst [vmem:[%s5627] ss:$4 sm:$0xff] %v5405
      %v5679 = vld.sshfl [vmem:[#allocation1] sm:$0xff pattern:$0x73625140]
      %v5680 = vld.sshfl [vmem:[#allocation1 + $0x20] sm:$0xff pattern:$0x73625140]
      %5681 = vst [vmem:[#allocation1] ss:$4 sm:$0xff] %v5406
      %5682 = vst [vmem:[%s5615] ss:$4 sm:$0xff] %v5407
      %5683 = vst [vmem:[%s5617] ss:$4 sm:$0xff] %v5408
      %5684 = vst [vmem:[%s5619] ss:$4 sm:$0xff] %v5409
      %5685 = vst [vmem:[%s5621] ss:$4 sm:$0xff] %v5410
      %5686 = vst [vmem:[%s5623] ss:$4 sm:$0xff] %v5411
      %5687 = vst [vmem:[%s5625] ss:$4 sm:$0xff] %v5412
      %5688 = vst [vmem:[%s5627] ss:$4 sm:$0xff] %v5413
      %v5689 = vld.sshfl [vmem:[#allocation1] sm:$0xff pattern:$0x73625140]
      %v5690 = vld.sshfl [vmem:[#allocation1 + $0x20] sm:$0xff pattern:$0x73625140]
      %5691 = vst [vmem:[#allocation1] ss:$4 sm:$0xff] %v5414
      %5692 = vst [vmem:[%s5615] ss:$4 sm:$0xff] %v5415
      %5693 = vst [vmem:[%s5617] ss:$4 sm:$0xff] %v5416
      %5694 = vst [vmem:[%s5619] ss:$4 sm:$0xff] %v5417
      %5695 = vst [vmem:[%s5621] ss:$4 sm:$0xff] %v5418
      %5696 = vst [vmem:[%s5623] ss:$4 sm:$0xff] %v5419
      %5697 = vst [vmem:[%s5625] ss:$4 sm:$0xff] %v5420
      %5698 = vst [vmem:[%s5627] ss:$4 sm:$0xff] %v5421
      %v5699 = vld.sshfl [vmem:[#allocation1] sm:$0xff pattern:$0x73625140]
      %v5700 = vld.sshfl [vmem:[#allocation1 + $0x20] sm:$0xff pattern:$0x73625140]
      %5701 = vst [vmem:[#allocation1] ss:$4 sm:$0xff] %v5422
      %5702 = vst [vmem:[%s5615] ss:$4 sm:$0xff] %v5423
      %5703 = vst [vmem:[%s5617] ss:$4 sm:$0xff] %v5424
      %5704 = vst [vmem:[%s5619] ss:$4 sm:$0xff] %v5425
      %5705 = vst [vmem:[%s5621] ss:$4 sm:$0xff] %v5426
      %5706 = vst [vmem:[%s5623] ss:$4 sm:$0xff] %v5427
      %5707 = vst [vmem:[%s5625] ss:$4 sm:$0xff] %v5428
      %5708 = vst [vmem:[%s5627] ss:$4 sm:$0xff] %v5429
      %v5709 = vld.sshfl [vmem:[#allocation1] sm:$0xff pattern:$0x73625140]
      %v5710 = vld.sshfl [vmem:[#allocation1 + $0x20] sm:$0xff pattern:$0x73625140]
      %5711 = vst [vmem:[#allocation1] ss:$4 sm:$0xff] %v5430
      %5712 = vst [vmem:[%s5615] ss:$4 sm:$0xff] %v5431
      %5713 = vst [vmem:[%s5617] ss:$4 sm:$0xff] %v5432
      %5714 = vst [vmem:[%s5619] ss:$4 sm:$0xff] %v5433
      %5715 = vst [vmem:[%s5621] ss:$4 sm:$0xff] %v5434
      %5716 = vst [vmem:[%s5623] ss:$4 sm:$0xff] %v5435
      %5717 = vst [vmem:[%s5625] ss:$4 sm:$0xff] %v5436
      %5718 = vst [vmem:[%s5627] ss:$4 sm:$0xff] %v5437
      %v5719 = vld.sshfl [vmem:[#allocation1] sm:$0xff pattern:$0x73625140]
      %v5720 = vld.sshfl [vmem:[#allocation1 + $0x20] sm:$0xff pattern:$0x73625140]
      %5721 = vst [vmem:[#allocation1] ss:$4 sm:$0xff] %v5438
      %5722 = vst [vmem:[%s5615] ss:$4 sm:$0xff] %v5439
      %5723 = vst [vmem:[%s5617] ss:$4 sm:$0xff] %v5440
      %5724 = vst [vmem:[%s5619] ss:$4 sm:$0xff] %v5441
      %5725 = vst [vmem:[%s5621] ss:$4 sm:$0xff] %v5442
      %5726 = vst [vmem:[%s5623] ss:$4 sm:$0xff] %v5443
      %5727 = vst [vmem:[%s5625] ss:$4 sm:$0xff] %v5444
      %5728 = vst [vmem:[%s5627] ss:$4 sm:$0xff] %v5445
      %v5729 = vld.sshfl [vmem:[#allocation1] sm:$0xff pattern:$0x73625140]
      %v5730 = vld.sshfl [vmem:[#allocation1 + $0x20] sm:$0xff pattern:$0x73625140]
      %5731 = vst [vmem:[#allocation1] ss:$4 sm:$0xff] %v5446
      %5732 = vst [vmem:[%s5615] ss:$4 sm:$0xff] %v5447
      %5733 = vst [vmem:[%s5617] ss:$4 sm:$0xff] %v5448
      %5734 = vst [vmem:[%s5619] ss:$4 sm:$0xff] %v5449
      %5735 = vst [vmem:[%s5621] ss:$4 sm:$0xff] %v5450
      %5736 = vst [vmem:[%s5623] ss:$4 sm:$0xff] %v5451
      %5737 = vst [vmem:[%s5625] ss:$4 sm:$0xff] %v5452
      %5738 = vst [vmem:[%s5627] ss:$4 sm:$0xff] %v5453
      %v5739 = vld.sshfl [vmem:[#allocation1] sm:$0xff pattern:$0x73625140]
      %v5740 = vld.sshfl [vmem:[#allocation1 + $0x20] sm:$0xff pattern:$0x73625140]
      %5741 = vst [vmem:[#allocation1] ss:$4 sm:$0xff] %v5454
      %5742 = vst [vmem:[%s5615] ss:$4 sm:$0xff] %v5455
      %5743 = vst [vmem:[%s5617] ss:$4 sm:$0xff] %v5456
      %5744 = vst [vmem:[%s5619] ss:$4 sm:$0xff] %v5457
      %5745 = vst [vmem:[%s5621] ss:$4 sm:$0xff] %v5458
      %5746 = vst [vmem:[%s5623] ss:$4 sm:$0xff] %v5459
      %5747 = vst [vmem:[%s5625] ss:$4 sm:$0xff] %v5460
      %5748 = vst [vmem:[%s5627] ss:$4 sm:$0xff] %v5461
      %v5749 = vld.sshfl [vmem:[#allocation1] sm:$0xff pattern:$0x73625140]
      %v5750 = vld.sshfl [vmem:[#allocation1 + $0x20] sm:$0xff pattern:$0x73625140]
      %5751 = vst [vmem:[#allocation1] ss:$4 sm:$0xff] %v5462
      %5752 = vst [vmem:[%s5615] ss:$4 sm:$0xff] %v5463
      %5753 = vst [vmem:[%s5617] ss:$4 sm:$0xff] %v5464
      %5754 = vst [vmem:[%s5619] ss:$4 sm:$0xff] %v5465
      %5755 = vst [vmem:[%s5621] ss:$4 sm:$0xff] %v5466
      %5756 = vst [vmem:[%s5623] ss:$4 sm:$0xff] %v5467
      %5757 = vst [vmem:[%s5625] ss:$4 sm:$0xff] %v5468
      %5758 = vst [vmem:[%s5627] ss:$4 sm:$0xff] %v5469
      %v5759 = vld.sshfl [vmem:[#allocation1] sm:$0xff pattern:$0x73625140]
      %v5760 = vld.sshfl [vmem:[#allocation1 + $0x20] sm:$0xff pattern:$0x73625140]
      %5761 = vst [vmem:[#allocation1] ss:$4 sm:$0xff] %v5470
      %5762 = vst [vmem:[%s5615] ss:$4 sm:$0xff] %v5471
      %5763 = vst [vmem:[%s5617] ss:$4 sm:$0xff] %v5472
      %5764 = vst [vmem:[%s5619] ss:$4 sm:$0xff] %v5473
      %5765 = vst [vmem:[%s5621] ss:$4 sm:$0xff] %v5474
      %5766 = vst [vmem:[%s5623] ss:$4 sm:$0xff] %v5475
      %5767 = vst [vmem:[%s5625] ss:$4 sm:$0xff] %v5476
      %5768 = vst [vmem:[%s5627] ss:$4 sm:$0xff] %v5477
      %v5769 = vld.sshfl [vmem:[#allocation1] sm:$0xff pattern:$0x73625140]
      %v5770 = vld.sshfl [vmem:[#allocation1 + $0x20] sm:$0xff pattern:$0x73625140]
      %5771 = vst [vmem:[#allocation1] ss:$4 sm:$0xff] %v5478
      %5772 = vst [vmem:[%s5615] ss:$4 sm:$0xff] %v5479
      %5773 = vst [vmem:[%s5617] ss:$4 sm:$0xff] %v5480
      %5774 = vst [vmem:[%s5619] ss:$4 sm:$0xff] %v5481
      %5775 = vst [vmem:[%s5621] ss:$4 sm:$0xff] %v5482
      %5776 = vst [vmem:[%s5623] ss:$4 sm:$0xff] %v5483
      %5777 = vst [vmem:[%s5625] ss:$4 sm:$0xff] %v5484
      %5778 = vst [vmem:[%s5627] ss:$4 sm:$0xff] %v5485
      %v5779 = vld.sshfl [vmem:[#allocation1] sm:$0xff pattern:$0x73625140]
      %v5780 = vld.sshfl [vmem:[#allocation1 + $0x20] sm:$0xff pattern:$0x73625140]
      %5813 = vst.msk [vmem:[%s258 + $0x1] sm:$0xff] %vm259, %v5629
      %5814 = vst.msk [vmem:[%s258 + $0x9] sm:$0xff] %vm259, %v5630
      %5815 = vst.msk [vmem:[%s258 + $0x19] sm:$0xff] %vm259, %v5639
      %5816 = vst.msk [vmem:[%s258 + $0x21] sm:$0xff] %vm259, %v5640
      %5817 = vst.msk [vmem:[%s258 + $0x31] sm:$0xff] %vm259, %v5649
      %5818 = vst.msk [vmem:[%s258 + $0x39] sm:$0xff] %vm259, %v5650
      %5819 = vst.msk [vmem:[%s258 + $0x49] sm:$0xff] %vm259, %v5659
      %5820 = vst.msk [vmem:[%s258 + $0x51] sm:$0xff] %vm259, %v5660
      %5821 = vst.msk [vmem:[%s258 + $0x61] sm:$0xff] %vm259, %v5669
      %5822 = vst.msk [vmem:[%s258 + $0x69] sm:$0xff] %vm259, %v5670
      %5823 = vst.msk [vmem:[%s258 + $0x79] sm:$0xff] %vm259, %v5679
      %5824 = vst.msk [vmem:[%s258 + $0x81] sm:$0xff] %vm259, %v5680
      %5825 = vst.msk [vmem:[%s258 + $0x91] sm:$0xff] %vm259, %v5689
      %5826 = vst.msk [vmem:[%s258 + $0x99] sm:$0xff] %vm259, %v5690
      %5827 = vst.msk [vmem:[%s258 + $0xa9] sm:$0xff] %vm259, %v5699
      %5828 = vst.msk [vmem:[%s258 + $0xb1] sm:$0xff] %vm259, %v5700
      %5829 = vst.msk [vmem:[%s258 + $0xc1] sm:$0xff] %vm259, %v5709
      %5830 = vst.msk [vmem:[%s258 + $0xc9] sm:$0xff] %vm259, %v5710
      %5831 = vst.msk [vmem:[%s258 + $0xd9] sm:$0xff] %vm259, %v5719
      %5832 = vst.msk [vmem:[%s258 + $0xe1] sm:$0xff] %vm259, %v5720
      %5833 = vst.msk [vmem:[%s258 + $0xf1] sm:$0xff] %vm259, %v5729
      %5834 = vst.msk [vmem:[%s258 + $0xf9] sm:$0xff] %vm259, %v5730
      %5835 = vst.msk [vmem:[%s258 + $0x109] sm:$0xff] %vm259, %v5739
      %5836 = vst.msk [vmem:[%s258 + $0x111] sm:$0xff] %vm259, %v5740
      %5837 = vst.msk [vmem:[%s258 + $0x121] sm:$0xff] %vm259, %v5749
      %5838 = vst.msk [vmem:[%s258 + $0x129] sm:$0xff] %vm259, %v5750
      %5839 = vst.msk [vmem:[%s258 + $0x139] sm:$0xff] %vm259, %v5759
      %5840 = vst.msk [vmem:[%s258 + $0x141] sm:$0xff] %vm259, %v5760
      %5841 = vst.msk [vmem:[%s258 + $0x151] sm:$0xff] %vm259, %v5769
      %5842 = vst.msk [vmem:[%s258 + $0x159] sm:$0xff] %vm259, %v5770
      %5843 = vst.msk [vmem:[%s258 + $0x169] sm:$0xff] %vm259, %v5779
      %5844 = vst.msk [vmem:[%s258 + $0x171] sm:$0xff] %vm259, %v5780
      %5845 = vst [vmem:[#allocation1] ss:$4 sm:$0xff] %v5366
      %s5846 = scalar_lea.vmem [#allocation1], 1
      %5847 = vst [vmem:[%s5846] ss:$4 sm:$0xff] %v5367
      %s5848 = scalar_lea.vmem [#allocation1], 2
      %5849 = vst [vmem:[%s5848] ss:$4 sm:$0xff] %v5368
      %s5850 = scalar_lea.vmem [#allocation1], 3
      %5851 = vst [vmem:[%s5850] ss:$4 sm:$0xff] %v5369
      %s5852 = scalar_lea.vmem [#allocation1], 32
      %5853 = vst [vmem:[%s5852] ss:$4 sm:$0xff] %v5370
      %s5854 = scalar_lea.vmem [#allocation1], 33
      %5855 = vst [vmem:[%s5854] ss:$4 sm:$0xff] %v5371
      %s5856 = scalar_lea.vmem [#allocation1], 34
      %5857 = vst [vmem:[%s5856] ss:$4 sm:$0xff] %v5372
      %s5858 = scalar_lea.vmem [#allocation1], 35
      %5859 = vst [vmem:[%s5858] ss:$4 sm:$0xff] %v5373
      %v5860 = vld.sshfl [vmem:[#allocation1] sm:$0xff pattern:$0x73625140]
      %v5861 = vld.sshfl [vmem:[#allocation1 + $0x20] sm:$0xff pattern:$0x73625140]
      %5864 = vst.msk [vmem:[#allocation2 + $0x1] sm:$0xff] %vm259, %v5860
      %5865 = vst.msk [vmem:[#allocation2 + $0x9] sm:$0xff] %vm259, %v5861
      %5866 = vst [vmem:[#allocation1] ss:$4 sm:$0xff] %v5470
      %s5867 = scalar_lea.vmem [#allocation1], 1
      %5868 = vst [vmem:[%s5867] ss:$4 sm:$0xff] %v5471
      %s5869 = scalar_lea.vmem [#allocation1], 2
      %5870 = vst [vmem:[%s5869] ss:$4 sm:$0xff] %v5472
      %s5871 = scalar_lea.vmem [#allocation1], 3
      %5872 = vst [vmem:[%s5871] ss:$4 sm:$0xff] %v5473
      %s5873 = scalar_lea.vmem [#allocation1], 32
      %5874 = vst [vmem:[%s5873] ss:$4 sm:$0xff] %v5474
      %s5875 = scalar_lea.vmem [#allocation1], 33
      %5876 = vst [vmem:[%s5875] ss:$4 sm:$0xff] %v5475
      %s5877 = scalar_lea.vmem [#allocation1], 34
      %5878 = vst [vmem:[%s5877] ss:$4 sm:$0xff] %v5476
      %s5879 = scalar_lea.vmem [#allocation1], 35
      %5880 = vst [vmem:[%s5879] ss:$4 sm:$0xff] %v5477
      %v5881 = vld.sshfl [vmem:[#allocation1] sm:$0xff pattern:$0x73625140]
      %v5882 = vld.sshfl [vmem:[#allocation1 + $0x20] sm:$0xff pattern:$0x73625140]
      %5885 = vst.msk [vmem:[%s294 + $0x1] sm:$0xff] %vm259, %v5881
      %5886 = vst.msk [vmem:[%s294 + $0x9] sm:$0xff] %vm259, %v5882
      %v5887 = vld [vmem:[#allocation2 + $0x2] sm:$0x1]
      %v5888 = vld [vmem:[#allocation2 + $0x1a] sm:$0x1]
      %v5889 = vld [vmem:[#allocation2 + $0x32] sm:$0x1]
      %v5890 = vld [vmem:[#allocation2 + $0x4a] sm:$0x1]
      %v5891 = vld [vmem:[#allocation2 + $0x62] sm:$0x1]
      %v5892 = vld [vmem:[#allocation2 + $0x7a] sm:$0x1]
      %v5893 = vld [vmem:[#allocation2 + $0x92] sm:$0x1]
      %v5894 = vld [vmem:[#allocation2 + $0xaa] sm:$0x1]
      %v5895 = vld [vmem:[#allocation2 + $0xc2] sm:$0x1]
      %v5896 = vld [vmem:[#allocation2 + $0xda] sm:$0x1]
      %v5897 = vld [vmem:[#allocation2 + $0xf2] sm:$0x1]
      %v5898 = vld [vmem:[#allocation2 + $0x10a] sm:$0x1]
      %v5899 = vld [vmem:[#allocation2 + $0x122] sm:$0x1]
      %v5900 = vld [vmem:[#allocation2 + $0x13a] sm:$0x1]
      %v5901 = vld [vmem:[#allocation2 + $0x152] sm:$0x1]
      %v5902 = vld [vmem:[#allocation2 + $0x16a] sm:$0x1]
      %v5903 = vld [vmem:[#allocation2 + $0x182] sm:$0x1]
      %v5904 = vld [vmem:[#allocation2 + $0x19a] sm:$0x1]
      %5905 = vst.msk [vmem:[#allocation2] sm:$0x1] %vm315, %v5887
      %5906 = vst.msk [vmem:[#allocation2 + $0x18] sm:$0x1] %vm315, %v5888
      %5907 = vst.msk [vmem:[#allocation2 + $0x30] sm:$0x1] %vm315, %v5889
      %5908 = vst.msk [vmem:[#allocation2 + $0x48] sm:$0x1] %vm315, %v5890
      %5909 = vst.msk [vmem:[#allocation2 + $0x60] sm:$0x1] %vm315, %v5891
      %5910 = vst.msk [vmem:[#allocation2 + $0x78] sm:$0x1] %vm315, %v5892
      %5911 = vst.msk [vmem:[#allocation2 + $0x90] sm:$0x1] %vm315, %v5893
      %5912 = vst.msk [vmem:[#allocation2 + $0xa8] sm:$0x1] %vm315, %v5894
      %5913 = vst.msk [vmem:[#allocation2 + $0xc0] sm:$0x1] %vm315, %v5895
      %5914 = vst.msk [vmem:[#allocation2 + $0xd8] sm:$0x1] %vm315, %v5896
      %5915 = vst.msk [vmem:[#allocation2 + $0xf0] sm:$0x1] %vm315, %v5897
      %5916 = vst.msk [vmem:[#allocation2 + $0x108] sm:$0x1] %vm315, %v5898
      %5917 = vst.msk [vmem:[#allocation2 + $0x120] sm:$0x1] %vm315, %v5899
      %5918 = vst.msk [vmem:[#allocation2 + $0x138] sm:$0x1] %vm315, %v5900
      %5919 = vst.msk [vmem:[#allocation2 + $0x150] sm:$0x1] %vm315, %v5901
      %5920 = vst.msk [vmem:[#allocation2 + $0x168] sm:$0x1] %vm315, %v5902
      %5921 = vst.msk [vmem:[#allocation2 + $0x180] sm:$0x1] %vm315, %v5903
      %5922 = vst.msk [vmem:[#allocation2 + $0x198] sm:$0x1] %vm315, %v5904
      %v5923 = vld [vmem:[#allocation2 + $0xf] sm:$0x1]
      %v5924 = vld [vmem:[#allocation2 + $0x27] sm:$0x1]
      %v5925 = vld [vmem:[#allocation2 + $0x3f] sm:$0x1]
      %v5926 = vld [vmem:[#allocation2 + $0x57] sm:$0x1]
      %v5927 = vld [vmem:[#allocation2 + $0x6f] sm:$0x1]
      %v5928 = vld [vmem:[#allocation2 + $0x87] sm:$0x1]
      %v5929 = vld [vmem:[#allocation2 + $0x9f] sm:$0x1]
      %v5930 = vld [vmem:[#allocation2 + $0xb7] sm:$0x1]
      %v5931 = vld [vmem:[#allocation2 + $0xcf] sm:$0x1]
      %v5932 = vld [vmem:[#allocation2 + $0xe7] sm:$0x1]
      %v5933 = vld [vmem:[#allocation2 + $0xff] sm:$0x1]
      %v5934 = vld [vmem:[#allocation2 + $0x117] sm:$0x1]
      %v5935 = vld [vmem:[#allocation2 + $0x12f] sm:$0x1]
      %v5936 = vld [vmem:[#allocation2 + $0x147] sm:$0x1]
      %v5937 = vld [vmem:[#allocation2 + $0x15f] sm:$0x1]
      %v5938 = vld [vmem:[#allocation2 + $0x177] sm:$0x1]
      %v5939 = vld [vmem:[#allocation2 + $0x18f] sm:$0x1]
      %v5940 = vld [vmem:[#allocation2 + $0x1a7] sm:$0x1]
      %5941 = vst.msk [vmem:[#allocation2 + $0x11] sm:$0x1] %vm315, %v5923
      %5942 = vst.msk [vmem:[#allocation2 + $0x29] sm:$0x1] %vm315, %v5924
      %5943 = vst.msk [vmem:[#allocation2 + $0x41] sm:$0x1] %vm315, %v5925
      %5944 = vst.msk [vmem:[#allocation2 + $0x59] sm:$0x1] %vm315, %v5926
      %5945 = vst.msk [vmem:[#allocation2 + $0x71] sm:$0x1] %vm315, %v5927
      %5946 = vst.msk [vmem:[#allocation2 + $0x89] sm:$0x1] %vm315, %v5928
      %5947 = vst.msk [vmem:[#allocation2 + $0xa1] sm:$0x1] %vm315, %v5929
      %5948 = vst.msk [vmem:[#allocation2 + $0xb9] sm:$0x1] %vm315, %v5930
      %5949 = vst.msk [vmem:[#allocation2 + $0xd1] sm:$0x1] %vm315, %v5931
      %5950 = vst.msk [vmem:[#allocation2 + $0xe9] sm:$0x1] %vm315, %v5932
      %5951 = vst.msk [vmem:[#allocation2 + $0x101] sm:$0x1] %vm315, %v5933
      %5952 = vst.msk [vmem:[#allocation2 + $0x119] sm:$0x1] %vm315, %v5934
      %5953 = vst.msk [vmem:[#allocation2 + $0x131] sm:$0x1] %vm315, %v5935
      %5954 = vst.msk [vmem:[#allocation2 + $0x149] sm:$0x1] %vm315, %v5936
      %5955 = vst.msk [vmem:[#allocation2 + $0x161] sm:$0x1] %vm315, %v5937
      %5956 = vst.msk [vmem:[#allocation2 + $0x179] sm:$0x1] %vm315, %v5938
      %5957 = vst.msk [vmem:[#allocation2 + $0x191] sm:$0x1] %vm315, %v5939
      %5958 = vst.msk [vmem:[#allocation2 + $0x1a9] sm:$0x1] %vm315, %v5940
      %v5959 = vld [vmem:[#allocation2] sm:$0xff]
      %v5960 = vld [vmem:[#allocation2 + $0x8] sm:$0xff]
      %v5961 = vld [vmem:[#allocation2 + $0x10] sm:$0x3]
      %v5962 = vld [vmem:[#allocation2 + $0x18] sm:$0xff]
      %v5963 = vld [vmem:[#allocation2 + $0x20] sm:$0xff]
      %v5964 = vld [vmem:[#allocation2 + $0x28] sm:$0x3]
      %v5965 = vld [vmem:[#allocation2 + $0x30] sm:$0xff]
      %v5966 = vld [vmem:[#allocation2 + $0x38] sm:$0xff]
      %v5967 = vld [vmem:[#allocation2 + $0x40] sm:$0x3]
      %v5968 = vld [vmem:[#allocation2 + $0x48] sm:$0xff]
      %v5969 = vld [vmem:[#allocation2 + $0x50] sm:$0xff]
      %v5970 = vld [vmem:[#allocation2 + $0x58] sm:$0x3]
      %v5971 = vld [vmem:[#allocation2 + $0x60] sm:$0xff]
      %v5972 = vld [vmem:[#allocation2 + $0x68] sm:$0xff]
      %v5973 = vld [vmem:[#allocation2 + $0x70] sm:$0x3]
      %v5974 = vld [vmem:[#allocation2 + $0x78] sm:$0xff]
      %v5975 = vld [vmem:[#allocation2 + $0x80] sm:$0xff]
      %v5976 = vld [vmem:[#allocation2 + $0x88] sm:$0x3]
      %v5977 = vld [vmem:[#allocation2 + $0x90] sm:$0xff]
      %v5978 = vld [vmem:[#allocation2 + $0x98] sm:$0xff]
      %v5979 = vld [vmem:[#allocation2 + $0xa0] sm:$0x3]
      %v5980 = vld [vmem:[#allocation2 + $0xa8] sm:$0xff]
      %v5981 = vld [vmem:[#allocation2 + $0xb0] sm:$0xff]
      %v5982 = vld [vmem:[#allocation2 + $0xb8] sm:$0x3]
      %v5983 = vld [vmem:[#allocation2 + $0xc0] sm:$0xff]
      %v5984 = vld [vmem:[#allocation2 + $0xc8] sm:$0xff]
      %v5985 = vld [vmem:[#allocation2 + $0xd0] sm:$0x3]
      %v5986 = vld [vmem:[#allocation2 + $0xd8] sm:$0xff]
      %v5987 = vld [vmem:[#allocation2 + $0xe0] sm:$0xff]
      %v5988 = vld [vmem:[#allocation2 + $0xe8] sm:$0x3]
      %v5989 = vld [vmem:[#allocation2 + $0xf0] sm:$0xff]
      %v5990 = vld [vmem:[#allocation2 + $0xf8] sm:$0xff]
      %v5991 = vld [vmem:[#allocation2 + $0x100] sm:$0x3]
      %v5992 = vld [vmem:[#allocation2 + $0x108] sm:$0xff]
      %v5993 = vld [vmem:[#allocation2 + $0x110] sm:$0xff]
      %v5994 = vld [vmem:[#allocation2 + $0x118] sm:$0x3]
      %v5995 = vld [vmem:[#allocation2 + $0x120] sm:$0xff]
      %v5996 = vld [vmem:[#allocation2 + $0x128] sm:$0xff]
      %v5997 = vld [vmem:[#allocation2 + $0x130] sm:$0x3]
      %v5998 = vld [vmem:[#allocation2 + $0x138] sm:$0xff]
      %v5999 = vld [vmem:[#allocation2 + $0x140] sm:$0xff]
      %v6000 = vld [vmem:[#allocation2 + $0x148] sm:$0x3]
      %v6001 = vld [vmem:[#allocation2 + $0x150] sm:$0xff]
      %v6002 = vld [vmem:[#allocation2 + $0x158] sm:$0xff]
      %v6003 = vld [vmem:[#allocation2 + $0x160] sm:$0x3]
      %v6004 = vld [vmem:[#allocation2 + $0x168] sm:$0xff]
      %v6005 = vld [vmem:[#allocation2 + $0x170] sm:$0xff]
      %v6006 = vld [vmem:[#allocation2 + $0x178] sm:$0x3]
      %v6007 = vld [vmem:[%s258] sm:$0xff]
      %v6008 = vld [vmem:[%s258 + $0x8] sm:$0xff]
      %v6009 = vld [vmem:[%s258 + $0x10] sm:$0x3]
      %v6010 = vld [vmem:[%s258 + $0x18] sm:$0xff]
      %v6011 = vld [vmem:[%s258 + $0x20] sm:$0xff]
      %v6012 = vld [vmem:[%s258 + $0x28] sm:$0x3]
      %v6013 = vld [vmem:[%s258 + $0x30] sm:$0xff]
      %v6014 = vld [vmem:[%s258 + $0x38] sm:$0xff]
      %v6015 = vld [vmem:[%s258 + $0x40] sm:$0x3]
      %v6016 = vld [vmem:[%s258 + $0x48] sm:$0xff]
      %v6017 = vld [vmem:[%s258 + $0x50] sm:$0xff]
      %v6018 = vld [vmem:[%s258 + $0x58] sm:$0x3]
      %v6019 = vld [vmem:[%s258 + $0x60] sm:$0xff]
      %v6020 = vld [vmem:[%s258 + $0x68] sm:$0xff]
      %v6021 = vld [vmem:[%s258 + $0x70] sm:$0x3]
      %v6022 = vld [vmem:[%s258 + $0x78] sm:$0xff]
      %v6023 = vld [vmem:[%s258 + $0x80] sm:$0xff]
      %v6024 = vld [vmem:[%s258 + $0x88] sm:$0x3]
      %v6025 = vld [vmem:[%s258 + $0x90] sm:$0xff]
      %v6026 = vld [vmem:[%s258 + $0x98] sm:$0xff]
      %v6027 = vld [vmem:[%s258 + $0xa0] sm:$0x3]
      %v6028 = vld [vmem:[%s258 + $0xa8] sm:$0xff]
      %v6029 = vld [vmem:[%s258 + $0xb0] sm:$0xff]
      %v6030 = vld [vmem:[%s258 + $0xb8] sm:$0x3]
      %v6031 = vld [vmem:[%s258 + $0xc0] sm:$0xff]
      %v6032 = vld [vmem:[%s258 + $0xc8] sm:$0xff]
      %v6033 = vld [vmem:[%s258 + $0xd0] sm:$0x3]
      %v6034 = vld [vmem:[%s258 + $0xd8] sm:$0xff]
      %v6035 = vld [vmem:[%s258 + $0xe0] sm:$0xff]
      %v6036 = vld [vmem:[%s258 + $0xe8] sm:$0x3]
      %v6037 = vld [vmem:[%s258 + $0xf0] sm:$0xff]
      %v6038 = vld [vmem:[%s258 + $0xf8] sm:$0xff]
      %v6039 = vld [vmem:[%s258 + $0x100] sm:$0x3]
      %v6040 = vld [vmem:[%s258 + $0x108] sm:$0xff]
      %v6041 = vld [vmem:[%s258 + $0x110] sm:$0xff]
      %v6042 = vld [vmem:[%s258 + $0x118] sm:$0x3]
      %v6043 = vld [vmem:[%s258 + $0x120] sm:$0xff]
      %v6044 = vld [vmem:[%s258 + $0x128] sm:$0xff]
      %v6045 = vld [vmem:[%s258 + $0x130] sm:$0x3]
      %v6046 = vld [vmem:[%s258 + $0x138] sm:$0xff]
      %v6047 = vld [vmem:[%s258 + $0x140] sm:$0xff]
      %v6048 = vld [vmem:[%s258 + $0x148] sm:$0x3]
      %v6049 = vld [vmem:[%s258 + $0x150] sm:$0xff]
      %v6050 = vld [vmem:[%s258 + $0x158] sm:$0xff]
      %v6051 = vld [vmem:[%s258 + $0x160] sm:$0x3]
      %v6052 = vld [vmem:[%s258 + $0x168] sm:$0xff]
      %v6053 = vld [vmem:[%s258 + $0x170] sm:$0xff]
      %v6054 = vld [vmem:[%s258 + $0x178] sm:$0x3]
      %v6055 = vld [vmem:[%s466] sm:$0xff]
      %v6056 = vld [vmem:[%s466 + $0x8] sm:$0xff]
      %v6057 = vld [vmem:[%s466 + $0x10] sm:$0x3]
      %v6058 = vld [vmem:[%s466 + $0x18] sm:$0xff]
      %v6059 = vld [vmem:[%s466 + $0x20] sm:$0xff]
      %v6060 = vld [vmem:[%s466 + $0x28] sm:$0x3]
      %v6061 = vld [vmem:[%s466 + $0x30] sm:$0xff]
      %v6062 = vld [vmem:[%s466 + $0x38] sm:$0xff]
      %v6063 = vld [vmem:[%s466 + $0x40] sm:$0x3]
      %v6064 = vld [vmem:[%s466 + $0x48] sm:$0xff]
      %v6065 = vld [vmem:[%s466 + $0x50] sm:$0xff]
      %v6066 = vld [vmem:[%s466 + $0x58] sm:$0x3]
      %v6067 = vld [vmem:[%s466 + $0x60] sm:$0xff]
      %v6068 = vld [vmem:[%s466 + $0x68] sm:$0xff]
      %v6069 = vld [vmem:[%s466 + $0x70] sm:$0x3]
      %v6070 = vld [vmem:[%s466 + $0x78] sm:$0xff]
      %v6071 = vld [vmem:[%s466 + $0x80] sm:$0xff]
      %v6072 = vld [vmem:[%s466 + $0x88] sm:$0x3]
      %v6073 = vld [vmem:[%s466 + $0x90] sm:$0xff]
      %v6074 = vld [vmem:[%s466 + $0x98] sm:$0xff]
      %v6075 = vld [vmem:[%s466 + $0xa0] sm:$0x3]
      %v6076 = vld [vmem:[%s466 + $0xa8] sm:$0xff]
      %v6077 = vld [vmem:[%s466 + $0xb0] sm:$0xff]
      %v6078 = vld [vmem:[%s466 + $0xb8] sm:$0x3]
      %v6079 = vld [vmem:[%s466 + $0xc0] sm:$0xff]
      %v6080 = vld [vmem:[%s466 + $0xc8] sm:$0xff]
      %v6081 = vld [vmem:[%s466 + $0xd0] sm:$0x3]
      %v6082 = vld [vmem:[%s466 + $0xd8] sm:$0xff]
      %v6083 = vld [vmem:[%s466 + $0xe0] sm:$0xff]
      %v6084 = vld [vmem:[%s466 + $0xe8] sm:$0x3]
      %v6085 = vld [vmem:[%s466 + $0xf0] sm:$0xff]
      %v6086 = vld [vmem:[%s466 + $0xf8] sm:$0xff]
      %v6087 = vld [vmem:[%s466 + $0x100] sm:$0x3]
      %v6088 = vld [vmem:[%s466 + $0x108] sm:$0xff]
      %v6089 = vld [vmem:[%s466 + $0x110] sm:$0xff]
      %v6090 = vld [vmem:[%s466 + $0x118] sm:$0x3]
      %v6091 = vld [vmem:[%s466 + $0x120] sm:$0xff]
      %v6092 = vld [vmem:[%s466 + $0x128] sm:$0xff]
      %v6093 = vld [vmem:[%s466 + $0x130] sm:$0x3]
      %v6094 = vld [vmem:[%s466 + $0x138] sm:$0xff]
      %v6095 = vld [vmem:[%s466 + $0x140] sm:$0xff]
      %v6096 = vld [vmem:[%s466 + $0x148] sm:$0x3]
      %v6097 = vld [vmem:[%s466 + $0x150] sm:$0xff]
      %v6098 = vld [vmem:[%s466 + $0x158] sm:$0xff]
      %v6099 = vld [vmem:[%s466 + $0x160] sm:$0x3]
      %v6100 = vld [vmem:[%s466 + $0x168] sm:$0xff]
      %v6101 = vld [vmem:[%s466 + $0x170] sm:$0xff]
      %v6102 = vld [vmem:[%s466 + $0x178] sm:$0x3]
      %6151 = vrot.lane.b32.xlu0 %v6007, 4
      %v6152 = vpop.permute.xlu0 %6151
      %6153 = vrot.lane.b32.xlu0 %v6008, 4
      %v6154 = vpop.permute.xlu0 %6153
      %6155 = vrot.lane.b32.xlu0 %v6009, 4
      %v6156 = vpop.permute.xlu0 %6155
      %6157 = vrot.lane.b32.xlu0 %v6010, 4
      %v6158 = vpop.permute.xlu0 %6157
      %6159 = vrot.lane.b32.xlu0 %v6011, 4
      %v6160 = vpop.permute.xlu0 %6159
      %6161 = vrot.lane.b32.xlu0 %v6012, 4
      %v6162 = vpop.permute.xlu0 %6161
      %6163 = vrot.lane.b32.xlu0 %v6013, 4
      %v6164 = vpop.permute.xlu0 %6163
      %6165 = vrot.lane.b32.xlu0 %v6014, 4
      %v6166 = vpop.permute.xlu0 %6165
      %6167 = vrot.lane.b32.xlu0 %v6015, 4
      %v6168 = vpop.permute.xlu0 %6167
      %6169 = vrot.lane.b32.xlu0 %v6016, 4
      %v6170 = vpop.permute.xlu0 %6169
      %6171 = vrot.lane.b32.xlu0 %v6017, 4
      %v6172 = vpop.permute.xlu0 %6171
      %6173 = vrot.lane.b32.xlu0 %v6018, 4
      %v6174 = vpop.permute.xlu0 %6173
      %6175 = vrot.lane.b32.xlu0 %v6019, 4
      %v6176 = vpop.permute.xlu0 %6175
      %6177 = vrot.lane.b32.xlu0 %v6020, 4
      %v6178 = vpop.permute.xlu0 %6177
      %6179 = vrot.lane.b32.xlu0 %v6021, 4
      %v6180 = vpop.permute.xlu0 %6179
      %6181 = vrot.lane.b32.xlu0 %v6022, 4
      %v6182 = vpop.permute.xlu0 %6181
      %6183 = vrot.lane.b32.xlu0 %v6023, 4
      %v6184 = vpop.permute.xlu0 %6183
      %6185 = vrot.lane.b32.xlu0 %v6024, 4
      %v6186 = vpop.permute.xlu0 %6185
      %6187 = vrot.lane.b32.xlu0 %v6025, 4
      %v6188 = vpop.permute.xlu0 %6187
      %6189 = vrot.lane.b32.xlu0 %v6026, 4
      %v6190 = vpop.permute.xlu0 %6189
      %6191 = vrot.lane.b32.xlu0 %v6027, 4
      %v6192 = vpop.permute.xlu0 %6191
      %6193 = vrot.lane.b32.xlu0 %v6028, 4
      %v6194 = vpop.permute.xlu0 %6193
      %6195 = vrot.lane.b32.xlu0 %v6029, 4
      %v6196 = vpop.permute.xlu0 %6195
      %6197 = vrot.lane.b32.xlu0 %v6030, 4
      %v6198 = vpop.permute.xlu0 %6197
      %6199 = vrot.lane.b32.xlu0 %v6031, 4
      %v6200 = vpop.permute.xlu0 %6199
      %6201 = vrot.lane.b32.xlu0 %v6032, 4
      %v6202 = vpop.permute.xlu0 %6201
      %6203 = vrot.lane.b32.xlu0 %v6033, 4
      %v6204 = vpop.permute.xlu0 %6203
      %6205 = vrot.lane.b32.xlu0 %v6034, 4
      %v6206 = vpop.permute.xlu0 %6205
      %6207 = vrot.lane.b32.xlu0 %v6035, 4
      %v6208 = vpop.permute.xlu0 %6207
      %6209 = vrot.lane.b32.xlu0 %v6036, 4
      %v6210 = vpop.permute.xlu0 %6209
      %6211 = vrot.lane.b32.xlu0 %v6037, 4
      %v6212 = vpop.permute.xlu0 %6211
      %6213 = vrot.lane.b32.xlu0 %v6038, 4
      %v6214 = vpop.permute.xlu0 %6213
      %6215 = vrot.lane.b32.xlu0 %v6039, 4
      %v6216 = vpop.permute.xlu0 %6215
      %6217 = vrot.lane.b32.xlu0 %v6040, 4
      %v6218 = vpop.permute.xlu0 %6217
      %6219 = vrot.lane.b32.xlu0 %v6041, 4
      %v6220 = vpop.permute.xlu0 %6219
      %6221 = vrot.lane.b32.xlu0 %v6042, 4
      %v6222 = vpop.permute.xlu0 %6221
      %6223 = vrot.lane.b32.xlu0 %v6043, 4
      %v6224 = vpop.permute.xlu0 %6223
      %6225 = vrot.lane.b32.xlu0 %v6044, 4
      %v6226 = vpop.permute.xlu0 %6225
      %6227 = vrot.lane.b32.xlu0 %v6045, 4
      %v6228 = vpop.permute.xlu0 %6227
      %6229 = vrot.lane.b32.xlu0 %v6046, 4
      %v6230 = vpop.permute.xlu0 %6229
      %6231 = vrot.lane.b32.xlu0 %v6047, 4
      %v6232 = vpop.permute.xlu0 %6231
      %6233 = vrot.lane.b32.xlu0 %v6048, 4
      %v6234 = vpop.permute.xlu0 %6233
      %6235 = vrot.lane.b32.xlu0 %v6049, 4
      %v6236 = vpop.permute.xlu0 %6235
      %6237 = vrot.lane.b32.xlu0 %v6050, 4
      %v6238 = vpop.permute.xlu0 %6237
      %6239 = vrot.lane.b32.xlu0 %v6051, 4
      %v6240 = vpop.permute.xlu0 %6239
      %6241 = vrot.lane.b32.xlu0 %v6052, 4
      %v6242 = vpop.permute.xlu0 %6241
      %6243 = vrot.lane.b32.xlu0 %v6053, 4
      %v6244 = vpop.permute.xlu0 %6243
      %6245 = vrot.lane.b32.xlu0 %v6054, 4
      %v6246 = vpop.permute.xlu0 %6245
      %6343 = vrot.lane.b32.xlu0 %v6055, 8
      %v6344 = vpop.permute.xlu0 %6343
      %6345 = vrot.lane.b32.xlu0 %v6056, 8
      %v6346 = vpop.permute.xlu0 %6345
      %6347 = vrot.lane.b32.xlu0 %v6057, 8
      %v6348 = vpop.permute.xlu0 %6347
      %6349 = vrot.lane.b32.xlu0 %v6058, 8
      %v6350 = vpop.permute.xlu0 %6349
      %6351 = vrot.lane.b32.xlu0 %v6059, 8
      %v6352 = vpop.permute.xlu0 %6351
      %6353 = vrot.lane.b32.xlu0 %v6060, 8
      %v6354 = vpop.permute.xlu0 %6353
      %6355 = vrot.lane.b32.xlu0 %v6061, 8
      %v6356 = vpop.permute.xlu0 %6355
      %6357 = vrot.lane.b32.xlu0 %v6062, 8
      %v6358 = vpop.permute.xlu0 %6357
      %6359 = vrot.lane.b32.xlu0 %v6063, 8
      %v6360 = vpop.permute.xlu0 %6359
      %6361 = vrot.lane.b32.xlu0 %v6064, 8
      %v6362 = vpop.permute.xlu0 %6361
      %6363 = vrot.lane.b32.xlu0 %v6065, 8
      %v6364 = vpop.permute.xlu0 %6363
      %6365 = vrot.lane.b32.xlu0 %v6066, 8
      %v6366 = vpop.permute.xlu0 %6365
      %6367 = vrot.lane.b32.xlu0 %v6067, 8
      %v6368 = vpop.permute.xlu0 %6367
      %6369 = vrot.lane.b32.xlu0 %v6068, 8
      %v6370 = vpop.permute.xlu0 %6369
      %6371 = vrot.lane.b32.xlu0 %v6069, 8
      %v6372 = vpop.permute.xlu0 %6371
      %6373 = vrot.lane.b32.xlu0 %v6070, 8
      %v6374 = vpop.permute.xlu0 %6373
      %6375 = vrot.lane.b32.xlu0 %v6071, 8
      %v6376 = vpop.permute.xlu0 %6375
      %6377 = vrot.lane.b32.xlu0 %v6072, 8
      %v6378 = vpop.permute.xlu0 %6377
      %6379 = vrot.lane.b32.xlu0 %v6073, 8
      %v6380 = vpop.permute.xlu0 %6379
      %6381 = vrot.lane.b32.xlu0 %v6074, 8
      %v6382 = vpop.permute.xlu0 %6381
      %6383 = vrot.lane.b32.xlu0 %v6075, 8
      %v6384 = vpop.permute.xlu0 %6383
      %6385 = vrot.lane.b32.xlu0 %v6076, 8
      %v6386 = vpop.permute.xlu0 %6385
      %6387 = vrot.lane.b32.xlu0 %v6077, 8
      %v6388 = vpop.permute.xlu0 %6387
      %6389 = vrot.lane.b32.xlu0 %v6078, 8
      %v6390 = vpop.permute.xlu0 %6389
      %6391 = vrot.lane.b32.xlu0 %v6079, 8
      %v6392 = vpop.permute.xlu0 %6391
      %6393 = vrot.lane.b32.xlu0 %v6080, 8
      %v6394 = vpop.permute.xlu0 %6393
      %6395 = vrot.lane.b32.xlu0 %v6081, 8
      %v6396 = vpop.permute.xlu0 %6395
      %6397 = vrot.lane.b32.xlu0 %v6082, 8
      %v6398 = vpop.permute.xlu0 %6397
      %6399 = vrot.lane.b32.xlu0 %v6083, 8
      %v6400 = vpop.permute.xlu0 %6399
      %6401 = vrot.lane.b32.xlu0 %v6084, 8
      %v6402 = vpop.permute.xlu0 %6401
      %6403 = vrot.lane.b32.xlu0 %v6085, 8
      %v6404 = vpop.permute.xlu0 %6403
      %6405 = vrot.lane.b32.xlu0 %v6086, 8
      %v6406 = vpop.permute.xlu0 %6405
      %6407 = vrot.lane.b32.xlu0 %v6087, 8
      %v6408 = vpop.permute.xlu0 %6407
      %6409 = vrot.lane.b32.xlu0 %v6088, 8
      %v6410 = vpop.permute.xlu0 %6409
      %6411 = vrot.lane.b32.xlu0 %v6089, 8
      %v6412 = vpop.permute.xlu0 %6411
      %6413 = vrot.lane.b32.xlu0 %v6090, 8
      %v6414 = vpop.permute.xlu0 %6413
      %6415 = vrot.lane.b32.xlu0 %v6091, 8
      %v6416 = vpop.permute.xlu0 %6415
      %6417 = vrot.lane.b32.xlu0 %v6092, 8
      %v6418 = vpop.permute.xlu0 %6417
      %6419 = vrot.lane.b32.xlu0 %v6093, 8
      %v6420 = vpop.permute.xlu0 %6419
      %6421 = vrot.lane.b32.xlu0 %v6094, 8
      %v6422 = vpop.permute.xlu0 %6421
      %6423 = vrot.lane.b32.xlu0 %v6095, 8
      %v6424 = vpop.permute.xlu0 %6423
      %6425 = vrot.lane.b32.xlu0 %v6096, 8
      %v6426 = vpop.permute.xlu0 %6425
      %6427 = vrot.lane.b32.xlu0 %v6097, 8
      %v6428 = vpop.permute.xlu0 %6427
      %6429 = vrot.lane.b32.xlu0 %v6098, 8
      %v6430 = vpop.permute.xlu0 %6429
      %6431 = vrot.lane.b32.xlu0 %v6099, 8
      %v6432 = vpop.permute.xlu0 %6431
      %6433 = vrot.lane.b32.xlu0 %v6100, 8
      %v6434 = vpop.permute.xlu0 %6433
      %6435 = vrot.lane.b32.xlu0 %v6101, 8
      %v6436 = vpop.permute.xlu0 %6435
      %6437 = vrot.lane.b32.xlu0 %v6102, 8
      %v6438 = vpop.permute.xlu0 %6437
      %v6487 = vsel %vm259, %v5959, %v6152
      %v6488 = vsel %vm259, %v5960, %v6154
      %v6489 = vsel %vm259, %v5961, %v6156
      %v6490 = vsel %vm259, %v5962, %v6158
      %v6491 = vsel %vm259, %v5963, %v6160
      %v6492 = vsel %vm259, %v5964, %v6162
      %v6493 = vsel %vm259, %v5965, %v6164
      %v6494 = vsel %vm259, %v5966, %v6166
      %v6495 = vsel %vm259, %v5967, %v6168
      %v6496 = vsel %vm259, %v5968, %v6170
      %v6497 = vsel %vm259, %v5969, %v6172
      %v6498 = vsel %vm259, %v5970, %v6174
      %v6499 = vsel %vm259, %v5971, %v6176
      %v6500 = vsel %vm259, %v5972, %v6178
      %v6501 = vsel %vm259, %v5973, %v6180
      %v6502 = vsel %vm259, %v5974, %v6182
      %v6503 = vsel %vm259, %v5975, %v6184
      %v6504 = vsel %vm259, %v5976, %v6186
      %v6505 = vsel %vm259, %v5977, %v6188
      %v6506 = vsel %vm259, %v5978, %v6190
      %v6507 = vsel %vm259, %v5979, %v6192
      %v6508 = vsel %vm259, %v5980, %v6194
      %v6509 = vsel %vm259, %v5981, %v6196
      %v6510 = vsel %vm259, %v5982, %v6198
      %v6511 = vsel %vm259, %v5983, %v6200
      %v6512 = vsel %vm259, %v5984, %v6202
      %v6513 = vsel %vm259, %v5985, %v6204
      %v6514 = vsel %vm259, %v5986, %v6206
      %v6515 = vsel %vm259, %v5987, %v6208
      %v6516 = vsel %vm259, %v5988, %v6210
      %v6517 = vsel %vm259, %v5989, %v6212
      %v6518 = vsel %vm259, %v5990, %v6214
      %v6519 = vsel %vm259, %v5991, %v6216
      %v6520 = vsel %vm259, %v5992, %v6218
      %v6521 = vsel %vm259, %v5993, %v6220
      %v6522 = vsel %vm259, %v5994, %v6222
      %v6523 = vsel %vm259, %v5995, %v6224
      %v6524 = vsel %vm259, %v5996, %v6226
      %v6525 = vsel %vm259, %v5997, %v6228
      %v6526 = vsel %vm259, %v5998, %v6230
      %v6527 = vsel %vm259, %v5999, %v6232
      %v6528 = vsel %vm259, %v6000, %v6234
      %v6529 = vsel %vm259, %v6001, %v6236
      %v6530 = vsel %vm259, %v6002, %v6238
      %v6531 = vsel %vm259, %v6003, %v6240
      %v6532 = vsel %vm259, %v6004, %v6242
      %v6533 = vsel %vm259, %v6005, %v6244
      %v6534 = vsel %vm259, %v6006, %v6246
      %v6535 = vsel %vm947, %v6487, %v6344
      %v6536 = vsel %vm947, %v6488, %v6346
      %v6537 = vsel %vm947, %v6489, %v6348
      %v6538 = vsel %vm947, %v6490, %v6350
      %v6539 = vsel %vm947, %v6491, %v6352
      %v6540 = vsel %vm947, %v6492, %v6354
      %v6541 = vsel %vm947, %v6493, %v6356
      %v6542 = vsel %vm947, %v6494, %v6358
      %v6543 = vsel %vm947, %v6495, %v6360
      %v6544 = vsel %vm947, %v6496, %v6362
      %v6545 = vsel %vm947, %v6497, %v6364
      %v6546 = vsel %vm947, %v6498, %v6366
      %v6547 = vsel %vm947, %v6499, %v6368
      %v6548 = vsel %vm947, %v6500, %v6370
      %v6549 = vsel %vm947, %v6501, %v6372
      %v6550 = vsel %vm947, %v6502, %v6374
      %v6551 = vsel %vm947, %v6503, %v6376
      %v6552 = vsel %vm947, %v6504, %v6378
      %v6553 = vsel %vm947, %v6505, %v6380
      %v6554 = vsel %vm947, %v6506, %v6382
      %v6555 = vsel %vm947, %v6507, %v6384
      %v6556 = vsel %vm947, %v6508, %v6386
      %v6557 = vsel %vm947, %v6509, %v6388
      %v6558 = vsel %vm947, %v6510, %v6390
      %v6559 = vsel %vm947, %v6511, %v6392
      %v6560 = vsel %vm947, %v6512, %v6394
      %v6561 = vsel %vm947, %v6513, %v6396
      %v6562 = vsel %vm947, %v6514, %v6398
      %v6563 = vsel %vm947, %v6515, %v6400
      %v6564 = vsel %vm947, %v6516, %v6402
      %v6565 = vsel %vm947, %v6517, %v6404
      %v6566 = vsel %vm947, %v6518, %v6406
      %v6567 = vsel %vm947, %v6519, %v6408
      %v6568 = vsel %vm947, %v6520, %v6410
      %v6569 = vsel %vm947, %v6521, %v6412
      %v6570 = vsel %vm947, %v6522, %v6414
      %v6571 = vsel %vm947, %v6523, %v6416
      %v6572 = vsel %vm947, %v6524, %v6418
      %v6573 = vsel %vm947, %v6525, %v6420
      %v6574 = vsel %vm947, %v6526, %v6422
      %v6575 = vsel %vm947, %v6527, %v6424
      %v6576 = vsel %vm947, %v6528, %v6426
      %v6577 = vsel %vm947, %v6529, %v6428
      %v6578 = vsel %vm947, %v6530, %v6430
      %v6579 = vsel %vm947, %v6531, %v6432
      %v6580 = vsel %vm947, %v6532, %v6434
      %v6581 = vsel %vm947, %v6533, %v6436
      %v6582 = vsel %vm947, %v6534, %v6438
      %v6583 = vpack.c.bf16 %v6535, %v6535
      %v6584 = vpack.c.bf16 %v6536, %v6536
      %v6585 = vpack.c.bf16 %v6537, %v6537
      %v6586 = vpack.c.bf16 %v6538, %v6538
      %v6587 = vpack.c.bf16 %v6539, %v6539
      %v6588 = vpack.c.bf16 %v6540, %v6540
      %v6589 = vpack.c.bf16 %v6541, %v6541
      %v6590 = vpack.c.bf16 %v6542, %v6542
      %v6591 = vpack.c.bf16 %v6543, %v6543
      %v6592 = vpack.c.bf16 %v6544, %v6544
      %v6593 = vpack.c.bf16 %v6545, %v6545
      %v6594 = vpack.c.bf16 %v6546, %v6546
      %v6595 = vpack.c.bf16 %v6547, %v6547
      %v6596 = vpack.c.bf16 %v6548, %v6548
      %v6597 = vpack.c.bf16 %v6549, %v6549
      %v6598 = vpack.c.bf16 %v6550, %v6550
      %v6599 = vpack.c.bf16 %v6551, %v6551
      %v6600 = vpack.c.bf16 %v6552, %v6552
      %v6601 = vpack.c.bf16 %v6553, %v6553
      %v6602 = vpack.c.bf16 %v6554, %v6554
      %v6603 = vpack.c.bf16 %v6555, %v6555
      %v6604 = vpack.c.bf16 %v6556, %v6556
      %v6605 = vpack.c.bf16 %v6557, %v6557
      %v6606 = vpack.c.bf16 %v6558, %v6558
      %v6607 = vpack.c.bf16 %v6559, %v6559
      %v6608 = vpack.c.bf16 %v6560, %v6560
      %v6609 = vpack.c.bf16 %v6561, %v6561
      %v6610 = vpack.c.bf16 %v6562, %v6562
      %v6611 = vpack.c.bf16 %v6563, %v6563
      %v6612 = vpack.c.bf16 %v6564, %v6564
      %v6613 = vpack.c.bf16 %v6565, %v6565
      %v6614 = vpack.c.bf16 %v6566, %v6566
      %v6615 = vpack.c.bf16 %v6567, %v6567
      %v6616 = vpack.c.bf16 %v6568, %v6568
      %v6617 = vpack.c.bf16 %v6569, %v6569
      %v6618 = vpack.c.bf16 %v6570, %v6570
      %v6619 = vpack.c.bf16 %v6571, %v6571
      %v6620 = vpack.c.bf16 %v6572, %v6572
      %v6621 = vpack.c.bf16 %v6573, %v6573
      %v6622 = vpack.c.bf16 %v6574, %v6574
      %v6623 = vpack.c.bf16 %v6575, %v6575
      %v6624 = vpack.c.bf16 %v6576, %v6576
      %v6625 = vpack.c.bf16 %v6577, %v6577
      %v6626 = vpack.c.bf16 %v6578, %v6578
      %v6627 = vpack.c.bf16 %v6579, %v6579
      %v6628 = vpack.c.bf16 %v6580, %v6580
      %v6629 = vpack.c.bf16 %v6581, %v6581
      %v6630 = vpack.c.bf16 %v6582, %v6582
      %v6679 = vrot.slane %v6583, 3
      %v6680 = vrot.slane %v6584, 3
      %v6681 = vrot.slane %v6585, 3
      %v6682 = vrot.slane %v6586, 3
      %v6683 = vrot.slane %v6587, 3
      %v6684 = vrot.slane %v6588, 3
      %v6685 = vrot.slane %v6589, 3
      %v6686 = vrot.slane %v6590, 3
      %v6687 = vrot.slane %v6591, 3
      %v6688 = vrot.slane %v6592, 3
      %v6689 = vrot.slane %v6593, 3
      %v6690 = vrot.slane %v6594, 3
      %v6691 = vrot.slane %v6595, 3
      %v6692 = vrot.slane %v6596, 3
      %v6693 = vrot.slane %v6597, 3
      %v6694 = vrot.slane %v6598, 3
      %v6695 = vrot.slane %v6599, 3
      %v6696 = vrot.slane %v6600, 3
      %v6697 = vrot.slane %v6601, 3
      %v6698 = vrot.slane %v6602, 3
      %v6699 = vrot.slane %v6603, 3
      %v6700 = vrot.slane %v6604, 3
      %v6701 = vrot.slane %v6605, 3
      %v6702 = vrot.slane %v6606, 3
      %v6703 = vrot.slane %v6607, 3
      %v6704 = vrot.slane %v6608, 3
      %v6705 = vrot.slane %v6609, 3
      %v6706 = vrot.slane %v6610, 3
      %v6707 = vrot.slane %v6611, 3
      %v6708 = vrot.slane %v6612, 3
      %v6709 = vrot.slane %v6613, 3
      %v6710 = vrot.slane %v6614, 3
      %v6711 = vrot.slane %v6615, 3
      %v6712 = vrot.slane %v6616, 3
      %v6713 = vrot.slane %v6617, 3
      %v6714 = vrot.slane %v6618, 3
      %v6715 = vrot.slane %v6619, 3
      %v6716 = vrot.slane %v6620, 3
      %v6717 = vrot.slane %v6621, 3
      %v6718 = vrot.slane %v6622, 3
      %v6719 = vrot.slane %v6623, 3
      %v6720 = vrot.slane %v6624, 3
      %v6721 = vrot.slane %v6625, 3
      %v6722 = vrot.slane %v6626, 3
      %v6723 = vrot.slane %v6627, 3
      %v6724 = vrot.slane %v6628, 3
      %v6725 = vrot.slane %v6629, 3
      %v6726 = vrot.slane %v6630, 3
      %v6729 = vsel %vm1140, %v6583, %v6679
      %v6730 = vsel %vm1144, %v6583, %v6679
      %v6732 = vrot.slane %v6730, 1
      %v6733 = vsel %vm1148, %v6583, %v6679
      %v6735 = vrot.slane %v6733, 2
      %v6736 = vsel %vm1152, %v6583, %v6679
      %v6738 = vrot.slane %v6736, 3
      %v6741 = vsel %vm1140, %v6584, %v6680
      %v6742 = vsel %vm1144, %v6584, %v6680
      %v6744 = vrot.slane %v6742, 1
      %v6745 = vsel %vm1148, %v6584, %v6680
      %v6747 = vrot.slane %v6745, 2
      %v6748 = vsel %vm1152, %v6584, %v6680
      %v6750 = vrot.slane %v6748, 3
      %v6753 = vsel %vm1140, %v6585, %v6681
      %v6756 = vsel %vm1140, %v6586, %v6682
      %v6757 = vsel %vm1144, %v6586, %v6682
      %v6759 = vrot.slane %v6757, 1
      %v6760 = vsel %vm1148, %v6586, %v6682
      %v6762 = vrot.slane %v6760, 2
      %v6763 = vsel %vm1152, %v6586, %v6682
      %v6765 = vrot.slane %v6763, 3
      %v6768 = vsel %vm1140, %v6587, %v6683
      %v6769 = vsel %vm1144, %v6587, %v6683
      %v6771 = vrot.slane %v6769, 1
      %v6772 = vsel %vm1148, %v6587, %v6683
      %v6774 = vrot.slane %v6772, 2
      %v6775 = vsel %vm1152, %v6587, %v6683
      %v6777 = vrot.slane %v6775, 3
      %v6780 = vsel %vm1140, %v6588, %v6684
      %v6783 = vsel %vm1140, %v6589, %v6685
      %v6784 = vsel %vm1144, %v6589, %v6685
      %v6786 = vrot.slane %v6784, 1
      %v6787 = vsel %vm1148, %v6589, %v6685
      %v6789 = vrot.slane %v6787, 2
      %v6790 = vsel %vm1152, %v6589, %v6685
      %v6792 = vrot.slane %v6790, 3
      %v6795 = vsel %vm1140, %v6590, %v6686
      %v6796 = vsel %vm1144, %v6590, %v6686
      %v6798 = vrot.slane %v6796, 1
      %v6799 = vsel %vm1148, %v6590, %v6686
      %v6801 = vrot.slane %v6799, 2
      %v6802 = vsel %vm1152, %v6590, %v6686
      %v6804 = vrot.slane %v6802, 3
      %v6807 = vsel %vm1140, %v6591, %v6687
      %v6810 = vsel %vm1140, %v6592, %v6688
      %v6811 = vsel %vm1144, %v6592, %v6688
      %v6813 = vrot.slane %v6811, 1
      %v6814 = vsel %vm1148, %v6592, %v6688
      %v6816 = vrot.slane %v6814, 2
      %v6817 = vsel %vm1152, %v6592, %v6688
      %v6819 = vrot.slane %v6817, 3
      %v6822 = vsel %vm1140, %v6593, %v6689
      %v6823 = vsel %vm1144, %v6593, %v6689
      %v6825 = vrot.slane %v6823, 1
      %v6826 = vsel %vm1148, %v6593, %v6689
      %v6828 = vrot.slane %v6826, 2
      %v6829 = vsel %vm1152, %v6593, %v6689
      %v6831 = vrot.slane %v6829, 3
      %v6834 = vsel %vm1140, %v6594, %v6690
      %v6837 = vsel %vm1140, %v6595, %v6691
      %v6838 = vsel %vm1144, %v6595, %v6691
      %v6840 = vrot.slane %v6838, 1
      %v6841 = vsel %vm1148, %v6595, %v6691
      %v6843 = vrot.slane %v6841, 2
      %v6844 = vsel %vm1152, %v6595, %v6691
      %v6846 = vrot.slane %v6844, 3
      %v6849 = vsel %vm1140, %v6596, %v6692
      %v6850 = vsel %vm1144, %v6596, %v6692
      %v6852 = vrot.slane %v6850, 1
      %v6853 = vsel %vm1148, %v6596, %v6692
      %v6855 = vrot.slane %v6853, 2
      %v6856 = vsel %vm1152, %v6596, %v6692
      %v6858 = vrot.slane %v6856, 3
      %v6861 = vsel %vm1140, %v6597, %v6693
      %v6864 = vsel %vm1140, %v6598, %v6694
      %v6865 = vsel %vm1144, %v6598, %v6694
      %v6867 = vrot.slane %v6865, 1
      %v6868 = vsel %vm1148, %v6598, %v6694
      %v6870 = vrot.slane %v6868, 2
      %v6871 = vsel %vm1152, %v6598, %v6694
      %v6873 = vrot.slane %v6871, 3
      %v6876 = vsel %vm1140, %v6599, %v6695
      %v6877 = vsel %vm1144, %v6599, %v6695
      %v6879 = vrot.slane %v6877, 1
      %v6880 = vsel %vm1148, %v6599, %v6695
      %v6882 = vrot.slane %v6880, 2
      %v6883 = vsel %vm1152, %v6599, %v6695
      %v6885 = vrot.slane %v6883, 3
      %v6888 = vsel %vm1140, %v6600, %v6696
      %v6891 = vsel %vm1140, %v6601, %v6697
      %v6892 = vsel %vm1144, %v6601, %v6697
      %v6894 = vrot.slane %v6892, 1
      %v6895 = vsel %vm1148, %v6601, %v6697
      %v6897 = vrot.slane %v6895, 2
      %v6898 = vsel %vm1152, %v6601, %v6697
      %v6900 = vrot.slane %v6898, 3
      %v6903 = vsel %vm1140, %v6602, %v6698
      %v6904 = vsel %vm1144, %v6602, %v6698
      %v6906 = vrot.slane %v6904, 1
      %v6907 = vsel %vm1148, %v6602, %v6698
      %v6909 = vrot.slane %v6907, 2
      %v6910 = vsel %vm1152, %v6602, %v6698
      %v6912 = vrot.slane %v6910, 3
      %v6915 = vsel %vm1140, %v6603, %v6699
      %v6918 = vsel %vm1140, %v6604, %v6700
      %v6919 = vsel %vm1144, %v6604, %v6700
      %v6921 = vrot.slane %v6919, 1
      %v6922 = vsel %vm1148, %v6604, %v6700
      %v6924 = vrot.slane %v6922, 2
      %v6925 = vsel %vm1152, %v6604, %v6700
      %v6927 = vrot.slane %v6925, 3
      %v6930 = vsel %vm1140, %v6605, %v6701
      %v6931 = vsel %vm1144, %v6605, %v6701
      %v6933 = vrot.slane %v6931, 1
      %v6934 = vsel %vm1148, %v6605, %v6701
      %v6936 = vrot.slane %v6934, 2
      %v6937 = vsel %vm1152, %v6605, %v6701
      %v6939 = vrot.slane %v6937, 3
      %v6942 = vsel %vm1140, %v6606, %v6702
      %v6945 = vsel %vm1140, %v6607, %v6703
      %v6946 = vsel %vm1144, %v6607, %v6703
      %v6948 = vrot.slane %v6946, 1
      %v6949 = vsel %vm1148, %v6607, %v6703
      %v6951 = vrot.slane %v6949, 2
      %v6952 = vsel %vm1152, %v6607, %v6703
      %v6954 = vrot.slane %v6952, 3
      %v6957 = vsel %vm1140, %v6608, %v6704
      %v6958 = vsel %vm1144, %v6608, %v6704
      %v6960 = vrot.slane %v6958, 1
      %v6961 = vsel %vm1148, %v6608, %v6704
      %v6963 = vrot.slane %v6961, 2
      %v6964 = vsel %vm1152, %v6608, %v6704
      %v6966 = vrot.slane %v6964, 3
      %v6969 = vsel %vm1140, %v6609, %v6705
      %v6972 = vsel %vm1140, %v6610, %v6706
      %v6973 = vsel %vm1144, %v6610, %v6706
      %v6975 = vrot.slane %v6973, 1
      %v6976 = vsel %vm1148, %v6610, %v6706
      %v6978 = vrot.slane %v6976, 2
      %v6979 = vsel %vm1152, %v6610, %v6706
      %v6981 = vrot.slane %v6979, 3
      %v6984 = vsel %vm1140, %v6611, %v6707
      %v6985 = vsel %vm1144, %v6611, %v6707
      %v6987 = vrot.slane %v6985, 1
      %v6988 = vsel %vm1148, %v6611, %v6707
      %v6990 = vrot.slane %v6988, 2
      %v6991 = vsel %vm1152, %v6611, %v6707
      %v6993 = vrot.slane %v6991, 3
      %v6996 = vsel %vm1140, %v6612, %v6708
      %v6999 = vsel %vm1140, %v6613, %v6709
      %v7000 = vsel %vm1144, %v6613, %v6709
      %v7002 = vrot.slane %v7000, 1
      %v7003 = vsel %vm1148, %v6613, %v6709
      %v7005 = vrot.slane %v7003, 2
      %v7006 = vsel %vm1152, %v6613, %v6709
      %v7008 = vrot.slane %v7006, 3
      %v7011 = vsel %vm1140, %v6614, %v6710
      %v7012 = vsel %vm1144, %v6614, %v6710
      %v7014 = vrot.slane %v7012, 1
      %v7015 = vsel %vm1148, %v6614, %v6710
      %v7017 = vrot.slane %v7015, 2
      %v7018 = vsel %vm1152, %v6614, %v6710
      %v7020 = vrot.slane %v7018, 3
      %v7023 = vsel %vm1140, %v6615, %v6711
      %v7026 = vsel %vm1140, %v6616, %v6712
      %v7027 = vsel %vm1144, %v6616, %v6712
      %v7029 = vrot.slane %v7027, 1
      %v7030 = vsel %vm1148, %v6616, %v6712
      %v7032 = vrot.slane %v7030, 2
      %v7033 = vsel %vm1152, %v6616, %v6712
      %v7035 = vrot.slane %v7033, 3
      %v7038 = vsel %vm1140, %v6617, %v6713
      %v7039 = vsel %vm1144, %v6617, %v6713
      %v7041 = vrot.slane %v7039, 1
      %v7042 = vsel %vm1148, %v6617, %v6713
      %v7044 = vrot.slane %v7042, 2
      %v7045 = vsel %vm1152, %v6617, %v6713
      %v7047 = vrot.slane %v7045, 3
      %v7050 = vsel %vm1140, %v6618, %v6714
      %v7053 = vsel %vm1140, %v6619, %v6715
      %v7054 = vsel %vm1144, %v6619, %v6715
      %v7056 = vrot.slane %v7054, 1
      %v7057 = vsel %vm1148, %v6619, %v6715
      %v7059 = vrot.slane %v7057, 2
      %v7060 = vsel %vm1152, %v6619, %v6715
      %v7062 = vrot.slane %v7060, 3
      %v7065 = vsel %vm1140, %v6620, %v6716
      %v7066 = vsel %vm1144, %v6620, %v6716
      %v7068 = vrot.slane %v7066, 1
      %v7069 = vsel %vm1148, %v6620, %v6716
      %v7071 = vrot.slane %v7069, 2
      %v7072 = vsel %vm1152, %v6620, %v6716
      %v7074 = vrot.slane %v7072, 3
      %v7077 = vsel %vm1140, %v6621, %v6717
      %v7080 = vsel %vm1140, %v6622, %v6718
      %v7081 = vsel %vm1144, %v6622, %v6718
      %v7083 = vrot.slane %v7081, 1
      %v7084 = vsel %vm1148, %v6622, %v6718
      %v7086 = vrot.slane %v7084, 2
      %v7087 = vsel %vm1152, %v6622, %v6718
      %v7089 = vrot.slane %v7087, 3
      %v7092 = vsel %vm1140, %v6623, %v6719
      %v7093 = vsel %vm1144, %v6623, %v6719
      %v7095 = vrot.slane %v7093, 1
      %v7096 = vsel %vm1148, %v6623, %v6719
      %v7098 = vrot.slane %v7096, 2
      %v7099 = vsel %vm1152, %v6623, %v6719
      %v7101 = vrot.slane %v7099, 3
      %v7104 = vsel %vm1140, %v6624, %v6720
      %v7107 = vsel %vm1140, %v6625, %v6721
      %v7108 = vsel %vm1144, %v6625, %v6721
      %v7110 = vrot.slane %v7108, 1
      %v7111 = vsel %vm1148, %v6625, %v6721
      %v7113 = vrot.slane %v7111, 2
      %v7114 = vsel %vm1152, %v6625, %v6721
      %v7116 = vrot.slane %v7114, 3
      %v7119 = vsel %vm1140, %v6626, %v6722
      %v7120 = vsel %vm1144, %v6626, %v6722
      %v7122 = vrot.slane %v7120, 1
      %v7123 = vsel %vm1148, %v6626, %v6722
      %v7125 = vrot.slane %v7123, 2
      %v7126 = vsel %vm1152, %v6626, %v6722
      %v7128 = vrot.slane %v7126, 3
      %v7131 = vsel %vm1140, %v6627, %v6723
      %v7134 = vsel %vm1140, %v6628, %v6724
      %v7135 = vsel %vm1144, %v6628, %v6724
      %v7137 = vrot.slane %v7135, 1
      %v7138 = vsel %vm1148, %v6628, %v6724
      %v7140 = vrot.slane %v7138, 2
      %v7141 = vsel %vm1152, %v6628, %v6724
      %v7143 = vrot.slane %v7141, 3
      %v7146 = vsel %vm1140, %v6629, %v6725
      %v7147 = vsel %vm1144, %v6629, %v6725
      %v7149 = vrot.slane %v7147, 1
      %v7150 = vsel %vm1148, %v6629, %v6725
      %v7152 = vrot.slane %v7150, 2
      %v7153 = vsel %vm1152, %v6629, %v6725
      %v7155 = vrot.slane %v7153, 3
      %v7158 = vsel %vm1140, %v6630, %v6726
      %v7159 = vld [vmem:[%s3] sm:$0xf]
      %v7160 = vld [vmem:[%s3 + $0x4] sm:$0x3]
      %7161 = vst [vmem:[#allocation1] ss:$9 sm:$0xff] %v6729
      %s7163 = scalar_lea.vmem [#allocation1], 1
      %7164 = vst [vmem:[%s7163] ss:$9 sm:$0xff] %v6732
      %s7166 = scalar_lea.vmem [#allocation1], 2
      %7167 = vst [vmem:[%s7166] ss:$9 sm:$0xff] %v6735
      %s7169 = scalar_lea.vmem [#allocation1], 3
      %7170 = vst [vmem:[%s7169] ss:$9 sm:$0xff] %v6738
      %s7171 = scalar_lea.vmem [#allocation1], 4
      %7172 = vst [vmem:[%s7171] ss:$9 sm:$0xff] %v6741
      %s7174 = scalar_lea.vmem [#allocation1], 5
      %7175 = vst [vmem:[%s7174] ss:$9 sm:$0xff] %v6744
      %s7177 = scalar_lea.vmem [#allocation1], 6
      %7178 = vst [vmem:[%s7177] ss:$9 sm:$0xff] %v6747
      %s7180 = scalar_lea.vmem [#allocation1], 7
      %7181 = vst [vmem:[%s7180] ss:$9 sm:$0xff] %v6750
      %v7182 = vld [vmem:[#allocation1] sm:$0xff]
      %7183 = vst [vmem:[#allocation1] ss:$9 sm:$0xff] %v6753
      %7184 = vst [vmem:[%s7163] ss:$9 sm:$0xff] %v6756
      %7186 = vst [vmem:[%s7166] ss:$9 sm:$0xff] %v6759
      %7188 = vst [vmem:[%s7169] ss:$9 sm:$0xff] %v6762
      %7190 = vst [vmem:[%s7171] ss:$9 sm:$0xff] %v6765
      %7191 = vst [vmem:[%s7174] ss:$9 sm:$0xff] %v6768
      %7193 = vst [vmem:[%s7177] ss:$9 sm:$0xff] %v6771
      %7195 = vst [vmem:[%s7180] ss:$9 sm:$0xff] %v6774
      %v7196 = vld [vmem:[#allocation1] sm:$0xff]
      %7198 = vst [vmem:[#allocation1] ss:$9 sm:$0xff] %v6777
      %7199 = vst [vmem:[%s7163] ss:$9 sm:$0xff] %v6780
      %7200 = vst [vmem:[%s7166] ss:$9 sm:$0xff] %v6783
      %7202 = vst [vmem:[%s7169] ss:$9 sm:$0xff] %v6786
      %7204 = vst [vmem:[%s7171] ss:$9 sm:$0xff] %v6789
      %7206 = vst [vmem:[%s7174] ss:$9 sm:$0xff] %v6792
      %7207 = vst [vmem:[%s7177] ss:$9 sm:$0xff] %v6795
      %7209 = vst [vmem:[%s7180] ss:$9 sm:$0xff] %v6798
      %v7210 = vld [vmem:[#allocation1] sm:$0xff]
      %7212 = vst [vmem:[#allocation1] ss:$9 sm:$0xff] %v6801
      %7214 = vst [vmem:[%s7163] ss:$9 sm:$0xff] %v6804
      %7215 = vst [vmem:[%s7166] ss:$9 sm:$0xff] %v6807
      %7216 = vst [vmem:[%s7169] ss:$9 sm:$0xff] %v6810
      %7218 = vst [vmem:[%s7171] ss:$9 sm:$0xff] %v6813
      %7220 = vst [vmem:[%s7174] ss:$9 sm:$0xff] %v6816
      %7222 = vst [vmem:[%s7177] ss:$9 sm:$0xff] %v6819
      %7223 = vst [vmem:[%s7180] ss:$9 sm:$0xff] %v6822
      %v7224 = vld [vmem:[#allocation1] sm:$0xff]
      %7226 = vst [vmem:[#allocation1] ss:$9 sm:$0xff] %v6825
      %7228 = vst [vmem:[%s7163] ss:$9 sm:$0xff] %v6828
      %7230 = vst [vmem:[%s7166] ss:$9 sm:$0xff] %v6831
      %7231 = vst [vmem:[%s7169] ss:$9 sm:$0xff] %v6834
      %7232 = vst [vmem:[%s7171] ss:$9 sm:$0xff] %v6837
      %7234 = vst [vmem:[%s7174] ss:$9 sm:$0xff] %v6840
      %7236 = vst [vmem:[%s7177] ss:$9 sm:$0xff] %v6843
      %7238 = vst [vmem:[%s7180] ss:$9 sm:$0xff] %v6846
      %v7239 = vld [vmem:[#allocation1] sm:$0xff]
      %7240 = vst [vmem:[#allocation1] ss:$9 sm:$0xff] %v6849
      %7242 = vst [vmem:[%s7163] ss:$9 sm:$0xff] %v6852
      %7244 = vst [vmem:[%s7166] ss:$9 sm:$0xff] %v6855
      %7246 = vst [vmem:[%s7169] ss:$9 sm:$0xff] %v6858
      %7247 = vst [vmem:[%s7171] ss:$9 sm:$0xff] %v6861
      %7248 = vst [vmem:[%s7174] ss:$9 sm:$0xff] %v6864
      %7250 = vst [vmem:[%s7177] ss:$9 sm:$0xff] %v6867
      %7252 = vst [vmem:[%s7180] ss:$9 sm:$0xff] %v6870
      %v7253 = vld [vmem:[#allocation1] sm:$0xff]
      %7255 = vst [vmem:[#allocation1] ss:$9 sm:$0xff] %v6873
      %7256 = vst [vmem:[%s7163] ss:$9 sm:$0xff] %v6876
      %7258 = vst [vmem:[%s7166] ss:$9 sm:$0xff] %v6879
      %7260 = vst [vmem:[%s7169] ss:$9 sm:$0xff] %v6882
      %7262 = vst [vmem:[%s7171] ss:$9 sm:$0xff] %v6885
      %7263 = vst [vmem:[%s7174] ss:$9 sm:$0xff] %v6888
      %7264 = vst [vmem:[%s7177] ss:$9 sm:$0xff] %v6891
      %7266 = vst [vmem:[%s7180] ss:$9 sm:$0xff] %v6894
      %v7267 = vld [vmem:[#allocation1] sm:$0xff]
      %7269 = vst [vmem:[#allocation1] ss:$9 sm:$0xff] %v6897
      %7271 = vst [vmem:[%s7163] ss:$9 sm:$0xff] %v6900
      %7272 = vst [vmem:[%s7166] ss:$9 sm:$0xff] %v6903
      %7274 = vst [vmem:[%s7169] ss:$9 sm:$0xff] %v6906
      %7276 = vst [vmem:[%s7171] ss:$9 sm:$0xff] %v6909
      %7278 = vst [vmem:[%s7174] ss:$9 sm:$0xff] %v6912
      %7279 = vst [vmem:[%s7177] ss:$9 sm:$0xff] %v6915
      %7280 = vst [vmem:[%s7180] ss:$9 sm:$0xff] %v6918
      %v7281 = vld [vmem:[#allocation1] sm:$0xff]
      %7283 = vst [vmem:[#allocation1] ss:$9 sm:$0xff] %v6921
      %7285 = vst [vmem:[%s7163] ss:$9 sm:$0xff] %v6924
      %7287 = vst [vmem:[%s7166] ss:$9 sm:$0xff] %v6927
      %7288 = vst [vmem:[%s7169] ss:$9 sm:$0xff] %v6930
      %7290 = vst [vmem:[%s7171] ss:$9 sm:$0xff] %v6933
      %7292 = vst [vmem:[%s7174] ss:$9 sm:$0xff] %v6936
      %7294 = vst [vmem:[%s7177] ss:$9 sm:$0xff] %v6939
      %7295 = vst [vmem:[%s7180] ss:$9 sm:$0xff] %v6942
      %v7296 = vld [vmem:[#allocation1] sm:$0xff]
      %7297 = vst [vmem:[#allocation1] ss:$9 sm:$0xff] %v6945
      %7299 = vst [vmem:[%s7163] ss:$9 sm:$0xff] %v6948
      %7301 = vst [vmem:[%s7166] ss:$9 sm:$0xff] %v6951
      %7303 = vst [vmem:[%s7169] ss:$9 sm:$0xff] %v6954
      %7304 = vst [vmem:[%s7171] ss:$9 sm:$0xff] %v6957
      %7306 = vst [vmem:[%s7174] ss:$9 sm:$0xff] %v6960
      %7308 = vst [vmem:[%s7177] ss:$9 sm:$0xff] %v6963
      %7310 = vst [vmem:[%s7180] ss:$9 sm:$0xff] %v6966
      %v7311 = vld [vmem:[#allocation1] sm:$0xff]
      %7312 = vst [vmem:[#allocation1] ss:$9 sm:$0xff] %v6969
      %7313 = vst [vmem:[%s7163] ss:$9 sm:$0xff] %v6972
      %7315 = vst [vmem:[%s7166] ss:$9 sm:$0xff] %v6975
      %7317 = vst [vmem:[%s7169] ss:$9 sm:$0xff] %v6978
      %7319 = vst [vmem:[%s7171] ss:$9 sm:$0xff] %v6981
      %7320 = vst [vmem:[%s7174] ss:$9 sm:$0xff] %v6984
      %7322 = vst [vmem:[%s7177] ss:$9 sm:$0xff] %v6987
      %7324 = vst [vmem:[%s7180] ss:$9 sm:$0xff] %v6990
      %v7325 = vld [vmem:[#allocation1] sm:$0xff]
      %7327 = vst [vmem:[#allocation1] ss:$9 sm:$0xff] %v6993
      %7328 = vst [vmem:[%s7163] ss:$9 sm:$0xff] %v6996
      %7329 = vst [vmem:[%s7166] ss:$9 sm:$0xff] %v6999
      %7331 = vst [vmem:[%s7169] ss:$9 sm:$0xff] %v7002
      %7333 = vst [vmem:[%s7171] ss:$9 sm:$0xff] %v7005
      %7335 = vst [vmem:[%s7174] ss:$9 sm:$0xff] %v7008
      %7336 = vst [vmem:[%s7177] ss:$9 sm:$0xff] %v7011
      %7338 = vst [vmem:[%s7180] ss:$9 sm:$0xff] %v7014
      %v7339 = vld [vmem:[#allocation1] sm:$0xff]
      %7341 = vst [vmem:[#allocation1] ss:$9 sm:$0xff] %v7017
      %7343 = vst [vmem:[%s7163] ss:$9 sm:$0xff] %v7020
      %7344 = vst [vmem:[%s7166] ss:$9 sm:$0xff] %v7023
      %7345 = vst [vmem:[%s7169] ss:$9 sm:$0xff] %v7026
      %7347 = vst [vmem:[%s7171] ss:$9 sm:$0xff] %v7029
      %7349 = vst [vmem:[%s7174] ss:$9 sm:$0xff] %v7032
      %7351 = vst [vmem:[%s7177] ss:$9 sm:$0xff] %v7035
      %7352 = vst [vmem:[%s7180] ss:$9 sm:$0xff] %v7038
      %v7353 = vld [vmem:[#allocation1] sm:$0xff]
      %7355 = vst [vmem:[#allocation1] ss:$9 sm:$0xff] %v7041
      %7357 = vst [vmem:[%s7163] ss:$9 sm:$0xff] %v7044
      %7359 = vst [vmem:[%s7166] ss:$9 sm:$0xff] %v7047
      %7360 = vst [vmem:[%s7169] ss:$9 sm:$0xff] %v7050
      %7361 = vst [vmem:[%s7171] ss:$9 sm:$0xff] %v7053
      %7363 = vst [vmem:[%s7174] ss:$9 sm:$0xff] %v7056
      %7365 = vst [vmem:[%s7177] ss:$9 sm:$0xff] %v7059
      %7367 = vst [vmem:[%s7180] ss:$9 sm:$0xff] %v7062
      %v7368 = vld [vmem:[#allocation1] sm:$0xff]
      %7369 = vst [vmem:[#allocation1] ss:$9 sm:$0xff] %v7065
      %7371 = vst [vmem:[%s7163] ss:$9 sm:$0xff] %v7068
      %7373 = vst [vmem:[%s7166] ss:$9 sm:$0xff] %v7071
      %7375 = vst [vmem:[%s7169] ss:$9 sm:$0xff] %v7074
      %7376 = vst [vmem:[%s7171] ss:$9 sm:$0xff] %v7077
      %7377 = vst [vmem:[%s7174] ss:$9 sm:$0xff] %v7080
      %7379 = vst [vmem:[%s7177] ss:$9 sm:$0xff] %v7083
      %7381 = vst [vmem:[%s7180] ss:$9 sm:$0xff] %v7086
      %v7382 = vld [vmem:[#allocation1] sm:$0xff]
      %7384 = vst [vmem:[#allocation1] ss:$9 sm:$0xff] %v7089
      %7385 = vst [vmem:[%s7163] ss:$9 sm:$0xff] %v7092
      %7387 = vst [vmem:[%s7166] ss:$9 sm:$0xff] %v7095
      %7389 = vst [vmem:[%s7169] ss:$9 sm:$0xff] %v7098
      %7391 = vst [vmem:[%s7171] ss:$9 sm:$0xff] %v7101
      %7392 = vst [vmem:[%s7174] ss:$9 sm:$0xff] %v7104
      %7393 = vst [vmem:[%s7177] ss:$9 sm:$0xff] %v7107
      %7395 = vst [vmem:[%s7180] ss:$9 sm:$0xff] %v7110
      %v7396 = vld [vmem:[#allocation1] sm:$0xff]
      %7398 = vst [vmem:[#allocation1] ss:$9 sm:$0xff] %v7113
      %7400 = vst [vmem:[%s7163] ss:$9 sm:$0xff] %v7116
      %7401 = vst [vmem:[%s7166] ss:$9 sm:$0xff] %v7119
      %7403 = vst [vmem:[%s7169] ss:$9 sm:$0xff] %v7122
      %7405 = vst [vmem:[%s7171] ss:$9 sm:$0xff] %v7125
      %7407 = vst [vmem:[%s7174] ss:$9 sm:$0xff] %v7128
      %7408 = vst [vmem:[%s7177] ss:$9 sm:$0xff] %v7131
      %7409 = vst [vmem:[%s7180] ss:$9 sm:$0xff] %v7134
      %v7410 = vld [vmem:[#allocation1] sm:$0xff]
      %7412 = vst [vmem:[#allocation1] ss:$9 sm:$0xff] %v7137
      %7414 = vst [vmem:[%s7163] ss:$9 sm:$0xff] %v7140
      %7416 = vst [vmem:[%s7166] ss:$9 sm:$0xff] %v7143
      %7417 = vst [vmem:[%s7169] ss:$9 sm:$0xff] %v7146
      %7419 = vst [vmem:[%s7171] ss:$9 sm:$0xff] %v7149
      %7421 = vst [vmem:[%s7174] ss:$9 sm:$0xff] %v7152
      %7423 = vst [vmem:[%s7177] ss:$9 sm:$0xff] %v7155
      %7424 = vst [vmem:[%s7180] ss:$9 sm:$0xff] %v7158
      %v7425 = vld [vmem:[#allocation1] sm:$0xff]
      %v7428 = vunpack.c.l.b16 %v7159
      %v7429 = vunpack.c.l.b16 %v7160
      %v7430 = vpack.c.b16 %v7429, %v7428
      %v7431 = vsel %vm1848, %v7182, 0
      %v7433 = vsel %vm1848, %v7196, 0
      %v7435 = vsel %vm1848, %v7210, 0
      %v7437 = vsel %vm1848, %v7224, 0
      %v7439 = vsel %vm1848, %v7239, 0
      %v7441 = vsel %vm1848, %v7253, 0
      %v7443 = vsel %vm1848, %v7267, 0
      %v7445 = vsel %vm1848, %v7281, 0
      %v7447 = vsel %vm1848, %v7296, 0
      %v7449 = vsel %vm1848, %v7311, 0
      %v7451 = vsel %vm1848, %v7325, 0
      %v7453 = vsel %vm1848, %v7339, 0
      %v7455 = vsel %vm1848, %v7353, 0
      %v7457 = vsel %vm1848, %v7368, 0
      %v7459 = vsel %vm1848, %v7382, 0
      %v7461 = vsel %vm1848, %v7396, 0
      %v7463 = vsel %vm1848, %v7410, 0
      %v7465 = vsel %vm1848, %v7425, 0
      %v7468 = vsel %vm1885, %v7430, 0
      %7470 = vmatpush.bf16.msra.mxu0 0
      %7471 = vmatpush.bf16.msra.mxu0 0
      %7472 = vmatpush.bf16.msra.mxu0 0
      %7473 = vmatpush.bf16.msra.mxu0 0
      %7474 = vmatpush.bf16.msra.mxu0 0
      %7475 = vmatpush.bf16.msra.mxu0 0
      %7476 = vmatpush.bf16.msra.mxu0 0
      %7477 = vmatpush.bf16.msra.mxu0 %v7468
      %7478 = vmatmul.bf16.gmra.mxu0 %v7431
      %v7479 = vpop.f32.mrf.mxu0
      %v7480 = vadd.f32 0.0, %v7479
      %v7481 = vpop.f32.mrf.mxu0
      %v7482 = vadd.f32 0.0, %v7481
      %7483 = vmatmul.bf16.gmra.mxu0 %v7433
      %v7484 = vpop.f32.mrf.mxu0
      %v7485 = vadd.f32 0.0, %v7484
      %v7486 = vpop.f32.mrf.mxu0
      %v7487 = vadd.f32 0.0, %v7486
      %7488 = vmatmul.bf16.gmra.mxu0 %v7435
      %v7489 = vpop.f32.mrf.mxu0
      %v7490 = vadd.f32 0.0, %v7489
      %v7491 = vpop.f32.mrf.mxu0
      %v7492 = vadd.f32 0.0, %v7491
      %7493 = vmatmul.bf16.gmra.mxu0 %v7437
      %v7494 = vpop.f32.mrf.mxu0
      %v7495 = vadd.f32 0.0, %v7494
      %v7496 = vpop.f32.mrf.mxu0
      %v7497 = vadd.f32 0.0, %v7496
      %7498 = vmatmul.bf16.gmra.mxu0 %v7439
      %v7499 = vpop.f32.mrf.mxu0
      %v7500 = vadd.f32 0.0, %v7499
      %v7501 = vpop.f32.mrf.mxu0
      %v7502 = vadd.f32 0.0, %v7501
      %7503 = vmatmul.bf16.gmra.mxu0 %v7441
      %v7504 = vpop.f32.mrf.mxu0
      %v7505 = vadd.f32 0.0, %v7504
      %v7506 = vpop.f32.mrf.mxu0
      %v7507 = vadd.f32 0.0, %v7506
      %7508 = vmatmul.bf16.gmra.mxu0 %v7443
      %v7509 = vpop.f32.mrf.mxu0
      %v7510 = vadd.f32 0.0, %v7509
      %v7511 = vpop.f32.mrf.mxu0
      %v7512 = vadd.f32 0.0, %v7511
      %7513 = vmatmul.bf16.gmra.mxu0 %v7445
      %v7514 = vpop.f32.mrf.mxu0
      %v7515 = vadd.f32 0.0, %v7514
      %v7516 = vpop.f32.mrf.mxu0
      %v7517 = vadd.f32 0.0, %v7516
      %7518 = vmatmul.bf16.gmra.mxu0 %v7447
      %v7519 = vpop.f32.mrf.mxu0
      %v7520 = vadd.f32 0.0, %v7519
      %v7521 = vpop.f32.mrf.mxu0
      %v7522 = vadd.f32 0.0, %v7521
      %7523 = vmatmul.bf16.gmra.mxu0 %v7449
      %v7524 = vpop.f32.mrf.mxu0
      %v7525 = vadd.f32 0.0, %v7524
      %v7526 = vpop.f32.mrf.mxu0
      %v7527 = vadd.f32 0.0, %v7526
      %7528 = vmatmul.bf16.gmra.mxu0 %v7451
      %v7529 = vpop.f32.mrf.mxu0
      %v7530 = vadd.f32 0.0, %v7529
      %v7531 = vpop.f32.mrf.mxu0
      %v7532 = vadd.f32 0.0, %v7531
      %7533 = vmatmul.bf16.gmra.mxu0 %v7453
      %v7534 = vpop.f32.mrf.mxu0
      %v7535 = vadd.f32 0.0, %v7534
      %v7536 = vpop.f32.mrf.mxu0
      %v7537 = vadd.f32 0.0, %v7536
      %7538 = vmatmul.bf16.gmra.mxu0 %v7455
      %v7539 = vpop.f32.mrf.mxu0
      %v7540 = vadd.f32 0.0, %v7539
      %v7541 = vpop.f32.mrf.mxu0
      %v7542 = vadd.f32 0.0, %v7541
      %7543 = vmatmul.bf16.gmra.mxu0 %v7457
      %v7544 = vpop.f32.mrf.mxu0
      %v7545 = vadd.f32 0.0, %v7544
      %v7546 = vpop.f32.mrf.mxu0
      %v7547 = vadd.f32 0.0, %v7546
      %7548 = vmatmul.bf16.gmra.mxu0 %v7459
      %v7549 = vpop.f32.mrf.mxu0
      %v7550 = vadd.f32 0.0, %v7549
      %v7551 = vpop.f32.mrf.mxu0
      %v7552 = vadd.f32 0.0, %v7551
      %7553 = vmatmul.bf16.gmra.mxu0 %v7461
      %v7554 = vpop.f32.mrf.mxu0
      %v7555 = vadd.f32 0.0, %v7554
      %v7556 = vpop.f32.mrf.mxu0
      %v7557 = vadd.f32 0.0, %v7556
      %7558 = vmatmul.bf16.gmra.mxu0 %v7463
      %v7559 = vpop.f32.mrf.mxu0
      %v7560 = vadd.f32 0.0, %v7559
      %v7561 = vpop.f32.mrf.mxu0
      %v7562 = vadd.f32 0.0, %v7561
      %7563 = vmatmul.bf16.gmra.mxu0 %v7465
      %v7564 = vpop.f32.mrf.mxu0
      %v7565 = vadd.f32 0.0, %v7564
      %v7566 = vpop.f32.mrf.mxu0
      %v7567 = vadd.f32 0.0, %v7566
      %7568 = vdwg.mxu0
      %v7605 = vrot.slane %v7480, 2
      %v7606 = vrot.slane %v7480, 4
      %v7607 = vrot.slane %v7480, 6
      %v7608 = vrot.slane %v7482, 2
      %v7609 = vrot.slane %v7482, 4
      %v7610 = vrot.slane %v7482, 6
      %v7611 = vrot.slane %v7485, 2
      %v7612 = vrot.slane %v7485, 4
      %v7613 = vrot.slane %v7485, 6
      %v7614 = vrot.slane %v7487, 2
      %v7615 = vrot.slane %v7487, 4
      %v7616 = vrot.slane %v7487, 6
      %v7617 = vrot.slane %v7490, 4
      %v7618 = vrot.slane %v7490, 6
      %v7619 = vrot.slane %v7492, 2
      %v7620 = vrot.slane %v7492, 4
      %v7621 = vrot.slane %v7492, 6
      %v7622 = vrot.slane %v7495, 2
      %v7623 = vrot.slane %v7495, 6
      %v7624 = vrot.slane %v7497, 2
      %v7625 = vrot.slane %v7497, 4
      %v7626 = vrot.slane %v7497, 6
      %v7627 = vrot.slane %v7500, 2
      %v7628 = vrot.slane %v7500, 4
      %v7629 = vrot.slane %v7502, 2
      %v7630 = vrot.slane %v7502, 4
      %v7631 = vrot.slane %v7502, 6
      %v7632 = vrot.slane %v7505, 2
      %v7633 = vrot.slane %v7505, 4
      %v7634 = vrot.slane %v7505, 6
      %v7635 = vrot.slane %v7507, 2
      %v7636 = vrot.slane %v7507, 4
      %v7637 = vrot.slane %v7507, 6
      %v7638 = vrot.slane %v7510, 2
      %v7639 = vrot.slane %v7510, 4
      %v7640 = vrot.slane %v7510, 6
      %v7641 = vrot.slane %v7512, 4
      %v7642 = vrot.slane %v7512, 6
      %v7643 = vrot.slane %v7515, 2
      %v7644 = vrot.slane %v7515, 4
      %v7645 = vrot.slane %v7515, 6
      %v7646 = vrot.slane %v7517, 2
      %v7647 = vrot.slane %v7517, 6
      %v7648 = vrot.slane %v7520, 2
      %v7649 = vrot.slane %v7520, 4
      %v7650 = vrot.slane %v7520, 6
      %v7651 = vrot.slane %v7522, 2
      %v7652 = vrot.slane %v7522, 4
      %v7653 = vrot.slane %v7525, 2
      %v7654 = vrot.slane %v7525, 4
      %v7655 = vrot.slane %v7525, 6
      %v7656 = vrot.slane %v7527, 2
      %v7657 = vrot.slane %v7527, 4
      %v7658 = vrot.slane %v7527, 6
      %v7659 = vrot.slane %v7530, 2
      %v7660 = vrot.slane %v7530, 4
      %v7661 = vrot.slane %v7530, 6
      %v7662 = vrot.slane %v7532, 2
      %v7663 = vrot.slane %v7532, 4
      %v7664 = vrot.slane %v7532, 6
      %v7665 = vrot.slane %v7535, 4
      %v7666 = vrot.slane %v7535, 6
      %v7667 = vrot.slane %v7537, 2
      %v7668 = vrot.slane %v7537, 4
      %v7669 = vrot.slane %v7537, 6
      %v7670 = vrot.slane %v7540, 2
      %v7671 = vrot.slane %v7540, 6
      %v7672 = vrot.slane %v7542, 2
      %v7673 = vrot.slane %v7542, 4
      %v7674 = vrot.slane %v7542, 6
      %v7675 = vrot.slane %v7545, 2
      %v7676 = vrot.slane %v7545, 4
      %v7677 = vrot.slane %v7547, 2
      %v7678 = vrot.slane %v7547, 4
      %v7679 = vrot.slane %v7547, 6
      %v7680 = vrot.slane %v7550, 2
      %v7681 = vrot.slane %v7550, 4
      %v7682 = vrot.slane %v7550, 6
      %v7683 = vrot.slane %v7552, 2
      %v7684 = vrot.slane %v7552, 4
      %v7685 = vrot.slane %v7552, 6
      %v7686 = vrot.slane %v7555, 2
      %v7687 = vrot.slane %v7555, 4
      %v7688 = vrot.slane %v7555, 6
      %v7689 = vrot.slane %v7557, 4
      %v7690 = vrot.slane %v7557, 6
      %v7691 = vrot.slane %v7560, 2
      %v7692 = vrot.slane %v7560, 4
      %v7693 = vrot.slane %v7560, 6
      %v7694 = vrot.slane %v7562, 2
      %v7695 = vrot.slane %v7562, 6
      %v7696 = vrot.slane %v7565, 2
      %v7697 = vrot.slane %v7565, 4
      %v7698 = vrot.slane %v7565, 6
      %v7699 = vrot.slane %v7567, 2
      %v7700 = vrot.slane %v7567, 4
      %v7797 = vadd.f32 %v7480, 0.0
      %v7798 = vadd.f32 %v7605, 0.0
      %v7799 = vadd.f32 %v7606, 0.0
      %v7800 = vadd.f32 %v7607, 0.0
      %v7801 = vadd.f32 %v7482, 0.0
      %v7802 = vadd.f32 %v7608, 0.0
      %v7803 = vadd.f32 %v7609, 0.0
      %v7804 = vadd.f32 %v7610, 0.0
      %v7805 = vadd.f32 %v7611, 0.0
      %v7806 = vadd.f32 %v7612, 0.0
      %v7807 = vadd.f32 %v7613, 0.0
      %v7808 = vadd.f32 %v7487, 0.0
      %v7809 = vadd.f32 %v7614, 0.0
      %v7810 = vadd.f32 %v7615, 0.0
      %v7811 = vadd.f32 %v7616, 0.0
      %v7812 = vadd.f32 %v7490, 0.0
      %v7813 = vadd.f32 %v7617, 0.0
      %v7814 = vadd.f32 %v7618, 0.0
      %v7815 = vadd.f32 %v7492, 0.0
      %v7816 = vadd.f32 %v7619, 0.0
      %v7817 = vadd.f32 %v7620, 0.0
      %v7818 = vadd.f32 %v7621, 0.0
      %v7819 = vadd.f32 %v7495, 0.0
      %v7820 = vadd.f32 %v7622, 0.0
      %v7821 = vadd.f32 %v7623, 0.0
      %v7822 = vadd.f32 %v7497, 0.0
      %v7823 = vadd.f32 %v7624, 0.0
      %v7824 = vadd.f32 %v7625, 0.0
      %v7825 = vadd.f32 %v7626, 0.0
      %v7826 = vadd.f32 %v7500, 0.0
      %v7827 = vadd.f32 %v7627, 0.0
      %v7828 = vadd.f32 %v7628, 0.0
      %v7829 = vadd.f32 %v7502, 0.0
      %v7830 = vadd.f32 %v7629, 0.0
      %v7831 = vadd.f32 %v7630, 0.0
      %v7832 = vadd.f32 %v7631, 0.0
      %v7833 = vadd.f32 %v7505, 0.0
      %v7834 = vadd.f32 %v7632, 0.0
      %v7835 = vadd.f32 %v7633, 0.0
      %v7836 = vadd.f32 %v7634, 0.0
      %v7837 = vadd.f32 %v7635, 0.0
      %v7838 = vadd.f32 %v7636, 0.0
      %v7839 = vadd.f32 %v7637, 0.0
      %v7840 = vadd.f32 %v7510, 0.0
      %v7841 = vadd.f32 %v7638, 0.0
      %v7842 = vadd.f32 %v7639, 0.0
      %v7843 = vadd.f32 %v7640, 0.0
      %v7844 = vadd.f32 %v7512, 0.0
      %v7845 = vadd.f32 %v7641, 0.0
      %v7846 = vadd.f32 %v7642, 0.0
      %v7847 = vadd.f32 %v7515, 0.0
      %v7848 = vadd.f32 %v7643, 0.0
      %v7849 = vadd.f32 %v7644, 0.0
      %v7850 = vadd.f32 %v7645, 0.0
      %v7851 = vadd.f32 %v7517, 0.0
      %v7852 = vadd.f32 %v7646, 0.0
      %v7853 = vadd.f32 %v7647, 0.0
      %v7854 = vadd.f32 %v7520, 0.0
      %v7855 = vadd.f32 %v7648, 0.0
      %v7856 = vadd.f32 %v7649, 0.0
      %v7857 = vadd.f32 %v7650, 0.0
      %v7858 = vadd.f32 %v7522, 0.0
      %v7859 = vadd.f32 %v7651, 0.0
      %v7860 = vadd.f32 %v7652, 0.0
      %v7861 = vadd.f32 %v7525, 0.0
      %v7862 = vadd.f32 %v7653, 0.0
      %v7863 = vadd.f32 %v7654, 0.0
      %v7864 = vadd.f32 %v7655, 0.0
      %v7865 = vadd.f32 %v7527, 0.0
      %v7866 = vadd.f32 %v7656, 0.0
      %v7867 = vadd.f32 %v7657, 0.0
      %v7868 = vadd.f32 %v7658, 0.0
      %v7869 = vadd.f32 %v7659, 0.0
      %v7870 = vadd.f32 %v7660, 0.0
      %v7871 = vadd.f32 %v7661, 0.0
      %v7872 = vadd.f32 %v7532, 0.0
      %v7873 = vadd.f32 %v7662, 0.0
      %v7874 = vadd.f32 %v7663, 0.0
      %v7875 = vadd.f32 %v7664, 0.0
      %v7876 = vadd.f32 %v7535, 0.0
      %v7877 = vadd.f32 %v7665, 0.0
      %v7878 = vadd.f32 %v7666, 0.0
      %v7879 = vadd.f32 %v7537, 0.0
      %v7880 = vadd.f32 %v7667, 0.0
      %v7881 = vadd.f32 %v7668, 0.0
      %v7882 = vadd.f32 %v7669, 0.0
      %v7883 = vadd.f32 %v7540, 0.0
      %v7884 = vadd.f32 %v7670, 0.0
      %v7885 = vadd.f32 %v7671, 0.0
      %v7886 = vadd.f32 %v7542, 0.0
      %v7887 = vadd.f32 %v7672, 0.0
      %v7888 = vadd.f32 %v7673, 0.0
      %v7889 = vadd.f32 %v7674, 0.0
      %v7890 = vadd.f32 %v7545, 0.0
      %v7891 = vadd.f32 %v7675, 0.0
      %v7892 = vadd.f32 %v7676, 0.0
      %v7893 = vadd.f32 %v7547, 0.0
      %v7894 = vadd.f32 %v7677, 0.0
      %v7895 = vadd.f32 %v7678, 0.0
      %v7896 = vadd.f32 %v7679, 0.0
      %v7897 = vadd.f32 %v7550, 0.0
      %v7898 = vadd.f32 %v7680, 0.0
      %v7899 = vadd.f32 %v7681, 0.0
      %v7900 = vadd.f32 %v7682, 0.0
      %v7901 = vadd.f32 %v7683, 0.0
      %v7902 = vadd.f32 %v7684, 0.0
      %v7903 = vadd.f32 %v7685, 0.0
      %v7904 = vadd.f32 %v7555, 0.0
      %v7905 = vadd.f32 %v7686, 0.0
      %v7906 = vadd.f32 %v7687, 0.0
      %v7907 = vadd.f32 %v7688, 0.0
      %v7908 = vadd.f32 %v7557, 0.0
      %v7909 = vadd.f32 %v7689, 0.0
      %v7910 = vadd.f32 %v7690, 0.0
      %v7911 = vadd.f32 %v7560, 0.0
      %v7912 = vadd.f32 %v7691, 0.0
      %v7913 = vadd.f32 %v7692, 0.0
      %v7914 = vadd.f32 %v7693, 0.0
      %v7915 = vadd.f32 %v7562, 0.0
      %v7916 = vadd.f32 %v7694, 0.0
      %v7917 = vadd.f32 %v7695, 0.0
      %v7918 = vadd.f32 %v7565, 0.0
      %v7919 = vadd.f32 %v7696, 0.0
      %v7920 = vadd.f32 %v7697, 0.0
      %v7921 = vadd.f32 %v7698, 0.0
      %v7922 = vadd.f32 %v7567, 0.0
      %v7923 = vadd.f32 %v7699, 0.0
      %v7924 = vadd.f32 %v7700, 0.0
      %s7925 = scalar_lea.vmem %s3, 8
      %v7926 = vld [vmem:[%s7925] sm:$0xf]
      %v7927 = vld [vmem:[%s7925 + $0x4] sm:$0x3]
      %7928 = vst [vmem:[#allocation1] ss:$9 sm:$0xff] %v6729
      %s7929 = scalar_lea.vmem [#allocation1], 1
      %7930 = vst [vmem:[%s7929] ss:$9 sm:$0xff] %v6732
      %s7931 = scalar_lea.vmem [#allocation1], 2
      %7932 = vst [vmem:[%s7931] ss:$9 sm:$0xff] %v6735
      %s7933 = scalar_lea.vmem [#allocation1], 3
      %7934 = vst [vmem:[%s7933] ss:$9 sm:$0xff] %v6738
      %s7935 = scalar_lea.vmem [#allocation1], 4
      %7936 = vst [vmem:[%s7935] ss:$9 sm:$0xff] %v6741
      %s7937 = scalar_lea.vmem [#allocation1], 5
      %7938 = vst [vmem:[%s7937] ss:$9 sm:$0xff] %v6744
      %s7939 = scalar_lea.vmem [#allocation1], 6
      %7940 = vst [vmem:[%s7939] ss:$9 sm:$0xff] %v6747
      %s7941 = scalar_lea.vmem [#allocation1], 7
      %7942 = vst [vmem:[%s7941] ss:$9 sm:$0xff] %v6750
      %v7943 = vld [vmem:[#allocation1] sm:$0xff]
      %7944 = vst [vmem:[#allocation1] ss:$9 sm:$0xff] %v6753
      %7945 = vst [vmem:[%s7929] ss:$9 sm:$0xff] %v6756
      %7946 = vst [vmem:[%s7931] ss:$9 sm:$0xff] %v6759
      %7947 = vst [vmem:[%s7933] ss:$9 sm:$0xff] %v6762
      %7948 = vst [vmem:[%s7935] ss:$9 sm:$0xff] %v6765
      %7949 = vst [vmem:[%s7937] ss:$9 sm:$0xff] %v6768
      %7950 = vst [vmem:[%s7939] ss:$9 sm:$0xff] %v6771
      %7951 = vst [vmem:[%s7941] ss:$9 sm:$0xff] %v6774
      %v7952 = vld [vmem:[#allocation1] sm:$0xff]
      %7953 = vst [vmem:[#allocation1] ss:$9 sm:$0xff] %v6777
      %7954 = vst [vmem:[%s7929] ss:$9 sm:$0xff] %v6780
      %7955 = vst [vmem:[%s7931] ss:$9 sm:$0xff] %v6783
      %7956 = vst [vmem:[%s7933] ss:$9 sm:$0xff] %v6786
      %7957 = vst [vmem:[%s7935] ss:$9 sm:$0xff] %v6789
      %7958 = vst [vmem:[%s7937] ss:$9 sm:$0xff] %v6792
      %7959 = vst [vmem:[%s7939] ss:$9 sm:$0xff] %v6795
      %7960 = vst [vmem:[%s7941] ss:$9 sm:$0xff] %v6798
      %v7961 = vld [vmem:[#allocation1] sm:$0xff]
      %7962 = vst [vmem:[#allocation1] ss:$9 sm:$0xff] %v6801
      %7963 = vst [vmem:[%s7929] ss:$9 sm:$0xff] %v6804
      %7964 = vst [vmem:[%s7931] ss:$9 sm:$0xff] %v6807
      %7965 = vst [vmem:[%s7933] ss:$9 sm:$0xff] %v6810
      %7966 = vst [vmem:[%s7935] ss:$9 sm:$0xff] %v6813
      %7967 = vst [vmem:[%s7937] ss:$9 sm:$0xff] %v6816
      %7968 = vst [vmem:[%s7939] ss:$9 sm:$0xff] %v6819
      %7969 = vst [vmem:[%s7941] ss:$9 sm:$0xff] %v6822
      %v7970 = vld [vmem:[#allocation1] sm:$0xff]
      %7971 = vst [vmem:[#allocation1] ss:$9 sm:$0xff] %v6825
      %7972 = vst [vmem:[%s7929] ss:$9 sm:$0xff] %v6828
      %7973 = vst [vmem:[%s7931] ss:$9 sm:$0xff] %v6831
      %7974 = vst [vmem:[%s7933] ss:$9 sm:$0xff] %v6834
      %7975 = vst [vmem:[%s7935] ss:$9 sm:$0xff] %v6837
      %7976 = vst [vmem:[%s7937] ss:$9 sm:$0xff] %v6840
      %7977 = vst [vmem:[%s7939] ss:$9 sm:$0xff] %v6843
      %7978 = vst [vmem:[%s7941] ss:$9 sm:$0xff] %v6846
      %v7979 = vld [vmem:[#allocation1] sm:$0xff]
      %7980 = vst [vmem:[#allocation1] ss:$9 sm:$0xff] %v6849
      %7981 = vst [vmem:[%s7929] ss:$9 sm:$0xff] %v6852
      %7982 = vst [vmem:[%s7931] ss:$9 sm:$0xff] %v6855
      %7983 = vst [vmem:[%s7933] ss:$9 sm:$0xff] %v6858
      %7984 = vst [vmem:[%s7935] ss:$9 sm:$0xff] %v6861
      %7985 = vst [vmem:[%s7937] ss:$9 sm:$0xff] %v6864
      %7986 = vst [vmem:[%s7939] ss:$9 sm:$0xff] %v6867
      %7987 = vst [vmem:[%s7941] ss:$9 sm:$0xff] %v6870
      %v7988 = vld [vmem:[#allocation1] sm:$0xff]
      %7989 = vst [vmem:[#allocation1] ss:$9 sm:$0xff] %v6873
      %7990 = vst [vmem:[%s7929] ss:$9 sm:$0xff] %v6876
      %7991 = vst [vmem:[%s7931] ss:$9 sm:$0xff] %v6879
      %7992 = vst [vmem:[%s7933] ss:$9 sm:$0xff] %v6882
      %7993 = vst [vmem:[%s7935] ss:$9 sm:$0xff] %v6885
      %7994 = vst [vmem:[%s7937] ss:$9 sm:$0xff] %v6888
      %7995 = vst [vmem:[%s7939] ss:$9 sm:$0xff] %v6891
      %7996 = vst [vmem:[%s7941] ss:$9 sm:$0xff] %v6894
      %v7997 = vld [vmem:[#allocation1] sm:$0xff]
      %7998 = vst [vmem:[#allocation1] ss:$9 sm:$0xff] %v6897
      %7999 = vst [vmem:[%s7929] ss:$9 sm:$0xff] %v6900
      %8000 = vst [vmem:[%s7931] ss:$9 sm:$0xff] %v6903
      %8001 = vst [vmem:[%s7933] ss:$9 sm:$0xff] %v6906
      %8002 = vst [vmem:[%s7935] ss:$9 sm:$0xff] %v6909
      %8003 = vst [vmem:[%s7937] ss:$9 sm:$0xff] %v6912
      %8004 = vst [vmem:[%s7939] ss:$9 sm:$0xff] %v6915
      %8005 = vst [vmem:[%s7941] ss:$9 sm:$0xff] %v6918
      %v8006 = vld [vmem:[#allocation1] sm:$0xff]
      %8007 = vst [vmem:[#allocation1] ss:$9 sm:$0xff] %v6921
      %8008 = vst [vmem:[%s7929] ss:$9 sm:$0xff] %v6924
      %8009 = vst [vmem:[%s7931] ss:$9 sm:$0xff] %v6927
      %8010 = vst [vmem:[%s7933] ss:$9 sm:$0xff] %v6930
      %8011 = vst [vmem:[%s7935] ss:$9 sm:$0xff] %v6933
      %8012 = vst [vmem:[%s7937] ss:$9 sm:$0xff] %v6936
      %8013 = vst [vmem:[%s7939] ss:$9 sm:$0xff] %v6939
      %8014 = vst [vmem:[%s7941] ss:$9 sm:$0xff] %v6942
      %v8015 = vld [vmem:[#allocation1] sm:$0xff]
      %8016 = vst [vmem:[#allocation1] ss:$9 sm:$0xff] %v6945
      %8017 = vst [vmem:[%s7929] ss:$9 sm:$0xff] %v6948
      %8018 = vst [vmem:[%s7931] ss:$9 sm:$0xff] %v6951
      %8019 = vst [vmem:[%s7933] ss:$9 sm:$0xff] %v6954
      %8020 = vst [vmem:[%s7935] ss:$9 sm:$0xff] %v6957
      %8021 = vst [vmem:[%s7937] ss:$9 sm:$0xff] %v6960
      %8022 = vst [vmem:[%s7939] ss:$9 sm:$0xff] %v6963
      %8023 = vst [vmem:[%s7941] ss:$9 sm:$0xff] %v6966
      %v8024 = vld [vmem:[#allocation1] sm:$0xff]
      %8025 = vst [vmem:[#allocation1] ss:$9 sm:$0xff] %v6969
      %8026 = vst [vmem:[%s7929] ss:$9 sm:$0xff] %v6972
      %8027 = vst [vmem:[%s7931] ss:$9 sm:$0xff] %v6975
      %8028 = vst [vmem:[%s7933] ss:$9 sm:$0xff] %v6978
      %8029 = vst [vmem:[%s7935] ss:$9 sm:$0xff] %v6981
      %8030 = vst [vmem:[%s7937] ss:$9 sm:$0xff] %v6984
      %8031 = vst [vmem:[%s7939] ss:$9 sm:$0xff] %v6987
      %8032 = vst [vmem:[%s7941] ss:$9 sm:$0xff] %v6990
      %v8033 = vld [vmem:[#allocation1] sm:$0xff]
      %8034 = vst [vmem:[#allocation1] ss:$9 sm:$0xff] %v6993
      %8035 = vst [vmem:[%s7929] ss:$9 sm:$0xff] %v6996
      %8036 = vst [vmem:[%s7931] ss:$9 sm:$0xff] %v6999
      %8037 = vst [vmem:[%s7933] ss:$9 sm:$0xff] %v7002
      %8038 = vst [vmem:[%s7935] ss:$9 sm:$0xff] %v7005
      %8039 = vst [vmem:[%s7937] ss:$9 sm:$0xff] %v7008
      %8040 = vst [vmem:[%s7939] ss:$9 sm:$0xff] %v7011
      %8041 = vst [vmem:[%s7941] ss:$9 sm:$0xff] %v7014
      %v8042 = vld [vmem:[#allocation1] sm:$0xff]
      %8043 = vst [vmem:[#allocation1] ss:$9 sm:$0xff] %v7017
      %8044 = vst [vmem:[%s7929] ss:$9 sm:$0xff] %v7020
      %8045 = vst [vmem:[%s7931] ss:$9 sm:$0xff] %v7023
      %8046 = vst [vmem:[%s7933] ss:$9 sm:$0xff] %v7026
      %8047 = vst [vmem:[%s7935] ss:$9 sm:$0xff] %v7029
      %8048 = vst [vmem:[%s7937] ss:$9 sm:$0xff] %v7032
      %8049 = vst [vmem:[%s7939] ss:$9 sm:$0xff] %v7035
      %8050 = vst [vmem:[%s7941] ss:$9 sm:$0xff] %v7038
      %v8051 = vld [vmem:[#allocation1] sm:$0xff]
      %8052 = vst [vmem:[#allocation1] ss:$9 sm:$0xff] %v7041
      %8053 = vst [vmem:[%s7929] ss:$9 sm:$0xff] %v7044
      %8054 = vst [vmem:[%s7931] ss:$9 sm:$0xff] %v7047
      %8055 = vst [vmem:[%s7933] ss:$9 sm:$0xff] %v7050
      %8056 = vst [vmem:[%s7935] ss:$9 sm:$0xff] %v7053
      %8057 = vst [vmem:[%s7937] ss:$9 sm:$0xff] %v7056
      %8058 = vst [vmem:[%s7939] ss:$9 sm:$0xff] %v7059
      %8059 = vst [vmem:[%s7941] ss:$9 sm:$0xff] %v7062
      %v8060 = vld [vmem:[#allocation1] sm:$0xff]
      %8061 = vst [vmem:[#allocation1] ss:$9 sm:$0xff] %v7065
      %8062 = vst [vmem:[%s7929] ss:$9 sm:$0xff] %v7068
      %8063 = vst [vmem:[%s7931] ss:$9 sm:$0xff] %v7071
      %8064 = vst [vmem:[%s7933] ss:$9 sm:$0xff] %v7074
      %8065 = vst [vmem:[%s7935] ss:$9 sm:$0xff] %v7077
      %8066 = vst [vmem:[%s7937] ss:$9 sm:$0xff] %v7080
      %8067 = vst [vmem:[%s7939] ss:$9 sm:$0xff] %v7083
      %8068 = vst [vmem:[%s7941] ss:$9 sm:$0xff] %v7086
      %v8069 = vld [vmem:[#allocation1] sm:$0xff]
      %8070 = vst [vmem:[#allocation1] ss:$9 sm:$0xff] %v7089
      %8071 = vst [vmem:[%s7929] ss:$9 sm:$0xff] %v7092
      %8072 = vst [vmem:[%s7931] ss:$9 sm:$0xff] %v7095
      %8073 = vst [vmem:[%s7933] ss:$9 sm:$0xff] %v7098
      %8074 = vst [vmem:[%s7935] ss:$9 sm:$0xff] %v7101
      %8075 = vst [vmem:[%s7937] ss:$9 sm:$0xff] %v7104
      %8076 = vst [vmem:[%s7939] ss:$9 sm:$0xff] %v7107
      %8077 = vst [vmem:[%s7941] ss:$9 sm:$0xff] %v7110
      %v8078 = vld [vmem:[#allocation1] sm:$0xff]
      %8079 = vst [vmem:[#allocation1] ss:$9 sm:$0xff] %v7113
      %8080 = vst [vmem:[%s7929] ss:$9 sm:$0xff] %v7116
      %8081 = vst [vmem:[%s7931] ss:$9 sm:$0xff] %v7119
      %8082 = vst [vmem:[%s7933] ss:$9 sm:$0xff] %v7122
      %8083 = vst [vmem:[%s7935] ss:$9 sm:$0xff] %v7125
      %8084 = vst [vmem:[%s7937] ss:$9 sm:$0xff] %v7128
      %8085 = vst [vmem:[%s7939] ss:$9 sm:$0xff] %v7131
      %8086 = vst [vmem:[%s7941] ss:$9 sm:$0xff] %v7134
      %v8087 = vld [vmem:[#allocation1] sm:$0xff]
      %8088 = vst [vmem:[#allocation1] ss:$9 sm:$0xff] %v7137
      %8089 = vst [vmem:[%s7929] ss:$9 sm:$0xff] %v7140
      %8090 = vst [vmem:[%s7931] ss:$9 sm:$0xff] %v7143
      %8091 = vst [vmem:[%s7933] ss:$9 sm:$0xff] %v7146
      %8092 = vst [vmem:[%s7935] ss:$9 sm:$0xff] %v7149
      %8093 = vst [vmem:[%s7937] ss:$9 sm:$0xff] %v7152
      %8094 = vst [vmem:[%s7939] ss:$9 sm:$0xff] %v7155
      %8095 = vst [vmem:[%s7941] ss:$9 sm:$0xff] %v7158
      %v8096 = vld [vmem:[#allocation1] sm:$0xff]
      %v8099 = vunpack.c.l.b16 %v7926
      %v8100 = vunpack.c.l.b16 %v7927
      %v8101 = vpack.c.b16 %v8100, %v8099
      %v8102 = vsel %vm1848, %v7943, 0
      %v8104 = vsel %vm1848, %v7952, 0
      %v8106 = vsel %vm1848, %v7961, 0
      %v8108 = vsel %vm1848, %v7970, 0
      %v8110 = vsel %vm1848, %v7979, 0
      %v8112 = vsel %vm1848, %v7988, 0
      %v8114 = vsel %vm1848, %v7997, 0
      %v8116 = vsel %vm1848, %v8006, 0
      %v8118 = vsel %vm1848, %v8015, 0
      %v8120 = vsel %vm1848, %v8024, 0
      %v8122 = vsel %vm1848, %v8033, 0
      %v8124 = vsel %vm1848, %v8042, 0
      %v8126 = vsel %vm1848, %v8051, 0
      %v8128 = vsel %vm1848, %v8060, 0
      %v8130 = vsel %vm1848, %v8069, 0
      %v8132 = vsel %vm1848, %v8078, 0
      %v8134 = vsel %vm1848, %v8087, 0
      %v8136 = vsel %vm1848, %v8096, 0
      %v8139 = vsel %vm1885, %v8101, 0
      %8141 = vmatpush.bf16.msra.mxu0 0
      %8142 = vmatpush.bf16.msra.mxu0 0
      %8143 = vmatpush.bf16.msra.mxu0 0
      %8144 = vmatpush.bf16.msra.mxu0 0
      %8145 = vmatpush.bf16.msra.mxu0 0
      %8146 = vmatpush.bf16.msra.mxu0 0
      %8147 = vmatpush.bf16.msra.mxu0 0
      %8148 = vmatpush.bf16.msra.mxu0 %v8139
      %8149 = vmatmul.bf16.gmra.mxu0 %v8102
      %v8150 = vpop.f32.mrf.mxu0
      %v8151 = vadd.f32 0.0, %v8150
      %v8152 = vpop.f32.mrf.mxu0
      %v8153 = vadd.f32 0.0, %v8152
      %8154 = vmatmul.bf16.gmra.mxu0 %v8104
      %v8155 = vpop.f32.mrf.mxu0
      %v8156 = vadd.f32 0.0, %v8155
      %v8157 = vpop.f32.mrf.mxu0
      %v8158 = vadd.f32 0.0, %v8157
      %8159 = vmatmul.bf16.gmra.mxu0 %v8106
      %v8160 = vpop.f32.mrf.mxu0
      %v8161 = vadd.f32 0.0, %v8160
      %v8162 = vpop.f32.mrf.mxu0
      %v8163 = vadd.f32 0.0, %v8162
      %8164 = vmatmul.bf16.gmra.mxu0 %v8108
      %v8165 = vpop.f32.mrf.mxu0
      %v8166 = vadd.f32 0.0, %v8165
      %v8167 = vpop.f32.mrf.mxu0
      %v8168 = vadd.f32 0.0, %v8167
      %8169 = vmatmul.bf16.gmra.mxu0 %v8110
      %v8170 = vpop.f32.mrf.mxu0
      %v8171 = vadd.f32 0.0, %v8170
      %v8172 = vpop.f32.mrf.mxu0
      %v8173 = vadd.f32 0.0, %v8172
      %8174 = vmatmul.bf16.gmra.mxu0 %v8112
      %v8175 = vpop.f32.mrf.mxu0
      %v8176 = vadd.f32 0.0, %v8175
      %v8177 = vpop.f32.mrf.mxu0
      %v8178 = vadd.f32 0.0, %v8177
      %8179 = vmatmul.bf16.gmra.mxu0 %v8114
      %v8180 = vpop.f32.mrf.mxu0
      %v8181 = vadd.f32 0.0, %v8180
      %v8182 = vpop.f32.mrf.mxu0
      %v8183 = vadd.f32 0.0, %v8182
      %8184 = vmatmul.bf16.gmra.mxu0 %v8116
      %v8185 = vpop.f32.mrf.mxu0
      %v8186 = vadd.f32 0.0, %v8185
      %v8187 = vpop.f32.mrf.mxu0
      %v8188 = vadd.f32 0.0, %v8187
      %8189 = vmatmul.bf16.gmra.mxu0 %v8118
      %v8190 = vpop.f32.mrf.mxu0
      %v8191 = vadd.f32 0.0, %v8190
      %v8192 = vpop.f32.mrf.mxu0
      %v8193 = vadd.f32 0.0, %v8192
      %8194 = vmatmul.bf16.gmra.mxu0 %v8120
      %v8195 = vpop.f32.mrf.mxu0
      %v8196 = vadd.f32 0.0, %v8195
      %v8197 = vpop.f32.mrf.mxu0
      %v8198 = vadd.f32 0.0, %v8197
      %8199 = vmatmul.bf16.gmra.mxu0 %v8122
      %v8200 = vpop.f32.mrf.mxu0
      %v8201 = vadd.f32 0.0, %v8200
      %v8202 = vpop.f32.mrf.mxu0
      %v8203 = vadd.f32 0.0, %v8202
      %8204 = vmatmul.bf16.gmra.mxu0 %v8124
      %v8205 = vpop.f32.mrf.mxu0
      %v8206 = vadd.f32 0.0, %v8205
      %v8207 = vpop.f32.mrf.mxu0
      %v8208 = vadd.f32 0.0, %v8207
      %8209 = vmatmul.bf16.gmra.mxu0 %v8126
      %v8210 = vpop.f32.mrf.mxu0
      %v8211 = vadd.f32 0.0, %v8210
      %v8212 = vpop.f32.mrf.mxu0
      %v8213 = vadd.f32 0.0, %v8212
      %8214 = vmatmul.bf16.gmra.mxu0 %v8128
      %v8215 = vpop.f32.mrf.mxu0
      %v8216 = vadd.f32 0.0, %v8215
      %v8217 = vpop.f32.mrf.mxu0
      %v8218 = vadd.f32 0.0, %v8217
      %8219 = vmatmul.bf16.gmra.mxu0 %v8130
      %v8220 = vpop.f32.mrf.mxu0
      %v8221 = vadd.f32 0.0, %v8220
      %v8222 = vpop.f32.mrf.mxu0
      %v8223 = vadd.f32 0.0, %v8222
      %8224 = vmatmul.bf16.gmra.mxu0 %v8132
      %v8225 = vpop.f32.mrf.mxu0
      %v8226 = vadd.f32 0.0, %v8225
      %v8227 = vpop.f32.mrf.mxu0
      %v8228 = vadd.f32 0.0, %v8227
      %8229 = vmatmul.bf16.gmra.mxu0 %v8134
      %v8230 = vpop.f32.mrf.mxu0
      %v8231 = vadd.f32 0.0, %v8230
      %v8232 = vpop.f32.mrf.mxu0
      %v8233 = vadd.f32 0.0, %v8232
      %8234 = vmatmul.bf16.gmra.mxu0 %v8136
      %v8235 = vpop.f32.mrf.mxu0
      %v8236 = vadd.f32 0.0, %v8235
      %v8237 = vpop.f32.mrf.mxu0
      %v8238 = vadd.f32 0.0, %v8237
      %8239 = vdwg.mxu0
      %v8276 = vrot.slane %v8151, 2
      %v8277 = vrot.slane %v8151, 4
      %v8278 = vrot.slane %v8151, 6
      %v8279 = vrot.slane %v8153, 2
      %v8280 = vrot.slane %v8153, 4
      %v8281 = vrot.slane %v8153, 6
      %v8282 = vrot.slane %v8156, 2
      %v8283 = vrot.slane %v8156, 4
      %v8284 = vrot.slane %v8156, 6
      %v8285 = vrot.slane %v8158, 2
      %v8286 = vrot.slane %v8158, 4
      %v8287 = vrot.slane %v8158, 6
      %v8288 = vrot.slane %v8161, 2
      %v8289 = vrot.slane %v8161, 4
      %v8290 = vrot.slane %v8161, 6
      %v8291 = vrot.slane %v8163, 2
      %v8292 = vrot.slane %v8163, 4
      %v8293 = vrot.slane %v8163, 6
      %v8294 = vrot.slane %v8166, 2
      %v8295 = vrot.slane %v8166, 4
      %v8296 = vrot.slane %v8166, 6
      %v8297 = vrot.slane %v8168, 2
      %v8298 = vrot.slane %v8168, 4
      %v8299 = vrot.slane %v8168, 6
      %v8300 = vrot.slane %v8171, 2
      %v8301 = vrot.slane %v8171, 4
      %v8302 = vrot.slane %v8171, 6
      %v8303 = vrot.slane %v8173, 2
      %v8304 = vrot.slane %v8173, 4
      %v8305 = vrot.slane %v8173, 6
      %v8306 = vrot.slane %v8176, 2
      %v8307 = vrot.slane %v8176, 4
      %v8308 = vrot.slane %v8176, 6
      %v8309 = vrot.slane %v8178, 2
      %v8310 = vrot.slane %v8178, 4
      %v8311 = vrot.slane %v8178, 6
      %v8312 = vrot.slane %v8181, 2
      %v8313 = vrot.slane %v8181, 4
      %v8314 = vrot.slane %v8181, 6
      %v8315 = vrot.slane %v8183, 2
      %v8316 = vrot.slane %v8183, 4
      %v8317 = vrot.slane %v8183, 6
      %v8318 = vrot.slane %v8186, 2
      %v8319 = vrot.slane %v8186, 4
      %v8320 = vrot.slane %v8186, 6
      %v8321 = vrot.slane %v8188, 2
      %v8322 = vrot.slane %v8188, 4
      %v8323 = vrot.slane %v8188, 6
      %v8324 = vrot.slane %v8191, 2
      %v8325 = vrot.slane %v8191, 4
      %v8326 = vrot.slane %v8191, 6
      %v8327 = vrot.slane %v8193, 2
      %v8328 = vrot.slane %v8193, 4
      %v8329 = vrot.slane %v8193, 6
      %v8330 = vrot.slane %v8196, 2
      %v8331 = vrot.slane %v8196, 4
      %v8332 = vrot.slane %v8196, 6
      %v8333 = vrot.slane %v8198, 2
      %v8334 = vrot.slane %v8198, 4
      %v8335 = vrot.slane %v8198, 6
      %v8336 = vrot.slane %v8201, 2
      %v8337 = vrot.slane %v8201, 4
      %v8338 = vrot.slane %v8201, 6
      %v8339 = vrot.slane %v8203, 2
      %v8340 = vrot.slane %v8203, 4
      %v8341 = vrot.slane %v8203, 6
      %v8342 = vrot.slane %v8206, 2
      %v8343 = vrot.slane %v8206, 4
      %v8344 = vrot.slane %v8206, 6
      %v8345 = vrot.slane %v8208, 2
      %v8346 = vrot.slane %v8208, 4
      %v8347 = vrot.slane %v8208, 6
      %v8348 = vrot.slane %v8211, 2
      %v8349 = vrot.slane %v8211, 4
      %v8350 = vrot.slane %v8211, 6
      %v8351 = vrot.slane %v8213, 2
      %v8352 = vrot.slane %v8213, 4
      %v8353 = vrot.slane %v8213, 6
      %v8354 = vrot.slane %v8216, 2
      %v8355 = vrot.slane %v8216, 4
      %v8356 = vrot.slane %v8216, 6
      %v8357 = vrot.slane %v8218, 2
      %v8358 = vrot.slane %v8218, 4
      %v8359 = vrot.slane %v8218, 6
      %v8360 = vrot.slane %v8221, 2
      %v8361 = vrot.slane %v8221, 4
      %v8362 = vrot.slane %v8221, 6
      %v8363 = vrot.slane %v8223, 2
      %v8364 = vrot.slane %v8223, 4
      %v8365 = vrot.slane %v8223, 6
      %v8366 = vrot.slane %v8226, 2
      %v8367 = vrot.slane %v8226, 4
      %v8368 = vrot.slane %v8226, 6
      %v8369 = vrot.slane %v8228, 2
      %v8370 = vrot.slane %v8228, 4
      %v8371 = vrot.slane %v8228, 6
      %v8372 = vrot.slane %v8231, 2
      %v8373 = vrot.slane %v8231, 4
      %v8374 = vrot.slane %v8231, 6
      %v8375 = vrot.slane %v8233, 2
      %v8376 = vrot.slane %v8233, 4
      %v8377 = vrot.slane %v8233, 6
      %v8378 = vrot.slane %v8236, 2
      %v8379 = vrot.slane %v8236, 4
      %v8380 = vrot.slane %v8236, 6
      %v8381 = vrot.slane %v8238, 2
      %v8382 = vrot.slane %v8238, 4
      %v8383 = vrot.slane %v8238, 6
      %v8384 = vrot.slane %v8151, 7
      %v8385 = vrot.slane %v8384, 2
      %v8386 = vrot.slane %v8276, 7
      %v8387 = vsel %vm2807, %v8385, %v8386
      %v8388 = vrot.slane %v8386, 2
      %v8389 = vrot.slane %v8277, 7
      %v8390 = vsel %vm2807, %v8388, %v8389
      %v8391 = vrot.slane %v8389, 2
      %v8392 = vrot.slane %v8278, 7
      %v8393 = vsel %vm2807, %v8391, %v8392
      %v8394 = vrot.slane %v8392, 2
      %v8395 = vrot.slane %v8153, 7
      %v8396 = vsel %vm2807, %v8394, %v8395
      %v8397 = vrot.slane %v8395, 2
      %v8398 = vrot.slane %v8279, 7
      %v8399 = vsel %vm2807, %v8397, %v8398
      %v8400 = vrot.slane %v8398, 2
      %v8401 = vrot.slane %v8280, 7
      %v8402 = vsel %vm2807, %v8400, %v8401
      %v8403 = vrot.slane %v8401, 2
      %v8404 = vrot.slane %v8281, 7
      %v8405 = vsel %vm2807, %v8403, %v8404
      %v8406 = vrot.slane %v8404, 2
      %v8407 = vrot.slane %v8156, 7
      %v8408 = vsel %vm2807, %v8406, %v8407
      %v8409 = vrot.slane %v8282, 7
      %v8410 = vrot.slane %v8409, 2
      %v8411 = vrot.slane %v8283, 7
      %v8412 = vsel %vm2807, %v8410, %v8411
      %v8413 = vrot.slane %v8411, 2
      %v8414 = vrot.slane %v8284, 7
      %v8415 = vsel %vm2807, %v8413, %v8414
      %v8416 = vrot.slane %v8414, 2
      %v8417 = vrot.slane %v8158, 7
      %v8418 = vsel %vm2807, %v8416, %v8417
      %v8419 = vrot.slane %v8417, 2
      %v8420 = vrot.slane %v8285, 7
      %v8421 = vsel %vm2807, %v8419, %v8420
      %v8422 = vrot.slane %v8420, 2
      %v8423 = vrot.slane %v8286, 7
      %v8424 = vsel %vm2807, %v8422, %v8423
      %v8425 = vrot.slane %v8423, 2
      %v8426 = vrot.slane %v8287, 7
      %v8427 = vsel %vm2807, %v8425, %v8426
      %v8428 = vrot.slane %v8426, 2
      %v8429 = vrot.slane %v8161, 7
      %v8430 = vsel %vm2807, %v8428, %v8429
      %v8431 = vrot.slane %v8429, 2
      %v8432 = vrot.slane %v8288, 7
      %v8433 = vsel %vm2807, %v8431, %v8432
      %v8434 = vrot.slane %v8289, 7
      %v8435 = vrot.slane %v8434, 2
      %v8436 = vrot.slane %v8290, 7
      %v8437 = vsel %vm2807, %v8435, %v8436
      %v8438 = vrot.slane %v8436, 2
      %v8439 = vrot.slane %v8163, 7
      %v8440 = vsel %vm2807, %v8438, %v8439
      %v8441 = vrot.slane %v8439, 2
      %v8442 = vrot.slane %v8291, 7
      %v8443 = vsel %vm2807, %v8441, %v8442
      %v8444 = vrot.slane %v8442, 2
      %v8445 = vrot.slane %v8292, 7
      %v8446 = vsel %vm2807, %v8444, %v8445
      %v8447 = vrot.slane %v8445, 2
      %v8448 = vrot.slane %v8293, 7
      %v8449 = vsel %vm2807, %v8447, %v8448
      %v8450 = vrot.slane %v8448, 2
      %v8451 = vrot.slane %v8166, 7
      %v8452 = vsel %vm2807, %v8450, %v8451
      %v8453 = vrot.slane %v8451, 2
      %v8454 = vrot.slane %v8294, 7
      %v8455 = vsel %vm2807, %v8453, %v8454
      %v8456 = vrot.slane %v8454, 2
      %v8457 = vrot.slane %v8295, 7
      %v8458 = vsel %vm2807, %v8456, %v8457
      %v8459 = vrot.slane %v8296, 7
      %v8460 = vrot.slane %v8459, 2
      %v8461 = vrot.slane %v8168, 7
      %v8462 = vsel %vm2807, %v8460, %v8461
      %v8463 = vrot.slane %v8461, 2
      %v8464 = vrot.slane %v8297, 7
      %v8465 = vsel %vm2807, %v8463, %v8464
      %v8466 = vrot.slane %v8464, 2
      %v8467 = vrot.slane %v8298, 7
      %v8468 = vsel %vm2807, %v8466, %v8467
      %v8469 = vrot.slane %v8467, 2
      %v8470 = vrot.slane %v8299, 7
      %v8471 = vsel %vm2807, %v8469, %v8470
      %v8472 = vrot.slane %v8470, 2
      %v8473 = vrot.slane %v8171, 7
      %v8474 = vsel %vm2807, %v8472, %v8473
      %v8475 = vrot.slane %v8473, 2
      %v8476 = vrot.slane %v8300, 7
      %v8477 = vsel %vm2807, %v8475, %v8476
      %v8478 = vrot.slane %v8476, 2
      %v8479 = vrot.slane %v8301, 7
      %v8480 = vsel %vm2807, %v8478, %v8479
      %v8481 = vrot.slane %v8479, 2
      %v8482 = vrot.slane %v8302, 7
      %v8483 = vsel %vm2807, %v8481, %v8482
      %v8484 = vrot.slane %v8173, 7
      %v8485 = vrot.slane %v8484, 2
      %v8486 = vrot.slane %v8303, 7
      %v8487 = vsel %vm2807, %v8485, %v8486
      %v8488 = vrot.slane %v8486, 2
      %v8489 = vrot.slane %v8304, 7
      %v8490 = vsel %vm2807, %v8488, %v8489
      %v8491 = vrot.slane %v8489, 2
      %v8492 = vrot.slane %v8305, 7
      %v8493 = vsel %vm2807, %v8491, %v8492
      %v8494 = vrot.slane %v8492, 2
      %v8495 = vrot.slane %v8176, 7
      %v8496 = vsel %vm2807, %v8494, %v8495
      %v8497 = vrot.slane %v8495, 2
      %v8498 = vrot.slane %v8306, 7
      %v8499 = vsel %vm2807, %v8497, %v8498
      %v8500 = vrot.slane %v8498, 2
      %v8501 = vrot.slane %v8307, 7
      %v8502 = vsel %vm2807, %v8500, %v8501
      %v8503 = vrot.slane %v8501, 2
      %v8504 = vrot.slane %v8308, 7
      %v8505 = vsel %vm2807, %v8503, %v8504
      %v8506 = vrot.slane %v8504, 2
      %v8507 = vrot.slane %v8178, 7
      %v8508 = vsel %vm2807, %v8506, %v8507
      %v8509 = vrot.slane %v8309, 7
      %v8510 = vrot.slane %v8509, 2
      %v8511 = vrot.slane %v8310, 7
      %v8512 = vsel %vm2807, %v8510, %v8511
      %v8513 = vrot.slane %v8511, 2
      %v8514 = vrot.slane %v8311, 7
      %v8515 = vsel %vm2807, %v8513, %v8514
      %v8516 = vrot.slane %v8514, 2
      %v8517 = vrot.slane %v8181, 7
      %v8518 = vsel %vm2807, %v8516, %v8517
      %v8519 = vrot.slane %v8517, 2
      %v8520 = vrot.slane %v8312, 7
      %v8521 = vsel %vm2807, %v8519, %v8520
      %v8522 = vrot.slane %v8520, 2
      %v8523 = vrot.slane %v8313, 7
      %v8524 = vsel %vm2807, %v8522, %v8523
      %v8525 = vrot.slane %v8523, 2
      %v8526 = vrot.slane %v8314, 7
      %v8527 = vsel %vm2807, %v8525, %v8526
      %v8528 = vrot.slane %v8526, 2
      %v8529 = vrot.slane %v8183, 7
      %v8530 = vsel %vm2807, %v8528, %v8529
      %v8531 = vrot.slane %v8529, 2
      %v8532 = vrot.slane %v8315, 7
      %v8533 = vsel %vm2807, %v8531, %v8532
      %v8534 = vrot.slane %v8316, 7
      %v8535 = vrot.slane %v8534, 2
      %v8536 = vrot.slane %v8317, 7
      %v8537 = vsel %vm2807, %v8535, %v8536
      %v8538 = vrot.slane %v8536, 2
      %v8539 = vrot.slane %v8186, 7
      %v8540 = vsel %vm2807, %v8538, %v8539
      %v8541 = vrot.slane %v8539, 2
      %v8542 = vrot.slane %v8318, 7
      %v8543 = vsel %vm2807, %v8541, %v8542
      %v8544 = vrot.slane %v8542, 2
      %v8545 = vrot.slane %v8319, 7
      %v8546 = vsel %vm2807, %v8544, %v8545
      %v8547 = vrot.slane %v8545, 2
      %v8548 = vrot.slane %v8320, 7
      %v8549 = vsel %vm2807, %v8547, %v8548
      %v8550 = vrot.slane %v8548, 2
      %v8551 = vrot.slane %v8188, 7
      %v8552 = vsel %vm2807, %v8550, %v8551
      %v8553 = vrot.slane %v8551, 2
      %v8554 = vrot.slane %v8321, 7
      %v8555 = vsel %vm2807, %v8553, %v8554
      %v8556 = vrot.slane %v8554, 2
      %v8557 = vrot.slane %v8322, 7
      %v8558 = vsel %vm2807, %v8556, %v8557
      %v8559 = vrot.slane %v8323, 7
      %v8560 = vrot.slane %v8559, 2
      %v8561 = vrot.slane %v8191, 7
      %v8562 = vsel %vm2807, %v8560, %v8561
      %v8563 = vrot.slane %v8561, 2
      %v8564 = vrot.slane %v8324, 7
      %v8565 = vsel %vm2807, %v8563, %v8564
      %v8566 = vrot.slane %v8564, 2
      %v8567 = vrot.slane %v8325, 7
      %v8568 = vsel %vm2807, %v8566, %v8567
      %v8569 = vrot.slane %v8567, 2
      %v8570 = vrot.slane %v8326, 7
      %v8571 = vsel %vm2807, %v8569, %v8570
      %v8572 = vrot.slane %v8570, 2
      %v8573 = vrot.slane %v8193, 7
      %v8574 = vsel %vm2807, %v8572, %v8573
      %v8575 = vrot.slane %v8573, 2
      %v8576 = vrot.slane %v8327, 7
      %v8577 = vsel %vm2807, %v8575, %v8576
      %v8578 = vrot.slane %v8576, 2
      %v8579 = vrot.slane %v8328, 7
      %v8580 = vsel %vm2807, %v8578, %v8579
      %v8581 = vrot.slane %v8579, 2
      %v8582 = vrot.slane %v8329, 7
      %v8583 = vsel %vm2807, %v8581, %v8582
      %v8584 = vrot.slane %v8196, 7
      %v8585 = vrot.slane %v8584, 2
      %v8586 = vrot.slane %v8330, 7
      %v8587 = vsel %vm2807, %v8585, %v8586
      %v8588 = vrot.slane %v8586, 2
      %v8589 = vrot.slane %v8331, 7
      %v8590 = vsel %vm2807, %v8588, %v8589
      %v8591 = vrot.slane %v8589, 2
      %v8592 = vrot.slane %v8332, 7
      %v8593 = vsel %vm2807, %v8591, %v8592
      %v8594 = vrot.slane %v8592, 2
      %v8595 = vrot.slane %v8198, 7
      %v8596 = vsel %vm2807, %v8594, %v8595
      %v8597 = vrot.slane %v8595, 2
      %v8598 = vrot.slane %v8333, 7
      %v8599 = vsel %vm2807, %v8597, %v8598
      %v8600 = vrot.slane %v8598, 2
      %v8601 = vrot.slane %v8334, 7
      %v8602 = vsel %vm2807, %v8600, %v8601
      %v8603 = vrot.slane %v8601, 2
      %v8604 = vrot.slane %v8335, 7
      %v8605 = vsel %vm2807, %v8603, %v8604
      %v8606 = vrot.slane %v8604, 2
      %v8607 = vrot.slane %v8201, 7
      %v8608 = vsel %vm2807, %v8606, %v8607
      %v8609 = vrot.slane %v8336, 7
      %v8610 = vrot.slane %v8609, 2
      %v8611 = vrot.slane %v8337, 7
      %v8612 = vsel %vm2807, %v8610, %v8611
      %v8613 = vrot.slane %v8611, 2
      %v8614 = vrot.slane %v8338, 7
      %v8615 = vsel %vm2807, %v8613, %v8614
      %v8616 = vrot.slane %v8614, 2
      %v8617 = vrot.slane %v8203, 7
      %v8618 = vsel %vm2807, %v8616, %v8617
      %v8619 = vrot.slane %v8617, 2
      %v8620 = vrot.slane %v8339, 7
      %v8621 = vsel %vm2807, %v8619, %v8620
      %v8622 = vrot.slane %v8620, 2
      %v8623 = vrot.slane %v8340, 7
      %v8624 = vsel %vm2807, %v8622, %v8623
      %v8625 = vrot.slane %v8623, 2
      %v8626 = vrot.slane %v8341, 7
      %v8627 = vsel %vm2807, %v8625, %v8626
      %v8628 = vrot.slane %v8626, 2
      %v8629 = vrot.slane %v8206, 7
      %v8630 = vsel %vm2807, %v8628, %v8629
      %v8631 = vrot.slane %v8629, 2
      %v8632 = vrot.slane %v8342, 7
      %v8633 = vsel %vm2807, %v8631, %v8632
      %v8634 = vrot.slane %v8343, 7
      %v8635 = vrot.slane %v8634, 2
      %v8636 = vrot.slane %v8344, 7
      %v8637 = vsel %vm2807, %v8635, %v8636
      %v8638 = vrot.slane %v8636, 2
      %v8639 = vrot.slane %v8208, 7
      %v8640 = vsel %vm2807, %v8638, %v8639
      %v8641 = vrot.slane %v8639, 2
      %v8642 = vrot.slane %v8345, 7
      %v8643 = vsel %vm2807, %v8641, %v8642
      %v8644 = vrot.slane %v8642, 2
      %v8645 = vrot.slane %v8346, 7
      %v8646 = vsel %vm2807, %v8644, %v8645
      %v8647 = vrot.slane %v8645, 2
      %v8648 = vrot.slane %v8347, 7
      %v8649 = vsel %vm2807, %v8647, %v8648
      %v8650 = vrot.slane %v8648, 2
      %v8651 = vrot.slane %v8211, 7
      %v8652 = vsel %vm2807, %v8650, %v8651
      %v8653 = vrot.slane %v8651, 2
      %v8654 = vrot.slane %v8348, 7
      %v8655 = vsel %vm2807, %v8653, %v8654
      %v8656 = vrot.slane %v8654, 2
      %v8657 = vrot.slane %v8349, 7
      %v8658 = vsel %vm2807, %v8656, %v8657
      %v8659 = vrot.slane %v8350, 7
      %v8660 = vrot.slane %v8659, 2
      %v8661 = vrot.slane %v8213, 7
      %v8662 = vsel %vm2807, %v8660, %v8661
      %v8663 = vrot.slane %v8661, 2
      %v8664 = vrot.slane %v8351, 7
      %v8665 = vsel %vm2807, %v8663, %v8664
      %v8666 = vrot.slane %v8664, 2
      %v8667 = vrot.slane %v8352, 7
      %v8668 = vsel %vm2807, %v8666, %v8667
      %v8669 = vrot.slane %v8667, 2
      %v8670 = vrot.slane %v8353, 7
      %v8671 = vsel %vm2807, %v8669, %v8670
      %v8672 = vrot.slane %v8670, 2
      %v8673 = vrot.slane %v8216, 7
      %v8674 = vsel %vm2807, %v8672, %v8673
      %v8675 = vrot.slane %v8673, 2
      %v8676 = vrot.slane %v8354, 7
      %v8677 = vsel %vm2807, %v8675, %v8676
      %v8678 = vrot.slane %v8676, 2
      %v8679 = vrot.slane %v8355, 7
      %v8680 = vsel %vm2807, %v8678, %v8679
      %v8681 = vrot.slane %v8679, 2
      %v8682 = vrot.slane %v8356, 7
      %v8683 = vsel %vm2807, %v8681, %v8682
      %v8684 = vrot.slane %v8218, 7
      %v8685 = vrot.slane %v8684, 2
      %v8686 = vrot.slane %v8357, 7
      %v8687 = vsel %vm2807, %v8685, %v8686
      %v8688 = vrot.slane %v8686, 2
      %v8689 = vrot.slane %v8358, 7
      %v8690 = vsel %vm2807, %v8688, %v8689
      %v8691 = vrot.slane %v8689, 2
      %v8692 = vrot.slane %v8359, 7
      %v8693 = vsel %vm2807, %v8691, %v8692
      %v8694 = vrot.slane %v8692, 2
      %v8695 = vrot.slane %v8221, 7
      %v8696 = vsel %vm2807, %v8694, %v8695
      %v8697 = vrot.slane %v8695, 2
      %v8698 = vrot.slane %v8360, 7
      %v8699 = vsel %vm2807, %v8697, %v8698
      %v8700 = vrot.slane %v8698, 2
      %v8701 = vrot.slane %v8361, 7
      %v8702 = vsel %vm2807, %v8700, %v8701
      %v8703 = vrot.slane %v8701, 2
      %v8704 = vrot.slane %v8362, 7
      %v8705 = vsel %vm2807, %v8703, %v8704
      %v8706 = vrot.slane %v8704, 2
      %v8707 = vrot.slane %v8223, 7
      %v8708 = vsel %vm2807, %v8706, %v8707
      %v8709 = vrot.slane %v8363, 7
      %v8710 = vrot.slane %v8709, 2
      %v8711 = vrot.slane %v8364, 7
      %v8712 = vsel %vm2807, %v8710, %v8711
      %v8713 = vrot.slane %v8711, 2
      %v8714 = vrot.slane %v8365, 7
      %v8715 = vsel %vm2807, %v8713, %v8714
      %v8716 = vrot.slane %v8714, 2
      %v8717 = vrot.slane %v8226, 7
      %v8718 = vsel %vm2807, %v8716, %v8717
      %v8719 = vrot.slane %v8717, 2
      %v8720 = vrot.slane %v8366, 7
      %v8721 = vsel %vm2807, %v8719, %v8720
      %v8722 = vrot.slane %v8720, 2
      %v8723 = vrot.slane %v8367, 7
      %v8724 = vsel %vm2807, %v8722, %v8723
      %v8725 = vrot.slane %v8723, 2
      %v8726 = vrot.slane %v8368, 7
      %v8727 = vsel %vm2807, %v8725, %v8726
      %v8728 = vrot.slane %v8726, 2
      %v8729 = vrot.slane %v8228, 7
      %v8730 = vsel %vm2807, %v8728, %v8729
      %v8731 = vrot.slane %v8729, 2
      %v8732 = vrot.slane %v8369, 7
      %v8733 = vsel %vm2807, %v8731, %v8732
      %v8734 = vrot.slane %v8370, 7
      %v8735 = vrot.slane %v8734, 2
      %v8736 = vrot.slane %v8371, 7
      %v8737 = vsel %vm2807, %v8735, %v8736
      %v8738 = vrot.slane %v8736, 2
      %v8739 = vrot.slane %v8231, 7
      %v8740 = vsel %vm2807, %v8738, %v8739
      %v8741 = vrot.slane %v8739, 2
      %v8742 = vrot.slane %v8372, 7
      %v8743 = vsel %vm2807, %v8741, %v8742
      %v8744 = vrot.slane %v8742, 2
      %v8745 = vrot.slane %v8373, 7
      %v8746 = vsel %vm2807, %v8744, %v8745
      %v8747 = vrot.slane %v8745, 2
      %v8748 = vrot.slane %v8374, 7
      %v8749 = vsel %vm2807, %v8747, %v8748
      %v8750 = vrot.slane %v8748, 2
      %v8751 = vrot.slane %v8233, 7
      %v8752 = vsel %vm2807, %v8750, %v8751
      %v8753 = vrot.slane %v8751, 2
      %v8754 = vrot.slane %v8375, 7
      %v8755 = vsel %vm2807, %v8753, %v8754
      %v8756 = vrot.slane %v8754, 2
      %v8757 = vrot.slane %v8376, 7
      %v8758 = vsel %vm2807, %v8756, %v8757
      %v8759 = vrot.slane %v8377, 7
      %v8760 = vrot.slane %v8759, 2
      %v8761 = vrot.slane %v8236, 7
      %v8762 = vsel %vm2807, %v8760, %v8761
      %v8763 = vrot.slane %v8761, 2
      %v8764 = vrot.slane %v8378, 7
      %v8765 = vsel %vm2807, %v8763, %v8764
      %v8766 = vrot.slane %v8764, 2
      %v8767 = vrot.slane %v8379, 7
      %v8768 = vsel %vm2807, %v8766, %v8767
      %v8769 = vrot.slane %v8767, 2
      %v8770 = vrot.slane %v8380, 7
      %v8771 = vsel %vm2807, %v8769, %v8770
      %v8772 = vrot.slane %v8770, 2
      %v8773 = vrot.slane %v8238, 7
      %v8774 = vsel %vm2807, %v8772, %v8773
      %v8775 = vrot.slane %v8773, 2
      %v8776 = vrot.slane %v8381, 7
      %v8777 = vsel %vm2807, %v8775, %v8776
      %v8778 = vrot.slane %v8776, 2
      %v8779 = vrot.slane %v8382, 7
      %v8780 = vsel %vm2807, %v8778, %v8779
      %v8781 = vrot.slane %v8779, 2
      %v8782 = vrot.slane %v8383, 7
      %v8783 = vsel %vm2807, %v8781, %v8782
      %v8912 = vadd.f32 %v7797, %v8387
      %v8913 = vadd.f32 %v7798, %v8390
      %v8914 = vadd.f32 %v7799, %v8393
      %v8915 = vadd.f32 %v7800, %v8396
      %v8916 = vadd.f32 %v7801, %v8399
      %v8917 = vadd.f32 %v7802, %v8402
      %v8918 = vadd.f32 %v7803, %v8405
      %v8919 = vadd.f32 %v7804, %v8408
      %v8920 = vadd.f32 %v7805, %v8412
      %v8921 = vadd.f32 %v7806, %v8415
      %v8922 = vadd.f32 %v7807, %v8418
      %v8923 = vadd.f32 %v7808, %v8421
      %v8924 = vadd.f32 %v7809, %v8424
      %v8925 = vadd.f32 %v7810, %v8427
      %v8926 = vadd.f32 %v7811, %v8430
      %v8927 = vadd.f32 %v7812, %v8433
      %v8928 = vadd.f32 %v7813, %v8437
      %v8929 = vadd.f32 %v7814, %v8440
      %v8930 = vadd.f32 %v7815, %v8443
      %v8931 = vadd.f32 %v7816, %v8446
      %v8932 = vadd.f32 %v7817, %v8449
      %v8933 = vadd.f32 %v7818, %v8452
      %v8934 = vadd.f32 %v7819, %v8455
      %v8935 = vadd.f32 %v7820, %v8458
      %v8936 = vadd.f32 %v7821, %v8462
      %v8937 = vadd.f32 %v7822, %v8465
      %v8938 = vadd.f32 %v7823, %v8468
      %v8939 = vadd.f32 %v7824, %v8471
      %v8940 = vadd.f32 %v7825, %v8474
      %v8941 = vadd.f32 %v7826, %v8477
      %v8942 = vadd.f32 %v7827, %v8480
      %v8943 = vadd.f32 %v7828, %v8483
      %v8944 = vadd.f32 %v7829, %v8487
      %v8945 = vadd.f32 %v7830, %v8490
      %v8946 = vadd.f32 %v7831, %v8493
      %v8947 = vadd.f32 %v7832, %v8496
      %v8948 = vadd.f32 %v7833, %v8499
      %v8949 = vadd.f32 %v7834, %v8502
      %v8950 = vadd.f32 %v7835, %v8505
      %v8951 = vadd.f32 %v7836, %v8508
      %v8952 = vadd.f32 %v7837, %v8512
      %v8953 = vadd.f32 %v7838, %v8515
      %v8954 = vadd.f32 %v7839, %v8518
      %v8955 = vadd.f32 %v7840, %v8521
      %v8956 = vadd.f32 %v7841, %v8524
      %v8957 = vadd.f32 %v7842, %v8527
      %v8958 = vadd.f32 %v7843, %v8530
      %v8959 = vadd.f32 %v7844, %v8533
      %v8960 = vadd.f32 %v7845, %v8537
      %v8961 = vadd.f32 %v7846, %v8540
      %v8962 = vadd.f32 %v7847, %v8543
      %v8963 = vadd.f32 %v7848, %v8546
      %v8964 = vadd.f32 %v7849, %v8549
      %v8965 = vadd.f32 %v7850, %v8552
      %v8966 = vadd.f32 %v7851, %v8555
      %v8967 = vadd.f32 %v7852, %v8558
      %v8968 = vadd.f32 %v7853, %v8562
      %v8969 = vadd.f32 %v7854, %v8565
      %v8970 = vadd.f32 %v7855, %v8568
      %v8971 = vadd.f32 %v7856, %v8571
      %v8972 = vadd.f32 %v7857, %v8574
      %v8973 = vadd.f32 %v7858, %v8577
      %v8974 = vadd.f32 %v7859, %v8580
      %v8975 = vadd.f32 %v7860, %v8583
      %v8976 = vadd.f32 %v7861, %v8587
      %v8977 = vadd.f32 %v7862, %v8590
      %v8978 = vadd.f32 %v7863, %v8593
      %v8979 = vadd.f32 %v7864, %v8596
      %v8980 = vadd.f32 %v7865, %v8599
      %v8981 = vadd.f32 %v7866, %v8602
      %v8982 = vadd.f32 %v7867, %v8605
      %v8983 = vadd.f32 %v7868, %v8608
      %v8984 = vadd.f32 %v7869, %v8612
      %v8985 = vadd.f32 %v7870, %v8615
      %v8986 = vadd.f32 %v7871, %v8618
      %v8987 = vadd.f32 %v7872, %v8621
      %v8988 = vadd.f32 %v7873, %v8624
      %v8989 = vadd.f32 %v7874, %v8627
      %v8990 = vadd.f32 %v7875, %v8630
      %v8991 = vadd.f32 %v7876, %v8633
      %v8992 = vadd.f32 %v7877, %v8637
      %v8993 = vadd.f32 %v7878, %v8640
      %v8994 = vadd.f32 %v7879, %v8643
      %v8995 = vadd.f32 %v7880, %v8646
      %v8996 = vadd.f32 %v7881, %v8649
      %v8997 = vadd.f32 %v7882, %v8652
      %v8998 = vadd.f32 %v7883, %v8655
      %v8999 = vadd.f32 %v7884, %v8658
      %v9000 = vadd.f32 %v7885, %v8662
      %v9001 = vadd.f32 %v7886, %v8665
      %v9002 = vadd.f32 %v7887, %v8668
      %v9003 = vadd.f32 %v7888, %v8671
      %v9004 = vadd.f32 %v7889, %v8674
      %v9005 = vadd.f32 %v7890, %v8677
      %v9006 = vadd.f32 %v7891, %v8680
      %v9007 = vadd.f32 %v7892, %v8683
      %v9008 = vadd.f32 %v7893, %v8687
      %v9009 = vadd.f32 %v7894, %v8690
      %v9010 = vadd.f32 %v7895, %v8693
      %v9011 = vadd.f32 %v7896, %v8696
      %v9012 = vadd.f32 %v7897, %v8699
      %v9013 = vadd.f32 %v7898, %v8702
      %v9014 = vadd.f32 %v7899, %v8705
      %v9015 = vadd.f32 %v7900, %v8708
      %v9016 = vadd.f32 %v7901, %v8712
      %v9017 = vadd.f32 %v7902, %v8715
      %v9018 = vadd.f32 %v7903, %v8718
      %v9019 = vadd.f32 %v7904, %v8721
      %v9020 = vadd.f32 %v7905, %v8724
      %v9021 = vadd.f32 %v7906, %v8727
      %v9022 = vadd.f32 %v7907, %v8730
      %v9023 = vadd.f32 %v7908, %v8733
      %v9024 = vadd.f32 %v7909, %v8737
      %v9025 = vadd.f32 %v7910, %v8740
      %v9026 = vadd.f32 %v7911, %v8743
      %v9027 = vadd.f32 %v7912, %v8746
      %v9028 = vadd.f32 %v7913, %v8749
      %v9029 = vadd.f32 %v7914, %v8752
      %v9030 = vadd.f32 %v7915, %v8755
      %v9031 = vadd.f32 %v7916, %v8758
      %v9032 = vadd.f32 %v7917, %v8762
      %v9033 = vadd.f32 %v7918, %v8765
      %v9034 = vadd.f32 %v7919, %v8768
      %v9035 = vadd.f32 %v7920, %v8771
      %v9036 = vadd.f32 %v7921, %v8774
      %v9037 = vadd.f32 %v7922, %v8777
      %v9038 = vadd.f32 %v7923, %v8780
      %v9039 = vadd.f32 %v7924, %v8783
      %s9040 = scalar_lea.vmem %s3, 16
      %v9041 = vld [vmem:[%s9040] sm:$0xf]
      %v9042 = vld [vmem:[%s9040 + $0x4] sm:$0x3]
      %9043 = vst [vmem:[#allocation1] ss:$9 sm:$0xff] %v6729
      %s9044 = scalar_lea.vmem [#allocation1], 1
      %9045 = vst [vmem:[%s9044] ss:$9 sm:$0xff] %v6732
      %s9046 = scalar_lea.vmem [#allocation1], 2
      %9047 = vst [vmem:[%s9046] ss:$9 sm:$0xff] %v6735
      %s9048 = scalar_lea.vmem [#allocation1], 3
      %9049 = vst [vmem:[%s9048] ss:$9 sm:$0xff] %v6738
      %s9050 = scalar_lea.vmem [#allocation1], 4
      %9051 = vst [vmem:[%s9050] ss:$9 sm:$0xff] %v6741
      %s9052 = scalar_lea.vmem [#allocation1], 5
      %9053 = vst [vmem:[%s9052] ss:$9 sm:$0xff] %v6744
      %s9054 = scalar_lea.vmem [#allocation1], 6
      %9055 = vst [vmem:[%s9054] ss:$9 sm:$0xff] %v6747
      %s9056 = scalar_lea.vmem [#allocation1], 7
      %9057 = vst [vmem:[%s9056] ss:$9 sm:$0xff] %v6750
      %v9058 = vld [vmem:[#allocation1] sm:$0xff]
      %9059 = vst [vmem:[#allocation1] ss:$9 sm:$0xff] %v6753
      %9060 = vst [vmem:[%s9044] ss:$9 sm:$0xff] %v6756
      %9061 = vst [vmem:[%s9046] ss:$9 sm:$0xff] %v6759
      %9062 = vst [vmem:[%s9048] ss:$9 sm:$0xff] %v6762
      %9063 = vst [vmem:[%s9050] ss:$9 sm:$0xff] %v6765
      %9064 = vst [vmem:[%s9052] ss:$9 sm:$0xff] %v6768
      %9065 = vst [vmem:[%s9054] ss:$9 sm:$0xff] %v6771
      %9066 = vst [vmem:[%s9056] ss:$9 sm:$0xff] %v6774
      %v9067 = vld [vmem:[#allocation1] sm:$0xff]
      %9068 = vst [vmem:[#allocation1] ss:$9 sm:$0xff] %v6777
      %9069 = vst [vmem:[%s9044] ss:$9 sm:$0xff] %v6780
      %9070 = vst [vmem:[%s9046] ss:$9 sm:$0xff] %v6783
      %9071 = vst [vmem:[%s9048] ss:$9 sm:$0xff] %v6786
      %9072 = vst [vmem:[%s9050] ss:$9 sm:$0xff] %v6789
      %9073 = vst [vmem:[%s9052] ss:$9 sm:$0xff] %v6792
      %9074 = vst [vmem:[%s9054] ss:$9 sm:$0xff] %v6795
      %9075 = vst [vmem:[%s9056] ss:$9 sm:$0xff] %v6798
      %v9076 = vld [vmem:[#allocation1] sm:$0xff]
      %9077 = vst [vmem:[#allocation1] ss:$9 sm:$0xff] %v6801
      %9078 = vst [vmem:[%s9044] ss:$9 sm:$0xff] %v6804
      %9079 = vst [vmem:[%s9046] ss:$9 sm:$0xff] %v6807
      %9080 = vst [vmem:[%s9048] ss:$9 sm:$0xff] %v6810
      %9081 = vst [vmem:[%s9050] ss:$9 sm:$0xff] %v6813
      %9082 = vst [vmem:[%s9052] ss:$9 sm:$0xff] %v6816
      %9083 = vst [vmem:[%s9054] ss:$9 sm:$0xff] %v6819
      %9084 = vst [vmem:[%s9056] ss:$9 sm:$0xff] %v6822
      %v9085 = vld [vmem:[#allocation1] sm:$0xff]
      %9086 = vst [vmem:[#allocation1] ss:$9 sm:$0xff] %v6825
      %9087 = vst [vmem:[%s9044] ss:$9 sm:$0xff] %v6828
      %9088 = vst [vmem:[%s9046] ss:$9 sm:$0xff] %v6831
      %9089 = vst [vmem:[%s9048] ss:$9 sm:$0xff] %v6834
      %9090 = vst [vmem:[%s9050] ss:$9 sm:$0xff] %v6837
      %9091 = vst [vmem:[%s9052] ss:$9 sm:$0xff] %v6840
      %9092 = vst [vmem:[%s9054] ss:$9 sm:$0xff] %v6843
      %9093 = vst [vmem:[%s9056] ss:$9 sm:$0xff] %v6846
      %v9094 = vld [vmem:[#allocation1] sm:$0xff]
      %9095 = vst [vmem:[#allocation1] ss:$9 sm:$0xff] %v6849
      %9096 = vst [vmem:[%s9044] ss:$9 sm:$0xff] %v6852
      %9097 = vst [vmem:[%s9046] ss:$9 sm:$0xff] %v6855
      %9098 = vst [vmem:[%s9048] ss:$9 sm:$0xff] %v6858
      %9099 = vst [vmem:[%s9050] ss:$9 sm:$0xff] %v6861
      %9100 = vst [vmem:[%s9052] ss:$9 sm:$0xff] %v6864
      %9101 = vst [vmem:[%s9054] ss:$9 sm:$0xff] %v6867
      %9102 = vst [vmem:[%s9056] ss:$9 sm:$0xff] %v6870
      %v9103 = vld [vmem:[#allocation1] sm:$0xff]
      %9104 = vst [vmem:[#allocation1] ss:$9 sm:$0xff] %v6873
      %9105 = vst [vmem:[%s9044] ss:$9 sm:$0xff] %v6876
      %9106 = vst [vmem:[%s9046] ss:$9 sm:$0xff] %v6879
      %9107 = vst [vmem:[%s9048] ss:$9 sm:$0xff] %v6882
      %9108 = vst [vmem:[%s9050] ss:$9 sm:$0xff] %v6885
      %9109 = vst [vmem:[%s9052] ss:$9 sm:$0xff] %v6888
      %9110 = vst [vmem:[%s9054] ss:$9 sm:$0xff] %v6891
      %9111 = vst [vmem:[%s9056] ss:$9 sm:$0xff] %v6894
      %v9112 = vld [vmem:[#allocation1] sm:$0xff]
      %9113 = vst [vmem:[#allocation1] ss:$9 sm:$0xff] %v6897
      %9114 = vst [vmem:[%s9044] ss:$9 sm:$0xff] %v6900
      %9115 = vst [vmem:[%s9046] ss:$9 sm:$0xff] %v6903
      %9116 = vst [vmem:[%s9048] ss:$9 sm:$0xff] %v6906
      %9117 = vst [vmem:[%s9050] ss:$9 sm:$0xff] %v6909
      %9118 = vst [vmem:[%s9052] ss:$9 sm:$0xff] %v6912
      %9119 = vst [vmem:[%s9054] ss:$9 sm:$0xff] %v6915
      %9120 = vst [vmem:[%s9056] ss:$9 sm:$0xff] %v6918
      %v9121 = vld [vmem:[#allocation1] sm:$0xff]
      %9122 = vst [vmem:[#allocation1] ss:$9 sm:$0xff] %v6921
      %9123 = vst [vmem:[%s9044] ss:$9 sm:$0xff] %v6924
      %9124 = vst [vmem:[%s9046] ss:$9 sm:$0xff] %v6927
      %9125 = vst [vmem:[%s9048] ss:$9 sm:$0xff] %v6930
      %9126 = vst [vmem:[%s9050] ss:$9 sm:$0xff] %v6933
      %9127 = vst [vmem:[%s9052] ss:$9 sm:$0xff] %v6936
      %9128 = vst [vmem:[%s9054] ss:$9 sm:$0xff] %v6939
      %9129 = vst [vmem:[%s9056] ss:$9 sm:$0xff] %v6942
      %v9130 = vld [vmem:[#allocation1] sm:$0xff]
      %9131 = vst [vmem:[#allocation1] ss:$9 sm:$0xff] %v6945
      %9132 = vst [vmem:[%s9044] ss:$9 sm:$0xff] %v6948
      %9133 = vst [vmem:[%s9046] ss:$9 sm:$0xff] %v6951
      %9134 = vst [vmem:[%s9048] ss:$9 sm:$0xff] %v6954
      %9135 = vst [vmem:[%s9050] ss:$9 sm:$0xff] %v6957
      %9136 = vst [vmem:[%s9052] ss:$9 sm:$0xff] %v6960
      %9137 = vst [vmem:[%s9054] ss:$9 sm:$0xff] %v6963
      %9138 = vst [vmem:[%s9056] ss:$9 sm:$0xff] %v6966
      %v9139 = vld [vmem:[#allocation1] sm:$0xff]
      %9140 = vst [vmem:[#allocation1] ss:$9 sm:$0xff] %v6969
      %9141 = vst [vmem:[%s9044] ss:$9 sm:$0xff] %v6972
      %9142 = vst [vmem:[%s9046] ss:$9 sm:$0xff] %v6975
      %9143 = vst [vmem:[%s9048] ss:$9 sm:$0xff] %v6978
      %9144 = vst [vmem:[%s9050] ss:$9 sm:$0xff] %v6981
      %9145 = vst [vmem:[%s9052] ss:$9 sm:$0xff] %v6984
      %9146 = vst [vmem:[%s9054] ss:$9 sm:$0xff] %v6987
      %9147 = vst [vmem:[%s9056] ss:$9 sm:$0xff] %v6990
      %v9148 = vld [vmem:[#allocation1] sm:$0xff]
      %9149 = vst [vmem:[#allocation1] ss:$9 sm:$0xff] %v6993
      %9150 = vst [vmem:[%s9044] ss:$9 sm:$0xff] %v6996
      %9151 = vst [vmem:[%s9046] ss:$9 sm:$0xff] %v6999
      %9152 = vst [vmem:[%s9048] ss:$9 sm:$0xff] %v7002
      %9153 = vst [vmem:[%s9050] ss:$9 sm:$0xff] %v7005
      %9154 = vst [vmem:[%s9052] ss:$9 sm:$0xff] %v7008
      %9155 = vst [vmem:[%s9054] ss:$9 sm:$0xff] %v7011
      %9156 = vst [vmem:[%s9056] ss:$9 sm:$0xff] %v7014
      %v9157 = vld [vmem:[#allocation1] sm:$0xff]
      %9158 = vst [vmem:[#allocation1] ss:$9 sm:$0xff] %v7017
      %9159 = vst [vmem:[%s9044] ss:$9 sm:$0xff] %v7020
      %9160 = vst [vmem:[%s9046] ss:$9 sm:$0xff] %v7023
      %9161 = vst [vmem:[%s9048] ss:$9 sm:$0xff] %v7026
      %9162 = vst [vmem:[%s9050] ss:$9 sm:$0xff] %v7029
      %9163 = vst [vmem:[%s9052] ss:$9 sm:$0xff] %v7032
      %9164 = vst [vmem:[%s9054] ss:$9 sm:$0xff] %v7035
      %9165 = vst [vmem:[%s9056] ss:$9 sm:$0xff] %v7038
      %v9166 = vld [vmem:[#allocation1] sm:$0xff]
      %9167 = vst [vmem:[#allocation1] ss:$9 sm:$0xff] %v7041
      %9168 = vst [vmem:[%s9044] ss:$9 sm:$0xff] %v7044
      %9169 = vst [vmem:[%s9046] ss:$9 sm:$0xff] %v7047
      %9170 = vst [vmem:[%s9048] ss:$9 sm:$0xff] %v7050
      %9171 = vst [vmem:[%s9050] ss:$9 sm:$0xff] %v7053
      %9172 = vst [vmem:[%s9052] ss:$9 sm:$0xff] %v7056
      %9173 = vst [vmem:[%s9054] ss:$9 sm:$0xff] %v7059
      %9174 = vst [vmem:[%s9056] ss:$9 sm:$0xff] %v7062
      %v9175 = vld [vmem:[#allocation1] sm:$0xff]
      %9176 = vst [vmem:[#allocation1] ss:$9 sm:$0xff] %v7065
      %9177 = vst [vmem:[%s9044] ss:$9 sm:$0xff] %v7068
      %9178 = vst [vmem:[%s9046] ss:$9 sm:$0xff] %v7071
      %9179 = vst [vmem:[%s9048] ss:$9 sm:$0xff] %v7074
      %9180 = vst [vmem:[%s9050] ss:$9 sm:$0xff] %v7077
      %9181 = vst [vmem:[%s9052] ss:$9 sm:$0xff] %v7080
      %9182 = vst [vmem:[%s9054] ss:$9 sm:$0xff] %v7083
      %9183 = vst [vmem:[%s9056] ss:$9 sm:$0xff] %v7086
      %v9184 = vld [vmem:[#allocation1] sm:$0xff]
      %9185 = vst [vmem:[#allocation1] ss:$9 sm:$0xff] %v7089
      %9186 = vst [vmem:[%s9044] ss:$9 sm:$0xff] %v7092
      %9187 = vst [vmem:[%s9046] ss:$9 sm:$0xff] %v7095
      %9188 = vst [vmem:[%s9048] ss:$9 sm:$0xff] %v7098
      %9189 = vst [vmem:[%s9050] ss:$9 sm:$0xff] %v7101
      %9190 = vst [vmem:[%s9052] ss:$9 sm:$0xff] %v7104
      %9191 = vst [vmem:[%s9054] ss:$9 sm:$0xff] %v7107
      %9192 = vst [vmem:[%s9056] ss:$9 sm:$0xff] %v7110
      %v9193 = vld [vmem:[#allocation1] sm:$0xff]
      %9194 = vst [vmem:[#allocation1] ss:$9 sm:$0xff] %v7113
      %9195 = vst [vmem:[%s9044] ss:$9 sm:$0xff] %v7116
      %9196 = vst [vmem:[%s9046] ss:$9 sm:$0xff] %v7119
      %9197 = vst [vmem:[%s9048] ss:$9 sm:$0xff] %v7122
      %9198 = vst [vmem:[%s9050] ss:$9 sm:$0xff] %v7125
      %9199 = vst [vmem:[%s9052] ss:$9 sm:$0xff] %v7128
      %9200 = vst [vmem:[%s9054] ss:$9 sm:$0xff] %v7131
      %9201 = vst [vmem:[%s9056] ss:$9 sm:$0xff] %v7134
      %v9202 = vld [vmem:[#allocation1] sm:$0xff]
      %9203 = vst [vmem:[#allocation1] ss:$9 sm:$0xff] %v7137
      %9204 = vst [vmem:[%s9044] ss:$9 sm:$0xff] %v7140
      %9205 = vst [vmem:[%s9046] ss:$9 sm:$0xff] %v7143
      %9206 = vst [vmem:[%s9048] ss:$9 sm:$0xff] %v7146
      %9207 = vst [vmem:[%s9050] ss:$9 sm:$0xff] %v7149
      %9208 = vst [vmem:[%s9052] ss:$9 sm:$0xff] %v7152
      %9209 = vst [vmem:[%s9054] ss:$9 sm:$0xff] %v7155
      %9210 = vst [vmem:[%s9056] ss:$9 sm:$0xff] %v7158
      %v9211 = vld [vmem:[#allocation1] sm:$0xff]
      %v9214 = vunpack.c.l.b16 %v9041
      %v9215 = vunpack.c.l.b16 %v9042
      %v9216 = vpack.c.b16 %v9215, %v9214
      %v9217 = vsel %vm1848, %v9058, 0
      %v9219 = vsel %vm1848, %v9067, 0
      %v9221 = vsel %vm1848, %v9076, 0
      %v9223 = vsel %vm1848, %v9085, 0
      %v9225 = vsel %vm1848, %v9094, 0
      %v9227 = vsel %vm1848, %v9103, 0
      %v9229 = vsel %vm1848, %v9112, 0
      %v9231 = vsel %vm1848, %v9121, 0
      %v9233 = vsel %vm1848, %v9130, 0
      %v9235 = vsel %vm1848, %v9139, 0
      %v9237 = vsel %vm1848, %v9148, 0
      %v9239 = vsel %vm1848, %v9157, 0
      %v9241 = vsel %vm1848, %v9166, 0
      %v9243 = vsel %vm1848, %v9175, 0
      %v9245 = vsel %vm1848, %v9184, 0
      %v9247 = vsel %vm1848, %v9193, 0
      %v9249 = vsel %vm1848, %v9202, 0
      %v9251 = vsel %vm1848, %v9211, 0
      %v9254 = vsel %vm1885, %v9216, 0
      %9256 = vmatpush.bf16.msra.mxu0 0
      %9257 = vmatpush.bf16.msra.mxu0 0
      %9258 = vmatpush.bf16.msra.mxu0 0
      %9259 = vmatpush.bf16.msra.mxu0 0
      %9260 = vmatpush.bf16.msra.mxu0 0
      %9261 = vmatpush.bf16.msra.mxu0 0
      %9262 = vmatpush.bf16.msra.mxu0 0
      %9263 = vmatpush.bf16.msra.mxu0 %v9254
      %9264 = vmatmul.bf16.gmra.mxu0 %v9217
      %v9265 = vpop.f32.mrf.mxu0
      %v9266 = vadd.f32 0.0, %v9265
      %v9267 = vpop.f32.mrf.mxu0
      %v9268 = vadd.f32 0.0, %v9267
      %9269 = vmatmul.bf16.gmra.mxu0 %v9219
      %v9270 = vpop.f32.mrf.mxu0
      %v9271 = vadd.f32 0.0, %v9270
      %v9272 = vpop.f32.mrf.mxu0
      %v9273 = vadd.f32 0.0, %v9272
      %9274 = vmatmul.bf16.gmra.mxu0 %v9221
      %v9275 = vpop.f32.mrf.mxu0
      %v9276 = vadd.f32 0.0, %v9275
      %v9277 = vpop.f32.mrf.mxu0
      %v9278 = vadd.f32 0.0, %v9277
      %9279 = vmatmul.bf16.gmra.mxu0 %v9223
      %v9280 = vpop.f32.mrf.mxu0
      %v9281 = vadd.f32 0.0, %v9280
      %v9282 = vpop.f32.mrf.mxu0
      %v9283 = vadd.f32 0.0, %v9282
      %9284 = vmatmul.bf16.gmra.mxu0 %v9225
      %v9285 = vpop.f32.mrf.mxu0
      %v9286 = vadd.f32 0.0, %v9285
      %v9287 = vpop.f32.mrf.mxu0
      %v9288 = vadd.f32 0.0, %v9287
      %9289 = vmatmul.bf16.gmra.mxu0 %v9227
      %v9290 = vpop.f32.mrf.mxu0
      %v9291 = vadd.f32 0.0, %v9290
      %v9292 = vpop.f32.mrf.mxu0
      %v9293 = vadd.f32 0.0, %v9292
      %9294 = vmatmul.bf16.gmra.mxu0 %v9229
      %v9295 = vpop.f32.mrf.mxu0
      %v9296 = vadd.f32 0.0, %v9295
      %v9297 = vpop.f32.mrf.mxu0
      %v9298 = vadd.f32 0.0, %v9297
      %9299 = vmatmul.bf16.gmra.mxu0 %v9231
      %v9300 = vpop.f32.mrf.mxu0
      %v9301 = vadd.f32 0.0, %v9300
      %v9302 = vpop.f32.mrf.mxu0
      %v9303 = vadd.f32 0.0, %v9302
      %9304 = vmatmul.bf16.gmra.mxu0 %v9233
      %v9305 = vpop.f32.mrf.mxu0
      %v9306 = vadd.f32 0.0, %v9305
      %v9307 = vpop.f32.mrf.mxu0
      %v9308 = vadd.f32 0.0, %v9307
      %9309 = vmatmul.bf16.gmra.mxu0 %v9235
      %v9310 = vpop.f32.mrf.mxu0
      %v9311 = vadd.f32 0.0, %v9310
      %v9312 = vpop.f32.mrf.mxu0
      %v9313 = vadd.f32 0.0, %v9312
      %9314 = vmatmul.bf16.gmra.mxu0 %v9237
      %v9315 = vpop.f32.mrf.mxu0
      %v9316 = vadd.f32 0.0, %v9315
      %v9317 = vpop.f32.mrf.mxu0
      %v9318 = vadd.f32 0.0, %v9317
      %9319 = vmatmul.bf16.gmra.mxu0 %v9239
      %v9320 = vpop.f32.mrf.mxu0
      %v9321 = vadd.f32 0.0, %v9320
      %v9322 = vpop.f32.mrf.mxu0
      %v9323 = vadd.f32 0.0, %v9322
      %9324 = vmatmul.bf16.gmra.mxu0 %v9241
      %v9325 = vpop.f32.mrf.mxu0
      %v9326 = vadd.f32 0.0, %v9325
      %v9327 = vpop.f32.mrf.mxu0
      %v9328 = vadd.f32 0.0, %v9327
      %9329 = vmatmul.bf16.gmra.mxu0 %v9243
      %v9330 = vpop.f32.mrf.mxu0
      %v9331 = vadd.f32 0.0, %v9330
      %v9332 = vpop.f32.mrf.mxu0
      %v9333 = vadd.f32 0.0, %v9332
      %9334 = vmatmul.bf16.gmra.mxu0 %v9245
      %v9335 = vpop.f32.mrf.mxu0
      %v9336 = vadd.f32 0.0, %v9335
      %v9337 = vpop.f32.mrf.mxu0
      %v9338 = vadd.f32 0.0, %v9337
      %9339 = vmatmul.bf16.gmra.mxu0 %v9247
      %v9340 = vpop.f32.mrf.mxu0
      %v9341 = vadd.f32 0.0, %v9340
      %v9342 = vpop.f32.mrf.mxu0
      %v9343 = vadd.f32 0.0, %v9342
      %9344 = vmatmul.bf16.gmra.mxu0 %v9249
      %v9345 = vpop.f32.mrf.mxu0
      %v9346 = vadd.f32 0.0, %v9345
      %v9347 = vpop.f32.mrf.mxu0
      %v9348 = vadd.f32 0.0, %v9347
      %9349 = vmatmul.bf16.gmra.mxu0 %v9251
      %v9350 = vpop.f32.mrf.mxu0
      %v9351 = vadd.f32 0.0, %v9350
      %v9352 = vpop.f32.mrf.mxu0
      %v9353 = vadd.f32 0.0, %v9352
      %9354 = vdwg.mxu0
      %v9391 = vrot.slane %v9266, 2
      %v9392 = vrot.slane %v9266, 4
      %v9393 = vrot.slane %v9266, 6
      %v9394 = vrot.slane %v9268, 2
      %v9395 = vrot.slane %v9268, 4
      %v9396 = vrot.slane %v9268, 6
      %v9397 = vrot.slane %v9271, 4
      %v9398 = vrot.slane %v9271, 6
      %v9399 = vrot.slane %v9273, 2
      %v9400 = vrot.slane %v9273, 4
      %v9401 = vrot.slane %v9273, 6
      %v9402 = vrot.slane %v9276, 2
      %v9403 = vrot.slane %v9276, 6
      %v9404 = vrot.slane %v9278, 2
      %v9405 = vrot.slane %v9278, 4
      %v9406 = vrot.slane %v9278, 6
      %v9407 = vrot.slane %v9281, 2
      %v9408 = vrot.slane %v9281, 4
      %v9409 = vrot.slane %v9283, 2
      %v9410 = vrot.slane %v9283, 4
      %v9411 = vrot.slane %v9283, 6
      %v9412 = vrot.slane %v9286, 2
      %v9413 = vrot.slane %v9286, 4
      %v9414 = vrot.slane %v9286, 6
      %v9415 = vrot.slane %v9288, 2
      %v9416 = vrot.slane %v9288, 4
      %v9417 = vrot.slane %v9288, 6
      %v9418 = vrot.slane %v9291, 2
      %v9419 = vrot.slane %v9291, 4
      %v9420 = vrot.slane %v9291, 6
      %v9421 = vrot.slane %v9293, 4
      %v9422 = vrot.slane %v9293, 6
      %v9423 = vrot.slane %v9296, 2
      %v9424 = vrot.slane %v9296, 4
      %v9425 = vrot.slane %v9296, 6
      %v9426 = vrot.slane %v9298, 2
      %v9427 = vrot.slane %v9298, 6
      %v9428 = vrot.slane %v9301, 2
      %v9429 = vrot.slane %v9301, 4
      %v9430 = vrot.slane %v9301, 6
      %v9431 = vrot.slane %v9303, 2
      %v9432 = vrot.slane %v9303, 4
      %v9433 = vrot.slane %v9306, 2
      %v9434 = vrot.slane %v9306, 4
      %v9435 = vrot.slane %v9306, 6
      %v9436 = vrot.slane %v9308, 2
      %v9437 = vrot.slane %v9308, 4
      %v9438 = vrot.slane %v9308, 6
      %v9439 = vrot.slane %v9311, 2
      %v9440 = vrot.slane %v9311, 4
      %v9441 = vrot.slane %v9311, 6
      %v9442 = vrot.slane %v9313, 2
      %v9443 = vrot.slane %v9313, 4
      %v9444 = vrot.slane %v9313, 6
      %v9445 = vrot.slane %v9316, 4
      %v9446 = vrot.slane %v9316, 6
      %v9447 = vrot.slane %v9318, 2
      %v9448 = vrot.slane %v9318, 4
      %v9449 = vrot.slane %v9318, 6
      %v9450 = vrot.slane %v9321, 2
      %v9451 = vrot.slane %v9321, 6
      %v9452 = vrot.slane %v9323, 2
      %v9453 = vrot.slane %v9323, 4
      %v9454 = vrot.slane %v9323, 6
      %v9455 = vrot.slane %v9326, 2
      %v9456 = vrot.slane %v9326, 4
      %v9457 = vrot.slane %v9328, 2
      %v9458 = vrot.slane %v9328, 4
      %v9459 = vrot.slane %v9328, 6
      %v9460 = vrot.slane %v9331, 2
      %v9461 = vrot.slane %v9331, 4
      %v9462 = vrot.slane %v9331, 6
      %v9463 = vrot.slane %v9333, 2
      %v9464 = vrot.slane %v9333, 4
      %v9465 = vrot.slane %v9333, 6
      %v9466 = vrot.slane %v9336, 2
      %v9467 = vrot.slane %v9336, 4
      %v9468 = vrot.slane %v9336, 6
      %v9469 = vrot.slane %v9338, 4
      %v9470 = vrot.slane %v9338, 6
      %v9471 = vrot.slane %v9341, 2
      %v9472 = vrot.slane %v9341, 4
      %v9473 = vrot.slane %v9341, 6
      %v9474 = vrot.slane %v9343, 2
      %v9475 = vrot.slane %v9343, 6
      %v9476 = vrot.slane %v9346, 2
      %v9477 = vrot.slane %v9346, 4
      %v9478 = vrot.slane %v9346, 6
      %v9479 = vrot.slane %v9348, 2
      %v9480 = vrot.slane %v9348, 4
      %v9481 = vrot.slane %v9351, 2
      %v9482 = vrot.slane %v9351, 4
      %v9483 = vrot.slane %v9351, 6
      %v9484 = vrot.slane %v9353, 2
      %v9485 = vrot.slane %v9353, 4
      %v9486 = vrot.slane %v9353, 6
      %v9583 = vadd.f32 %v8912, %v9391
      %v9584 = vadd.f32 %v8913, %v9392
      %v9585 = vadd.f32 %v8914, %v9393
      %v9586 = vadd.f32 %v8915, %v9268
      %v9587 = vadd.f32 %v8916, %v9394
      %v9588 = vadd.f32 %v8917, %v9395
      %v9589 = vadd.f32 %v8918, %v9396
      %v9590 = vadd.f32 %v8919, %v9271
      %v9591 = vadd.f32 %v8920, %v9397
      %v9592 = vadd.f32 %v8921, %v9398
      %v9593 = vadd.f32 %v8922, %v9273
      %v9594 = vadd.f32 %v8923, %v9399
      %v9595 = vadd.f32 %v8924, %v9400
      %v9596 = vadd.f32 %v8925, %v9401
      %v9597 = vadd.f32 %v8926, %v9276
      %v9598 = vadd.f32 %v8927, %v9402
      %v9599 = vadd.f32 %v8928, %v9403
      %v9600 = vadd.f32 %v8929, %v9278
      %v9601 = vadd.f32 %v8930, %v9404
      %v9602 = vadd.f32 %v8931, %v9405
      %v9603 = vadd.f32 %v8932, %v9406
      %v9604 = vadd.f32 %v8933, %v9281
      %v9605 = vadd.f32 %v8934, %v9407
      %v9606 = vadd.f32 %v8935, %v9408
      %v9607 = vadd.f32 %v8936, %v9283
      %v9608 = vadd.f32 %v8937, %v9409
      %v9609 = vadd.f32 %v8938, %v9410
      %v9610 = vadd.f32 %v8939, %v9411
      %v9611 = vadd.f32 %v8940, %v9286
      %v9612 = vadd.f32 %v8941, %v9412
      %v9613 = vadd.f32 %v8942, %v9413
      %v9614 = vadd.f32 %v8943, %v9414
      %v9615 = vadd.f32 %v8944, %v9415
      %v9616 = vadd.f32 %v8945, %v9416
      %v9617 = vadd.f32 %v8946, %v9417
      %v9618 = vadd.f32 %v8947, %v9291
      %v9619 = vadd.f32 %v8948, %v9418
      %v9620 = vadd.f32 %v8949, %v9419
      %v9621 = vadd.f32 %v8950, %v9420
      %v9622 = vadd.f32 %v8951, %v9293
      %v9623 = vadd.f32 %v8952, %v9421
      %v9624 = vadd.f32 %v8953, %v9422
      %v9625 = vadd.f32 %v8954, %v9296
      %v9626 = vadd.f32 %v8955, %v9423
      %v9627 = vadd.f32 %v8956, %v9424
      %v9628 = vadd.f32 %v8957, %v9425
      %v9629 = vadd.f32 %v8958, %v9298
      %v9630 = vadd.f32 %v8959, %v9426
      %v9631 = vadd.f32 %v8960, %v9427
      %v9632 = vadd.f32 %v8961, %v9301
      %v9633 = vadd.f32 %v8962, %v9428
      %v9634 = vadd.f32 %v8963, %v9429
      %v9635 = vadd.f32 %v8964, %v9430
      %v9636 = vadd.f32 %v8965, %v9303
      %v9637 = vadd.f32 %v8966, %v9431
      %v9638 = vadd.f32 %v8967, %v9432
      %v9639 = vadd.f32 %v8968, %v9306
      %v9640 = vadd.f32 %v8969, %v9433
      %v9641 = vadd.f32 %v8970, %v9434
      %v9642 = vadd.f32 %v8971, %v9435
      %v9643 = vadd.f32 %v8972, %v9308
      %v9644 = vadd.f32 %v8973, %v9436
      %v9645 = vadd.f32 %v8974, %v9437
      %v9646 = vadd.f32 %v8975, %v9438
      %v9647 = vadd.f32 %v8976, %v9439
      %v9648 = vadd.f32 %v8977, %v9440
      %v9649 = vadd.f32 %v8978, %v9441
      %v9650 = vadd.f32 %v8979, %v9313
      %v9651 = vadd.f32 %v8980, %v9442
      %v9652 = vadd.f32 %v8981, %v9443
      %v9653 = vadd.f32 %v8982, %v9444
      %v9654 = vadd.f32 %v8983, %v9316
      %v9655 = vadd.f32 %v8984, %v9445
      %v9656 = vadd.f32 %v8985, %v9446
      %v9657 = vadd.f32 %v8986, %v9318
      %v9658 = vadd.f32 %v8987, %v9447
      %v9659 = vadd.f32 %v8988, %v9448
      %v9660 = vadd.f32 %v8989, %v9449
      %v9661 = vadd.f32 %v8990, %v9321
      %v9662 = vadd.f32 %v8991, %v9450
      %v9663 = vadd.f32 %v8992, %v9451
      %v9664 = vadd.f32 %v8993, %v9323
      %v9665 = vadd.f32 %v8994, %v9452
      %v9666 = vadd.f32 %v8995, %v9453
      %v9667 = vadd.f32 %v8996, %v9454
      %v9668 = vadd.f32 %v8997, %v9326
      %v9669 = vadd.f32 %v8998, %v9455
      %v9670 = vadd.f32 %v8999, %v9456
      %v9671 = vadd.f32 %v9000, %v9328
      %v9672 = vadd.f32 %v9001, %v9457
      %v9673 = vadd.f32 %v9002, %v9458
      %v9674 = vadd.f32 %v9003, %v9459
      %v9675 = vadd.f32 %v9004, %v9331
      %v9676 = vadd.f32 %v9005, %v9460
      %v9677 = vadd.f32 %v9006, %v9461
      %v9678 = vadd.f32 %v9007, %v9462
      %v9679 = vadd.f32 %v9008, %v9463
      %v9680 = vadd.f32 %v9009, %v9464
      %v9681 = vadd.f32 %v9010, %v9465
      %v9682 = vadd.f32 %v9011, %v9336
      %v9683 = vadd.f32 %v9012, %v9466
      %v9684 = vadd.f32 %v9013, %v9467
      %v9685 = vadd.f32 %v9014, %v9468
      %v9686 = vadd.f32 %v9015, %v9338
      %v9687 = vadd.f32 %v9016, %v9469
      %v9688 = vadd.f32 %v9017, %v9470
      %v9689 = vadd.f32 %v9018, %v9341
      %v9690 = vadd.f32 %v9019, %v9471
      %v9691 = vadd.f32 %v9020, %v9472
      %v9692 = vadd.f32 %v9021, %v9473
      %v9693 = vadd.f32 %v9022, %v9343
      %v9694 = vadd.f32 %v9023, %v9474
      %v9695 = vadd.f32 %v9024, %v9475
      %v9696 = vadd.f32 %v9025, %v9346
      %v9697 = vadd.f32 %v9026, %v9476
      %v9698 = vadd.f32 %v9027, %v9477
      %v9699 = vadd.f32 %v9028, %v9478
      %v9700 = vadd.f32 %v9029, %v9348
      %v9701 = vadd.f32 %v9030, %v9479
      %v9702 = vadd.f32 %v9031, %v9480
      %v9703 = vadd.f32 %v9032, %v9351
      %v9704 = vadd.f32 %v9033, %v9481
      %v9705 = vadd.f32 %v9034, %v9482
      %v9706 = vadd.f32 %v9035, %v9483
      %v9707 = vadd.f32 %v9036, %v9353
      %v9708 = vadd.f32 %v9037, %v9484
      %v9709 = vadd.f32 %v9038, %v9485
      %v9710 = vadd.f32 %v9039, %v9486
      %v9711 = vld [vmem:[%s4] sm:$0x1]
      %v9713 = vperm.slane %v9711, 0
      %v9715 = vrot.slane %v9713, 2
      %v9716 = vrot.slane %v9713, 4
      %v9717 = vrot.slane %v9713, 6
      %v9721 = vadd.f32 %v9583, %v9713
      %v9722 = vadd.f32 %v9584, %v9715
      %v9723 = vadd.f32 %v9585, %v9716
      %v9724 = vadd.f32 %v9586, %v9717
      %v9725 = vadd.f32 %v9587, %v9713
      %v9726 = vadd.f32 %v9588, %v9715
      %v9727 = vadd.f32 %v9589, %v9716
      %v9728 = vadd.f32 %v9590, %v9717
      %v9729 = vadd.f32 %v9591, %v9713
      %v9730 = vadd.f32 %v9592, %v9715
      %v9731 = vadd.f32 %v9593, %v9716
      %v9732 = vadd.f32 %v9594, %v9717
      %v9733 = vadd.f32 %v9595, %v9713
      %v9734 = vadd.f32 %v9596, %v9715
      %v9735 = vadd.f32 %v9597, %v9716
      %v9736 = vadd.f32 %v9598, %v9717
      %v9737 = vadd.f32 %v9599, %v9713
      %v9738 = vadd.f32 %v9600, %v9715
      %v9739 = vadd.f32 %v9601, %v9716
      %v9740 = vadd.f32 %v9602, %v9717
      %v9741 = vadd.f32 %v9603, %v9713
      %v9742 = vadd.f32 %v9604, %v9715
      %v9743 = vadd.f32 %v9605, %v9716
      %v9744 = vadd.f32 %v9606, %v9717
      %v9745 = vadd.f32 %v9607, %v9713
      %v9746 = vadd.f32 %v9608, %v9715
      %v9747 = vadd.f32 %v9609, %v9716
      %v9748 = vadd.f32 %v9610, %v9717
      %v9749 = vadd.f32 %v9611, %v9713
      %v9750 = vadd.f32 %v9612, %v9715
      %v9751 = vadd.f32 %v9613, %v9716
      %v9752 = vadd.f32 %v9614, %v9717
      %v9753 = vadd.f32 %v9615, %v9713
      %v9754 = vadd.f32 %v9616, %v9715
      %v9755 = vadd.f32 %v9617, %v9716
      %v9756 = vadd.f32 %v9618, %v9717
      %v9757 = vadd.f32 %v9619, %v9713
      %v9758 = vadd.f32 %v9620, %v9715
      %v9759 = vadd.f32 %v9621, %v9716
      %v9760 = vadd.f32 %v9622, %v9717
      %v9761 = vadd.f32 %v9623, %v9713
      %v9762 = vadd.f32 %v9624, %v9715
      %v9763 = vadd.f32 %v9625, %v9716
      %v9764 = vadd.f32 %v9626, %v9717
      %v9765 = vadd.f32 %v9627, %v9713
      %v9766 = vadd.f32 %v9628, %v9715
      %v9767 = vadd.f32 %v9629, %v9716
      %v9768 = vadd.f32 %v9630, %v9717
      %v9769 = vadd.f32 %v9631, %v9713
      %v9770 = vadd.f32 %v9632, %v9715
      %v9771 = vadd.f32 %v9633, %v9716
      %v9772 = vadd.f32 %v9634, %v9717
      %v9773 = vadd.f32 %v9635, %v9713
      %v9774 = vadd.f32 %v9636, %v9715
      %v9775 = vadd.f32 %v9637, %v9716
      %v9776 = vadd.f32 %v9638, %v9717
      %v9777 = vadd.f32 %v9639, %v9713
      %v9778 = vadd.f32 %v9640, %v9715
      %v9779 = vadd.f32 %v9641, %v9716
      %v9780 = vadd.f32 %v9642, %v9717
      %v9781 = vadd.f32 %v9643, %v9713
      %v9782 = vadd.f32 %v9644, %v9715
      %v9783 = vadd.f32 %v9645, %v9716
      %v9784 = vadd.f32 %v9646, %v9717
      %v9785 = vadd.f32 %v9647, %v9713
      %v9786 = vadd.f32 %v9648, %v9715
      %v9787 = vadd.f32 %v9649, %v9716
      %v9788 = vadd.f32 %v9650, %v9717
      %v9789 = vadd.f32 %v9651, %v9713
      %v9790 = vadd.f32 %v9652, %v9715
      %v9791 = vadd.f32 %v9653, %v9716
      %v9792 = vadd.f32 %v9654, %v9717
      %v9793 = vadd.f32 %v9655, %v9713
      %v9794 = vadd.f32 %v9656, %v9715
      %v9795 = vadd.f32 %v9657, %v9716
      %v9796 = vadd.f32 %v9658, %v9717
      %v9797 = vadd.f32 %v9659, %v9713
      %v9798 = vadd.f32 %v9660, %v9715
      %v9799 = vadd.f32 %v9661, %v9716
      %v9800 = vadd.f32 %v9662, %v9717
      %v9801 = vadd.f32 %v9663, %v9713
      %v9802 = vadd.f32 %v9664, %v9715
      %v9803 = vadd.f32 %v9665, %v9716
      %v9804 = vadd.f32 %v9666, %v9717
      %v9805 = vadd.f32 %v9667, %v9713
      %v9806 = vadd.f32 %v9668, %v9715
      %v9807 = vadd.f32 %v9669, %v9716
      %v9808 = vadd.f32 %v9670, %v9717
      %v9809 = vadd.f32 %v9671, %v9713
      %v9810 = vadd.f32 %v9672, %v9715
      %v9811 = vadd.f32 %v9673, %v9716
      %v9812 = vadd.f32 %v9674, %v9717
      %v9813 = vadd.f32 %v9675, %v9713
      %v9814 = vadd.f32 %v9676, %v9715
      %v9815 = vadd.f32 %v9677, %v9716
      %v9816 = vadd.f32 %v9678, %v9717
      %v9817 = vadd.f32 %v9679, %v9713
      %v9818 = vadd.f32 %v9680, %v9715
      %v9819 = vadd.f32 %v9681, %v9716
      %v9820 = vadd.f32 %v9682, %v9717
      %v9821 = vadd.f32 %v9683, %v9713
      %v9822 = vadd.f32 %v9684, %v9715
      %v9823 = vadd.f32 %v9685, %v9716
      %v9824 = vadd.f32 %v9686, %v9717
      %v9825 = vadd.f32 %v9687, %v9713
      %v9826 = vadd.f32 %v9688, %v9715
      %v9827 = vadd.f32 %v9689, %v9716
      %v9828 = vadd.f32 %v9690, %v9717
      %v9829 = vadd.f32 %v9691, %v9713
      %v9830 = vadd.f32 %v9692, %v9715
      %v9831 = vadd.f32 %v9693, %v9716
      %v9832 = vadd.f32 %v9694, %v9717
      %v9833 = vadd.f32 %v9695, %v9713
      %v9834 = vadd.f32 %v9696, %v9715
      %v9835 = vadd.f32 %v9697, %v9716
      %v9836 = vadd.f32 %v9698, %v9717
      %v9837 = vadd.f32 %v9699, %v9713
      %v9838 = vadd.f32 %v9700, %v9715
      %v9839 = vadd.f32 %v9701, %v9716
      %v9840 = vadd.f32 %v9702, %v9717
      %v9841 = vadd.f32 %v9703, %v9713
      %v9842 = vadd.f32 %v9704, %v9715
      %v9843 = vadd.f32 %v9705, %v9716
      %v9844 = vadd.f32 %v9706, %v9717
      %v9845 = vadd.f32 %v9707, %v9713
      %v9846 = vadd.f32 %v9708, %v9715
      %v9847 = vadd.f32 %v9709, %v9716
      %v9848 = vadd.f32 %v9710, %v9717
      %9977 = vst [vmem:[#allocation1] ss:$4 sm:$0xff] %v9721
      %s9978 = scalar_lea.vmem [#allocation1], 1
      %9979 = vst [vmem:[%s9978] ss:$4 sm:$0xff] %v9722
      %s9980 = scalar_lea.vmem [#allocation1], 2
      %9981 = vst [vmem:[%s9980] ss:$4 sm:$0xff] %v9723
      %s9982 = scalar_lea.vmem [#allocation1], 3
      %9983 = vst [vmem:[%s9982] ss:$4 sm:$0xff] %v9724
      %s9984 = scalar_lea.vmem [#allocation1], 32
      %9985 = vst [vmem:[%s9984] ss:$4 sm:$0xff] %v9725
      %s9986 = scalar_lea.vmem [#allocation1], 33
      %9987 = vst [vmem:[%s9986] ss:$4 sm:$0xff] %v9726
      %s9988 = scalar_lea.vmem [#allocation1], 34
      %9989 = vst [vmem:[%s9988] ss:$4 sm:$0xff] %v9727
      %s9990 = scalar_lea.vmem [#allocation1], 35
      %9991 = vst [vmem:[%s9990] ss:$4 sm:$0xff] %v9728
      %v9992 = vld.sshfl [vmem:[#allocation1] sm:$0xff pattern:$0x73625140]
      %v9993 = vld.sshfl [vmem:[#allocation1 + $0x20] sm:$0xff pattern:$0x73625140]
      %9994 = vst [vmem:[#allocation1] ss:$4 sm:$0xff] %v9729
      %9995 = vst [vmem:[%s9978] ss:$4 sm:$0xff] %v9730
      %9996 = vst [vmem:[%s9980] ss:$4 sm:$0xff] %v9731
      %9997 = vst [vmem:[%s9982] ss:$4 sm:$0xff] %v9732
      %9998 = vst [vmem:[%s9984] ss:$4 sm:$0xff] %v9733
      %9999 = vst [vmem:[%s9986] ss:$4 sm:$0xff] %v9734
      %10000 = vst [vmem:[%s9988] ss:$4 sm:$0xff] %v9735
      %10001 = vst [vmem:[%s9990] ss:$4 sm:$0xff] %v9736
      %v10002 = vld.sshfl [vmem:[#allocation1] sm:$0xff pattern:$0x73625140]
      %v10003 = vld.sshfl [vmem:[#allocation1 + $0x20] sm:$0xff pattern:$0x73625140]
      %10004 = vst [vmem:[#allocation1] ss:$4 sm:$0xff] %v9737
      %10005 = vst [vmem:[%s9978] ss:$4 sm:$0xff] %v9738
      %10006 = vst [vmem:[%s9980] ss:$4 sm:$0xff] %v9739
      %10007 = vst [vmem:[%s9982] ss:$4 sm:$0xff] %v9740
      %10008 = vst [vmem:[%s9984] ss:$4 sm:$0xff] %v9741
      %10009 = vst [vmem:[%s9986] ss:$4 sm:$0xff] %v9742
      %10010 = vst [vmem:[%s9988] ss:$4 sm:$0xff] %v9743
      %10011 = vst [vmem:[%s9990] ss:$4 sm:$0xff] %v9744
      %v10012 = vld.sshfl [vmem:[#allocation1] sm:$0xff pattern:$0x73625140]
      %v10013 = vld.sshfl [vmem:[#allocation1 + $0x20] sm:$0xff pattern:$0x73625140]
      %10014 = vst [vmem:[#allocation1] ss:$4 sm:$0xff] %v9745
      %10015 = vst [vmem:[%s9978] ss:$4 sm:$0xff] %v9746
      %10016 = vst [vmem:[%s9980] ss:$4 sm:$0xff] %v9747
      %10017 = vst [vmem:[%s9982] ss:$4 sm:$0xff] %v9748
      %10018 = vst [vmem:[%s9984] ss:$4 sm:$0xff] %v9749
      %10019 = vst [vmem:[%s9986] ss:$4 sm:$0xff] %v9750
      %10020 = vst [vmem:[%s9988] ss:$4 sm:$0xff] %v9751
      %10021 = vst [vmem:[%s9990] ss:$4 sm:$0xff] %v9752
      %v10022 = vld.sshfl [vmem:[#allocation1] sm:$0xff pattern:$0x73625140]
      %v10023 = vld.sshfl [vmem:[#allocation1 + $0x20] sm:$0xff pattern:$0x73625140]
      %10024 = vst [vmem:[#allocation1] ss:$4 sm:$0xff] %v9753
      %10025 = vst [vmem:[%s9978] ss:$4 sm:$0xff] %v9754
      %10026 = vst [vmem:[%s9980] ss:$4 sm:$0xff] %v9755
      %10027 = vst [vmem:[%s9982] ss:$4 sm:$0xff] %v9756
      %10028 = vst [vmem:[%s9984] ss:$4 sm:$0xff] %v9757
      %10029 = vst [vmem:[%s9986] ss:$4 sm:$0xff] %v9758
      %10030 = vst [vmem:[%s9988] ss:$4 sm:$0xff] %v9759
      %10031 = vst [vmem:[%s9990] ss:$4 sm:$0xff] %v9760
      %v10032 = vld.sshfl [vmem:[#allocation1] sm:$0xff pattern:$0x73625140]
      %v10033 = vld.sshfl [vmem:[#allocation1 + $0x20] sm:$0xff pattern:$0x73625140]
      %10034 = vst [vmem:[#allocation1] ss:$4 sm:$0xff] %v9761
      %10035 = vst [vmem:[%s9978] ss:$4 sm:$0xff] %v9762
      %10036 = vst [vmem:[%s9980] ss:$4 sm:$0xff] %v9763
      %10037 = vst [vmem:[%s9982] ss:$4 sm:$0xff] %v9764
      %10038 = vst [vmem:[%s9984] ss:$4 sm:$0xff] %v9765
      %10039 = vst [vmem:[%s9986] ss:$4 sm:$0xff] %v9766
      %10040 = vst [vmem:[%s9988] ss:$4 sm:$0xff] %v9767
      %10041 = vst [vmem:[%s9990] ss:$4 sm:$0xff] %v9768
      %v10042 = vld.sshfl [vmem:[#allocation1] sm:$0xff pattern:$0x73625140]
      %v10043 = vld.sshfl [vmem:[#allocation1 + $0x20] sm:$0xff pattern:$0x73625140]
      %10044 = vst [vmem:[#allocation1] ss:$4 sm:$0xff] %v9769
      %10045 = vst [vmem:[%s9978] ss:$4 sm:$0xff] %v9770
      %10046 = vst [vmem:[%s9980] ss:$4 sm:$0xff] %v9771
      %10047 = vst [vmem:[%s9982] ss:$4 sm:$0xff] %v9772
      %10048 = vst [vmem:[%s9984] ss:$4 sm:$0xff] %v9773
      %10049 = vst [vmem:[%s9986] ss:$4 sm:$0xff] %v9774
      %10050 = vst [vmem:[%s9988] ss:$4 sm:$0xff] %v9775
      %10051 = vst [vmem:[%s9990] ss:$4 sm:$0xff] %v9776
      %v10052 = vld.sshfl [vmem:[#allocation1] sm:$0xff pattern:$0x73625140]
      %v10053 = vld.sshfl [vmem:[#allocation1 + $0x20] sm:$0xff pattern:$0x73625140]
      %10054 = vst [vmem:[#allocation1] ss:$4 sm:$0xff] %v9777
      %10055 = vst [vmem:[%s9978] ss:$4 sm:$0xff] %v9778
      %10056 = vst [vmem:[%s9980] ss:$4 sm:$0xff] %v9779
      %10057 = vst [vmem:[%s9982] ss:$4 sm:$0xff] %v9780
      %10058 = vst [vmem:[%s9984] ss:$4 sm:$0xff] %v9781
      %10059 = vst [vmem:[%s9986] ss:$4 sm:$0xff] %v9782
      %10060 = vst [vmem:[%s9988] ss:$4 sm:$0xff] %v9783
      %10061 = vst [vmem:[%s9990] ss:$4 sm:$0xff] %v9784
      %v10062 = vld.sshfl [vmem:[#allocation1] sm:$0xff pattern:$0x73625140]
      %v10063 = vld.sshfl [vmem:[#allocation1 + $0x20] sm:$0xff pattern:$0x73625140]
      %10064 = vst [vmem:[#allocation1] ss:$4 sm:$0xff] %v9785
      %10065 = vst [vmem:[%s9978] ss:$4 sm:$0xff] %v9786
      %10066 = vst [vmem:[%s9980] ss:$4 sm:$0xff] %v9787
      %10067 = vst [vmem:[%s9982] ss:$4 sm:$0xff] %v9788
      %10068 = vst [vmem:[%s9984] ss:$4 sm:$0xff] %v9789
      %10069 = vst [vmem:[%s9986] ss:$4 sm:$0xff] %v9790
      %10070 = vst [vmem:[%s9988] ss:$4 sm:$0xff] %v9791
      %10071 = vst [vmem:[%s9990] ss:$4 sm:$0xff] %v9792
      %v10072 = vld.sshfl [vmem:[#allocation1] sm:$0xff pattern:$0x73625140]
      %v10073 = vld.sshfl [vmem:[#allocation1 + $0x20] sm:$0xff pattern:$0x73625140]
      %10074 = vst [vmem:[#allocation1] ss:$4 sm:$0xff] %v9793
      %10075 = vst [vmem:[%s9978] ss:$4 sm:$0xff] %v9794
      %10076 = vst [vmem:[%s9980] ss:$4 sm:$0xff] %v9795
      %10077 = vst [vmem:[%s9982] ss:$4 sm:$0xff] %v9796
      %10078 = vst [vmem:[%s9984] ss:$4 sm:$0xff] %v9797
      %10079 = vst [vmem:[%s9986] ss:$4 sm:$0xff] %v9798
      %10080 = vst [vmem:[%s9988] ss:$4 sm:$0xff] %v9799
      %10081 = vst [vmem:[%s9990] ss:$4 sm:$0xff] %v9800
      %v10082 = vld.sshfl [vmem:[#allocation1] sm:$0xff pattern:$0x73625140]
      %v10083 = vld.sshfl [vmem:[#allocation1 + $0x20] sm:$0xff pattern:$0x73625140]
      %10084 = vst [vmem:[#allocation1] ss:$4 sm:$0xff] %v9801
      %10085 = vst [vmem:[%s9978] ss:$4 sm:$0xff] %v9802
      %10086 = vst [vmem:[%s9980] ss:$4 sm:$0xff] %v9803
      %10087 = vst [vmem:[%s9982] ss:$4 sm:$0xff] %v9804
      %10088 = vst [vmem:[%s9984] ss:$4 sm:$0xff] %v9805
      %10089 = vst [vmem:[%s9986] ss:$4 sm:$0xff] %v9806
      %10090 = vst [vmem:[%s9988] ss:$4 sm:$0xff] %v9807
      %10091 = vst [vmem:[%s9990] ss:$4 sm:$0xff] %v9808
      %v10092 = vld.sshfl [vmem:[#allocation1] sm:$0xff pattern:$0x73625140]
      %v10093 = vld.sshfl [vmem:[#allocation1 + $0x20] sm:$0xff pattern:$0x73625140]
      %10094 = vst [vmem:[#allocation1] ss:$4 sm:$0xff] %v9809
      %10095 = vst [vmem:[%s9978] ss:$4 sm:$0xff] %v9810
      %10096 = vst [vmem:[%s9980] ss:$4 sm:$0xff] %v9811
      %10097 = vst [vmem:[%s9982] ss:$4 sm:$0xff] %v9812
      %10098 = vst [vmem:[%s9984] ss:$4 sm:$0xff] %v9813
      %10099 = vst [vmem:[%s9986] ss:$4 sm:$0xff] %v9814
      %10100 = vst [vmem:[%s9988] ss:$4 sm:$0xff] %v9815
      %10101 = vst [vmem:[%s9990] ss:$4 sm:$0xff] %v9816
      %v10102 = vld.sshfl [vmem:[#allocation1] sm:$0xff pattern:$0x73625140]
      %v10103 = vld.sshfl [vmem:[#allocation1 + $0x20] sm:$0xff pattern:$0x73625140]
      %10104 = vst [vmem:[#allocation1] ss:$4 sm:$0xff] %v9817
      %10105 = vst [vmem:[%s9978] ss:$4 sm:$0xff] %v9818
      %10106 = vst [vmem:[%s9980] ss:$4 sm:$0xff] %v9819
      %10107 = vst [vmem:[%s9982] ss:$4 sm:$0xff] %v9820
      %10108 = vst [vmem:[%s9984] ss:$4 sm:$0xff] %v9821
      %10109 = vst [vmem:[%s9986] ss:$4 sm:$0xff] %v9822
      %10110 = vst [vmem:[%s9988] ss:$4 sm:$0xff] %v9823
      %10111 = vst [vmem:[%s9990] ss:$4 sm:$0xff] %v9824
      %v10112 = vld.sshfl [vmem:[#allocation1] sm:$0xff pattern:$0x73625140]
      %v10113 = vld.sshfl [vmem:[#allocation1 + $0x20] sm:$0xff pattern:$0x73625140]
      %10114 = vst [vmem:[#allocation1] ss:$4 sm:$0xff] %v9825
      %10115 = vst [vmem:[%s9978] ss:$4 sm:$0xff] %v9826
      %10116 = vst [vmem:[%s9980] ss:$4 sm:$0xff] %v9827
      %10117 = vst [vmem:[%s9982] ss:$4 sm:$0xff] %v9828
      %10118 = vst [vmem:[%s9984] ss:$4 sm:$0xff] %v9829
      %10119 = vst [vmem:[%s9986] ss:$4 sm:$0xff] %v9830
      %10120 = vst [vmem:[%s9988] ss:$4 sm:$0xff] %v9831
      %10121 = vst [vmem:[%s9990] ss:$4 sm:$0xff] %v9832
      %v10122 = vld.sshfl [vmem:[#allocation1] sm:$0xff pattern:$0x73625140]
      %v10123 = vld.sshfl [vmem:[#allocation1 + $0x20] sm:$0xff pattern:$0x73625140]
      %10124 = vst [vmem:[#allocation1] ss:$4 sm:$0xff] %v9833
      %10125 = vst [vmem:[%s9978] ss:$4 sm:$0xff] %v9834
      %10126 = vst [vmem:[%s9980] ss:$4 sm:$0xff] %v9835
      %10127 = vst [vmem:[%s9982] ss:$4 sm:$0xff] %v9836
      %10128 = vst [vmem:[%s9984] ss:$4 sm:$0xff] %v9837
      %10129 = vst [vmem:[%s9986] ss:$4 sm:$0xff] %v9838
      %10130 = vst [vmem:[%s9988] ss:$4 sm:$0xff] %v9839
      %10131 = vst [vmem:[%s9990] ss:$4 sm:$0xff] %v9840
      %v10132 = vld.sshfl [vmem:[#allocation1] sm:$0xff pattern:$0x73625140]
      %v10133 = vld.sshfl [vmem:[#allocation1 + $0x20] sm:$0xff pattern:$0x73625140]
      %10134 = vst [vmem:[#allocation1] ss:$4 sm:$0xff] %v9841
      %10135 = vst [vmem:[%s9978] ss:$4 sm:$0xff] %v9842
      %10136 = vst [vmem:[%s9980] ss:$4 sm:$0xff] %v9843
      %10137 = vst [vmem:[%s9982] ss:$4 sm:$0xff] %v9844
      %10138 = vst [vmem:[%s9984] ss:$4 sm:$0xff] %v9845
      %10139 = vst [vmem:[%s9986] ss:$4 sm:$0xff] %v9846
      %10140 = vst [vmem:[%s9988] ss:$4 sm:$0xff] %v9847
      %10141 = vst [vmem:[%s9990] ss:$4 sm:$0xff] %v9848
      %v10142 = vld.sshfl [vmem:[#allocation1] sm:$0xff pattern:$0x73625140]
      %v10143 = vld.sshfl [vmem:[#allocation1 + $0x20] sm:$0xff pattern:$0x73625140]
      %v10176 = vsel %vm259, %v9992, 0.0
      %v10177 = vsel %vm259, %v9993, 0.0
      %v10178 = vadd.f32 %v10176, %v10177
      %v10179 = vsel %vm259, %v10002, 0.0
      %v10180 = vadd.f32 %v10178, %v10179
      %v10181 = vsel %vm259, %v10003, 0.0
      %v10182 = vadd.f32 %v10180, %v10181
      %v10183 = vsel %vm259, %v10012, 0.0
      %v10184 = vadd.f32 %v10182, %v10183
      %v10185 = vsel %vm259, %v10013, 0.0
      %v10186 = vadd.f32 %v10184, %v10185
      %v10187 = vsel %vm259, %v10022, 0.0
      %v10188 = vadd.f32 %v10186, %v10187
      %v10189 = vsel %vm259, %v10023, 0.0
      %v10190 = vadd.f32 %v10188, %v10189
      %v10191 = vsel %vm259, %v10032, 0.0
      %v10192 = vadd.f32 %v10190, %v10191
      %v10193 = vsel %vm259, %v10033, 0.0
      %v10194 = vadd.f32 %v10192, %v10193
      %v10195 = vsel %vm259, %v10042, 0.0
      %v10196 = vadd.f32 %v10194, %v10195
      %v10197 = vsel %vm259, %v10043, 0.0
      %v10198 = vadd.f32 %v10196, %v10197
      %v10199 = vsel %vm259, %v10052, 0.0
      %v10200 = vadd.f32 %v10198, %v10199
      %v10201 = vsel %vm259, %v10053, 0.0
      %v10202 = vadd.f32 %v10200, %v10201
      %v10203 = vsel %vm259, %v10062, 0.0
      %v10204 = vadd.f32 %v10202, %v10203
      %v10205 = vsel %vm259, %v10063, 0.0
      %v10206 = vadd.f32 %v10204, %v10205
      %v10207 = vsel %vm259, %v10072, 0.0
      %v10208 = vadd.f32 %v10206, %v10207
      %v10209 = vsel %vm259, %v10073, 0.0
      %v10210 = vadd.f32 %v10208, %v10209
      %v10211 = vsel %vm259, %v10082, 0.0
      %v10212 = vadd.f32 %v10210, %v10211
      %v10213 = vsel %vm259, %v10083, 0.0
      %v10214 = vadd.f32 %v10212, %v10213
      %v10215 = vsel %vm259, %v10092, 0.0
      %v10216 = vadd.f32 %v10214, %v10215
      %v10217 = vsel %vm259, %v10093, 0.0
      %v10218 = vadd.f32 %v10216, %v10217
      %v10219 = vsel %vm259, %v10102, 0.0
      %v10220 = vadd.f32 %v10218, %v10219
      %v10221 = vsel %vm259, %v10103, 0.0
      %v10222 = vadd.f32 %v10220, %v10221
      %v10223 = vsel %vm259, %v10112, 0.0
      %v10224 = vadd.f32 %v10222, %v10223
      %v10225 = vsel %vm259, %v10113, 0.0
      %v10226 = vadd.f32 %v10224, %v10225
      %v10227 = vsel %vm259, %v10122, 0.0
      %v10228 = vadd.f32 %v10226, %v10227
      %v10229 = vsel %vm259, %v10123, 0.0
      %v10230 = vadd.f32 %v10228, %v10229
      %v10231 = vsel %vm259, %v10132, 0.0
      %v10232 = vadd.f32 %v10230, %v10231
      %v10233 = vsel %vm259, %v10133, 0.0
      %v10234 = vadd.f32 %v10232, %v10233
      %v10235 = vsel %vm259, %v10142, 0.0
      %v10236 = vadd.f32 %v10234, %v10235
      %v10237 = vsel %vm259, %v10143, 0.0
      %v10238 = vadd.f32 %v10236, %v10237
      %v10239 = vrot.slane %v10238, 4
      %v10240 = vadd.f32 %v10238, %v10239
      %v10241 = vrot.slane %v10240, 2
      %v10242 = vadd.f32 %v10240, %v10241
      %v10243 = vrot.slane %v10242, 1
      %v10244 = vadd.f32 %v10242, %v10243
      %v10245 = vmul.f32 %v10244, %v4675
      %v10246 = vmul.f32 %v9721, %v9721
      %v10247 = vmul.f32 %v9722, %v9722
      %v10248 = vmul.f32 %v9723, %v9723
      %v10249 = vmul.f32 %v9724, %v9724
      %v10250 = vmul.f32 %v9725, %v9725
      %v10251 = vmul.f32 %v9726, %v9726
      %v10252 = vmul.f32 %v9727, %v9727
      %v10253 = vmul.f32 %v9728, %v9728
      %v10254 = vmul.f32 %v9729, %v9729
      %v10255 = vmul.f32 %v9730, %v9730
      %v10256 = vmul.f32 %v9731, %v9731
      %v10257 = vmul.f32 %v9732, %v9732
      %v10258 = vmul.f32 %v9733, %v9733
      %v10259 = vmul.f32 %v9734, %v9734
      %v10260 = vmul.f32 %v9735, %v9735
      %v10261 = vmul.f32 %v9736, %v9736
      %v10262 = vmul.f32 %v9737, %v9737
      %v10263 = vmul.f32 %v9738, %v9738
      %v10264 = vmul.f32 %v9739, %v9739
      %v10265 = vmul.f32 %v9740, %v9740
      %v10266 = vmul.f32 %v9741, %v9741
      %v10267 = vmul.f32 %v9742, %v9742
      %v10268 = vmul.f32 %v9743, %v9743
      %v10269 = vmul.f32 %v9744, %v9744
      %v10270 = vmul.f32 %v9745, %v9745
      %v10271 = vmul.f32 %v9746, %v9746
      %v10272 = vmul.f32 %v9747, %v9747
      %v10273 = vmul.f32 %v9748, %v9748
      %v10274 = vmul.f32 %v9749, %v9749
      %v10275 = vmul.f32 %v9750, %v9750
      %v10276 = vmul.f32 %v9751, %v9751
      %v10277 = vmul.f32 %v9752, %v9752
      %v10278 = vmul.f32 %v9753, %v9753
      %v10279 = vmul.f32 %v9754, %v9754
      %v10280 = vmul.f32 %v9755, %v9755
      %v10281 = vmul.f32 %v9756, %v9756
      %v10282 = vmul.f32 %v9757, %v9757
      %v10283 = vmul.f32 %v9758, %v9758
      %v10284 = vmul.f32 %v9759, %v9759
      %v10285 = vmul.f32 %v9760, %v9760
      %v10286 = vmul.f32 %v9761, %v9761
      %v10287 = vmul.f32 %v9762, %v9762
      %v10288 = vmul.f32 %v9763, %v9763
      %v10289 = vmul.f32 %v9764, %v9764
      %v10290 = vmul.f32 %v9765, %v9765
      %v10291 = vmul.f32 %v9766, %v9766
      %v10292 = vmul.f32 %v9767, %v9767
      %v10293 = vmul.f32 %v9768, %v9768
      %v10294 = vmul.f32 %v9769, %v9769
      %v10295 = vmul.f32 %v9770, %v9770
      %v10296 = vmul.f32 %v9771, %v9771
      %v10297 = vmul.f32 %v9772, %v9772
      %v10298 = vmul.f32 %v9773, %v9773
      %v10299 = vmul.f32 %v9774, %v9774
      %v10300 = vmul.f32 %v9775, %v9775
      %v10301 = vmul.f32 %v9776, %v9776
      %v10302 = vmul.f32 %v9777, %v9777
      %v10303 = vmul.f32 %v9778, %v9778
      %v10304 = vmul.f32 %v9779, %v9779
      %v10305 = vmul.f32 %v9780, %v9780
      %v10306 = vmul.f32 %v9781, %v9781
      %v10307 = vmul.f32 %v9782, %v9782
      %v10308 = vmul.f32 %v9783, %v9783
      %v10309 = vmul.f32 %v9784, %v9784
      %v10310 = vmul.f32 %v9785, %v9785
      %v10311 = vmul.f32 %v9786, %v9786
      %v10312 = vmul.f32 %v9787, %v9787
      %v10313 = vmul.f32 %v9788, %v9788
      %v10314 = vmul.f32 %v9789, %v9789
      %v10315 = vmul.f32 %v9790, %v9790
      %v10316 = vmul.f32 %v9791, %v9791
      %v10317 = vmul.f32 %v9792, %v9792
      %v10318 = vmul.f32 %v9793, %v9793
      %v10319 = vmul.f32 %v9794, %v9794
      %v10320 = vmul.f32 %v9795, %v9795
      %v10321 = vmul.f32 %v9796, %v9796
      %v10322 = vmul.f32 %v9797, %v9797
      %v10323 = vmul.f32 %v9798, %v9798
      %v10324 = vmul.f32 %v9799, %v9799
      %v10325 = vmul.f32 %v9800, %v9800
      %v10326 = vmul.f32 %v9801, %v9801
      %v10327 = vmul.f32 %v9802, %v9802
      %v10328 = vmul.f32 %v9803, %v9803
      %v10329 = vmul.f32 %v9804, %v9804
      %v10330 = vmul.f32 %v9805, %v9805
      %v10331 = vmul.f32 %v9806, %v9806
      %v10332 = vmul.f32 %v9807, %v9807
      %v10333 = vmul.f32 %v9808, %v9808
      %v10334 = vmul.f32 %v9809, %v9809
      %v10335 = vmul.f32 %v9810, %v9810
      %v10336 = vmul.f32 %v9811, %v9811
      %v10337 = vmul.f32 %v9812, %v9812
      %v10338 = vmul.f32 %v9813, %v9813
      %v10339 = vmul.f32 %v9814, %v9814
      %v10340 = vmul.f32 %v9815, %v9815
      %v10341 = vmul.f32 %v9816, %v9816
      %v10342 = vmul.f32 %v9817, %v9817
      %v10343 = vmul.f32 %v9818, %v9818
      %v10344 = vmul.f32 %v9819, %v9819
      %v10345 = vmul.f32 %v9820, %v9820
      %v10346 = vmul.f32 %v9821, %v9821
      %v10347 = vmul.f32 %v9822, %v9822
      %v10348 = vmul.f32 %v9823, %v9823
      %v10349 = vmul.f32 %v9824, %v9824
      %v10350 = vmul.f32 %v9825, %v9825
      %v10351 = vmul.f32 %v9826, %v9826
      %v10352 = vmul.f32 %v9827, %v9827
      %v10353 = vmul.f32 %v9828, %v9828
      %v10354 = vmul.f32 %v9829, %v9829
      %v10355 = vmul.f32 %v9830, %v9830
      %v10356 = vmul.f32 %v9831, %v9831
      %v10357 = vmul.f32 %v9832, %v9832
      %v10358 = vmul.f32 %v9833, %v9833
      %v10359 = vmul.f32 %v9834, %v9834
      %v10360 = vmul.f32 %v9835, %v9835
      %v10361 = vmul.f32 %v9836, %v9836
      %v10362 = vmul.f32 %v9837, %v9837
      %v10363 = vmul.f32 %v9838, %v9838
      %v10364 = vmul.f32 %v9839, %v9839
      %v10365 = vmul.f32 %v9840, %v9840
      %v10366 = vmul.f32 %v9841, %v9841
      %v10367 = vmul.f32 %v9842, %v9842
      %v10368 = vmul.f32 %v9843, %v9843
      %v10369 = vmul.f32 %v9844, %v9844
      %v10370 = vmul.f32 %v9845, %v9845
      %v10371 = vmul.f32 %v9846, %v9846
      %v10372 = vmul.f32 %v9847, %v9847
      %v10373 = vmul.f32 %v9848, %v9848
      %10502 = vst [vmem:[#allocation1] ss:$4 sm:$0xff] %v10246
      %s10503 = scalar_lea.vmem [#allocation1], 1
      %10504 = vst [vmem:[%s10503] ss:$4 sm:$0xff] %v10247
      %s10505 = scalar_lea.vmem [#allocation1], 2
      %10506 = vst [vmem:[%s10505] ss:$4 sm:$0xff] %v10248
      %s10507 = scalar_lea.vmem [#allocation1], 3
      %10508 = vst [vmem:[%s10507] ss:$4 sm:$0xff] %v10249
      %s10509 = scalar_lea.vmem [#allocation1], 32
      %10510 = vst [vmem:[%s10509] ss:$4 sm:$0xff] %v10250
      %s10511 = scalar_lea.vmem [#allocation1], 33
      %10512 = vst [vmem:[%s10511] ss:$4 sm:$0xff] %v10251
      %s10513 = scalar_lea.vmem [#allocation1], 34
      %10514 = vst [vmem:[%s10513] ss:$4 sm:$0xff] %v10252
      %s10515 = scalar_lea.vmem [#allocation1], 35
      %10516 = vst [vmem:[%s10515] ss:$4 sm:$0xff] %v10253
      %v10517 = vld.sshfl [vmem:[#allocation1] sm:$0xff pattern:$0x73625140]
      %v10518 = vld.sshfl [vmem:[#allocation1 + $0x20] sm:$0xff pattern:$0x73625140]
      %10519 = vst [vmem:[#allocation1] ss:$4 sm:$0xff] %v10254
      %10520 = vst [vmem:[%s10503] ss:$4 sm:$0xff] %v10255
      %10521 = vst [vmem:[%s10505] ss:$4 sm:$0xff] %v10256
      %10522 = vst [vmem:[%s10507] ss:$4 sm:$0xff] %v10257
      %10523 = vst [vmem:[%s10509] ss:$4 sm:$0xff] %v10258
      %10524 = vst [vmem:[%s10511] ss:$4 sm:$0xff] %v10259
      %10525 = vst [vmem:[%s10513] ss:$4 sm:$0xff] %v10260
      %10526 = vst [vmem:[%s10515] ss:$4 sm:$0xff] %v10261
      %v10527 = vld.sshfl [vmem:[#allocation1] sm:$0xff pattern:$0x73625140]
      %v10528 = vld.sshfl [vmem:[#allocation1 + $0x20] sm:$0xff pattern:$0x73625140]
      %10529 = vst [vmem:[#allocation1] ss:$4 sm:$0xff] %v10262
      %10530 = vst [vmem:[%s10503] ss:$4 sm:$0xff] %v10263
      %10531 = vst [vmem:[%s10505] ss:$4 sm:$0xff] %v10264
      %10532 = vst [vmem:[%s10507] ss:$4 sm:$0xff] %v10265
      %10533 = vst [vmem:[%s10509] ss:$4 sm:$0xff] %v10266
      %10534 = vst [vmem:[%s10511] ss:$4 sm:$0xff] %v10267
      %10535 = vst [vmem:[%s10513] ss:$4 sm:$0xff] %v10268
      %10536 = vst [vmem:[%s10515] ss:$4 sm:$0xff] %v10269
      %v10537 = vld.sshfl [vmem:[#allocation1] sm:$0xff pattern:$0x73625140]
      %v10538 = vld.sshfl [vmem:[#allocation1 + $0x20] sm:$0xff pattern:$0x73625140]
      %10539 = vst [vmem:[#allocation1] ss:$4 sm:$0xff] %v10270
      %10540 = vst [vmem:[%s10503] ss:$4 sm:$0xff] %v10271
      %10541 = vst [vmem:[%s10505] ss:$4 sm:$0xff] %v10272
      %10542 = vst [vmem:[%s10507] ss:$4 sm:$0xff] %v10273
      %10543 = vst [vmem:[%s10509] ss:$4 sm:$0xff] %v10274
      %10544 = vst [vmem:[%s10511] ss:$4 sm:$0xff] %v10275
      %10545 = vst [vmem:[%s10513] ss:$4 sm:$0xff] %v10276
      %10546 = vst [vmem:[%s10515] ss:$4 sm:$0xff] %v10277
      %v10547 = vld.sshfl [vmem:[#allocation1] sm:$0xff pattern:$0x73625140]
      %v10548 = vld.sshfl [vmem:[#allocation1 + $0x20] sm:$0xff pattern:$0x73625140]
      %10549 = vst [vmem:[#allocation1] ss:$4 sm:$0xff] %v10278
      %10550 = vst [vmem:[%s10503] ss:$4 sm:$0xff] %v10279
      %10551 = vst [vmem:[%s10505] ss:$4 sm:$0xff] %v10280
      %10552 = vst [vmem:[%s10507] ss:$4 sm:$0xff] %v10281
      %10553 = vst [vmem:[%s10509] ss:$4 sm:$0xff] %v10282
      %10554 = vst [vmem:[%s10511] ss:$4 sm:$0xff] %v10283
      %10555 = vst [vmem:[%s10513] ss:$4 sm:$0xff] %v10284
      %10556 = vst [vmem:[%s10515] ss:$4 sm:$0xff] %v10285
      %v10557 = vld.sshfl [vmem:[#allocation1] sm:$0xff pattern:$0x73625140]
      %v10558 = vld.sshfl [vmem:[#allocation1 + $0x20] sm:$0xff pattern:$0x73625140]
      %10559 = vst [vmem:[#allocation1] ss:$4 sm:$0xff] %v10286
      %10560 = vst [vmem:[%s10503] ss:$4 sm:$0xff] %v10287
      %10561 = vst [vmem:[%s10505] ss:$4 sm:$0xff] %v10288
      %10562 = vst [vmem:[%s10507] ss:$4 sm:$0xff] %v10289
      %10563 = vst [vmem:[%s10509] ss:$4 sm:$0xff] %v10290
      %10564 = vst [vmem:[%s10511] ss:$4 sm:$0xff] %v10291
      %10565 = vst [vmem:[%s10513] ss:$4 sm:$0xff] %v10292
      %10566 = vst [vmem:[%s10515] ss:$4 sm:$0xff] %v10293
      %v10567 = vld.sshfl [vmem:[#allocation1] sm:$0xff pattern:$0x73625140]
      %v10568 = vld.sshfl [vmem:[#allocation1 + $0x20] sm:$0xff pattern:$0x73625140]
      %10569 = vst [vmem:[#allocation1] ss:$4 sm:$0xff] %v10294
      %10570 = vst [vmem:[%s10503] ss:$4 sm:$0xff] %v10295
      %10571 = vst [vmem:[%s10505] ss:$4 sm:$0xff] %v10296
      %10572 = vst [vmem:[%s10507] ss:$4 sm:$0xff] %v10297
      %10573 = vst [vmem:[%s10509] ss:$4 sm:$0xff] %v10298
      %10574 = vst [vmem:[%s10511] ss:$4 sm:$0xff] %v10299
      %10575 = vst [vmem:[%s10513] ss:$4 sm:$0xff] %v10300
      %10576 = vst [vmem:[%s10515] ss:$4 sm:$0xff] %v10301
      %v10577 = vld.sshfl [vmem:[#allocation1] sm:$0xff pattern:$0x73625140]
      %v10578 = vld.sshfl [vmem:[#allocation1 + $0x20] sm:$0xff pattern:$0x73625140]
      %10579 = vst [vmem:[#allocation1] ss:$4 sm:$0xff] %v10302
      %10580 = vst [vmem:[%s10503] ss:$4 sm:$0xff] %v10303
      %10581 = vst [vmem:[%s10505] ss:$4 sm:$0xff] %v10304
      %10582 = vst [vmem:[%s10507] ss:$4 sm:$0xff] %v10305
      %10583 = vst [vmem:[%s10509] ss:$4 sm:$0xff] %v10306
      %10584 = vst [vmem:[%s10511] ss:$4 sm:$0xff] %v10307
      %10585 = vst [vmem:[%s10513] ss:$4 sm:$0xff] %v10308
      %10586 = vst [vmem:[%s10515] ss:$4 sm:$0xff] %v10309
      %v10587 = vld.sshfl [vmem:[#allocation1] sm:$0xff pattern:$0x73625140]
      %v10588 = vld.sshfl [vmem:[#allocation1 + $0x20] sm:$0xff pattern:$0x73625140]
      %10589 = vst [vmem:[#allocation1] ss:$4 sm:$0xff] %v10310
      %10590 = vst [vmem:[%s10503] ss:$4 sm:$0xff] %v10311
      %10591 = vst [vmem:[%s10505] ss:$4 sm:$0xff] %v10312
      %10592 = vst [vmem:[%s10507] ss:$4 sm:$0xff] %v10313
      %10593 = vst [vmem:[%s10509] ss:$4 sm:$0xff] %v10314
      %10594 = vst [vmem:[%s10511] ss:$4 sm:$0xff] %v10315
      %10595 = vst [vmem:[%s10513] ss:$4 sm:$0xff] %v10316
      %10596 = vst [vmem:[%s10515] ss:$4 sm:$0xff] %v10317
      %v10597 = vld.sshfl [vmem:[#allocation1] sm:$0xff pattern:$0x73625140]
      %v10598 = vld.sshfl [vmem:[#allocation1 + $0x20] sm:$0xff pattern:$0x73625140]
      %10599 = vst [vmem:[#allocation1] ss:$4 sm:$0xff] %v10318
      %10600 = vst [vmem:[%s10503] ss:$4 sm:$0xff] %v10319
      %10601 = vst [vmem:[%s10505] ss:$4 sm:$0xff] %v10320
      %10602 = vst [vmem:[%s10507] ss:$4 sm:$0xff] %v10321
      %10603 = vst [vmem:[%s10509] ss:$4 sm:$0xff] %v10322
      %10604 = vst [vmem:[%s10511] ss:$4 sm:$0xff] %v10323
      %10605 = vst [vmem:[%s10513] ss:$4 sm:$0xff] %v10324
      %10606 = vst [vmem:[%s10515] ss:$4 sm:$0xff] %v10325
      %v10607 = vld.sshfl [vmem:[#allocation1] sm:$0xff pattern:$0x73625140]
      %v10608 = vld.sshfl [vmem:[#allocation1 + $0x20] sm:$0xff pattern:$0x73625140]
      %10609 = vst [vmem:[#allocation1] ss:$4 sm:$0xff] %v10326
      %10610 = vst [vmem:[%s10503] ss:$4 sm:$0xff] %v10327
      %10611 = vst [vmem:[%s10505] ss:$4 sm:$0xff] %v10328
      %10612 = vst [vmem:[%s10507] ss:$4 sm:$0xff] %v10329
      %10613 = vst [vmem:[%s10509] ss:$4 sm:$0xff] %v10330
      %10614 = vst [vmem:[%s10511] ss:$4 sm:$0xff] %v10331
      %10615 = vst [vmem:[%s10513] ss:$4 sm:$0xff] %v10332
      %10616 = vst [vmem:[%s10515] ss:$4 sm:$0xff] %v10333
      %v10617 = vld.sshfl [vmem:[#allocation1] sm:$0xff pattern:$0x73625140]
      %v10618 = vld.sshfl [vmem:[#allocation1 + $0x20] sm:$0xff pattern:$0x73625140]
      %10619 = vst [vmem:[#allocation1] ss:$4 sm:$0xff] %v10334
      %10620 = vst [vmem:[%s10503] ss:$4 sm:$0xff] %v10335
      %10621 = vst [vmem:[%s10505] ss:$4 sm:$0xff] %v10336
      %10622 = vst [vmem:[%s10507] ss:$4 sm:$0xff] %v10337
      %10623 = vst [vmem:[%s10509] ss:$4 sm:$0xff] %v10338
      %10624 = vst [vmem:[%s10511] ss:$4 sm:$0xff] %v10339
      %10625 = vst [vmem:[%s10513] ss:$4 sm:$0xff] %v10340
      %10626 = vst [vmem:[%s10515] ss:$4 sm:$0xff] %v10341
      %v10627 = vld.sshfl [vmem:[#allocation1] sm:$0xff pattern:$0x73625140]
      %v10628 = vld.sshfl [vmem:[#allocation1 + $0x20] sm:$0xff pattern:$0x73625140]
      %10629 = vst [vmem:[#allocation1] ss:$4 sm:$0xff] %v10342
      %10630 = vst [vmem:[%s10503] ss:$4 sm:$0xff] %v10343
      %10631 = vst [vmem:[%s10505] ss:$4 sm:$0xff] %v10344
      %10632 = vst [vmem:[%s10507] ss:$4 sm:$0xff] %v10345
      %10633 = vst [vmem:[%s10509] ss:$4 sm:$0xff] %v10346
      %10634 = vst [vmem:[%s10511] ss:$4 sm:$0xff] %v10347
      %10635 = vst [vmem:[%s10513] ss:$4 sm:$0xff] %v10348
      %10636 = vst [vmem:[%s10515] ss:$4 sm:$0xff] %v10349
      %v10637 = vld.sshfl [vmem:[#allocation1] sm:$0xff pattern:$0x73625140]
      %v10638 = vld.sshfl [vmem:[#allocation1 + $0x20] sm:$0xff pattern:$0x73625140]
      %10639 = vst [vmem:[#allocation1] ss:$4 sm:$0xff] %v10350
      %10640 = vst [vmem:[%s10503] ss:$4 sm:$0xff] %v10351
      %10641 = vst [vmem:[%s10505] ss:$4 sm:$0xff] %v10352
      %10642 = vst [vmem:[%s10507] ss:$4 sm:$0xff] %v10353
      %10643 = vst [vmem:[%s10509] ss:$4 sm:$0xff] %v10354
      %10644 = vst [vmem:[%s10511] ss:$4 sm:$0xff] %v10355
      %10645 = vst [vmem:[%s10513] ss:$4 sm:$0xff] %v10356
      %10646 = vst [vmem:[%s10515] ss:$4 sm:$0xff] %v10357
      %v10647 = vld.sshfl [vmem:[#allocation1] sm:$0xff pattern:$0x73625140]
      %v10648 = vld.sshfl [vmem:[#allocation1 + $0x20] sm:$0xff pattern:$0x73625140]
      %10649 = vst [vmem:[#allocation1] ss:$4 sm:$0xff] %v10358
      %10650 = vst [vmem:[%s10503] ss:$4 sm:$0xff] %v10359
      %10651 = vst [vmem:[%s10505] ss:$4 sm:$0xff] %v10360
      %10652 = vst [vmem:[%s10507] ss:$4 sm:$0xff] %v10361
      %10653 = vst [vmem:[%s10509] ss:$4 sm:$0xff] %v10362
      %10654 = vst [vmem:[%s10511] ss:$4 sm:$0xff] %v10363
      %10655 = vst [vmem:[%s10513] ss:$4 sm:$0xff] %v10364
      %10656 = vst [vmem:[%s10515] ss:$4 sm:$0xff] %v10365
      %v10657 = vld.sshfl [vmem:[#allocation1] sm:$0xff pattern:$0x73625140]
      %v10658 = vld.sshfl [vmem:[#allocation1 + $0x20] sm:$0xff pattern:$0x73625140]
      %10659 = vst [vmem:[#allocation1] ss:$4 sm:$0xff] %v10366
      %10660 = vst [vmem:[%s10503] ss:$4 sm:$0xff] %v10367
      %10661 = vst [vmem:[%s10505] ss:$4 sm:$0xff] %v10368
      %10662 = vst [vmem:[%s10507] ss:$4 sm:$0xff] %v10369
      %10663 = vst [vmem:[%s10509] ss:$4 sm:$0xff] %v10370
      %10664 = vst [vmem:[%s10511] ss:$4 sm:$0xff] %v10371
      %10665 = vst [vmem:[%s10513] ss:$4 sm:$0xff] %v10372
      %10666 = vst [vmem:[%s10515] ss:$4 sm:$0xff] %v10373
      %v10667 = vld.sshfl [vmem:[#allocation1] sm:$0xff pattern:$0x73625140]
      %v10668 = vld.sshfl [vmem:[#allocation1 + $0x20] sm:$0xff pattern:$0x73625140]
      %v10701 = vsel %vm259, %v10517, 0.0
      %v10702 = vsel %vm259, %v10518, 0.0
      %v10703 = vadd.f32 %v10701, %v10702
      %v10704 = vsel %vm259, %v10527, 0.0
      %v10705 = vadd.f32 %v10703, %v10704
      %v10706 = vsel %vm259, %v10528, 0.0
      %v10707 = vadd.f32 %v10705, %v10706
      %v10708 = vsel %vm259, %v10537, 0.0
      %v10709 = vadd.f32 %v10707, %v10708
      %v10710 = vsel %vm259, %v10538, 0.0
      %v10711 = vadd.f32 %v10709, %v10710
      %v10712 = vsel %vm259, %v10547, 0.0
      %v10713 = vadd.f32 %v10711, %v10712
      %v10714 = vsel %vm259, %v10548, 0.0
      %v10715 = vadd.f32 %v10713, %v10714
      %v10716 = vsel %vm259, %v10557, 0.0
      %v10717 = vadd.f32 %v10715, %v10716
      %v10718 = vsel %vm259, %v10558, 0.0
      %v10719 = vadd.f32 %v10717, %v10718
      %v10720 = vsel %vm259, %v10567, 0.0
      %v10721 = vadd.f32 %v10719, %v10720
      %v10722 = vsel %vm259, %v10568, 0.0
      %v10723 = vadd.f32 %v10721, %v10722
      %v10724 = vsel %vm259, %v10577, 0.0
      %v10725 = vadd.f32 %v10723, %v10724
      %v10726 = vsel %vm259, %v10578, 0.0
      %v10727 = vadd.f32 %v10725, %v10726
      %v10728 = vsel %vm259, %v10587, 0.0
      %v10729 = vadd.f32 %v10727, %v10728
      %v10730 = vsel %vm259, %v10588, 0.0
      %v10731 = vadd.f32 %v10729, %v10730
      %v10732 = vsel %vm259, %v10597, 0.0
      %v10733 = vadd.f32 %v10731, %v10732
      %v10734 = vsel %vm259, %v10598, 0.0
      %v10735 = vadd.f32 %v10733, %v10734
      %v10736 = vsel %vm259, %v10607, 0.0
      %v10737 = vadd.f32 %v10735, %v10736
      %v10738 = vsel %vm259, %v10608, 0.0
      %v10739 = vadd.f32 %v10737, %v10738
      %v10740 = vsel %vm259, %v10617, 0.0
      %v10741 = vadd.f32 %v10739, %v10740
      %v10742 = vsel %vm259, %v10618, 0.0
      %v10743 = vadd.f32 %v10741, %v10742
      %v10744 = vsel %vm259, %v10627, 0.0
      %v10745 = vadd.f32 %v10743, %v10744
      %v10746 = vsel %vm259, %v10628, 0.0
      %v10747 = vadd.f32 %v10745, %v10746
      %v10748 = vsel %vm259, %v10637, 0.0
      %v10749 = vadd.f32 %v10747, %v10748
      %v10750 = vsel %vm259, %v10638, 0.0
      %v10751 = vadd.f32 %v10749, %v10750
      %v10752 = vsel %vm259, %v10647, 0.0
      %v10753 = vadd.f32 %v10751, %v10752
      %v10754 = vsel %vm259, %v10648, 0.0
      %v10755 = vadd.f32 %v10753, %v10754
      %v10756 = vsel %vm259, %v10657, 0.0
      %v10757 = vadd.f32 %v10755, %v10756
      %v10758 = vsel %vm259, %v10658, 0.0
      %v10759 = vadd.f32 %v10757, %v10758
      %v10760 = vsel %vm259, %v10667, 0.0
      %v10761 = vadd.f32 %v10759, %v10760
      %v10762 = vsel %vm259, %v10668, 0.0
      %v10763 = vadd.f32 %v10761, %v10762
      %v10764 = vrot.slane %v10763, 4
      %v10765 = vadd.f32 %v10763, %v10764
      %v10766 = vrot.slane %v10765, 2
      %v10767 = vadd.f32 %v10765, %v10766
      %v10768 = vrot.slane %v10767, 1
      %v10769 = vadd.f32 %v10767, %v10768
      %v10770 = vmul.f32 %v10769, %v4675
      %v10771 = vmul.f32 %v10245, %v10245
      %v10772 = vsub.f32 %v10770, %v10771
      %v10773 = vmax.f32 %v10772, 0.0
      %v10774 = vadd.f32 %v10773, 1e-05
      %v10775 = vrsqrt.pop %v10774
      %v10776 = vmul.f32 %v10775, %v10774
      %v10777 = vmul.f32 %v10776, %v10775
      %v10778 = vmul.f32 0.5, %v10777
      %v10779 = vsub.f32 1.5, %v10778
      %v10780 = vmul.f32 %v10775, %v10779
      %vm10781 = vweird.f32 %v10774
      %vm10782 = vweird.f32 %v10775
      %vm10783 = vmor %vm10781, %vm10782
      %v10784 = vsel %vm10783, %v10775, %v10780
      %v10786 = vrot.slane %v10245, 2
      %v10787 = vrot.slane %v10245, 4
      %v10788 = vrot.slane %v10245, 6
      %v10792 = vsub.f32 %v9721, %v10245
      %v10793 = vsub.f32 %v9722, %v10786
      %v10794 = vsub.f32 %v9723, %v10787
      %v10795 = vsub.f32 %v9724, %v10788
      %v10796 = vsub.f32 %v9725, %v10245
      %v10797 = vsub.f32 %v9726, %v10786
      %v10798 = vsub.f32 %v9727, %v10787
      %v10799 = vsub.f32 %v9728, %v10788
      %v10800 = vsub.f32 %v9729, %v10245
      %v10801 = vsub.f32 %v9730, %v10786
      %v10802 = vsub.f32 %v9731, %v10787
      %v10803 = vsub.f32 %v9732, %v10788
      %v10804 = vsub.f32 %v9733, %v10245
      %v10805 = vsub.f32 %v9734, %v10786
      %v10806 = vsub.f32 %v9735, %v10787
      %v10807 = vsub.f32 %v9736, %v10788
      %v10808 = vsub.f32 %v9737, %v10245
      %v10809 = vsub.f32 %v9738, %v10786
      %v10810 = vsub.f32 %v9739, %v10787
      %v10811 = vsub.f32 %v9740, %v10788
      %v10812 = vsub.f32 %v9741, %v10245
      %v10813 = vsub.f32 %v9742, %v10786
      %v10814 = vsub.f32 %v9743, %v10787
      %v10815 = vsub.f32 %v9744, %v10788
      %v10816 = vsub.f32 %v9745, %v10245
      %v10817 = vsub.f32 %v9746, %v10786
      %v10818 = vsub.f32 %v9747, %v10787
      %v10819 = vsub.f32 %v9748, %v10788
      %v10820 = vsub.f32 %v9749, %v10245
      %v10821 = vsub.f32 %v9750, %v10786
      %v10822 = vsub.f32 %v9751, %v10787
      %v10823 = vsub.f32 %v9752, %v10788
      %v10824 = vsub.f32 %v9753, %v10245
      %v10825 = vsub.f32 %v9754, %v10786
      %v10826 = vsub.f32 %v9755, %v10787
      %v10827 = vsub.f32 %v9756, %v10788
      %v10828 = vsub.f32 %v9757, %v10245
      %v10829 = vsub.f32 %v9758, %v10786
      %v10830 = vsub.f32 %v9759, %v10787
      %v10831 = vsub.f32 %v9760, %v10788
      %v10832 = vsub.f32 %v9761, %v10245
      %v10833 = vsub.f32 %v9762, %v10786
      %v10834 = vsub.f32 %v9763, %v10787
      %v10835 = vsub.f32 %v9764, %v10788
      %v10836 = vsub.f32 %v9765, %v10245
      %v10837 = vsub.f32 %v9766, %v10786
      %v10838 = vsub.f32 %v9767, %v10787
      %v10839 = vsub.f32 %v9768, %v10788
      %v10840 = vsub.f32 %v9769, %v10245
      %v10841 = vsub.f32 %v9770, %v10786
      %v10842 = vsub.f32 %v9771, %v10787
      %v10843 = vsub.f32 %v9772, %v10788
      %v10844 = vsub.f32 %v9773, %v10245
      %v10845 = vsub.f32 %v9774, %v10786
      %v10846 = vsub.f32 %v9775, %v10787
      %v10847 = vsub.f32 %v9776, %v10788
      %v10848 = vsub.f32 %v9777, %v10245
      %v10849 = vsub.f32 %v9778, %v10786
      %v10850 = vsub.f32 %v9779, %v10787
      %v10851 = vsub.f32 %v9780, %v10788
      %v10852 = vsub.f32 %v9781, %v10245
      %v10853 = vsub.f32 %v9782, %v10786
      %v10854 = vsub.f32 %v9783, %v10787
      %v10855 = vsub.f32 %v9784, %v10788
      %v10856 = vsub.f32 %v9785, %v10245
      %v10857 = vsub.f32 %v9786, %v10786
      %v10858 = vsub.f32 %v9787, %v10787
      %v10859 = vsub.f32 %v9788, %v10788
      %v10860 = vsub.f32 %v9789, %v10245
      %v10861 = vsub.f32 %v9790, %v10786
      %v10862 = vsub.f32 %v9791, %v10787
      %v10863 = vsub.f32 %v9792, %v10788
      %v10864 = vsub.f32 %v9793, %v10245
      %v10865 = vsub.f32 %v9794, %v10786
      %v10866 = vsub.f32 %v9795, %v10787
      %v10867 = vsub.f32 %v9796, %v10788
      %v10868 = vsub.f32 %v9797, %v10245
      %v10869 = vsub.f32 %v9798, %v10786
      %v10870 = vsub.f32 %v9799, %v10787
      %v10871 = vsub.f32 %v9800, %v10788
      %v10872 = vsub.f32 %v9801, %v10245
      %v10873 = vsub.f32 %v9802, %v10786
      %v10874 = vsub.f32 %v9803, %v10787
      %v10875 = vsub.f32 %v9804, %v10788
      %v10876 = vsub.f32 %v9805, %v10245
      %v10877 = vsub.f32 %v9806, %v10786
      %v10878 = vsub.f32 %v9807, %v10787
      %v10879 = vsub.f32 %v9808, %v10788
      %v10880 = vsub.f32 %v9809, %v10245
      %v10881 = vsub.f32 %v9810, %v10786
      %v10882 = vsub.f32 %v9811, %v10787
      %v10883 = vsub.f32 %v9812, %v10788
      %v10884 = vsub.f32 %v9813, %v10245
      %v10885 = vsub.f32 %v9814, %v10786
      %v10886 = vsub.f32 %v9815, %v10787
      %v10887 = vsub.f32 %v9816, %v10788
      %v10888 = vsub.f32 %v9817, %v10245
      %v10889 = vsub.f32 %v9818, %v10786
      %v10890 = vsub.f32 %v9819, %v10787
      %v10891 = vsub.f32 %v9820, %v10788
      %v10892 = vsub.f32 %v9821, %v10245
      %v10893 = vsub.f32 %v9822, %v10786
      %v10894 = vsub.f32 %v9823, %v10787
      %v10895 = vsub.f32 %v9824, %v10788
      %v10896 = vsub.f32 %v9825, %v10245
      %v10897 = vsub.f32 %v9826, %v10786
      %v10898 = vsub.f32 %v9827, %v10787
      %v10899 = vsub.f32 %v9828, %v10788
      %v10900 = vsub.f32 %v9829, %v10245
      %v10901 = vsub.f32 %v9830, %v10786
      %v10902 = vsub.f32 %v9831, %v10787
      %v10903 = vsub.f32 %v9832, %v10788
      %v10904 = vsub.f32 %v9833, %v10245
      %v10905 = vsub.f32 %v9834, %v10786
      %v10906 = vsub.f32 %v9835, %v10787
      %v10907 = vsub.f32 %v9836, %v10788
      %v10908 = vsub.f32 %v9837, %v10245
      %v10909 = vsub.f32 %v9838, %v10786
      %v10910 = vsub.f32 %v9839, %v10787
      %v10911 = vsub.f32 %v9840, %v10788
      %v10912 = vsub.f32 %v9841, %v10245
      %v10913 = vsub.f32 %v9842, %v10786
      %v10914 = vsub.f32 %v9843, %v10787
      %v10915 = vsub.f32 %v9844, %v10788
      %v10916 = vsub.f32 %v9845, %v10245
      %v10917 = vsub.f32 %v9846, %v10786
      %v10918 = vsub.f32 %v9847, %v10787
      %v10919 = vsub.f32 %v9848, %v10788
      %v10921 = vrot.slane %v10784, 2
      %v10922 = vrot.slane %v10784, 4
      %v10923 = vrot.slane %v10784, 6
      %v10927 = vmul.f32 %v10792, %v10784
      %v10928 = vmul.f32 %v10793, %v10921
      %v10929 = vmul.f32 %v10794, %v10922
      %v10930 = vmul.f32 %v10795, %v10923
      %v10931 = vmul.f32 %v10796, %v10784
      %v10932 = vmul.f32 %v10797, %v10921
      %v10933 = vmul.f32 %v10798, %v10922
      %v10934 = vmul.f32 %v10799, %v10923
      %v10935 = vmul.f32 %v10800, %v10784
      %v10936 = vmul.f32 %v10801, %v10921
      %v10937 = vmul.f32 %v10802, %v10922
      %v10938 = vmul.f32 %v10803, %v10923
      %v10939 = vmul.f32 %v10804, %v10784
      %v10940 = vmul.f32 %v10805, %v10921
      %v10941 = vmul.f32 %v10806, %v10922
      %v10942 = vmul.f32 %v10807, %v10923
      %v10943 = vmul.f32 %v10808, %v10784
      %v10944 = vmul.f32 %v10809, %v10921
      %v10945 = vmul.f32 %v10810, %v10922
      %v10946 = vmul.f32 %v10811, %v10923
      %v10947 = vmul.f32 %v10812, %v10784
      %v10948 = vmul.f32 %v10813, %v10921
      %v10949 = vmul.f32 %v10814, %v10922
      %v10950 = vmul.f32 %v10815, %v10923
      %v10951 = vmul.f32 %v10816, %v10784
      %v10952 = vmul.f32 %v10817, %v10921
      %v10953 = vmul.f32 %v10818, %v10922
      %v10954 = vmul.f32 %v10819, %v10923
      %v10955 = vmul.f32 %v10820, %v10784
      %v10956 = vmul.f32 %v10821, %v10921
      %v10957 = vmul.f32 %v10822, %v10922
      %v10958 = vmul.f32 %v10823, %v10923
      %v10959 = vmul.f32 %v10824, %v10784
      %v10960 = vmul.f32 %v10825, %v10921
      %v10961 = vmul.f32 %v10826, %v10922
      %v10962 = vmul.f32 %v10827, %v10923
      %v10963 = vmul.f32 %v10828, %v10784
      %v10964 = vmul.f32 %v10829, %v10921
      %v10965 = vmul.f32 %v10830, %v10922
      %v10966 = vmul.f32 %v10831, %v10923
      %v10967 = vmul.f32 %v10832, %v10784
      %v10968 = vmul.f32 %v10833, %v10921
      %v10969 = vmul.f32 %v10834, %v10922
      %v10970 = vmul.f32 %v10835, %v10923
      %v10971 = vmul.f32 %v10836, %v10784
      %v10972 = vmul.f32 %v10837, %v10921
      %v10973 = vmul.f32 %v10838, %v10922
      %v10974 = vmul.f32 %v10839, %v10923
      %v10975 = vmul.f32 %v10840, %v10784
      %v10976 = vmul.f32 %v10841, %v10921
      %v10977 = vmul.f32 %v10842, %v10922
      %v10978 = vmul.f32 %v10843, %v10923
      %v10979 = vmul.f32 %v10844, %v10784
      %v10980 = vmul.f32 %v10845, %v10921
      %v10981 = vmul.f32 %v10846, %v10922
      %v10982 = vmul.f32 %v10847, %v10923
      %v10983 = vmul.f32 %v10848, %v10784
      %v10984 = vmul.f32 %v10849, %v10921
      %v10985 = vmul.f32 %v10850, %v10922
      %v10986 = vmul.f32 %v10851, %v10923
      %v10987 = vmul.f32 %v10852, %v10784
      %v10988 = vmul.f32 %v10853, %v10921
      %v10989 = vmul.f32 %v10854, %v10922
      %v10990 = vmul.f32 %v10855, %v10923
      %v10991 = vmul.f32 %v10856, %v10784
      %v10992 = vmul.f32 %v10857, %v10921
      %v10993 = vmul.f32 %v10858, %v10922
      %v10994 = vmul.f32 %v10859, %v10923
      %v10995 = vmul.f32 %v10860, %v10784
      %v10996 = vmul.f32 %v10861, %v10921
      %v10997 = vmul.f32 %v10862, %v10922
      %v10998 = vmul.f32 %v10863, %v10923
      %v10999 = vmul.f32 %v10864, %v10784
      %v11000 = vmul.f32 %v10865, %v10921
      %v11001 = vmul.f32 %v10866, %v10922
      %v11002 = vmul.f32 %v10867, %v10923
      %v11003 = vmul.f32 %v10868, %v10784
      %v11004 = vmul.f32 %v10869, %v10921
      %v11005 = vmul.f32 %v10870, %v10922
      %v11006 = vmul.f32 %v10871, %v10923
      %v11007 = vmul.f32 %v10872, %v10784
      %v11008 = vmul.f32 %v10873, %v10921
      %v11009 = vmul.f32 %v10874, %v10922
      %v11010 = vmul.f32 %v10875, %v10923
      %v11011 = vmul.f32 %v10876, %v10784
      %v11012 = vmul.f32 %v10877, %v10921
      %v11013 = vmul.f32 %v10878, %v10922
      %v11014 = vmul.f32 %v10879, %v10923
      %v11015 = vmul.f32 %v10880, %v10784
      %v11016 = vmul.f32 %v10881, %v10921
      %v11017 = vmul.f32 %v10882, %v10922
      %v11018 = vmul.f32 %v10883, %v10923
      %v11019 = vmul.f32 %v10884, %v10784
      %v11020 = vmul.f32 %v10885, %v10921
      %v11021 = vmul.f32 %v10886, %v10922
      %v11022 = vmul.f32 %v10887, %v10923
      %v11023 = vmul.f32 %v10888, %v10784
      %v11024 = vmul.f32 %v10889, %v10921
      %v11025 = vmul.f32 %v10890, %v10922
      %v11026 = vmul.f32 %v10891, %v10923
      %v11027 = vmul.f32 %v10892, %v10784
      %v11028 = vmul.f32 %v10893, %v10921
      %v11029 = vmul.f32 %v10894, %v10922
      %v11030 = vmul.f32 %v10895, %v10923
      %v11031 = vmul.f32 %v10896, %v10784
      %v11032 = vmul.f32 %v10897, %v10921
      %v11033 = vmul.f32 %v10898, %v10922
      %v11034 = vmul.f32 %v10899, %v10923
      %v11035 = vmul.f32 %v10900, %v10784
      %v11036 = vmul.f32 %v10901, %v10921
      %v11037 = vmul.f32 %v10902, %v10922
      %v11038 = vmul.f32 %v10903, %v10923
      %v11039 = vmul.f32 %v10904, %v10784
      %v11040 = vmul.f32 %v10905, %v10921
      %v11041 = vmul.f32 %v10906, %v10922
      %v11042 = vmul.f32 %v10907, %v10923
      %v11043 = vmul.f32 %v10908, %v10784
      %v11044 = vmul.f32 %v10909, %v10921
      %v11045 = vmul.f32 %v10910, %v10922
      %v11046 = vmul.f32 %v10911, %v10923
      %v11047 = vmul.f32 %v10912, %v10784
      %v11048 = vmul.f32 %v10913, %v10921
      %v11049 = vmul.f32 %v10914, %v10922
      %v11050 = vmul.f32 %v10915, %v10923
      %v11051 = vmul.f32 %v10916, %v10784
      %v11052 = vmul.f32 %v10917, %v10921
      %v11053 = vmul.f32 %v10918, %v10922
      %v11054 = vmul.f32 %v10919, %v10923
      %v11055 = vmax.f32 %v10927, 0.0
      %v11056 = vmax.f32 %v10928, 0.0
      %v11057 = vmax.f32 %v10929, 0.0
      %v11058 = vmax.f32 %v10930, 0.0
      %v11059 = vmax.f32 %v10931, 0.0
      %v11060 = vmax.f32 %v10932, 0.0
      %v11061 = vmax.f32 %v10933, 0.0
      %v11062 = vmax.f32 %v10934, 0.0
      %v11063 = vmax.f32 %v10935, 0.0
      %v11064 = vmax.f32 %v10936, 0.0
      %v11065 = vmax.f32 %v10937, 0.0
      %v11066 = vmax.f32 %v10938, 0.0
      %v11067 = vmax.f32 %v10939, 0.0
      %v11068 = vmax.f32 %v10940, 0.0
      %v11069 = vmax.f32 %v10941, 0.0
      %v11070 = vmax.f32 %v10942, 0.0
      %v11071 = vmax.f32 %v10943, 0.0
      %v11072 = vmax.f32 %v10944, 0.0
      %v11073 = vmax.f32 %v10945, 0.0
      %v11074 = vmax.f32 %v10946, 0.0
      %v11075 = vmax.f32 %v10947, 0.0
      %v11076 = vmax.f32 %v10948, 0.0
      %v11077 = vmax.f32 %v10949, 0.0
      %v11078 = vmax.f32 %v10950, 0.0
      %v11079 = vmax.f32 %v10951, 0.0
      %v11080 = vmax.f32 %v10952, 0.0
      %v11081 = vmax.f32 %v10953, 0.0
      %v11082 = vmax.f32 %v10954, 0.0
      %v11083 = vmax.f32 %v10955, 0.0
      %v11084 = vmax.f32 %v10956, 0.0
      %v11085 = vmax.f32 %v10957, 0.0
      %v11086 = vmax.f32 %v10958, 0.0
      %v11087 = vmax.f32 %v10959, 0.0
      %v11088 = vmax.f32 %v10960, 0.0
      %v11089 = vmax.f32 %v10961, 0.0
      %v11090 = vmax.f32 %v10962, 0.0
      %v11091 = vmax.f32 %v10963, 0.0
      %v11092 = vmax.f32 %v10964, 0.0
      %v11093 = vmax.f32 %v10965, 0.0
      %v11094 = vmax.f32 %v10966, 0.0
      %v11095 = vmax.f32 %v10967, 0.0
      %v11096 = vmax.f32 %v10968, 0.0
      %v11097 = vmax.f32 %v10969, 0.0
      %v11098 = vmax.f32 %v10970, 0.0
      %v11099 = vmax.f32 %v10971, 0.0
      %v11100 = vmax.f32 %v10972, 0.0
      %v11101 = vmax.f32 %v10973, 0.0
      %v11102 = vmax.f32 %v10974, 0.0
      %v11103 = vmax.f32 %v10975, 0.0
      %v11104 = vmax.f32 %v10976, 0.0
      %v11105 = vmax.f32 %v10977, 0.0
      %v11106 = vmax.f32 %v10978, 0.0
      %v11107 = vmax.f32 %v10979, 0.0
      %v11108 = vmax.f32 %v10980, 0.0
      %v11109 = vmax.f32 %v10981, 0.0
      %v11110 = vmax.f32 %v10982, 0.0
      %v11111 = vmax.f32 %v10983, 0.0
      %v11112 = vmax.f32 %v10984, 0.0
      %v11113 = vmax.f32 %v10985, 0.0
      %v11114 = vmax.f32 %v10986, 0.0
      %v11115 = vmax.f32 %v10987, 0.0
      %v11116 = vmax.f32 %v10988, 0.0
      %v11117 = vmax.f32 %v10989, 0.0
      %v11118 = vmax.f32 %v10990, 0.0
      %v11119 = vmax.f32 %v10991, 0.0
      %v11120 = vmax.f32 %v10992, 0.0
      %v11121 = vmax.f32 %v10993, 0.0
      %v11122 = vmax.f32 %v10994, 0.0
      %v11123 = vmax.f32 %v10995, 0.0
      %v11124 = vmax.f32 %v10996, 0.0
      %v11125 = vmax.f32 %v10997, 0.0
      %v11126 = vmax.f32 %v10998, 0.0
      %v11127 = vmax.f32 %v10999, 0.0
      %v11128 = vmax.f32 %v11000, 0.0
      %v11129 = vmax.f32 %v11001, 0.0
      %v11130 = vmax.f32 %v11002, 0.0
      %v11131 = vmax.f32 %v11003, 0.0
      %v11132 = vmax.f32 %v11004, 0.0
      %v11133 = vmax.f32 %v11005, 0.0
      %v11134 = vmax.f32 %v11006, 0.0
      %v11135 = vmax.f32 %v11007, 0.0
      %v11136 = vmax.f32 %v11008, 0.0
      %v11137 = vmax.f32 %v11009, 0.0
      %v11138 = vmax.f32 %v11010, 0.0
      %v11139 = vmax.f32 %v11011, 0.0
      %v11140 = vmax.f32 %v11012, 0.0
      %v11141 = vmax.f32 %v11013, 0.0
      %v11142 = vmax.f32 %v11014, 0.0
      %v11143 = vmax.f32 %v11015, 0.0
      %v11144 = vmax.f32 %v11016, 0.0
      %v11145 = vmax.f32 %v11017, 0.0
      %v11146 = vmax.f32 %v11018, 0.0
      %v11147 = vmax.f32 %v11019, 0.0
      %v11148 = vmax.f32 %v11020, 0.0
      %v11149 = vmax.f32 %v11021, 0.0
      %v11150 = vmax.f32 %v11022, 0.0
      %v11151 = vmax.f32 %v11023, 0.0
      %v11152 = vmax.f32 %v11024, 0.0
      %v11153 = vmax.f32 %v11025, 0.0
      %v11154 = vmax.f32 %v11026, 0.0
      %v11155 = vmax.f32 %v11027, 0.0
      %v11156 = vmax.f32 %v11028, 0.0
      %v11157 = vmax.f32 %v11029, 0.0
      %v11158 = vmax.f32 %v11030, 0.0
      %v11159 = vmax.f32 %v11031, 0.0
      %v11160 = vmax.f32 %v11032, 0.0
      %v11161 = vmax.f32 %v11033, 0.0
      %v11162 = vmax.f32 %v11034, 0.0
      %v11163 = vmax.f32 %v11035, 0.0
      %v11164 = vmax.f32 %v11036, 0.0
      %v11165 = vmax.f32 %v11037, 0.0
      %v11166 = vmax.f32 %v11038, 0.0
      %v11167 = vmax.f32 %v11039, 0.0
      %v11168 = vmax.f32 %v11040, 0.0
      %v11169 = vmax.f32 %v11041, 0.0
      %v11170 = vmax.f32 %v11042, 0.0
      %v11171 = vmax.f32 %v11043, 0.0
      %v11172 = vmax.f32 %v11044, 0.0
      %v11173 = vmax.f32 %v11045, 0.0
      %v11174 = vmax.f32 %v11046, 0.0
      %v11175 = vmax.f32 %v11047, 0.0
      %v11176 = vmax.f32 %v11048, 0.0
      %v11177 = vmax.f32 %v11049, 0.0
      %v11178 = vmax.f32 %v11050, 0.0
      %v11179 = vmax.f32 %v11051, 0.0
      %v11180 = vmax.f32 %v11052, 0.0
      %v11181 = vmax.f32 %v11053, 0.0
      %v11182 = vmax.f32 %v11054, 0.0
      %v11215 = vrot.slane %v226, 2
      %v11216 = vrot.slane %v226, 4
      %v11217 = vrot.slane %v226, 6
      %v11218 = vrot.slane %v227, 2
      %v11219 = vrot.slane %v227, 4
      %v11220 = vrot.slane %v227, 6
      %v11221 = vrot.slane %v228, 2
      %v11222 = vrot.slane %v228, 4
      %v11223 = vrot.slane %v228, 6
      %v11224 = vrot.slane %v229, 2
      %v11225 = vrot.slane %v229, 4
      %v11226 = vrot.slane %v229, 6
      %v11227 = vrot.slane %v230, 2
      %v11228 = vrot.slane %v230, 4
      %v11229 = vrot.slane %v230, 6
      %v11230 = vrot.slane %v231, 2
      %v11231 = vrot.slane %v231, 4
      %v11232 = vrot.slane %v231, 6
      %v11233 = vrot.slane %v232, 2
      %v11234 = vrot.slane %v232, 4
      %v11235 = vrot.slane %v232, 6
      %v11236 = vrot.slane %v233, 2
      %v11237 = vrot.slane %v233, 4
      %v11238 = vrot.slane %v233, 6
      %v11239 = vrot.slane %v234, 2
      %v11240 = vrot.slane %v234, 4
      %v11241 = vrot.slane %v234, 6
      %v11242 = vrot.slane %v235, 2
      %v11243 = vrot.slane %v235, 4
      %v11244 = vrot.slane %v235, 6
      %v11245 = vrot.slane %v236, 2
      %v11246 = vrot.slane %v236, 4
      %v11247 = vrot.slane %v236, 6
      %v11248 = vrot.slane %v237, 2
      %v11249 = vrot.slane %v237, 4
      %v11250 = vrot.slane %v237, 6
      %v11251 = vrot.slane %v238, 2
      %v11252 = vrot.slane %v238, 4
      %v11253 = vrot.slane %v238, 6
      %v11254 = vrot.slane %v239, 2
      %v11255 = vrot.slane %v239, 4
      %v11256 = vrot.slane %v239, 6
      %v11257 = vrot.slane %v240, 2
      %v11258 = vrot.slane %v240, 4
      %v11259 = vrot.slane %v240, 6
      %v11260 = vrot.slane %v241, 2
      %v11261 = vrot.slane %v241, 4
      %v11262 = vrot.slane %v241, 6
      %v11263 = vrot.slane %v242, 2
      %v11264 = vrot.slane %v242, 4
      %v11265 = vrot.slane %v242, 6
      %v11266 = vrot.slane %v243, 2
      %v11267 = vrot.slane %v243, 4
      %v11268 = vrot.slane %v243, 6
      %v11269 = vrot.slane %v244, 2
      %v11270 = vrot.slane %v244, 4
      %v11271 = vrot.slane %v244, 6
      %v11272 = vrot.slane %v245, 2
      %v11273 = vrot.slane %v245, 4
      %v11274 = vrot.slane %v245, 6
      %v11275 = vrot.slane %v246, 2
      %v11276 = vrot.slane %v246, 4
      %v11277 = vrot.slane %v246, 6
      %v11278 = vrot.slane %v247, 2
      %v11279 = vrot.slane %v247, 4
      %v11280 = vrot.slane %v247, 6
      %v11281 = vrot.slane %v248, 2
      %v11282 = vrot.slane %v248, 4
      %v11283 = vrot.slane %v248, 6
      %v11284 = vrot.slane %v249, 2
      %v11285 = vrot.slane %v249, 4
      %v11286 = vrot.slane %v249, 6
      %v11287 = vrot.slane %v250, 2
      %v11288 = vrot.slane %v250, 4
      %v11289 = vrot.slane %v250, 6
      %v11290 = vrot.slane %v251, 2
      %v11291 = vrot.slane %v251, 4
      %v11292 = vrot.slane %v251, 6
      %v11293 = vrot.slane %v252, 2
      %v11294 = vrot.slane %v252, 4
      %v11295 = vrot.slane %v252, 6
      %v11296 = vrot.slane %v253, 2
      %v11297 = vrot.slane %v253, 4
      %v11298 = vrot.slane %v253, 6
      %v11299 = vrot.slane %v254, 2
      %v11300 = vrot.slane %v254, 4
      %v11301 = vrot.slane %v254, 6
      %v11302 = vrot.slane %v255, 2
      %v11303 = vrot.slane %v255, 4
      %v11304 = vrot.slane %v255, 6
      %v11305 = vrot.slane %v256, 2
      %v11306 = vrot.slane %v256, 4
      %v11307 = vrot.slane %v256, 6
      %v11308 = vrot.slane %v257, 2
      %v11309 = vrot.slane %v257, 4
      %v11310 = vrot.slane %v257, 6
      %v11407 = vadd.f32 %v11055, %v226
      %v11408 = vadd.f32 %v11056, %v11215
      %v11409 = vadd.f32 %v11057, %v11216
      %v11410 = vadd.f32 %v11058, %v11217
      %v11411 = vadd.f32 %v11059, %v227
      %v11412 = vadd.f32 %v11060, %v11218
      %v11413 = vadd.f32 %v11061, %v11219
      %v11414 = vadd.f32 %v11062, %v11220
      %v11415 = vadd.f32 %v11063, %v228
      %v11416 = vadd.f32 %v11064, %v11221
      %v11417 = vadd.f32 %v11065, %v11222
      %v11418 = vadd.f32 %v11066, %v11223
      %v11419 = vadd.f32 %v11067, %v229
      %v11420 = vadd.f32 %v11068, %v11224
      %v11421 = vadd.f32 %v11069, %v11225
      %v11422 = vadd.f32 %v11070, %v11226
      %v11423 = vadd.f32 %v11071, %v230
      %v11424 = vadd.f32 %v11072, %v11227
      %v11425 = vadd.f32 %v11073, %v11228
      %v11426 = vadd.f32 %v11074, %v11229
      %v11427 = vadd.f32 %v11075, %v231
      %v11428 = vadd.f32 %v11076, %v11230
      %v11429 = vadd.f32 %v11077, %v11231
      %v11430 = vadd.f32 %v11078, %v11232
      %v11431 = vadd.f32 %v11079, %v232
      %v11432 = vadd.f32 %v11080, %v11233
      %v11433 = vadd.f32 %v11081, %v11234
      %v11434 = vadd.f32 %v11082, %v11235
      %v11435 = vadd.f32 %v11083, %v233
      %v11436 = vadd.f32 %v11084, %v11236
      %v11437 = vadd.f32 %v11085, %v11237
      %v11438 = vadd.f32 %v11086, %v11238
      %v11439 = vadd.f32 %v11087, %v234
      %v11440 = vadd.f32 %v11088, %v11239
      %v11441 = vadd.f32 %v11089, %v11240
      %v11442 = vadd.f32 %v11090, %v11241
      %v11443 = vadd.f32 %v11091, %v235
      %v11444 = vadd.f32 %v11092, %v11242
      %v11445 = vadd.f32 %v11093, %v11243
      %v11446 = vadd.f32 %v11094, %v11244
      %v11447 = vadd.f32 %v11095, %v236
      %v11448 = vadd.f32 %v11096, %v11245
      %v11449 = vadd.f32 %v11097, %v11246
      %v11450 = vadd.f32 %v11098, %v11247
      %v11451 = vadd.f32 %v11099, %v237
      %v11452 = vadd.f32 %v11100, %v11248
      %v11453 = vadd.f32 %v11101, %v11249
      %v11454 = vadd.f32 %v11102, %v11250
      %v11455 = vadd.f32 %v11103, %v238
      %v11456 = vadd.f32 %v11104, %v11251
      %v11457 = vadd.f32 %v11105, %v11252
      %v11458 = vadd.f32 %v11106, %v11253
      %v11459 = vadd.f32 %v11107, %v239
      %v11460 = vadd.f32 %v11108, %v11254
      %v11461 = vadd.f32 %v11109, %v11255
      %v11462 = vadd.f32 %v11110, %v11256
      %v11463 = vadd.f32 %v11111, %v240
      %v11464 = vadd.f32 %v11112, %v11257
      %v11465 = vadd.f32 %v11113, %v11258
      %v11466 = vadd.f32 %v11114, %v11259
      %v11467 = vadd.f32 %v11115, %v241
      %v11468 = vadd.f32 %v11116, %v11260
      %v11469 = vadd.f32 %v11117, %v11261
      %v11470 = vadd.f32 %v11118, %v11262
      %v11471 = vadd.f32 %v11119, %v242
      %v11472 = vadd.f32 %v11120, %v11263
      %v11473 = vadd.f32 %v11121, %v11264
      %v11474 = vadd.f32 %v11122, %v11265
      %v11475 = vadd.f32 %v11123, %v243
      %v11476 = vadd.f32 %v11124, %v11266
      %v11477 = vadd.f32 %v11125, %v11267
      %v11478 = vadd.f32 %v11126, %v11268
      %v11479 = vadd.f32 %v11127, %v244
      %v11480 = vadd.f32 %v11128, %v11269
      %v11481 = vadd.f32 %v11129, %v11270
      %v11482 = vadd.f32 %v11130, %v11271
      %v11483 = vadd.f32 %v11131, %v245
      %v11484 = vadd.f32 %v11132, %v11272
      %v11485 = vadd.f32 %v11133, %v11273
      %v11486 = vadd.f32 %v11134, %v11274
      %v11487 = vadd.f32 %v11135, %v246
      %v11488 = vadd.f32 %v11136, %v11275
      %v11489 = vadd.f32 %v11137, %v11276
      %v11490 = vadd.f32 %v11138, %v11277
      %v11491 = vadd.f32 %v11139, %v247
      %v11492 = vadd.f32 %v11140, %v11278
      %v11493 = vadd.f32 %v11141, %v11279
      %v11494 = vadd.f32 %v11142, %v11280
      %v11495 = vadd.f32 %v11143, %v248
      %v11496 = vadd.f32 %v11144, %v11281
      %v11497 = vadd.f32 %v11145, %v11282
      %v11498 = vadd.f32 %v11146, %v11283
      %v11499 = vadd.f32 %v11147, %v249
      %v11500 = vadd.f32 %v11148, %v11284
      %v11501 = vadd.f32 %v11149, %v11285
      %v11502 = vadd.f32 %v11150, %v11286
      %v11503 = vadd.f32 %v11151, %v250
      %v11504 = vadd.f32 %v11152, %v11287
      %v11505 = vadd.f32 %v11153, %v11288
      %v11506 = vadd.f32 %v11154, %v11289
      %v11507 = vadd.f32 %v11155, %v251
      %v11508 = vadd.f32 %v11156, %v11290
      %v11509 = vadd.f32 %v11157, %v11291
      %v11510 = vadd.f32 %v11158, %v11292
      %v11511 = vadd.f32 %v11159, %v252
      %v11512 = vadd.f32 %v11160, %v11293
      %v11513 = vadd.f32 %v11161, %v11294
      %v11514 = vadd.f32 %v11162, %v11295
      %v11515 = vadd.f32 %v11163, %v253
      %v11516 = vadd.f32 %v11164, %v11296
      %v11517 = vadd.f32 %v11165, %v11297
      %v11518 = vadd.f32 %v11166, %v11298
      %v11519 = vadd.f32 %v11167, %v254
      %v11520 = vadd.f32 %v11168, %v11299
      %v11521 = vadd.f32 %v11169, %v11300
      %v11522 = vadd.f32 %v11170, %v11301
      %v11523 = vadd.f32 %v11171, %v255
      %v11524 = vadd.f32 %v11172, %v11302
      %v11525 = vadd.f32 %v11173, %v11303
      %v11526 = vadd.f32 %v11174, %v11304
      %v11527 = vadd.f32 %v11175, %v256
      %v11528 = vadd.f32 %v11176, %v11305
      %v11529 = vadd.f32 %v11177, %v11306
      %v11530 = vadd.f32 %v11178, %v11307
      %v11531 = vadd.f32 %v11179, %v257
      %v11532 = vadd.f32 %v11180, %v11308
      %v11533 = vadd.f32 %v11181, %v11309
      %v11534 = vadd.f32 %v11182, %v11310
      %11663 = vst [vmem:[#allocation1] ss:$4 sm:$0xff] %v11407
      %s11664 = scalar_lea.vmem [#allocation1], 1
      %11665 = vst [vmem:[%s11664] ss:$4 sm:$0xff] %v11408
      %s11666 = scalar_lea.vmem [#allocation1], 2
      %11667 = vst [vmem:[%s11666] ss:$4 sm:$0xff] %v11409
      %s11668 = scalar_lea.vmem [#allocation1], 3
      %11669 = vst [vmem:[%s11668] ss:$4 sm:$0xff] %v11410
      %s11670 = scalar_lea.vmem [#allocation1], 32
      %11671 = vst [vmem:[%s11670] ss:$4 sm:$0xff] %v11411
      %s11672 = scalar_lea.vmem [#allocation1], 33
      %11673 = vst [vmem:[%s11672] ss:$4 sm:$0xff] %v11412
      %s11674 = scalar_lea.vmem [#allocation1], 34
      %11675 = vst [vmem:[%s11674] ss:$4 sm:$0xff] %v11413
      %s11676 = scalar_lea.vmem [#allocation1], 35
      %11677 = vst [vmem:[%s11676] ss:$4 sm:$0xff] %v11414
      %v11678 = vld.sshfl [vmem:[#allocation1] sm:$0xff pattern:$0x73625140]
      %v11679 = vld.sshfl [vmem:[#allocation1 + $0x20] sm:$0xff pattern:$0x73625140]
      %11680 = vst [vmem:[#allocation1] ss:$4 sm:$0xff] %v11415
      %11681 = vst [vmem:[%s11664] ss:$4 sm:$0xff] %v11416
      %11682 = vst [vmem:[%s11666] ss:$4 sm:$0xff] %v11417
      %11683 = vst [vmem:[%s11668] ss:$4 sm:$0xff] %v11418
      %11684 = vst [vmem:[%s11670] ss:$4 sm:$0xff] %v11419
      %11685 = vst [vmem:[%s11672] ss:$4 sm:$0xff] %v11420
      %11686 = vst [vmem:[%s11674] ss:$4 sm:$0xff] %v11421
      %11687 = vst [vmem:[%s11676] ss:$4 sm:$0xff] %v11422
      %v11688 = vld.sshfl [vmem:[#allocation1] sm:$0xff pattern:$0x73625140]
      %v11689 = vld.sshfl [vmem:[#allocation1 + $0x20] sm:$0xff pattern:$0x73625140]
      %11690 = vst [vmem:[#allocation1] ss:$4 sm:$0xff] %v11423
      %11691 = vst [vmem:[%s11664] ss:$4 sm:$0xff] %v11424
      %11692 = vst [vmem:[%s11666] ss:$4 sm:$0xff] %v11425
      %11693 = vst [vmem:[%s11668] ss:$4 sm:$0xff] %v11426
      %11694 = vst [vmem:[%s11670] ss:$4 sm:$0xff] %v11427
      %11695 = vst [vmem:[%s11672] ss:$4 sm:$0xff] %v11428
      %11696 = vst [vmem:[%s11674] ss:$4 sm:$0xff] %v11429
      %11697 = vst [vmem:[%s11676] ss:$4 sm:$0xff] %v11430
      %v11698 = vld.sshfl [vmem:[#allocation1] sm:$0xff pattern:$0x73625140]
      %v11699 = vld.sshfl [vmem:[#allocation1 + $0x20] sm:$0xff pattern:$0x73625140]
      %11700 = vst [vmem:[#allocation1] ss:$4 sm:$0xff] %v11431
      %11701 = vst [vmem:[%s11664] ss:$4 sm:$0xff] %v11432
      %11702 = vst [vmem:[%s11666] ss:$4 sm:$0xff] %v11433
      %11703 = vst [vmem:[%s11668] ss:$4 sm:$0xff] %v11434
      %11704 = vst [vmem:[%s11670] ss:$4 sm:$0xff] %v11435
      %11705 = vst [vmem:[%s11672] ss:$4 sm:$0xff] %v11436
      %11706 = vst [vmem:[%s11674] ss:$4 sm:$0xff] %v11437
      %11707 = vst [vmem:[%s11676] ss:$4 sm:$0xff] %v11438
      %v11708 = vld.sshfl [vmem:[#allocation1] sm:$0xff pattern:$0x73625140]
      %v11709 = vld.sshfl [vmem:[#allocation1 + $0x20] sm:$0xff pattern:$0x73625140]
      %11710 = vst [vmem:[#allocation1] ss:$4 sm:$0xff] %v11439
      %11711 = vst [vmem:[%s11664] ss:$4 sm:$0xff] %v11440
      %11712 = vst [vmem:[%s11666] ss:$4 sm:$0xff] %v11441
      %11713 = vst [vmem:[%s11668] ss:$4 sm:$0xff] %v11442
      %11714 = vst [vmem:[%s11670] ss:$4 sm:$0xff] %v11443
      %11715 = vst [vmem:[%s11672] ss:$4 sm:$0xff] %v11444
      %11716 = vst [vmem:[%s11674] ss:$4 sm:$0xff] %v11445
      %11717 = vst [vmem:[%s11676] ss:$4 sm:$0xff] %v11446
      %v11718 = vld.sshfl [vmem:[#allocation1] sm:$0xff pattern:$0x73625140]
      %v11719 = vld.sshfl [vmem:[#allocation1 + $0x20] sm:$0xff pattern:$0x73625140]
      %11720 = vst [vmem:[#allocation1] ss:$4 sm:$0xff] %v11447
      %11721 = vst [vmem:[%s11664] ss:$4 sm:$0xff] %v11448
      %11722 = vst [vmem:[%s11666] ss:$4 sm:$0xff] %v11449
      %11723 = vst [vmem:[%s11668] ss:$4 sm:$0xff] %v11450
      %11724 = vst [vmem:[%s11670] ss:$4 sm:$0xff] %v11451
      %11725 = vst [vmem:[%s11672] ss:$4 sm:$0xff] %v11452
      %11726 = vst [vmem:[%s11674] ss:$4 sm:$0xff] %v11453
      %11727 = vst [vmem:[%s11676] ss:$4 sm:$0xff] %v11454
      %v11728 = vld.sshfl [vmem:[#allocation1] sm:$0xff pattern:$0x73625140]
      %v11729 = vld.sshfl [vmem:[#allocation1 + $0x20] sm:$0xff pattern:$0x73625140]
      %11730 = vst [vmem:[#allocation1] ss:$4 sm:$0xff] %v11455
      %11731 = vst [vmem:[%s11664] ss:$4 sm:$0xff] %v11456
      %11732 = vst [vmem:[%s11666] ss:$4 sm:$0xff] %v11457
      %11733 = vst [vmem:[%s11668] ss:$4 sm:$0xff] %v11458
      %11734 = vst [vmem:[%s11670] ss:$4 sm:$0xff] %v11459
      %11735 = vst [vmem:[%s11672] ss:$4 sm:$0xff] %v11460
      %11736 = vst [vmem:[%s11674] ss:$4 sm:$0xff] %v11461
      %11737 = vst [vmem:[%s11676] ss:$4 sm:$0xff] %v11462
      %v11738 = vld.sshfl [vmem:[#allocation1] sm:$0xff pattern:$0x73625140]
      %v11739 = vld.sshfl [vmem:[#allocation1 + $0x20] sm:$0xff pattern:$0x73625140]
      %11740 = vst [vmem:[#allocation1] ss:$4 sm:$0xff] %v11463
      %11741 = vst [vmem:[%s11664] ss:$4 sm:$0xff] %v11464
      %11742 = vst [vmem:[%s11666] ss:$4 sm:$0xff] %v11465
      %11743 = vst [vmem:[%s11668] ss:$4 sm:$0xff] %v11466
      %11744 = vst [vmem:[%s11670] ss:$4 sm:$0xff] %v11467
      %11745 = vst [vmem:[%s11672] ss:$4 sm:$0xff] %v11468
      %11746 = vst [vmem:[%s11674] ss:$4 sm:$0xff] %v11469
      %11747 = vst [vmem:[%s11676] ss:$4 sm:$0xff] %v11470
      %v11748 = vld.sshfl [vmem:[#allocation1] sm:$0xff pattern:$0x73625140]
      %v11749 = vld.sshfl [vmem:[#allocation1 + $0x20] sm:$0xff pattern:$0x73625140]
      %11750 = vst [vmem:[#allocation1] ss:$4 sm:$0xff] %v11471
      %11751 = vst [vmem:[%s11664] ss:$4 sm:$0xff] %v11472
      %11752 = vst [vmem:[%s11666] ss:$4 sm:$0xff] %v11473
      %11753 = vst [vmem:[%s11668] ss:$4 sm:$0xff] %v11474
      %11754 = vst [vmem:[%s11670] ss:$4 sm:$0xff] %v11475
      %11755 = vst [vmem:[%s11672] ss:$4 sm:$0xff] %v11476
      %11756 = vst [vmem:[%s11674] ss:$4 sm:$0xff] %v11477
      %11757 = vst [vmem:[%s11676] ss:$4 sm:$0xff] %v11478
      %v11758 = vld.sshfl [vmem:[#allocation1] sm:$0xff pattern:$0x73625140]
      %v11759 = vld.sshfl [vmem:[#allocation1 + $0x20] sm:$0xff pattern:$0x73625140]
      %11760 = vst [vmem:[#allocation1] ss:$4 sm:$0xff] %v11479
      %11761 = vst [vmem:[%s11664] ss:$4 sm:$0xff] %v11480
      %11762 = vst [vmem:[%s11666] ss:$4 sm:$0xff] %v11481
      %11763 = vst [vmem:[%s11668] ss:$4 sm:$0xff] %v11482
      %11764 = vst [vmem:[%s11670] ss:$4 sm:$0xff] %v11483
      %11765 = vst [vmem:[%s11672] ss:$4 sm:$0xff] %v11484
      %11766 = vst [vmem:[%s11674] ss:$4 sm:$0xff] %v11485
      %11767 = vst [vmem:[%s11676] ss:$4 sm:$0xff] %v11486
      %v11768 = vld.sshfl [vmem:[#allocation1] sm:$0xff pattern:$0x73625140]
      %v11769 = vld.sshfl [vmem:[#allocation1 + $0x20] sm:$0xff pattern:$0x73625140]
      %11770 = vst [vmem:[#allocation1] ss:$4 sm:$0xff] %v11487
      %11771 = vst [vmem:[%s11664] ss:$4 sm:$0xff] %v11488
      %11772 = vst [vmem:[%s11666] ss:$4 sm:$0xff] %v11489
      %11773 = vst [vmem:[%s11668] ss:$4 sm:$0xff] %v11490
      %11774 = vst [vmem:[%s11670] ss:$4 sm:$0xff] %v11491
      %11775 = vst [vmem:[%s11672] ss:$4 sm:$0xff] %v11492
      %11776 = vst [vmem:[%s11674] ss:$4 sm:$0xff] %v11493
      %11777 = vst [vmem:[%s11676] ss:$4 sm:$0xff] %v11494
      %v11778 = vld.sshfl [vmem:[#allocation1] sm:$0xff pattern:$0x73625140]
      %v11779 = vld.sshfl [vmem:[#allocation1 + $0x20] sm:$0xff pattern:$0x73625140]
      %11780 = vst [vmem:[#allocation1] ss:$4 sm:$0xff] %v11495
      %11781 = vst [vmem:[%s11664] ss:$4 sm:$0xff] %v11496
      %11782 = vst [vmem:[%s11666] ss:$4 sm:$0xff] %v11497
      %11783 = vst [vmem:[%s11668] ss:$4 sm:$0xff] %v11498
      %11784 = vst [vmem:[%s11670] ss:$4 sm:$0xff] %v11499
      %11785 = vst [vmem:[%s11672] ss:$4 sm:$0xff] %v11500
      %11786 = vst [vmem:[%s11674] ss:$4 sm:$0xff] %v11501
      %11787 = vst [vmem:[%s11676] ss:$4 sm:$0xff] %v11502
      %v11788 = vld.sshfl [vmem:[#allocation1] sm:$0xff pattern:$0x73625140]
      %v11789 = vld.sshfl [vmem:[#allocation1 + $0x20] sm:$0xff pattern:$0x73625140]
      %11790 = vst [vmem:[#allocation1] ss:$4 sm:$0xff] %v11503
      %11791 = vst [vmem:[%s11664] ss:$4 sm:$0xff] %v11504
      %11792 = vst [vmem:[%s11666] ss:$4 sm:$0xff] %v11505
      %11793 = vst [vmem:[%s11668] ss:$4 sm:$0xff] %v11506
      %11794 = vst [vmem:[%s11670] ss:$4 sm:$0xff] %v11507
      %11795 = vst [vmem:[%s11672] ss:$4 sm:$0xff] %v11508
      %11796 = vst [vmem:[%s11674] ss:$4 sm:$0xff] %v11509
      %11797 = vst [vmem:[%s11676] ss:$4 sm:$0xff] %v11510
      %v11798 = vld.sshfl [vmem:[#allocation1] sm:$0xff pattern:$0x73625140]
      %v11799 = vld.sshfl [vmem:[#allocation1 + $0x20] sm:$0xff pattern:$0x73625140]
      %11800 = vst [vmem:[#allocation1] ss:$4 sm:$0xff] %v11511
      %11801 = vst [vmem:[%s11664] ss:$4 sm:$0xff] %v11512
      %11802 = vst [vmem:[%s11666] ss:$4 sm:$0xff] %v11513
      %11803 = vst [vmem:[%s11668] ss:$4 sm:$0xff] %v11514
      %11804 = vst [vmem:[%s11670] ss:$4 sm:$0xff] %v11515
      %11805 = vst [vmem:[%s11672] ss:$4 sm:$0xff] %v11516
      %11806 = vst [vmem:[%s11674] ss:$4 sm:$0xff] %v11517
      %11807 = vst [vmem:[%s11676] ss:$4 sm:$0xff] %v11518
      %v11808 = vld.sshfl [vmem:[#allocation1] sm:$0xff pattern:$0x73625140]
      %v11809 = vld.sshfl [vmem:[#allocation1 + $0x20] sm:$0xff pattern:$0x73625140]
      %11810 = vst [vmem:[#allocation1] ss:$4 sm:$0xff] %v11519
      %11811 = vst [vmem:[%s11664] ss:$4 sm:$0xff] %v11520
      %11812 = vst [vmem:[%s11666] ss:$4 sm:$0xff] %v11521
      %11813 = vst [vmem:[%s11668] ss:$4 sm:$0xff] %v11522
      %11814 = vst [vmem:[%s11670] ss:$4 sm:$0xff] %v11523
      %11815 = vst [vmem:[%s11672] ss:$4 sm:$0xff] %v11524
      %11816 = vst [vmem:[%s11674] ss:$4 sm:$0xff] %v11525
      %11817 = vst [vmem:[%s11676] ss:$4 sm:$0xff] %v11526
      %v11818 = vld.sshfl [vmem:[#allocation1] sm:$0xff pattern:$0x73625140]
      %v11819 = vld.sshfl [vmem:[#allocation1 + $0x20] sm:$0xff pattern:$0x73625140]
      %11820 = vst [vmem:[#allocation1] ss:$4 sm:$0xff] %v11527
      %11821 = vst [vmem:[%s11664] ss:$4 sm:$0xff] %v11528
      %11822 = vst [vmem:[%s11666] ss:$4 sm:$0xff] %v11529
      %11823 = vst [vmem:[%s11668] ss:$4 sm:$0xff] %v11530
      %11824 = vst [vmem:[%s11670] ss:$4 sm:$0xff] %v11531
      %11825 = vst [vmem:[%s11672] ss:$4 sm:$0xff] %v11532
      %11826 = vst [vmem:[%s11674] ss:$4 sm:$0xff] %v11533
      %11827 = vst [vmem:[%s11676] ss:$4 sm:$0xff] %v11534
      %v11828 = vld.sshfl [vmem:[#allocation1] sm:$0xff pattern:$0x73625140]
      %v11829 = vld.sshfl [vmem:[#allocation1 + $0x20] sm:$0xff pattern:$0x73625140]
      %11862 = vst.msk [vmem:[%s224] sm:$0xff] %vm259, %v11678
      %11863 = vst.msk [vmem:[%s224 + $0x8] sm:$0xff] %vm259, %v11679
      %11864 = vst.msk [vmem:[%s224 + $0x10] sm:$0xff] %vm259, %v11688
      %11865 = vst.msk [vmem:[%s224 + $0x18] sm:$0xff] %vm259, %v11689
      %11866 = vst.msk [vmem:[%s224 + $0x20] sm:$0xff] %vm259, %v11698
      %11867 = vst.msk [vmem:[%s224 + $0x28] sm:$0xff] %vm259, %v11699
      %11868 = vst.msk [vmem:[%s224 + $0x30] sm:$0xff] %vm259, %v11708
      %11869 = vst.msk [vmem:[%s224 + $0x38] sm:$0xff] %vm259, %v11709
      %11870 = vst.msk [vmem:[%s224 + $0x40] sm:$0xff] %vm259, %v11718
      %11871 = vst.msk [vmem:[%s224 + $0x48] sm:$0xff] %vm259, %v11719
      %11872 = vst.msk [vmem:[%s224 + $0x50] sm:$0xff] %vm259, %v11728
      %11873 = vst.msk [vmem:[%s224 + $0x58] sm:$0xff] %vm259, %v11729
      %11874 = vst.msk [vmem:[%s224 + $0x60] sm:$0xff] %vm259, %v11738
      %11875 = vst.msk [vmem:[%s224 + $0x68] sm:$0xff] %vm259, %v11739
      %11876 = vst.msk [vmem:[%s224 + $0x70] sm:$0xff] %vm259, %v11748
      %11877 = vst.msk [vmem:[%s224 + $0x78] sm:$0xff] %vm259, %v11749
      %11878 = vst.msk [vmem:[%s224 + $0x80] sm:$0xff] %vm259, %v11758
      %11879 = vst.msk [vmem:[%s224 + $0x88] sm:$0xff] %vm259, %v11759
      %11880 = vst.msk [vmem:[%s224 + $0x90] sm:$0xff] %vm259, %v11768
      %11881 = vst.msk [vmem:[%s224 + $0x98] sm:$0xff] %vm259, %v11769
      %11882 = vst.msk [vmem:[%s224 + $0xa0] sm:$0xff] %vm259, %v11778
      %11883 = vst.msk [vmem:[%s224 + $0xa8] sm:$0xff] %vm259, %v11779
      %11884 = vst.msk [vmem:[%s224 + $0xb0] sm:$0xff] %vm259, %v11788
      %11885 = vst.msk [vmem:[%s224 + $0xb8] sm:$0xff] %vm259, %v11789
      %11886 = vst.msk [vmem:[%s224 + $0xc0] sm:$0xff] %vm259, %v11798
      %11887 = vst.msk [vmem:[%s224 + $0xc8] sm:$0xff] %vm259, %v11799
      %11888 = vst.msk [vmem:[%s224 + $0xd0] sm:$0xff] %vm259, %v11808
      %11889 = vst.msk [vmem:[%s224 + $0xd8] sm:$0xff] %vm259, %v11809
      %11890 = vst.msk [vmem:[%s224 + $0xe0] sm:$0xff] %vm259, %v11818
      %11891 = vst.msk [vmem:[%s224 + $0xe8] sm:$0xff] %vm259, %v11819
      %11892 = vst.msk [vmem:[%s224 + $0xf0] sm:$0xff] %vm259, %v11828
      %11893 = vst.msk [vmem:[%s224 + $0xf8] sm:$0xff] %vm259, %v11829
      %p11894 = scmp.lt.s32.totalorder %s16, 1
      %s11895 = scalar_select %p11894, %s16, 1
      %s11896 = smul.addr %s11895, 32
      %s11897 = smul.addr %s11896, 8
      %s11898 = scalar_lea.vmem %s5, %s11897
      // Predicated region
      $region41: #{resnet_block.1} parent=39 // pred_check
        %p11899 = pneg %p144
      $region42: #{resnet_block.1} parent=39 // pred_check_branch
        %11901 = sbr.rel (%p11899) target = $region44
      $region43: #{resnet_block.1} parent=39 // pred_region
        _
      $region44: #{resnet_block.1} parent=39 // pred_fallthru
        _
    $region40: #{resnet_block.1} parent=5 // pred_fallthru
      _
    %p11902 = scmp.le.s32.totalorder 2, %s11
    // Predicated region
    $region45: #{resnet_block.1} parent=5 // pred_check
      %p11903 = pneg %p11902
    $region46: #{resnet_block.1} parent=5 // pred_check_branch
      %11905 = sbr.rel (%p11903) target = $region48
    $region47: #{resnet_block.1} parent=5 // pred_region
      %s11906 = ssub.s32 %s11, 2
      // Predicated region
      $region49: #{resnet_block.1} parent=47 // pred_check
        %p11907 = pneg %p150
      $region50: #{resnet_block.1} parent=47 // pred_check_branch
        %11909 = sbr.rel (%p11907) target = $region52
      $region51: #{resnet_block.1} parent=47 // pred_region
        %p11910 = scmp.lt.s32.totalorder %s17, 1
        %s11911 = scalar_select %p11910, %s17, 1
        %s11912 = smul.addr %s11911, 32
        %s11913 = smul.addr %s11912, 8
        %s11914 = scalar_lea.vmem %s5, %s11913
      $region52: #{resnet_block.1} parent=47 // pred_fallthru
        _
    $region48: #{resnet_block.1} parent=5 // pred_fallthru
      _
  $region6: #{resnet_block.1} parent=0 // loop_footer
    %s15 = sadd.s32 1, %s11
  $region7: #{resnet_block.1} parent=0 // loop_footer_branch
    %10 = sbr.rel target = $region3
  $region8: #{resnet_block.1} parent=0 // loop_exit
    _

</llo_original>
